<compile_context>
chip_gen: v6e
topology: v6e:2x2x1
jax: 0.10.0
libtpu: 0.0.40
codegen_flags: <defaults>
</compile_context>

<pallas_src>
import jax
import jax.numpy as jnp
import numpy as np
from jax.experimental import pallas as pl


# ----------------------------------------------------------------------------
# Fused kernel.
# Activations are 2-D matrices A[(b, h, w), c] (channels-last rows).
# Conv layer operands:
#   s_ref : [T*M_out, M_in]   stacked constant 0/1 gather matrix (tap-major)
#   w_ref : [T, C_in, C_out]  per-tap weight matrices
#   b_ref : [1, C_out]        bias
# and computes   A_out = relu( sum_t (s[t] @ A_in) @ w[t] + bias ).
# The fc layer uses per-position gather matrices sf[T, B, B*P] (flatten folded in).
# ----------------------------------------------------------------------------
def _encoder_kernel(a0_ref,
                    s1_ref, w1_ref, b1_ref,
                    s2_ref, w2_ref, b2_ref,
                    s3_ref, w3_ref, b3_ref,
                    sf_ref, wf_ref, bf_ref,
                    out_ref):

    def conv_layer(a, s_ref, w_ref, b_ref):
        taps, _, c_out = w_ref.shape
        m_out = s_ref.shape[0] // taps
        # One long gather matmul (im2col + stride + zero padding in one dot).
        gathered = jnp.dot(s_ref[...], a, preferred_element_type=jnp.float32)
        acc = jnp.zeros((m_out, c_out), jnp.float32)
        for t in range(taps):  # static unroll (9 taps); slices are sublane-aligned
            acc = acc + jnp.dot(gathered[t * m_out:(t + 1) * m_out, :], w_ref[t],
                                preferred_element_type=jnp.float32)
        return jnp.maximum(acc + b_ref[...], 0.0)

    def fc_layer(a, s_ref, w_ref, b_ref):
        taps, rows, _ = s_ref.shape
        e_dim = w_ref.shape[2]
        acc = jnp.zeros((rows, e_dim), jnp.float32)
        for t in range(taps):  # static unroll (P spatial positions)
            g = jnp.dot(s_ref[t], a, preferred_element_type=jnp.float32)
            acc = acc + jnp.dot(g, w_ref[t], preferred_element_type=jnp.float32)
        return acc + b_ref[...]

    a = a0_ref[...]
    a = conv_layer(a, s1_ref, w1_ref, b1_ref)   # conv1 + ReLU
    a = conv_layer(a, s2_ref, w2_ref, b2_ref)   # conv2 + ReLU
    a = conv_layer(a, s3_ref, w3_ref, b3_ref)   # conv3 + ReLU
    a = fc_layer(a, sf_ref, wf_ref, bf_ref)     # fc (no ReLU)
    out_ref[...] = a.astype(out_ref.dtype)


def _full_block(shape):
    # Whole-array VMEM blocks (full-extent block shapes are always legal).
    if len(shape) == 2:
        return pl.BlockSpec(shape, lambda: (0, 0))
    return pl.BlockSpec(shape, lambda: (0, 0, 0))


@jax.jit
def encoder_forward(packed, x):
    """x: [B, C, H, W] float32 (PyTorch NCHW). Returns [B, embedding_dim]."""
    B, C, H, W = x.shape
    # Single cheap layout conversion of the network input: rows=(b,h,w), cols=c.
    a0 = jnp.transpose(x, (0, 2, 3, 1)).reshape(B * H * W, C)

    operands = (a0,
                packed["s1"], packed["w1"], packed["b1"],
                packed["s2"], packed["w2"], packed["b2"],
                packed["s3"], packed["w3"], packed["b3"],
                packed["sf"], packed["wf"], packed["bf"])
    emb_dim = packed["wf"].shape[2]
    return pl.pallas_call(
        _encoder_kernel,
        out_shape=jax.ShapeDtypeStruct((B, emb_dim), jnp.float32),
        in_specs=[_full_block(o.shape) for o in operands],
        out_specs=_full_block((B, emb_dim)),
        # Default scoped VMEM is ample (~3 MiB working set) on v5e/v6e/v7x.
    )(*operands)


# ----------------------------------------------------------------------------
# Init-time parameter construction (PyTorch layouts) and one-time packing into
# the kernel's layout (stacked gather matrices, per-tap weights, pre-permuted
# fc weight, 2-D biases).
# ----------------------------------------------------------------------------
def init_encoder_params(key, image_size, channels, embedding_dim):
    ks = jax.random.split(key, 8)

    def conv_init(kw_, kb_, cout, cin):
        bound = 1.0 / np.sqrt(cin * 9)
        w = jax.random.uniform(kw_, (cout, cin, 3, 3), jnp.float32, -bound, bound)
        b = jax.random.uniform(kb_, (cout,), jnp.float32, -bound, bound)
        return w, b

    w1, b1 = conv_init(ks[0], ks[1], 32, channels)
    w2, b2 = conv_init(ks[2], ks[3], 64, 32)
    w3, b3 = conv_init(ks[4], ks[5], 128, 64)

    flat = (image_size // 8) * (image_size // 8) * 128
    bound = 1.0 / np.sqrt(flat)
    wf = jax.random.uniform(ks[6], (embedding_dim, flat), jnp.float32, -bound, bound)
    bf = jax.random.uniform(ks[7], (embedding_dim,), jnp.float32, -bound, bound)
    return dict(w1=w1, b1=b1, w2=w2, b2=b2, w3=w3, b3=b3, wf=wf, bf=bf)


def _conv_gather(batch, h_in, w_in, ksize=3, stride=2, pad=1):
    """Stacked 0/1 row-gather matrix: S[t*M_out + out_row, in_row] = 1 selects the
    input pixel feeding kernel tap t of output pixel out_row (all-zero rows => zero
    padding)."""
    oh = (h_in + 2 * pad - ksize) // stride + 1
    ow = (w_in + 2 * pad - ksize) // stride + 1
    m_in, m_out = batch * h_in * w_in, batch * oh * ow
    s = np.zeros((ksize * ksize, m_out, m_in), np.float32)
    for ki in range(ksize):
        for kj in range(ksize):
            t = ki * ksize + kj
            for b in range(batch):
                for r in range(oh):
                    hi = stride * r + ki - pad
                    if hi < 0 or hi >= h_in:
                        continue
                    for c in range(ow):
                        wi = stride * c + kj - pad
                        if wi < 0 or wi >= w_in:
                            continue
                        s[t, b * oh * ow + r * ow + c,
                          b * h_in * w_in + hi * w_in + wi] = 1.0
    return jnp.asarray(s.reshape(ksize * ksize * m_out, m_in)), oh, ow


def pack_encoder_params(raw, batch, image_size):
    s1, oh1, ow1 = _conv_gather(batch, image_size, image_size)
    s2, oh2, ow2 = _conv_gather(batch, oh1, ow1)
    s3, oh3, ow3 = _conv_gather(batch, oh2, ow2)

    def conv_w(w):  # [Cout, Cin, 3, 3] -> [9, Cin, Cout], tap-major like S mats
        cout, cin = w.shape[0], w.shape[1]
        return jnp.transpose(w, (2, 3, 1, 0)).reshape(9, cin, cout)

    # fc: PyTorch flattens conv3 output NCHW -> column index (c * P + p), p = h*OW3 + w.
    # Our rows are (b, p) with columns c, so split wf by p and pre-transpose each slice;
    # Sf[p] picks row (b*P + p) for each batch item.
    P = oh3 * ow3
    wf_taps = jnp.stack([raw["wf"][:, p::P].T for p in range(P)], axis=0)  # [P, 128, E]
    sf = np.zeros((P, batch, batch * P), np.float32)
    for p in range(P):
        for b in range(batch):
            sf[p, b, b * P + p] = 1.0

    return dict(
        s1=s1, w1=conv_w(raw["w1"]), b1=raw["b1"].reshape(1, -1),
        s2=s2, w2=conv_w(raw["w2"]), b2=raw["b2"].reshape(1, -1),
        s3=s3, w3=conv_w(raw["w3"]), b3=raw["b3"].reshape(1, -1),
        sf=jnp.asarray(sf), wf=wf_taps, bf=raw["bf"].reshape(1, -1),
    )


# ----------------------------------------------------------------------------
# Plain-JAX reference (mirrors the PyTorch module) for a sanity check.
# ----------------------------------------------------------------------------
def reference_forward(raw, x):
    def conv(x, w, b):
        y = jax.lax.conv_general_dilated(
            x, w, window_strides=(2, 2), padding=((1, 1), (1, 1)),
            dimension_numbers=("NCHW", "OIHW", "NCHW"))
        return jax.nn.relu(y + b[None, :, None, None])

    x = conv(x, raw["w1"], raw["b1"])
    x = conv(x, raw["w2"], raw["b2"])
    x = conv(x, raw["w3"], raw["b3"])
    flat = x.reshape(x.shape[0], -1)
    return flat @ raw["wf"].T + raw["bf"][None, :]


if __name__ == "__main__":
    batch, channels, image_size, embedding_dim = 2, 4, 16, 32

    key = jax.random.PRNGKey(0)
    k_params, k_x = jax.random.split(key)
    raw = init_encoder_params(k_params, image_size, channels, embedding_dim)
    packed = pack_encoder_params(raw, batch, image_size)
    x = jax.random.normal(k_x, (batch, channels, image_size, image_size), jnp.float32)

    out = encoder_forward(packed, x)
    out = jax.block_until_ready(out)
    assert out.shape == (batch, embedding_dim)

    ref = jax.block_until_ready(reference_forward(raw, x))
    np.testing.assert_allclose(np.asarray(out), np.asarray(ref), rtol=5e-2, atol=5e-2)

    print("KERNEL_OK")
</pallas_src>

<mosaic_0001>
module attributes {stable_mosaic.version = 11 : i64} {
  func.func @_encoder_kernel(%arg0: memref<512x4xf32, #tpu.memory_space<vmem>>, %arg1: memref<1152x512xf32, #tpu.memory_space<vmem>>, %arg2: memref<9x4x32xf32, #tpu.memory_space<vmem>>, %arg3: memref<1x32xf32, #tpu.memory_space<vmem>>, %arg4: memref<288x128xf32, #tpu.memory_space<vmem>>, %arg5: memref<9x32x64xf32, #tpu.memory_space<vmem>>, %arg6: memref<1x64xf32, #tpu.memory_space<vmem>>, %arg7: memref<72x32xf32, #tpu.memory_space<vmem>>, %arg8: memref<9x64x128xf32, #tpu.memory_space<vmem>>, %arg9: memref<1x128xf32, #tpu.memory_space<vmem>>, %arg10: memref<4x2x8xf32, #tpu.memory_space<vmem>>, %arg11: memref<4x128x32xf32, #tpu.memory_space<vmem>>, %arg12: memref<1x32xf32, #tpu.memory_space<vmem>>, %arg13: memref<2x32xf32, #tpu.memory_space<vmem>>) attributes {dimension_semantics = [], scalar_prefetch = 0 : i64, scratch_operands = 0 : i64, tpu.core_type = #tpu.core_type<tc>} {
    %c0 = arith.constant 0 : index
    %c0_0 = arith.constant 0 : index
    %0 = vector.load %arg0[%c0, %c0_0] : memref<512x4xf32, #tpu.memory_space<vmem>>, vector<512x4xf32>
    %c0_1 = arith.constant 0 : index
    %c0_2 = arith.constant 0 : index
    %1 = vector.load %arg1[%c0_1, %c0_2] : memref<1152x512xf32, #tpu.memory_space<vmem>>, vector<1152x512xf32>
    %cst = arith.constant dense<0.000000e+00> : vector<1152x4xf32>
    %2 = tpu.matmul %1, %0, %cst {dimension_numbers = #tpu.dot_dimension_numbers<[1], [0], [0], [1], [0, 0, 1, 1], [], []>} : vector<1152x512xf32>, vector<512x4xf32>, vector<1152x4xf32> -> vector<1152x4xf32>
    %cst_3 = arith.constant 0.000000e+00 : f32
    %3 = vector.broadcast %cst_3 : f32 to vector<128x32xf32>
    %4 = vector.extract_strided_slice %2 {offsets = [0, 0], sizes = [128, 4], strides = [1, 1]} : vector<1152x4xf32> to vector<128x4xf32>
    %c0_4 = arith.constant 0 : index
    %c0_5 = arith.constant 0 : index
    %c0_6 = arith.constant 0 : index
    %5 = vector.load %arg2[%c0_4, %c0_5, %c0_6] : memref<9x4x32xf32, #tpu.memory_space<vmem>>, vector<1x4x32xf32>
    %6 = vector.shape_cast %5 : vector<1x4x32xf32> to vector<4x32xf32>
    %cst_7 = arith.constant dense<0.000000e+00> : vector<128x32xf32>
    %7 = tpu.matmul %4, %6, %cst_7 {dimension_numbers = #tpu.dot_dimension_numbers<[1], [0], [0], [1], [0, 0, 1, 1], [], []>} : vector<128x4xf32>, vector<4x32xf32>, vector<128x32xf32> -> vector<128x32xf32>
    %8 = arith.addf %3, %7 : vector<128x32xf32>
    %9 = vector.extract_strided_slice %2 {offsets = [128, 0], sizes = [128, 4], strides = [1, 1]} : vector<1152x4xf32> to vector<128x4xf32>
    %c1 = arith.constant 1 : index
    %c0_8 = arith.constant 0 : index
    %c0_9 = arith.constant 0 : index
    %10 = vector.load %arg2[%c1, %c0_8, %c0_9] : memref<9x4x32xf32, #tpu.memory_space<vmem>>, vector<1x4x32xf32>
    %11 = vector.shape_cast %10 : vector<1x4x32xf32> to vector<4x32xf32>
    %cst_10 = arith.constant dense<0.000000e+00> : vector<128x32xf32>
    %12 = tpu.matmul %9, %11, %cst_10 {dimension_numbers = #tpu.dot_dimension_numbers<[1], [0], [0], [1], [0, 0, 1, 1], [], []>} : vector<128x4xf32>, vector<4x32xf32>, vector<128x32xf32> -> vector<128x32xf32>
    %13 = arith.addf %8, %12 : vector<128x32xf32>
    %14 = vector.extract_strided_slice %2 {offsets = [256, 0], sizes = [128, 4], strides = [1, 1]} : vector<1152x4xf32> to vector<128x4xf32>
    %c2 = arith.constant 2 : index
    %c0_11 = arith.constant 0 : index
    %c0_12 = arith.constant 0 : index
    %15 = vector.load %arg2[%c2, %c0_11, %c0_12] : memref<9x4x32xf32, #tpu.memory_space<vmem>>, vector<1x4x32xf32>
    %16 = vector.shape_cast %15 : vector<1x4x32xf32> to vector<4x32xf32>
    %cst_13 = arith.constant dense<0.000000e+00> : vector<128x32xf32>
    %17 = tpu.matmul %14, %16, %cst_13 {dimension_numbers = #tpu.dot_dimension_numbers<[1], [0], [0], [1], [0, 0, 1, 1], [], []>} : vector<128x4xf32>, vector<4x32xf32>, vector<128x32xf32> -> vector<128x32xf32>
    %18 = arith.addf %13, %17 : vector<128x32xf32>
    %19 = vector.extract_strided_slice %2 {offsets = [384, 0], sizes = [128, 4], strides = [1, 1]} : vector<1152x4xf32> to vector<128x4xf32>
    %c3 = arith.constant 3 : index
    %c0_14 = arith.constant 0 : index
    %c0_15 = arith.constant 0 : index
    %20 = vector.load %arg2[%c3, %c0_14, %c0_15] : memref<9x4x32xf32, #tpu.memory_space<vmem>>, vector<1x4x32xf32>
    %21 = vector.shape_cast %20 : vector<1x4x32xf32> to vector<4x32xf32>
    %cst_16 = arith.constant dense<0.000000e+00> : vector<128x32xf32>
    %22 = tpu.matmul %19, %21, %cst_16 {dimension_numbers = #tpu.dot_dimension_numbers<[1], [0], [0], [1], [0, 0, 1, 1], [], []>} : vector<128x4xf32>, vector<4x32xf32>, vector<128x32xf32> -> vector<128x32xf32>
    %23 = arith.addf %18, %22 : vector<128x32xf32>
    %24 = vector.extract_strided_slice %2 {offsets = [512, 0], sizes = [128, 4], strides = [1, 1]} : vector<1152x4xf32> to vector<128x4xf32>
    %c4 = arith.constant 4 : index
    %c0_17 = arith.constant 0 : index
    %c0_18 = arith.constant 0 : index
    %25 = vector.load %arg2[%c4, %c0_17, %c0_18] : memref<9x4x32xf32, #tpu.memory_space<vmem>>, vector<1x4x32xf32>
    %26 = vector.shape_cast %25 : vector<1x4x32xf32> to vector<4x32xf32>
    %cst_19 = arith.constant dense<0.000000e+00> : vector<128x32xf32>
    %27 = tpu.matmul %24, %26, %cst_19 {dimension_numbers = #tpu.dot_dimension_numbers<[1], [0], [0], [1], [0, 0, 1, 1], [], []>} : vector<128x4xf32>, vector<4x32xf32>, vector<128x32xf32> -> vector<128x32xf32>
    %28 = arith.addf %23, %27 : vector<128x32xf32>
    %29 = vector.extract_strided_slice %2 {offsets = [640, 0], sizes = [128, 4], strides = [1, 1]} : vector<1152x4xf32> to vector<128x4xf32>
    %c5 = arith.constant 5 : index
    %c0_20 = arith.constant 0 : index
    %c0_21 = arith.constant 0 : index
    %30 = vector.load %arg2[%c5, %c0_20, %c0_21] : memref<9x4x32xf32, #tpu.memory_space<vmem>>, vector<1x4x32xf32>
    %31 = vector.shape_cast %30 : vector<1x4x32xf32> to vector<4x32xf32>
    %cst_22 = arith.constant dense<0.000000e+00> : vector<128x32xf32>
    %32 = tpu.matmul %29, %31, %cst_22 {dimension_numbers = #tpu.dot_dimension_numbers<[1], [0], [0], [1], [0, 0, 1, 1], [], []>} : vector<128x4xf32>, vector<4x32xf32>, vector<128x32xf32> -> vector<128x32xf32>
    %33 = arith.addf %28, %32 : vector<128x32xf32>
    %34 = vector.extract_strided_slice %2 {offsets = [768, 0], sizes = [128, 4], strides = [1, 1]} : vector<1152x4xf32> to vector<128x4xf32>
    %c6 = arith.constant 6 : index
    %c0_23 = arith.constant 0 : index
    %c0_24 = arith.constant 0 : index
    %35 = vector.load %arg2[%c6, %c0_23, %c0_24] : memref<9x4x32xf32, #tpu.memory_space<vmem>>, vector<1x4x32xf32>
    %36 = vector.shape_cast %35 : vector<1x4x32xf32> to vector<4x32xf32>
    %cst_25 = arith.constant dense<0.000000e+00> : vector<128x32xf32>
    %37 = tpu.matmul %34, %36, %cst_25 {dimension_numbers = #tpu.dot_dimension_numbers<[1], [0], [0], [1], [0, 0, 1, 1], [], []>} : vector<128x4xf32>, vector<4x32xf32>, vector<128x32xf32> -> vector<128x32xf32>
    %38 = arith.addf %33, %37 : vector<128x32xf32>
    %39 = vector.extract_strided_slice %2 {offsets = [896, 0], sizes = [128, 4], strides = [1, 1]} : vector<1152x4xf32> to vector<128x4xf32>
    %c7 = arith.constant 7 : index
    %c0_26 = arith.constant 0 : index
    %c0_27 = arith.constant 0 : index
    %40 = vector.load %arg2[%c7, %c0_26, %c0_27] : memref<9x4x32xf32, #tpu.memory_space<vmem>>, vector<1x4x32xf32>
    %41 = vector.shape_cast %40 : vector<1x4x32xf32> to vector<4x32xf32>
    %cst_28 = arith.constant dense<0.000000e+00> : vector<128x32xf32>
    %42 = tpu.matmul %39, %41, %cst_28 {dimension_numbers = #tpu.dot_dimension_numbers<[1], [0], [0], [1], [0, 0, 1, 1], [], []>} : vector<128x4xf32>, vector<4x32xf32>, vector<128x32xf32> -> vector<128x32xf32>
    %43 = arith.addf %38, %42 : vector<128x32xf32>
    %44 = vector.extract_strided_slice %2 {offsets = [1024, 0], sizes = [128, 4], strides = [1, 1]} : vector<1152x4xf32> to vector<128x4xf32>
    %c8 = arith.constant 8 : index
    %c0_29 = arith.constant 0 : index
    %c0_30 = arith.constant 0 : index
    %45 = vector.load %arg2[%c8, %c0_29, %c0_30] : memref<9x4x32xf32, #tpu.memory_space<vmem>>, vector<1x4x32xf32>
    %46 = vector.shape_cast %45 : vector<1x4x32xf32> to vector<4x32xf32>
    %cst_31 = arith.constant dense<0.000000e+00> : vector<128x32xf32>
    %47 = tpu.matmul %44, %46, %cst_31 {dimension_numbers = #tpu.dot_dimension_numbers<[1], [0], [0], [1], [0, 0, 1, 1], [], []>} : vector<128x4xf32>, vector<4x32xf32>, vector<128x32xf32> -> vector<128x32xf32>
    %48 = arith.addf %43, %47 : vector<128x32xf32>
    %c0_32 = arith.constant 0 : index
    %c0_33 = arith.constant 0 : index
    %49 = vector.load %arg3[%c0_32, %c0_33] : memref<1x32xf32, #tpu.memory_space<vmem>>, vector<1x32xf32>
    %50 = vector.broadcast %49 : vector<1x32xf32> to vector<128x32xf32>
    %51 = arith.addf %48, %50 : vector<128x32xf32>
    %cst_34 = arith.constant 0.000000e+00 : f32
    %52 = vector.broadcast %cst_34 : f32 to vector<128x32xf32>
    %53 = arith.maximumf %51, %52 : vector<128x32xf32>
    %c0_35 = arith.constant 0 : index
    %c0_36 = arith.constant 0 : index
    %54 = vector.load %arg4[%c0_35, %c0_36] : memref<288x128xf32, #tpu.memory_space<vmem>>, vector<288x128xf32>
    %cst_37 = arith.constant dense<0.000000e+00> : vector<288x32xf32>
    %55 = tpu.matmul %54, %53, %cst_37 {dimension_numbers = #tpu.dot_dimension_numbers<[1], [0], [0], [1], [0, 0, 1, 1], [], []>} : vector<288x128xf32>, vector<128x32xf32>, vector<288x32xf32> -> vector<288x32xf32>
    %cst_38 = arith.constant 0.000000e+00 : f32
    %56 = vector.broadcast %cst_38 : f32 to vector<32x64xf32>
    %57 = vector.extract_strided_slice %55 {offsets = [0, 0], sizes = [32, 32], strides = [1, 1]} : vector<288x32xf32> to vector<32x32xf32>
    %c0_39 = arith.constant 0 : index
    %c0_40 = arith.constant 0 : index
    %c0_41 = arith.constant 0 : index
    %58 = vector.load %arg5[%c0_39, %c0_40, %c0_41] : memref<9x32x64xf32, #tpu.memory_space<vmem>>, vector<1x32x64xf32>
    %59 = vector.shape_cast %58 : vector<1x32x64xf32> to vector<32x64xf32>
    %cst_42 = arith.constant dense<0.000000e+00> : vector<32x64xf32>
    %60 = tpu.matmul %57, %59, %cst_42 {dimension_numbers = #tpu.dot_dimension_numbers<[1], [0], [0], [1], [0, 0, 1, 1], [], []>} : vector<32x32xf32>, vector<32x64xf32>, vector<32x64xf32> -> vector<32x64xf32>
    %61 = arith.addf %56, %60 : vector<32x64xf32>
    %62 = vector.extract_strided_slice %55 {offsets = [32, 0], sizes = [32, 32], strides = [1, 1]} : vector<288x32xf32> to vector<32x32xf32>
    %c1_43 = arith.constant 1 : index
    %c0_44 = arith.constant 0 : index
    %c0_45 = arith.constant 0 : index
    %63 = vector.load %arg5[%c1_43, %c0_44, %c0_45] : memref<9x32x64xf32, #tpu.memory_space<vmem>>, vector<1x32x64xf32>
    %64 = vector.shape_cast %63 : vector<1x32x64xf32> to vector<32x64xf32>
    %cst_46 = arith.constant dense<0.000000e+00> : vector<32x64xf32>
    %65 = tpu.matmul %62, %64, %cst_46 {dimension_numbers = #tpu.dot_dimension_numbers<[1], [0], [0], [1], [0, 0, 1, 1], [], []>} : vector<32x32xf32>, vector<32x64xf32>, vector<32x64xf32> -> vector<32x64xf32>
    %66 = arith.addf %61, %65 : vector<32x64xf32>
    %67 = vector.extract_strided_slice %55 {offsets = [64, 0], sizes = [32, 32], strides = [1, 1]} : vector<288x32xf32> to vector<32x32xf32>
    %c2_47 = arith.constant 2 : index
    %c0_48 = arith.constant 0 : index
    %c0_49 = arith.constant 0 : index
    %68 = vector.load %arg5[%c2_47, %c0_48, %c0_49] : memref<9x32x64xf32, #tpu.memory_space<vmem>>, vector<1x32x64xf32>
    %69 = vector.shape_cast %68 : vector<1x32x64xf32> to vector<32x64xf32>
    %cst_50 = arith.constant dense<0.000000e+00> : vector<32x64xf32>
    %70 = tpu.matmul %67, %69, %cst_50 {dimension_numbers = #tpu.dot_dimension_numbers<[1], [0], [0], [1], [0, 0, 1, 1], [], []>} : vector<32x32xf32>, vector<32x64xf32>, vector<32x64xf32> -> vector<32x64xf32>
    %71 = arith.addf %66, %70 : vector<32x64xf32>
    %72 = vector.extract_strided_slice %55 {offsets = [96, 0], sizes = [32, 32], strides = [1, 1]} : vector<288x32xf32> to vector<32x32xf32>
    %c3_51 = arith.constant 3 : index
    %c0_52 = arith.constant 0 : index
    %c0_53 = arith.constant 0 : index
    %73 = vector.load %arg5[%c3_51, %c0_52, %c0_53] : memref<9x32x64xf32, #tpu.memory_space<vmem>>, vector<1x32x64xf32>
    %74 = vector.shape_cast %73 : vector<1x32x64xf32> to vector<32x64xf32>
    %cst_54 = arith.constant dense<0.000000e+00> : vector<32x64xf32>
    %75 = tpu.matmul %72, %74, %cst_54 {dimension_numbers = #tpu.dot_dimension_numbers<[1], [0], [0], [1], [0, 0, 1, 1], [], []>} : vector<32x32xf32>, vector<32x64xf32>, vector<32x64xf32> -> vector<32x64xf32>
    %76 = arith.addf %71, %75 : vector<32x64xf32>
    %77 = vector.extract_strided_slice %55 {offsets = [128, 0], sizes = [32, 32], strides = [1, 1]} : vector<288x32xf32> to vector<32x32xf32>
    %c4_55 = arith.constant 4 : index
    %c0_56 = arith.constant 0 : index
    %c0_57 = arith.constant 0 : index
    %78 = vector.load %arg5[%c4_55, %c0_56, %c0_57] : memref<9x32x64xf32, #tpu.memory_space<vmem>>, vector<1x32x64xf32>
    %79 = vector.shape_cast %78 : vector<1x32x64xf32> to vector<32x64xf32>
    %cst_58 = arith.constant dense<0.000000e+00> : vector<32x64xf32>
    %80 = tpu.matmul %77, %79, %cst_58 {dimension_numbers = #tpu.dot_dimension_numbers<[1], [0], [0], [1], [0, 0, 1, 1], [], []>} : vector<32x32xf32>, vector<32x64xf32>, vector<32x64xf32> -> vector<32x64xf32>
    %81 = arith.addf %76, %80 : vector<32x64xf32>
    %82 = vector.extract_strided_slice %55 {offsets = [160, 0], sizes = [32, 32], strides = [1, 1]} : vector<288x32xf32> to vector<32x32xf32>
    %c5_59 = arith.constant 5 : index
    %c0_60 = arith.constant 0 : index
    %c0_61 = arith.constant 0 : index
    %83 = vector.load %arg5[%c5_59, %c0_60, %c0_61] : memref<9x32x64xf32, #tpu.memory_space<vmem>>, vector<1x32x64xf32>
    %84 = vector.shape_cast %83 : vector<1x32x64xf32> to vector<32x64xf32>
    %cst_62 = arith.constant dense<0.000000e+00> : vector<32x64xf32>
    %85 = tpu.matmul %82, %84, %cst_62 {dimension_numbers = #tpu.dot_dimension_numbers<[1], [0], [0], [1], [0, 0, 1, 1], [], []>} : vector<32x32xf32>, vector<32x64xf32>, vector<32x64xf32> -> vector<32x64xf32>
    %86 = arith.addf %81, %85 : vector<32x64xf32>
    %87 = vector.extract_strided_slice %55 {offsets = [192, 0], sizes = [32, 32], strides = [1, 1]} : vector<288x32xf32> to vector<32x32xf32>
    %c6_63 = arith.constant 6 : index
    %c0_64 = arith.constant 0 : index
    %c0_65 = arith.constant 0 : index
    %88 = vector.load %arg5[%c6_63, %c0_64, %c0_65] : memref<9x32x64xf32, #tpu.memory_space<vmem>>, vector<1x32x64xf32>
    %89 = vector.shape_cast %88 : vector<1x32x64xf32> to vector<32x64xf32>
    %cst_66 = arith.constant dense<0.000000e+00> : vector<32x64xf32>
    %90 = tpu.matmul %87, %89, %cst_66 {dimension_numbers = #tpu.dot_dimension_numbers<[1], [0], [0], [1], [0, 0, 1, 1], [], []>} : vector<32x32xf32>, vector<32x64xf32>, vector<32x64xf32> -> vector<32x64xf32>
    %91 = arith.addf %86, %90 : vector<32x64xf32>
    %92 = vector.extract_strided_slice %55 {offsets = [224, 0], sizes = [32, 32], strides = [1, 1]} : vector<288x32xf32> to vector<32x32xf32>
    %c7_67 = arith.constant 7 : index
    %c0_68 = arith.constant 0 : index
    %c0_69 = arith.constant 0 : index
    %93 = vector.load %arg5[%c7_67, %c0_68, %c0_69] : memref<9x32x64xf32, #tpu.memory_space<vmem>>, vector<1x32x64xf32>
    %94 = vector.shape_cast %93 : vector<1x32x64xf32> to vector<32x64xf32>
    %cst_70 = arith.constant dense<0.000000e+00> : vector<32x64xf32>
    %95 = tpu.matmul %92, %94, %cst_70 {dimension_numbers = #tpu.dot_dimension_numbers<[1], [0], [0], [1], [0, 0, 1, 1], [], []>} : vector<32x32xf32>, vector<32x64xf32>, vector<32x64xf32> -> vector<32x64xf32>
    %96 = arith.addf %91, %95 : vector<32x64xf32>
    %97 = vector.extract_strided_slice %55 {offsets = [256, 0], sizes = [32, 32], strides = [1, 1]} : vector<288x32xf32> to vector<32x32xf32>
    %c8_71 = arith.constant 8 : index
    %c0_72 = arith.constant 0 : index
    %c0_73 = arith.constant 0 : index
    %98 = vector.load %arg5[%c8_71, %c0_72, %c0_73] : memref<9x32x64xf32, #tpu.memory_space<vmem>>, vector<1x32x64xf32>
    %99 = vector.shape_cast %98 : vector<1x32x64xf32> to vector<32x64xf32>
    %cst_74 = arith.constant dense<0.000000e+00> : vector<32x64xf32>
    %100 = tpu.matmul %97, %99, %cst_74 {dimension_numbers = #tpu.dot_dimension_numbers<[1], [0], [0], [1], [0, 0, 1, 1], [], []>} : vector<32x32xf32>, vector<32x64xf32>, vector<32x64xf32> -> vector<32x64xf32>
    %101 = arith.addf %96, %100 : vector<32x64xf32>
    %c0_75 = arith.constant 0 : index
    %c0_76 = arith.constant 0 : index
    %102 = vector.load %arg6[%c0_75, %c0_76] : memref<1x64xf32, #tpu.memory_space<vmem>>, vector<1x64xf32>
    %103 = vector.broadcast %102 : vector<1x64xf32> to vector<32x64xf32>
    %104 = arith.addf %101, %103 : vector<32x64xf32>
    %cst_77 = arith.constant 0.000000e+00 : f32
    %105 = vector.broadcast %cst_77 : f32 to vector<32x64xf32>
    %106 = arith.maximumf %104, %105 : vector<32x64xf32>
    %c0_78 = arith.constant 0 : index
    %c0_79 = arith.constant 0 : index
    %107 = vector.load %arg7[%c0_78, %c0_79] : memref<72x32xf32, #tpu.memory_space<vmem>>, vector<72x32xf32>
    %cst_80 = arith.constant dense<0.000000e+00> : vector<72x64xf32>
    %108 = tpu.matmul %107, %106, %cst_80 {dimension_numbers = #tpu.dot_dimension_numbers<[1], [0], [0], [1], [0, 0, 1, 1], [], []>} : vector<72x32xf32>, vector<32x64xf32>, vector<72x64xf32> -> vector<72x64xf32>
    %cst_81 = arith.constant 0.000000e+00 : f32
    %109 = vector.broadcast %cst_81 : f32 to vector<8x128xf32>
    %110 = vector.extract_strided_slice %108 {offsets = [0, 0], sizes = [8, 64], strides = [1, 1]} : vector<72x64xf32> to vector<8x64xf32>
    %c0_82 = arith.constant 0 : index
    %c0_83 = arith.constant 0 : index
    %c0_84 = arith.constant 0 : index
    %111 = vector.load %arg8[%c0_82, %c0_83, %c0_84] : memref<9x64x128xf32, #tpu.memory_space<vmem>>, vector<1x64x128xf32>
    %112 = vector.shape_cast %111 : vector<1x64x128xf32> to vector<64x128xf32>
    %cst_85 = arith.constant dense<0.000000e+00> : vector<8x128xf32>
    %113 = tpu.matmul %110, %112, %cst_85 {dimension_numbers = #tpu.dot_dimension_numbers<[1], [0], [0], [1], [0, 0, 1, 1], [], []>} : vector<8x64xf32>, vector<64x128xf32>, vector<8x128xf32> -> vector<8x128xf32>
    %114 = arith.addf %109, %113 : vector<8x128xf32>
    %115 = vector.extract_strided_slice %108 {offsets = [8, 0], sizes = [8, 64], strides = [1, 1]} : vector<72x64xf32> to vector<8x64xf32>
    %c1_86 = arith.constant 1 : index
    %c0_87 = arith.constant 0 : index
    %c0_88 = arith.constant 0 : index
    %116 = vector.load %arg8[%c1_86, %c0_87, %c0_88] : memref<9x64x128xf32, #tpu.memory_space<vmem>>, vector<1x64x128xf32>
    %117 = vector.shape_cast %116 : vector<1x64x128xf32> to vector<64x128xf32>
    %cst_89 = arith.constant dense<0.000000e+00> : vector<8x128xf32>
    %118 = tpu.matmul %115, %117, %cst_89 {dimension_numbers = #tpu.dot_dimension_numbers<[1], [0], [0], [1], [0, 0, 1, 1], [], []>} : vector<8x64xf32>, vector<64x128xf32>, vector<8x128xf32> -> vector<8x128xf32>
    %119 = arith.addf %114, %118 : vector<8x128xf32>
    %120 = vector.extract_strided_slice %108 {offsets = [16, 0], sizes = [8, 64], strides = [1, 1]} : vector<72x64xf32> to vector<8x64xf32>
    %c2_90 = arith.constant 2 : index
    %c0_91 = arith.constant 0 : index
    %c0_92 = arith.constant 0 : index
    %121 = vector.load %arg8[%c2_90, %c0_91, %c0_92] : memref<9x64x128xf32, #tpu.memory_space<vmem>>, vector<1x64x128xf32>
    %122 = vector.shape_cast %121 : vector<1x64x128xf32> to vector<64x128xf32>
    %cst_93 = arith.constant dense<0.000000e+00> : vector<8x128xf32>
    %123 = tpu.matmul %120, %122, %cst_93 {dimension_numbers = #tpu.dot_dimension_numbers<[1], [0], [0], [1], [0, 0, 1, 1], [], []>} : vector<8x64xf32>, vector<64x128xf32>, vector<8x128xf32> -> vector<8x128xf32>
    %124 = arith.addf %119, %123 : vector<8x128xf32>
    %125 = vector.extract_strided_slice %108 {offsets = [24, 0], sizes = [8, 64], strides = [1, 1]} : vector<72x64xf32> to vector<8x64xf32>
    %c3_94 = arith.constant 3 : index
    %c0_95 = arith.constant 0 : index
    %c0_96 = arith.constant 0 : index
    %126 = vector.load %arg8[%c3_94, %c0_95, %c0_96] : memref<9x64x128xf32, #tpu.memory_space<vmem>>, vector<1x64x128xf32>
    %127 = vector.shape_cast %126 : vector<1x64x128xf32> to vector<64x128xf32>
    %cst_97 = arith.constant dense<0.000000e+00> : vector<8x128xf32>
    %128 = tpu.matmul %125, %127, %cst_97 {dimension_numbers = #tpu.dot_dimension_numbers<[1], [0], [0], [1], [0, 0, 1, 1], [], []>} : vector<8x64xf32>, vector<64x128xf32>, vector<8x128xf32> -> vector<8x128xf32>
    %129 = arith.addf %124, %128 : vector<8x128xf32>
    %130 = vector.extract_strided_slice %108 {offsets = [32, 0], sizes = [8, 64], strides = [1, 1]} : vector<72x64xf32> to vector<8x64xf32>
    %c4_98 = arith.constant 4 : index
    %c0_99 = arith.constant 0 : index
    %c0_100 = arith.constant 0 : index
    %131 = vector.load %arg8[%c4_98, %c0_99, %c0_100] : memref<9x64x128xf32, #tpu.memory_space<vmem>>, vector<1x64x128xf32>
    %132 = vector.shape_cast %131 : vector<1x64x128xf32> to vector<64x128xf32>
    %cst_101 = arith.constant dense<0.000000e+00> : vector<8x128xf32>
    %133 = tpu.matmul %130, %132, %cst_101 {dimension_numbers = #tpu.dot_dimension_numbers<[1], [0], [0], [1], [0, 0, 1, 1], [], []>} : vector<8x64xf32>, vector<64x128xf32>, vector<8x128xf32> -> vector<8x128xf32>
    %134 = arith.addf %129, %133 : vector<8x128xf32>
    %135 = vector.extract_strided_slice %108 {offsets = [40, 0], sizes = [8, 64], strides = [1, 1]} : vector<72x64xf32> to vector<8x64xf32>
    %c5_102 = arith.constant 5 : index
    %c0_103 = arith.constant 0 : index
    %c0_104 = arith.constant 0 : index
    %136 = vector.load %arg8[%c5_102, %c0_103, %c0_104] : memref<9x64x128xf32, #tpu.memory_space<vmem>>, vector<1x64x128xf32>
    %137 = vector.shape_cast %136 : vector<1x64x128xf32> to vector<64x128xf32>
    %cst_105 = arith.constant dense<0.000000e+00> : vector<8x128xf32>
    %138 = tpu.matmul %135, %137, %cst_105 {dimension_numbers = #tpu.dot_dimension_numbers<[1], [0], [0], [1], [0, 0, 1, 1], [], []>} : vector<8x64xf32>, vector<64x128xf32>, vector<8x128xf32> -> vector<8x128xf32>
    %139 = arith.addf %134, %138 : vector<8x128xf32>
    %140 = vector.extract_strided_slice %108 {offsets = [48, 0], sizes = [8, 64], strides = [1, 1]} : vector<72x64xf32> to vector<8x64xf32>
    %c6_106 = arith.constant 6 : index
    %c0_107 = arith.constant 0 : index
    %c0_108 = arith.constant 0 : index
    %141 = vector.load %arg8[%c6_106, %c0_107, %c0_108] : memref<9x64x128xf32, #tpu.memory_space<vmem>>, vector<1x64x128xf32>
    %142 = vector.shape_cast %141 : vector<1x64x128xf32> to vector<64x128xf32>
    %cst_109 = arith.constant dense<0.000000e+00> : vector<8x128xf32>
    %143 = tpu.matmul %140, %142, %cst_109 {dimension_numbers = #tpu.dot_dimension_numbers<[1], [0], [0], [1], [0, 0, 1, 1], [], []>} : vector<8x64xf32>, vector<64x128xf32>, vector<8x128xf32> -> vector<8x128xf32>
    %144 = arith.addf %139, %143 : vector<8x128xf32>
    %145 = vector.extract_strided_slice %108 {offsets = [56, 0], sizes = [8, 64], strides = [1, 1]} : vector<72x64xf32> to vector<8x64xf32>
    %c7_110 = arith.constant 7 : index
    %c0_111 = arith.constant 0 : index
    %c0_112 = arith.constant 0 : index
    %146 = vector.load %arg8[%c7_110, %c0_111, %c0_112] : memref<9x64x128xf32, #tpu.memory_space<vmem>>, vector<1x64x128xf32>
    %147 = vector.shape_cast %146 : vector<1x64x128xf32> to vector<64x128xf32>
    %cst_113 = arith.constant dense<0.000000e+00> : vector<8x128xf32>
    %148 = tpu.matmul %145, %147, %cst_113 {dimension_numbers = #tpu.dot_dimension_numbers<[1], [0], [0], [1], [0, 0, 1, 1], [], []>} : vector<8x64xf32>, vector<64x128xf32>, vector<8x128xf32> -> vector<8x128xf32>
    %149 = arith.addf %144, %148 : vector<8x128xf32>
    %150 = vector.extract_strided_slice %108 {offsets = [64, 0], sizes = [8, 64], strides = [1, 1]} : vector<72x64xf32> to vector<8x64xf32>
    %c8_114 = arith.constant 8 : index
    %c0_115 = arith.constant 0 : index
    %c0_116 = arith.constant 0 : index
    %151 = vector.load %arg8[%c8_114, %c0_115, %c0_116] : memref<9x64x128xf32, #tpu.memory_space<vmem>>, vector<1x64x128xf32>
    %152 = vector.shape_cast %151 : vector<1x64x128xf32> to vector<64x128xf32>
    %cst_117 = arith.constant dense<0.000000e+00> : vector<8x128xf32>
    %153 = tpu.matmul %150, %152, %cst_117 {dimension_numbers = #tpu.dot_dimension_numbers<[1], [0], [0], [1], [0, 0, 1, 1], [], []>} : vector<8x64xf32>, vector<64x128xf32>, vector<8x128xf32> -> vector<8x128xf32>
    %154 = arith.addf %149, %153 : vector<8x128xf32>
    %c0_118 = arith.constant 0 : index
    %c0_119 = arith.constant 0 : index
    %155 = vector.load %arg9[%c0_118, %c0_119] : memref<1x128xf32, #tpu.memory_space<vmem>>, vector<1x128xf32>
    %156 = vector.broadcast %155 : vector<1x128xf32> to vector<8x128xf32>
    %157 = arith.addf %154, %156 : vector<8x128xf32>
    %cst_120 = arith.constant 0.000000e+00 : f32
    %158 = vector.broadcast %cst_120 : f32 to vector<8x128xf32>
    %159 = arith.maximumf %157, %158 : vector<8x128xf32>
    %cst_121 = arith.constant 0.000000e+00 : f32
    %160 = vector.broadcast %cst_121 : f32 to vector<2x32xf32>
    %c0_122 = arith.constant 0 : index
    %c0_123 = arith.constant 0 : index
    %c0_124 = arith.constant 0 : index
    %161 = vector.load %arg10[%c0_122, %c0_123, %c0_124] : memref<4x2x8xf32, #tpu.memory_space<vmem>>, vector<1x2x8xf32>
    %162 = vector.shape_cast %161 : vector<1x2x8xf32> to vector<2x8xf32>
    %cst_125 = arith.constant dense<0.000000e+00> : vector<2x128xf32>
    %163 = tpu.matmul %162, %159, %cst_125 {dimension_numbers = #tpu.dot_dimension_numbers<[1], [0], [0], [1], [0, 0, 1, 1], [], []>} : vector<2x8xf32>, vector<8x128xf32>, vector<2x128xf32> -> vector<2x128xf32>
    %c0_126 = arith.constant 0 : index
    %c0_127 = arith.constant 0 : index
    %c0_128 = arith.constant 0 : index
    %164 = vector.load %arg11[%c0_126, %c0_127, %c0_128] : memref<4x128x32xf32, #tpu.memory_space<vmem>>, vector<1x128x32xf32>
    %165 = vector.shape_cast %164 : vector<1x128x32xf32> to vector<128x32xf32>
    %cst_129 = arith.constant dense<0.000000e+00> : vector<2x32xf32>
    %166 = tpu.matmul %163, %165, %cst_129 {dimension_numbers = #tpu.dot_dimension_numbers<[1], [0], [0], [1], [0, 0, 1, 1], [], []>} : vector<2x128xf32>, vector<128x32xf32>, vector<2x32xf32> -> vector<2x32xf32>
    %167 = arith.addf %160, %166 : vector<2x32xf32>
    %c1_130 = arith.constant 1 : index
    %c0_131 = arith.constant 0 : index
    %c0_132 = arith.constant 0 : index
    %168 = vector.load %arg10[%c1_130, %c0_131, %c0_132] : memref<4x2x8xf32, #tpu.memory_space<vmem>>, vector<1x2x8xf32>
    %169 = vector.shape_cast %168 : vector<1x2x8xf32> to vector<2x8xf32>
    %cst_133 = arith.constant dense<0.000000e+00> : vector<2x128xf32>
    %170 = tpu.matmul %169, %159, %cst_133 {dimension_numbers = #tpu.dot_dimension_numbers<[1], [0], [0], [1], [0, 0, 1, 1], [], []>} : vector<2x8xf32>, vector<8x128xf32>, vector<2x128xf32> -> vector<2x128xf32>
    %c1_134 = arith.constant 1 : index
    %c0_135 = arith.constant 0 : index
    %c0_136 = arith.constant 0 : index
    %171 = vector.load %arg11[%c1_134, %c0_135, %c0_136] : memref<4x128x32xf32, #tpu.memory_space<vmem>>, vector<1x128x32xf32>
    %172 = vector.shape_cast %171 : vector<1x128x32xf32> to vector<128x32xf32>
    %cst_137 = arith.constant dense<0.000000e+00> : vector<2x32xf32>
    %173 = tpu.matmul %170, %172, %cst_137 {dimension_numbers = #tpu.dot_dimension_numbers<[1], [0], [0], [1], [0, 0, 1, 1], [], []>} : vector<2x128xf32>, vector<128x32xf32>, vector<2x32xf32> -> vector<2x32xf32>
    %174 = arith.addf %167, %173 : vector<2x32xf32>
    %c2_138 = arith.constant 2 : index
    %c0_139 = arith.constant 0 : index
    %c0_140 = arith.constant 0 : index
    %175 = vector.load %arg10[%c2_138, %c0_139, %c0_140] : memref<4x2x8xf32, #tpu.memory_space<vmem>>, vector<1x2x8xf32>
    %176 = vector.shape_cast %175 : vector<1x2x8xf32> to vector<2x8xf32>
    %cst_141 = arith.constant dense<0.000000e+00> : vector<2x128xf32>
    %177 = tpu.matmul %176, %159, %cst_141 {dimension_numbers = #tpu.dot_dimension_numbers<[1], [0], [0], [1], [0, 0, 1, 1], [], []>} : vector<2x8xf32>, vector<8x128xf32>, vector<2x128xf32> -> vector<2x128xf32>
    %c2_142 = arith.constant 2 : index
    %c0_143 = arith.constant 0 : index
    %c0_144 = arith.constant 0 : index
    %178 = vector.load %arg11[%c2_142, %c0_143, %c0_144] : memref<4x128x32xf32, #tpu.memory_space<vmem>>, vector<1x128x32xf32>
    %179 = vector.shape_cast %178 : vector<1x128x32xf32> to vector<128x32xf32>
    %cst_145 = arith.constant dense<0.000000e+00> : vector<2x32xf32>
    %180 = tpu.matmul %177, %179, %cst_145 {dimension_numbers = #tpu.dot_dimension_numbers<[1], [0], [0], [1], [0, 0, 1, 1], [], []>} : vector<2x128xf32>, vector<128x32xf32>, vector<2x32xf32> -> vector<2x32xf32>
    %181 = arith.addf %174, %180 : vector<2x32xf32>
    %c3_146 = arith.constant 3 : index
    %c0_147 = arith.constant 0 : index
    %c0_148 = arith.constant 0 : index
    %182 = vector.load %arg10[%c3_146, %c0_147, %c0_148] : memref<4x2x8xf32, #tpu.memory_space<vmem>>, vector<1x2x8xf32>
    %183 = vector.shape_cast %182 : vector<1x2x8xf32> to vector<2x8xf32>
    %cst_149 = arith.constant dense<0.000000e+00> : vector<2x128xf32>
    %184 = tpu.matmul %183, %159, %cst_149 {dimension_numbers = #tpu.dot_dimension_numbers<[1], [0], [0], [1], [0, 0, 1, 1], [], []>} : vector<2x8xf32>, vector<8x128xf32>, vector<2x128xf32> -> vector<2x128xf32>
    %c3_150 = arith.constant 3 : index
    %c0_151 = arith.constant 0 : index
    %c0_152 = arith.constant 0 : index
    %185 = vector.load %arg11[%c3_150, %c0_151, %c0_152] : memref<4x128x32xf32, #tpu.memory_space<vmem>>, vector<1x128x32xf32>
    %186 = vector.shape_cast %185 : vector<1x128x32xf32> to vector<128x32xf32>
    %cst_153 = arith.constant dense<0.000000e+00> : vector<2x32xf32>
    %187 = tpu.matmul %184, %186, %cst_153 {dimension_numbers = #tpu.dot_dimension_numbers<[1], [0], [0], [1], [0, 0, 1, 1], [], []>} : vector<2x128xf32>, vector<128x32xf32>, vector<2x32xf32> -> vector<2x32xf32>
    %188 = arith.addf %181, %187 : vector<2x32xf32>
    %c0_154 = arith.constant 0 : index
    %c0_155 = arith.constant 0 : index
    %189 = vector.load %arg12[%c0_154, %c0_155] : memref<1x32xf32, #tpu.memory_space<vmem>>, vector<1x32xf32>
    %190 = vector.broadcast %189 : vector<1x32xf32> to vector<2x32xf32>
    %191 = arith.addf %188, %190 : vector<2x32xf32>
    %c0_156 = arith.constant 0 : index
    %c0_157 = arith.constant 0 : index
    %192 = vector.load %arg13[%c0_156, %c0_157] : memref<2x32xf32, #tpu.memory_space<vmem>>, vector<2x32xf32>
    tpu.vector_store %arg13[%c0_156, %c0_157], %191 {strides = array<i32>} : memref<2x32xf32, #tpu.memory_space<vmem>>, vector<2x32xf32>,
    return
  }
}

</mosaic_0001>

<llo_original>
// kernel: encoder_forward.1
$region0: #{encoder_forward.1}
  #allocation0 [shape = 'u32[]', space=smem, size = 0x4, offset = 0x4, fixed_abs, tag = 'smem constant byte address 0x4 - core index']
  #allocation1 [shape = 'u32[144,128]{1,0:T(1,128)}', space=vmem, size = 0x12000, scoped, tag = 'internal scratch']
  %s0 = inlined_call_operand.vmem [shape: f32[512,4], index: 0, kind: input, shape index: {}]
  %s1 = inlined_call_operand.hbm [shape: f32[1152,512], index: 1, kind: input, shape index: {}]
  %s2 = inlined_call_operand.hbm [shape: f32[9,4,32], index: 2, kind: input, shape index: {}]
  %s3 = inlined_call_operand.hbm [shape: f32[1,32], index: 3, kind: input, shape index: {}]
  %s4 = inlined_call_operand.hbm [shape: f32[288,128], index: 4, kind: input, shape index: {}]
  %s5 = inlined_call_operand.hbm [shape: f32[9,32,64], index: 5, kind: input, shape index: {}]
  %s6 = inlined_call_operand.hbm [shape: f32[1,64], index: 6, kind: input, shape index: {}]
  %s7 = inlined_call_operand.vmem [shape: f32[72,32], index: 7, kind: input, shape index: {}]
  %s8 = inlined_call_operand.hbm [shape: f32[9,64,128], index: 8, kind: input, shape index: {}]
  %s9 = inlined_call_operand.hbm [shape: f32[1,128], index: 9, kind: input, shape index: {}]
  %s10 = inlined_call_operand.hbm [shape: f32[4,2,8], index: 10, kind: input, shape index: {}]
  %s11 = inlined_call_operand.vmem [shape: f32[4,128,32], index: 11, kind: input, shape index: {}]
  %s12 = inlined_call_operand.hbm [shape: f32[1,32], index: 12, kind: input, shape index: {}]
  %s13 = inlined_call_operand.hbm [shape: f32[2,32], index: 13, kind: output, shape index: {}]
  %s14 = sld [smem:[#allocation0]]
  $region102: #{encoder_forward.1} parent=0
    _
  %s16 = ssub.s32 1, %s14
  %s17 = scalar_select 0, %s16, %s14
  $region1: #{encoder_forward.1} parent=0
    #allocation2 [shape = 'u8[2359296]{0}', space=vmem, size = 0x240000, scoped, tag = 'input window, operand 1, single buffered']
    #allocation3 [shape = 's32[1]{0}', space=sflag, size = 0x4, scoped, tag = 'scoped memory for encoder_forward.1']
    #allocation4 [shape = 's32[1]{0}', space=sflag, size = 0x4, scoped, tag = 'scoped memory for encoder_forward.1']
    #allocation5 [shape = 'u8[18432]{0}', space=vmem, size = 0x4800, scoped, tag = 'input window, operand 2, single buffered']
    #allocation6 [shape = 's32[1]{0}', space=sflag, size = 0x4, scoped, tag = 'scoped memory for encoder_forward.1']
    #allocation7 [shape = 'u8[512]{0}', space=vmem, size = 0x400, scoped, tag = 'input window, operand 3, single buffered']
    #allocation8 [shape = 'u8[147456]{0}', space=vmem, size = 0x24000, scoped, tag = 'input window, operand 4, single buffered']
    #allocation9 [shape = 's32[1]{0}', space=sflag, size = 0x4, scoped, tag = 'scoped memory for encoder_forward.1']
    #allocation10 [shape = 'u8[147456]{0}', space=vmem, size = 0x24000, scoped, tag = 'input window, operand 5, single buffered']
    #allocation11 [shape = 'u8[512]{0}', space=vmem, size = 0x400, scoped, tag = 'input window, operand 6, single buffered']
    #allocation12 [shape = 's32[1]{0}', space=sflag, size = 0x4, scoped, tag = 'scoped memory for encoder_forward.1']
    #allocation13 [shape = 'u8[294912]{0}', space=vmem, size = 0x48000, scoped, tag = 'input window, operand 8, single buffered']
    #allocation14 [shape = 'u8[512]{0}', space=vmem, size = 0x400, scoped, tag = 'input window, operand 9, single buffered']
    #allocation15 [shape = 's32[1]{0}', space=sflag, size = 0x4, scoped, tag = 'scoped memory for encoder_forward.1']
    #allocation16 [shape = 'u8[4096]{0}', space=vmem, size = 0x1000, scoped, tag = 'input window, operand 10, single buffered']
    #allocation17 [shape = 'u8[512]{0}', space=vmem, size = 0x400, scoped, tag = 'input window, operand 12, single buffered']
    #allocation18 [shape = 's32[1]{0}', space=sflag, size = 0x4, scoped, tag = 'scoped memory for encoder_forward.1']
    #allocation19 [shape = 'u8[1024]{0}', space=vmem, size = 0x400, scoped, tag = 'output window, operand 0, single buffered']
    %18 = vsyncpa [#allocation3], 0
    %19 = vsyncpa [#allocation6], 0
    %20 = vsyncpa [#allocation9], 0
    %21 = vsyncpa [#allocation12], 0
    %22 = vsyncpa [#allocation15], 0
    %23 = vsyncpa [#allocation18], 0
    %24 = vsyncpa [#allocation4], 0
    // Predicated region
    $region2: #{encoder_forward.1} parent=1 // pred_check
      _
    $region3: #{encoder_forward.1} parent=1 // pred_check_branch
      %26 = sbr.rel (0) target = $region5
    $region4: #{encoder_forward.1} parent=1 // pred_region
      _
    $region5: #{encoder_forward.1} parent=1 // pred_fallthru
      _
    // Predicated region
    $region6: #{encoder_forward.1} parent=1 // pred_check
      _
    $region7: #{encoder_forward.1} parent=1 // pred_check_branch
      %28 = sbr.rel (0) target = $region9
    $region8: #{encoder_forward.1} parent=1 // pred_region
      %s30 = ssub.s32 73728, 73728
      %31 = vsyncadd [#allocation3], %s30
      %s32 = sshll.u32 [#allocation2], 4
      %s33 = int_to_ptr.vmem [resolvable:$true] %s32
      %38 = dma.hbm_to_vmem [thread:$0]  %s1, 73728, %s33, [#allocation3], 512, 512, 32
    $region9: #{encoder_forward.1} parent=1 // pred_fallthru
      _
    // Predicated region
    $region10: #{encoder_forward.1} parent=1 // pred_check
      _
    $region11: #{encoder_forward.1} parent=1 // pred_check_branch
      %40 = sbr.rel (0) target = $region13
    $region12: #{encoder_forward.1} parent=1 // pred_region
      %s42 = ssub.s32 576, 576
      %43 = vsyncadd [#allocation6], %s42
      %s44 = sshll.u32 [#allocation5], 4
      %s45 = int_to_ptr.vmem [resolvable:$true] %s44
      %50 = dma.hbm_to_vmem [thread:$0]  %s2, 576, %s45, [#allocation6], 64, 64, 4
    $region13: #{encoder_forward.1} parent=1 // pred_fallthru
      _
    // Predicated region
    $region14: #{encoder_forward.1} parent=1 // pred_check
      _
    $region15: #{encoder_forward.1} parent=1 // pred_check_branch
      %52 = sbr.rel (0) target = $region17
    $region16: #{encoder_forward.1} parent=1 // pred_region
      %s54 = ssub.s32 16, 16
      %55 = vsyncadd [#allocation6], %s54
      %s57 = sshll.u32 [#allocation7], 4
      %s58 = int_to_ptr.vmem [resolvable:$true] %s57
      %60 = dma.hbm_to_vmem [thread:$0]  %s3, 16, %s58, [#allocation6]
    $region17: #{encoder_forward.1} parent=1 // pred_fallthru
      _
    // Predicated region
    $region18: #{encoder_forward.1} parent=1 // pred_check
      _
    $region19: #{encoder_forward.1} parent=1 // pred_check_branch
      %62 = sbr.rel (0) target = $region21
    $region20: #{encoder_forward.1} parent=1 // pred_region
      %s64 = ssub.s32 4608, 4608
      %65 = vsyncadd [#allocation9], %s64
      %s66 = sshll.u32 [#allocation8], 4
      %s67 = int_to_ptr.vmem [resolvable:$true] %s66
      %72 = dma.hbm_to_vmem [thread:$0]  %s4, 4608, %s67, [#allocation9], 128, 128, 8
    $region21: #{encoder_forward.1} parent=1 // pred_fallthru
      _
    // Predicated region
    $region22: #{encoder_forward.1} parent=1 // pred_check
      _
    $region23: #{encoder_forward.1} parent=1 // pred_check_branch
      %74 = sbr.rel (0) target = $region25
    $region24: #{encoder_forward.1} parent=1 // pred_region
      %s76 = ssub.s32 4608, 4608
      %77 = vsyncadd [#allocation9], %s76
      %s78 = sshll.u32 [#allocation10], 4
      %s79 = int_to_ptr.vmem [resolvable:$true] %s78
      %84 = dma.hbm_to_vmem [thread:$0]  %s5, 4608, %s79, [#allocation9], 128, 128, 8
    $region25: #{encoder_forward.1} parent=1 // pred_fallthru
      _
    // Predicated region
    $region26: #{encoder_forward.1} parent=1 // pred_check
      _
    $region27: #{encoder_forward.1} parent=1 // pred_check_branch
      %86 = sbr.rel (0) target = $region29
    $region28: #{encoder_forward.1} parent=1 // pred_region
      %s88 = ssub.s32 16, 16
      %89 = vsyncadd [#allocation12], %s88
      %s91 = sshll.u32 [#allocation11], 4
      %s92 = int_to_ptr.vmem [resolvable:$true] %s91
      %94 = dma.hbm_to_vmem [thread:$0]  %s6, 16, %s92, [#allocation12]
    $region29: #{encoder_forward.1} parent=1 // pred_fallthru
      _
    // Predicated region
    $region30: #{encoder_forward.1} parent=1 // pred_check
      _
    $region31: #{encoder_forward.1} parent=1 // pred_check_branch
      %96 = sbr.rel (0) target = $region33
    $region32: #{encoder_forward.1} parent=1 // pred_region
      _
    $region33: #{encoder_forward.1} parent=1 // pred_fallthru
      _
    // Predicated region
    $region34: #{encoder_forward.1} parent=1 // pred_check
      _
    $region35: #{encoder_forward.1} parent=1 // pred_check_branch
      %98 = sbr.rel (0) target = $region37
    $region36: #{encoder_forward.1} parent=1 // pred_region
      %s100 = ssub.s32 9216, 9216
      %101 = vsyncadd [#allocation12], %s100
      %s102 = sshll.u32 [#allocation13], 4
      %s103 = int_to_ptr.vmem [resolvable:$true] %s102
      %108 = dma.hbm_to_vmem [thread:$0]  %s8, 9216, %s103, [#allocation12], 128, 128, 8
    $region37: #{encoder_forward.1} parent=1 // pred_fallthru
      _
    // Predicated region
    $region38: #{encoder_forward.1} parent=1 // pred_check
      _
    $region39: #{encoder_forward.1} parent=1 // pred_check_branch
      %110 = sbr.rel (0) target = $region41
    $region40: #{encoder_forward.1} parent=1 // pred_region
      %s112 = ssub.s32 16, 16
      %113 = vsyncadd [#allocation15], %s112
      %s115 = sshll.u32 [#allocation14], 4
      %s116 = int_to_ptr.vmem [resolvable:$true] %s115
      %118 = dma.hbm_to_vmem [thread:$0]  %s9, 16, %s116, [#allocation15]
    $region41: #{encoder_forward.1} parent=1 // pred_fallthru
      _
    // Predicated region
    $region42: #{encoder_forward.1} parent=1 // pred_check
      _
    $region43: #{encoder_forward.1} parent=1 // pred_check_branch
      %120 = sbr.rel (0) target = $region45
    $region44: #{encoder_forward.1} parent=1 // pred_region
      %s122 = ssub.s32 128, 128
      %123 = vsyncadd [#allocation15], %s122
      %s124 = sshll.u32 [#allocation16], 4
      %s125 = int_to_ptr.vmem [resolvable:$true] %s124
      %130 = dma.hbm_to_vmem [thread:$0]  %s10, 128, %s125, [#allocation15], 32, 32, 2
    $region45: #{encoder_forward.1} parent=1 // pred_fallthru
      _
    // Predicated region
    $region46: #{encoder_forward.1} parent=1 // pred_check
      _
    $region47: #{encoder_forward.1} parent=1 // pred_check_branch
      %132 = sbr.rel (0) target = $region49
    $region48: #{encoder_forward.1} parent=1 // pred_region
      _
    $region49: #{encoder_forward.1} parent=1 // pred_fallthru
      _
    // Predicated region
    $region50: #{encoder_forward.1} parent=1 // pred_check
      _
    $region51: #{encoder_forward.1} parent=1 // pred_check_branch
      %134 = sbr.rel (0) target = $region53
    $region52: #{encoder_forward.1} parent=1 // pred_region
      %s136 = ssub.s32 16, 16
      %137 = vsyncadd [#allocation18], %s136
      %s139 = sshll.u32 [#allocation17], 4
      %s140 = int_to_ptr.vmem [resolvable:$true] %s139
      %142 = dma.hbm_to_vmem [thread:$0]  %s12, 16, %s140, [#allocation18]
    $region53: #{encoder_forward.1} parent=1 // pred_fallthru
      _
    // Predicated region
    $region54: #{encoder_forward.1} parent=1 // pred_check
      _
    $region55: #{encoder_forward.1} parent=1 // pred_check_branch
      %144 = sbr.rel (0) target = $region57
    $region56: #{encoder_forward.1} parent=1 // pred_region
      %145 = dma.done [#allocation3], 73728
    $region57: #{encoder_forward.1} parent=1 // pred_fallthru
      _
    // Predicated region
    $region58: #{encoder_forward.1} parent=1 // pred_check
      _
    $region59: #{encoder_forward.1} parent=1 // pred_check_branch
      %147 = sbr.rel (0) target = $region61
    $region60: #{encoder_forward.1} parent=1 // pred_region
      %148 = dma.done [#allocation6], 576
    $region61: #{encoder_forward.1} parent=1 // pred_fallthru
      _
    // Predicated region
    $region62: #{encoder_forward.1} parent=1 // pred_check
      _
    $region63: #{encoder_forward.1} parent=1 // pred_check_branch
      %150 = sbr.rel (0) target = $region65
    $region64: #{encoder_forward.1} parent=1 // pred_region
      %151 = dma.done [#allocation6], 16
    $region65: #{encoder_forward.1} parent=1 // pred_fallthru
      _
    // Predicated region
    $region66: #{encoder_forward.1} parent=1 // pred_check
      _
    $region67: #{encoder_forward.1} parent=1 // pred_check_branch
      %153 = sbr.rel (0) target = $region69
    $region68: #{encoder_forward.1} parent=1 // pred_region
      %154 = dma.done [#allocation9], 4608
    $region69: #{encoder_forward.1} parent=1 // pred_fallthru
      _
    // Predicated region
    $region70: #{encoder_forward.1} parent=1 // pred_check
      _
    $region71: #{encoder_forward.1} parent=1 // pred_check_branch
      %156 = sbr.rel (0) target = $region73
    $region72: #{encoder_forward.1} parent=1 // pred_region
      %157 = dma.done [#allocation9], 4608
    $region73: #{encoder_forward.1} parent=1 // pred_fallthru
      _
    // Predicated region
    $region74: #{encoder_forward.1} parent=1 // pred_check
      _
    $region75: #{encoder_forward.1} parent=1 // pred_check_branch
      %159 = sbr.rel (0) target = $region77
    $region76: #{encoder_forward.1} parent=1 // pred_region
      %160 = dma.done [#allocation12], 16
    $region77: #{encoder_forward.1} parent=1 // pred_fallthru
      _
    // Predicated region
    $region78: #{encoder_forward.1} parent=1 // pred_check
      _
    $region79: #{encoder_forward.1} parent=1 // pred_check_branch
      %162 = sbr.rel (0) target = $region81
    $region80: #{encoder_forward.1} parent=1 // pred_region
      %163 = dma.done [#allocation12], 9216
    $region81: #{encoder_forward.1} parent=1 // pred_fallthru
      _
    // Predicated region
    $region82: #{encoder_forward.1} parent=1 // pred_check
      _
    $region83: #{encoder_forward.1} parent=1 // pred_check_branch
      %165 = sbr.rel (0) target = $region85
    $region84: #{encoder_forward.1} parent=1 // pred_region
      %166 = dma.done [#allocation15], 16
    $region85: #{encoder_forward.1} parent=1 // pred_fallthru
      _
    // Predicated region
    $region86: #{encoder_forward.1} parent=1 // pred_check
      _
    $region87: #{encoder_forward.1} parent=1 // pred_check_branch
      %168 = sbr.rel (0) target = $region89
    $region88: #{encoder_forward.1} parent=1 // pred_region
      %169 = dma.done [#allocation15], 128
    $region89: #{encoder_forward.1} parent=1 // pred_fallthru
      _
    // Predicated region
    $region90: #{encoder_forward.1} parent=1 // pred_check
      _
    $region91: #{encoder_forward.1} parent=1 // pred_check_branch
      %171 = sbr.rel (0) target = $region93
    $region92: #{encoder_forward.1} parent=1 // pred_region
      %172 = dma.done [#allocation18], 16
    $region93: #{encoder_forward.1} parent=1 // pred_fallthru
      _
    %v173 = vld [vmem:[%s0] sm:$0xff]
    %v174 = vld [vmem:[%s0 + $0x8] sm:$0xff]
    %v175 = vld [vmem:[%s0 + $0x10] sm:$0xff]
    %v176 = vld [vmem:[%s0 + $0x18] sm:$0xff]
    %v177 = vld [vmem:[%s0 + $0x20] sm:$0xff]
    %v178 = vld [vmem:[%s0 + $0x28] sm:$0xff]
    %v179 = vld [vmem:[%s0 + $0x30] sm:$0xff]
    %v180 = vld [vmem:[%s0 + $0x38] sm:$0xff]
    %v181 = vld [vmem:[%s0 + $0x40] sm:$0xff]
    %v182 = vld [vmem:[%s0 + $0x48] sm:$0xff]
    %v183 = vld [vmem:[%s0 + $0x50] sm:$0xff]
    %v184 = vld [vmem:[%s0 + $0x58] sm:$0xff]
    %v185 = vld [vmem:[%s0 + $0x60] sm:$0xff]
    %v186 = vld [vmem:[%s0 + $0x68] sm:$0xff]
    %v187 = vld [vmem:[%s0 + $0x70] sm:$0xff]
    %v188 = vld [vmem:[%s0 + $0x78] sm:$0xff]
    %v189 = vld [vmem:[%s0 + $0x80] sm:$0xff]
    %v190 = vld [vmem:[%s0 + $0x88] sm:$0xff]
    %v191 = vld [vmem:[%s0 + $0x90] sm:$0xff]
    %v192 = vld [vmem:[%s0 + $0x98] sm:$0xff]
    %v193 = vld [vmem:[%s0 + $0xa0] sm:$0xff]
    %v194 = vld [vmem:[%s0 + $0xa8] sm:$0xff]
    %v195 = vld [vmem:[%s0 + $0xb0] sm:$0xff]
    %v196 = vld [vmem:[%s0 + $0xb8] sm:$0xff]
    %v197 = vld [vmem:[%s0 + $0xc0] sm:$0xff]
    %v198 = vld [vmem:[%s0 + $0xc8] sm:$0xff]
    %v199 = vld [vmem:[%s0 + $0xd0] sm:$0xff]
    %v200 = vld [vmem:[%s0 + $0xd8] sm:$0xff]
    %v201 = vld [vmem:[%s0 + $0xe0] sm:$0xff]
    %v202 = vld [vmem:[%s0 + $0xe8] sm:$0xff]
    %v203 = vld [vmem:[%s0 + $0xf0] sm:$0xff]
    %v204 = vld [vmem:[%s0 + $0xf8] sm:$0xff]
    %v205 = vld [vmem:[%s0 + $0x100] sm:$0xff]
    %v206 = vld [vmem:[%s0 + $0x108] sm:$0xff]
    %v207 = vld [vmem:[%s0 + $0x110] sm:$0xff]
    %v208 = vld [vmem:[%s0 + $0x118] sm:$0xff]
    %v209 = vld [vmem:[%s0 + $0x120] sm:$0xff]
    %v210 = vld [vmem:[%s0 + $0x128] sm:$0xff]
    %v211 = vld [vmem:[%s0 + $0x130] sm:$0xff]
    %v212 = vld [vmem:[%s0 + $0x138] sm:$0xff]
    %v213 = vld [vmem:[%s0 + $0x140] sm:$0xff]
    %v214 = vld [vmem:[%s0 + $0x148] sm:$0xff]
    %v215 = vld [vmem:[%s0 + $0x150] sm:$0xff]
    %v216 = vld [vmem:[%s0 + $0x158] sm:$0xff]
    %v217 = vld [vmem:[%s0 + $0x160] sm:$0xff]
    %v218 = vld [vmem:[%s0 + $0x168] sm:$0xff]
    %v219 = vld [vmem:[%s0 + $0x170] sm:$0xff]
    %v220 = vld [vmem:[%s0 + $0x178] sm:$0xff]
    %v221 = vld [vmem:[%s0 + $0x180] sm:$0xff]
    %v222 = vld [vmem:[%s0 + $0x188] sm:$0xff]
    %v223 = vld [vmem:[%s0 + $0x190] sm:$0xff]
    %v224 = vld [vmem:[%s0 + $0x198] sm:$0xff]
    %v225 = vld [vmem:[%s0 + $0x1a0] sm:$0xff]
    %v226 = vld [vmem:[%s0 + $0x1a8] sm:$0xff]
    %v227 = vld [vmem:[%s0 + $0x1b0] sm:$0xff]
    %v228 = vld [vmem:[%s0 + $0x1b8] sm:$0xff]
    %v229 = vld [vmem:[%s0 + $0x1c0] sm:$0xff]
    %v230 = vld [vmem:[%s0 + $0x1c8] sm:$0xff]
    %v231 = vld [vmem:[%s0 + $0x1d0] sm:$0xff]
    %v232 = vld [vmem:[%s0 + $0x1d8] sm:$0xff]
    %v233 = vld [vmem:[%s0 + $0x1e0] sm:$0xff]
    %v234 = vld [vmem:[%s0 + $0x1e8] sm:$0xff]
    %v235 = vld [vmem:[%s0 + $0x1f0] sm:$0xff]
    %v236 = vld [vmem:[%s0 + $0x1f8] sm:$0xff]
    %v237 = vld [vmem:[#allocation2] sm:$0xff]
    %v238 = vld [vmem:[#allocation2 + $0x8] sm:$0xff]
    %v239 = vld [vmem:[#allocation2 + $0x10] sm:$0xff]
    %v240 = vld [vmem:[#allocation2 + $0x18] sm:$0xff]
    %v241 = vld [vmem:[#allocation2 + $0x20] sm:$0xff]
    %v242 = vld [vmem:[#allocation2 + $0x28] sm:$0xff]
    %v243 = vld [vmem:[#allocation2 + $0x30] sm:$0xff]
    %v244 = vld [vmem:[#allocation2 + $0x38] sm:$0xff]
    %v245 = vld [vmem:[#allocation2 + $0x40] sm:$0xff]
    %v246 = vld [vmem:[#allocation2 + $0x48] sm:$0xff]
    %v247 = vld [vmem:[#allocation2 + $0x50] sm:$0xff]
    %v248 = vld [vmem:[#allocation2 + $0x58] sm:$0xff]
    %v249 = vld [vmem:[#allocation2 + $0x60] sm:$0xff]
    %v250 = vld [vmem:[#allocation2 + $0x68] sm:$0xff]
    %v251 = vld [vmem:[#allocation2 + $0x70] sm:$0xff]
    %v252 = vld [vmem:[#allocation2 + $0x78] sm:$0xff]
    %v253 = vld [vmem:[#allocation2 + $0x80] sm:$0xff]
    %v254 = vld [vmem:[#allocation2 + $0x88] sm:$0xff]
    %v255 = vld [vmem:[#allocation2 + $0x90] sm:$0xff]
    %v256 = vld [vmem:[#allocation2 + $0x98] sm:$0xff]
    %v257 = vld [vmem:[#allocation2 + $0xa0] sm:$0xff]
    %v258 = vld [vmem:[#allocation2 + $0xa8] sm:$0xff]
    %v259 = vld [vmem:[#allocation2 + $0xb0] sm:$0xff]
    %v260 = vld [vmem:[#allocation2 + $0xb8] sm:$0xff]
    %v261 = vld [vmem:[#allocation2 + $0xc0] sm:$0xff]
    %v262 = vld [vmem:[#allocation2 + $0xc8] sm:$0xff]
    %v263 = vld [vmem:[#allocation2 + $0xd0] sm:$0xff]
    %v264 = vld [vmem:[#allocation2 + $0xd8] sm:$0xff]
    %v265 = vld [vmem:[#allocation2 + $0xe0] sm:$0xff]
    %v266 = vld [vmem:[#allocation2 + $0xe8] sm:$0xff]
    %v267 = vld [vmem:[#allocation2 + $0xf0] sm:$0xff]
    %v268 = vld [vmem:[#allocation2 + $0xf8] sm:$0xff]
    %v269 = vld [vmem:[#allocation2 + $0x100] sm:$0xff]
    %v270 = vld [vmem:[#allocation2 + $0x108] sm:$0xff]
    %v271 = vld [vmem:[#allocation2 + $0x110] sm:$0xff]
    %v272 = vld [vmem:[#allocation2 + $0x118] sm:$0xff]
    %v273 = vld [vmem:[#allocation2 + $0x120] sm:$0xff]
    %v274 = vld [vmem:[#allocation2 + $0x128] sm:$0xff]
    %v275 = vld [vmem:[#allocation2 + $0x130] sm:$0xff]
    %v276 = vld [vmem:[#allocation2 + $0x138] sm:$0xff]
    %v277 = vld [vmem:[#allocation2 + $0x140] sm:$0xff]
    %v278 = vld [vmem:[#allocation2 + $0x148] sm:$0xff]
    %v279 = vld [vmem:[#allocation2 + $0x150] sm:$0xff]
    %v280 = vld [vmem:[#allocation2 + $0x158] sm:$0xff]
    %v281 = vld [vmem:[#allocation2 + $0x160] sm:$0xff]
    %v282 = vld [vmem:[#allocation2 + $0x168] sm:$0xff]
    %v283 = vld [vmem:[#allocation2 + $0x170] sm:$0xff]
    %v284 = vld [vmem:[#allocation2 + $0x178] sm:$0xff]
    %v285 = vld [vmem:[#allocation2 + $0x180] sm:$0xff]
    %v286 = vld [vmem:[#allocation2 + $0x188] sm:$0xff]
    %v287 = vld [vmem:[#allocation2 + $0x190] sm:$0xff]
    %v288 = vld [vmem:[#allocation2 + $0x198] sm:$0xff]
    %v289 = vld [vmem:[#allocation2 + $0x1a0] sm:$0xff]
    %v290 = vld [vmem:[#allocation2 + $0x1a8] sm:$0xff]
    %v291 = vld [vmem:[#allocation2 + $0x1b0] sm:$0xff]
    %v292 = vld [vmem:[#allocation2 + $0x1b8] sm:$0xff]
    %v293 = vld [vmem:[#allocation2 + $0x1c0] sm:$0xff]
    %v294 = vld [vmem:[#allocation2 + $0x1c8] sm:$0xff]
    %v295 = vld [vmem:[#allocation2 + $0x1d0] sm:$0xff]
    %v296 = vld [vmem:[#allocation2 + $0x1d8] sm:$0xff]
    %v297 = vld [vmem:[#allocation2 + $0x1e0] sm:$0xff]
    %v298 = vld [vmem:[#allocation2 + $0x1e8] sm:$0xff]
    %v299 = vld [vmem:[#allocation2 + $0x1f0] sm:$0xff]
    %v300 = vld [vmem:[#allocation2 + $0x1f8] sm:$0xff]
    %v301 = vld [vmem:[#allocation2 + $0x200] sm:$0xff]
    %v302 = vld [vmem:[#allocation2 + $0x208] sm:$0xff]
    %v303 = vld [vmem:[#allocation2 + $0x210] sm:$0xff]
    %v304 = vld [vmem:[#allocation2 + $0x218] sm:$0xff]
    %v305 = vld [vmem:[#allocation2 + $0x220] sm:$0xff]
    %v306 = vld [vmem:[#allocation2 + $0x228] sm:$0xff]
    %v307 = vld [vmem:[#allocation2 + $0x230] sm:$0xff]
    %v308 = vld [vmem:[#allocation2 + $0x238] sm:$0xff]
    %v309 = vld [vmem:[#allocation2 + $0x240] sm:$0xff]
    %v310 = vld [vmem:[#allocation2 + $0x248] sm:$0xff]
    %v311 = vld [vmem:[#allocation2 + $0x250] sm:$0xff]
    %v312 = vld [vmem:[#allocation2 + $0x258] sm:$0xff]
    %v313 = vld [vmem:[#allocation2 + $0x260] sm:$0xff]
    %v314 = vld [vmem:[#allocation2 + $0x268] sm:$0xff]
    %v315 = vld [vmem:[#allocation2 + $0x270] sm:$0xff]
    %v316 = vld [vmem:[#allocation2 + $0x278] sm:$0xff]
    %v317 = vld [vmem:[#allocation2 + $0x280] sm:$0xff]
    %v318 = vld [vmem:[#allocation2 + $0x288] sm:$0xff]
    %v319 = vld [vmem:[#allocation2 + $0x290] sm:$0xff]
    %v320 = vld [vmem:[#allocation2 + $0x298] sm:$0xff]
    %v321 = vld [vmem:[#allocation2 + $0x2a0] sm:$0xff]
    %v322 = vld [vmem:[#allocation2 + $0x2a8] sm:$0xff]
    %v323 = vld [vmem:[#allocation2 + $0x2b0] sm:$0xff]
    %v324 = vld [vmem:[#allocation2 + $0x2b8] sm:$0xff]
    %v325 = vld [vmem:[#allocation2 + $0x2c0] sm:$0xff]
    %v326 = vld [vmem:[#allocation2 + $0x2c8] sm:$0xff]
    %v327 = vld [vmem:[#allocation2 + $0x2d0] sm:$0xff]
    %v328 = vld [vmem:[#allocation2 + $0x2d8] sm:$0xff]
    %v329 = vld [vmem:[#allocation2 + $0x2e0] sm:$0xff]
    %v330 = vld [vmem:[#allocation2 + $0x2e8] sm:$0xff]
    %v331 = vld [vmem:[#allocation2 + $0x2f0] sm:$0xff]
    %v332 = vld [vmem:[#allocation2 + $0x2f8] sm:$0xff]
    %v333 = vld [vmem:[#allocation2 + $0x300] sm:$0xff]
    %v334 = vld [vmem:[#allocation2 + $0x308] sm:$0xff]
    %v335 = vld [vmem:[#allocation2 + $0x310] sm:$0xff]
    %v336 = vld [vmem:[#allocation2 + $0x318] sm:$0xff]
    %v337 = vld [vmem:[#allocation2 + $0x320] sm:$0xff]
    %v338 = vld [vmem:[#allocation2 + $0x328] sm:$0xff]
    %v339 = vld [vmem:[#allocation2 + $0x330] sm:$0xff]
    %v340 = vld [vmem:[#allocation2 + $0x338] sm:$0xff]
    %v341 = vld [vmem:[#allocation2 + $0x340] sm:$0xff]
    %v342 = vld [vmem:[#allocation2 + $0x348] sm:$0xff]
    %v343 = vld [vmem:[#allocation2 + $0x350] sm:$0xff]
    %v344 = vld [vmem:[#allocation2 + $0x358] sm:$0xff]
    %v345 = vld [vmem:[#allocation2 + $0x360] sm:$0xff]
    %v346 = vld [vmem:[#allocation2 + $0x368] sm:$0xff]
    %v347 = vld [vmem:[#allocation2 + $0x370] sm:$0xff]
    %v348 = vld [vmem:[#allocation2 + $0x378] sm:$0xff]
    %v349 = vld [vmem:[#allocation2 + $0x380] sm:$0xff]
    %v350 = vld [vmem:[#allocation2 + $0x388] sm:$0xff]
    %v351 = vld [vmem:[#allocation2 + $0x390] sm:$0xff]
    %v352 = vld [vmem:[#allocation2 + $0x398] sm:$0xff]
    %v353 = vld [vmem:[#allocation2 + $0x3a0] sm:$0xff]
    %v354 = vld [vmem:[#allocation2 + $0x3a8] sm:$0xff]
    %v355 = vld [vmem:[#allocation2 + $0x3b0] sm:$0xff]
    %v356 = vld [vmem:[#allocation2 + $0x3b8] sm:$0xff]
    %v357 = vld [vmem:[#allocation2 + $0x3c0] sm:$0xff]
    %v358 = vld [vmem:[#allocation2 + $0x3c8] sm:$0xff]
    %v359 = vld [vmem:[#allocation2 + $0x3d0] sm:$0xff]
    %v360 = vld [vmem:[#allocation2 + $0x3d8] sm:$0xff]
    %v361 = vld [vmem:[#allocation2 + $0x3e0] sm:$0xff]
    %v362 = vld [vmem:[#allocation2 + $0x3e8] sm:$0xff]
    %v363 = vld [vmem:[#allocation2 + $0x3f0] sm:$0xff]
    %v364 = vld [vmem:[#allocation2 + $0x3f8] sm:$0xff]
    %v365 = vld [vmem:[#allocation2 + $0x400] sm:$0xff]
    %v366 = vld [vmem:[#allocation2 + $0x408] sm:$0xff]
    %v367 = vld [vmem:[#allocation2 + $0x410] sm:$0xff]
    %v368 = vld [vmem:[#allocation2 + $0x418] sm:$0xff]
    %v369 = vld [vmem:[#allocation2 + $0x420] sm:$0xff]
    %v370 = vld [vmem:[#allocation2 + $0x428] sm:$0xff]
    %v371 = vld [vmem:[#allocation2 + $0x430] sm:$0xff]
    %v372 = vld [vmem:[#allocation2 + $0x438] sm:$0xff]
    %v373 = vld [vmem:[#allocation2 + $0x440] sm:$0xff]
    %v374 = vld [vmem:[#allocation2 + $0x448] sm:$0xff]
    %v375 = vld [vmem:[#allocation2 + $0x450] sm:$0xff]
    %v376 = vld [vmem:[#allocation2 + $0x458] sm:$0xff]
    %v377 = vld [vmem:[#allocation2 + $0x460] sm:$0xff]
    %v378 = vld [vmem:[#allocation2 + $0x468] sm:$0xff]
    %v379 = vld [vmem:[#allocation2 + $0x470] sm:$0xff]
    %v380 = vld [vmem:[#allocation2 + $0x478] sm:$0xff]
    %v381 = vld [vmem:[#allocation2 + $0x480] sm:$0xff]
    %v382 = vld [vmem:[#allocation2 + $0x488] sm:$0xff]
    %v383 = vld [vmem:[#allocation2 + $0x490] sm:$0xff]
    %v384 = vld [vmem:[#allocation2 + $0x498] sm:$0xff]
    %v385 = vld [vmem:[#allocation2 + $0x4a0] sm:$0xff]
    %v386 = vld [vmem:[#allocation2 + $0x4a8] sm:$0xff]
    %v387 = vld [vmem:[#allocation2 + $0x4b0] sm:$0xff]
    %v388 = vld [vmem:[#allocation2 + $0x4b8] sm:$0xff]
    %v389 = vld [vmem:[#allocation2 + $0x4c0] sm:$0xff]
    %v390 = vld [vmem:[#allocation2 + $0x4c8] sm:$0xff]
    %v391 = vld [vmem:[#allocation2 + $0x4d0] sm:$0xff]
    %v392 = vld [vmem:[#allocation2 + $0x4d8] sm:$0xff]
    %v393 = vld [vmem:[#allocation2 + $0x4e0] sm:$0xff]
    %v394 = vld [vmem:[#allocation2 + $0x4e8] sm:$0xff]
    %v395 = vld [vmem:[#allocation2 + $0x4f0] sm:$0xff]
    %v396 = vld [vmem:[#allocation2 + $0x4f8] sm:$0xff]
    %v397 = vld [vmem:[#allocation2 + $0x500] sm:$0xff]
    %v398 = vld [vmem:[#allocation2 + $0x508] sm:$0xff]
    %v399 = vld [vmem:[#allocation2 + $0x510] sm:$0xff]
    %v400 = vld [vmem:[#allocation2 + $0x518] sm:$0xff]
    %v401 = vld [vmem:[#allocation2 + $0x520] sm:$0xff]
    %v402 = vld [vmem:[#allocation2 + $0x528] sm:$0xff]
    %v403 = vld [vmem:[#allocation2 + $0x530] sm:$0xff]
    %v404 = vld [vmem:[#allocation2 + $0x538] sm:$0xff]
    %v405 = vld [vmem:[#allocation2 + $0x540] sm:$0xff]
    %v406 = vld [vmem:[#allocation2 + $0x548] sm:$0xff]
    %v407 = vld [vmem:[#allocation2 + $0x550] sm:$0xff]
    %v408 = vld [vmem:[#allocation2 + $0x558] sm:$0xff]
    %v409 = vld [vmem:[#allocation2 + $0x560] sm:$0xff]
    %v410 = vld [vmem:[#allocation2 + $0x568] sm:$0xff]
    %v411 = vld [vmem:[#allocation2 + $0x570] sm:$0xff]
    %v412 = vld [vmem:[#allocation2 + $0x578] sm:$0xff]
    %v413 = vld [vmem:[#allocation2 + $0x580] sm:$0xff]
    %v414 = vld [vmem:[#allocation2 + $0x588] sm:$0xff]
    %v415 = vld [vmem:[#allocation2 + $0x590] sm:$0xff]
    %v416 = vld [vmem:[#allocation2 + $0x598] sm:$0xff]
    %v417 = vld [vmem:[#allocation2 + $0x5a0] sm:$0xff]
    %v418 = vld [vmem:[#allocation2 + $0x5a8] sm:$0xff]
    %v419 = vld [vmem:[#allocation2 + $0x5b0] sm:$0xff]
    %v420 = vld [vmem:[#allocation2 + $0x5b8] sm:$0xff]
    %v421 = vld [vmem:[#allocation2 + $0x5c0] sm:$0xff]
    %v422 = vld [vmem:[#allocation2 + $0x5c8] sm:$0xff]
    %v423 = vld [vmem:[#allocation2 + $0x5d0] sm:$0xff]
    %v424 = vld [vmem:[#allocation2 + $0x5d8] sm:$0xff]
    %v425 = vld [vmem:[#allocation2 + $0x5e0] sm:$0xff]
    %v426 = vld [vmem:[#allocation2 + $0x5e8] sm:$0xff]
    %v427 = vld [vmem:[#allocation2 + $0x5f0] sm:$0xff]
    %v428 = vld [vmem:[#allocation2 + $0x5f8] sm:$0xff]
    %v429 = vld [vmem:[#allocation2 + $0x600] sm:$0xff]
    %v430 = vld [vmem:[#allocation2 + $0x608] sm:$0xff]
    %v431 = vld [vmem:[#allocation2 + $0x610] sm:$0xff]
    %v432 = vld [vmem:[#allocation2 + $0x618] sm:$0xff]
    %v433 = vld [vmem:[#allocation2 + $0x620] sm:$0xff]
    %v434 = vld [vmem:[#allocation2 + $0x628] sm:$0xff]
    %v435 = vld [vmem:[#allocation2 + $0x630] sm:$0xff]
    %v436 = vld [vmem:[#allocation2 + $0x638] sm:$0xff]
    %v437 = vld [vmem:[#allocation2 + $0x640] sm:$0xff]
    %v438 = vld [vmem:[#allocation2 + $0x648] sm:$0xff]
    %v439 = vld [vmem:[#allocation2 + $0x650] sm:$0xff]
    %v440 = vld [vmem:[#allocation2 + $0x658] sm:$0xff]
    %v441 = vld [vmem:[#allocation2 + $0x660] sm:$0xff]
    %v442 = vld [vmem:[#allocation2 + $0x668] sm:$0xff]
    %v443 = vld [vmem:[#allocation2 + $0x670] sm:$0xff]
    %v444 = vld [vmem:[#allocation2 + $0x678] sm:$0xff]
    %v445 = vld [vmem:[#allocation2 + $0x680] sm:$0xff]
    %v446 = vld [vmem:[#allocation2 + $0x688] sm:$0xff]
    %v447 = vld [vmem:[#allocation2 + $0x690] sm:$0xff]
    %v448 = vld [vmem:[#allocation2 + $0x698] sm:$0xff]
    %v449 = vld [vmem:[#allocation2 + $0x6a0] sm:$0xff]
    %v450 = vld [vmem:[#allocation2 + $0x6a8] sm:$0xff]
    %v451 = vld [vmem:[#allocation2 + $0x6b0] sm:$0xff]
    %v452 = vld [vmem:[#allocation2 + $0x6b8] sm:$0xff]
    %v453 = vld [vmem:[#allocation2 + $0x6c0] sm:$0xff]
    %v454 = vld [vmem:[#allocation2 + $0x6c8] sm:$0xff]
    %v455 = vld [vmem:[#allocation2 + $0x6d0] sm:$0xff]
    %v456 = vld [vmem:[#allocation2 + $0x6d8] sm:$0xff]
    %v457 = vld [vmem:[#allocation2 + $0x6e0] sm:$0xff]
    %v458 = vld [vmem:[#allocation2 + $0x6e8] sm:$0xff]
    %v459 = vld [vmem:[#allocation2 + $0x6f0] sm:$0xff]
    %v460 = vld [vmem:[#allocation2 + $0x6f8] sm:$0xff]
    %v461 = vld [vmem:[#allocation2 + $0x700] sm:$0xff]
    %v462 = vld [vmem:[#allocation2 + $0x708] sm:$0xff]
    %v463 = vld [vmem:[#allocation2 + $0x710] sm:$0xff]
    %v464 = vld [vmem:[#allocation2 + $0x718] sm:$0xff]
    %v465 = vld [vmem:[#allocation2 + $0x720] sm:$0xff]
    %v466 = vld [vmem:[#allocation2 + $0x728] sm:$0xff]
    %v467 = vld [vmem:[#allocation2 + $0x730] sm:$0xff]
    %v468 = vld [vmem:[#allocation2 + $0x738] sm:$0xff]
    %v469 = vld [vmem:[#allocation2 + $0x740] sm:$0xff]
    %v470 = vld [vmem:[#allocation2 + $0x748] sm:$0xff]
    %v471 = vld [vmem:[#allocation2 + $0x750] sm:$0xff]
    %v472 = vld [vmem:[#allocation2 + $0x758] sm:$0xff]
    %v473 = vld [vmem:[#allocation2 + $0x760] sm:$0xff]
    %v474 = vld [vmem:[#allocation2 + $0x768] sm:$0xff]
    %v475 = vld [vmem:[#allocation2 + $0x770] sm:$0xff]
    %v476 = vld [vmem:[#allocation2 + $0x778] sm:$0xff]
    %v477 = vld [vmem:[#allocation2 + $0x780] sm:$0xff]
    %v478 = vld [vmem:[#allocation2 + $0x788] sm:$0xff]
    %v479 = vld [vmem:[#allocation2 + $0x790] sm:$0xff]
    %v480 = vld [vmem:[#allocation2 + $0x798] sm:$0xff]
    %v481 = vld [vmem:[#allocation2 + $0x7a0] sm:$0xff]
    %v482 = vld [vmem:[#allocation2 + $0x7a8] sm:$0xff]
    %v483 = vld [vmem:[#allocation2 + $0x7b0] sm:$0xff]
    %v484 = vld [vmem:[#allocation2 + $0x7b8] sm:$0xff]
    %v485 = vld [vmem:[#allocation2 + $0x7c0] sm:$0xff]
    %v486 = vld [vmem:[#allocation2 + $0x7c8] sm:$0xff]
    %v487 = vld [vmem:[#allocation2 + $0x7d0] sm:$0xff]
    %v488 = vld [vmem:[#allocation2 + $0x7d8] sm:$0xff]
    %v489 = vld [vmem:[#allocation2 + $0x7e0] sm:$0xff]
    %v490 = vld [vmem:[#allocation2 + $0x7e8] sm:$0xff]
    %v491 = vld [vmem:[#allocation2 + $0x7f0] sm:$0xff]
    %v492 = vld [vmem:[#allocation2 + $0x7f8] sm:$0xff]
    %v493 = vld [vmem:[#allocation2 + $0x800] sm:$0xff]
    %v494 = vld [vmem:[#allocation2 + $0x808] sm:$0xff]
    %v495 = vld [vmem:[#allocation2 + $0x810] sm:$0xff]
    %v496 = vld [vmem:[#allocation2 + $0x818] sm:$0xff]
    %v497 = vld [vmem:[#allocation2 + $0x820] sm:$0xff]
    %v498 = vld [vmem:[#allocation2 + $0x828] sm:$0xff]
    %v499 = vld [vmem:[#allocation2 + $0x830] sm:$0xff]
    %v500 = vld [vmem:[#allocation2 + $0x838] sm:$0xff]
    %v501 = vld [vmem:[#allocation2 + $0x840] sm:$0xff]
    %v502 = vld [vmem:[#allocation2 + $0x848] sm:$0xff]
    %v503 = vld [vmem:[#allocation2 + $0x850] sm:$0xff]
    %v504 = vld [vmem:[#allocation2 + $0x858] sm:$0xff]
    %v505 = vld [vmem:[#allocation2 + $0x860] sm:$0xff]
    %v506 = vld [vmem:[#allocation2 + $0x868] sm:$0xff]
    %v507 = vld [vmem:[#allocation2 + $0x870] sm:$0xff]
    %v508 = vld [vmem:[#allocation2 + $0x878] sm:$0xff]
    %v509 = vld [vmem:[#allocation2 + $0x880] sm:$0xff]
    %v510 = vld [vmem:[#allocation2 + $0x888] sm:$0xff]
    %v511 = vld [vmem:[#allocation2 + $0x890] sm:$0xff]
    %v512 = vld [vmem:[#allocation2 + $0x898] sm:$0xff]
    %v513 = vld [vmem:[#allocation2 + $0x8a0] sm:$0xff]
    %v514 = vld [vmem:[#allocation2 + $0x8a8] sm:$0xff]
    %v515 = vld [vmem:[#allocation2 + $0x8b0] sm:$0xff]
    %v516 = vld [vmem:[#allocation2 + $0x8b8] sm:$0xff]
    %v517 = vld [vmem:[#allocation2 + $0x8c0] sm:$0xff]
    %v518 = vld [vmem:[#allocation2 + $0x8c8] sm:$0xff]
    %v519 = vld [vmem:[#allocation2 + $0x8d0] sm:$0xff]
    %v520 = vld [vmem:[#allocation2 + $0x8d8] sm:$0xff]
    %v521 = vld [vmem:[#allocation2 + $0x8e0] sm:$0xff]
    %v522 = vld [vmem:[#allocation2 + $0x8e8] sm:$0xff]
    %v523 = vld [vmem:[#allocation2 + $0x8f0] sm:$0xff]
    %v524 = vld [vmem:[#allocation2 + $0x8f8] sm:$0xff]
    %v525 = vld [vmem:[#allocation2 + $0x900] sm:$0xff]
    %v526 = vld [vmem:[#allocation2 + $0x908] sm:$0xff]
    %v527 = vld [vmem:[#allocation2 + $0x910] sm:$0xff]
    %v528 = vld [vmem:[#allocation2 + $0x918] sm:$0xff]
    %v529 = vld [vmem:[#allocation2 + $0x920] sm:$0xff]
    %v530 = vld [vmem:[#allocation2 + $0x928] sm:$0xff]
    %v531 = vld [vmem:[#allocation2 + $0x930] sm:$0xff]
    %v532 = vld [vmem:[#allocation2 + $0x938] sm:$0xff]
    %v533 = vld [vmem:[#allocation2 + $0x940] sm:$0xff]
    %v534 = vld [vmem:[#allocation2 + $0x948] sm:$0xff]
    %v535 = vld [vmem:[#allocation2 + $0x950] sm:$0xff]
    %v536 = vld [vmem:[#allocation2 + $0x958] sm:$0xff]
    %v537 = vld [vmem:[#allocation2 + $0x960] sm:$0xff]
    %v538 = vld [vmem:[#allocation2 + $0x968] sm:$0xff]
    %v539 = vld [vmem:[#allocation2 + $0x970] sm:$0xff]
    %v540 = vld [vmem:[#allocation2 + $0x978] sm:$0xff]
    %v541 = vld [vmem:[#allocation2 + $0x980] sm:$0xff]
    %v542 = vld [vmem:[#allocation2 + $0x988] sm:$0xff]
    %v543 = vld [vmem:[#allocation2 + $0x990] sm:$0xff]
    %v544 = vld [vmem:[#allocation2 + $0x998] sm:$0xff]
    %v545 = vld [vmem:[#allocation2 + $0x9a0] sm:$0xff]
    %v546 = vld [vmem:[#allocation2 + $0x9a8] sm:$0xff]
    %v547 = vld [vmem:[#allocation2 + $0x9b0] sm:$0xff]
    %v548 = vld [vmem:[#allocation2 + $0x9b8] sm:$0xff]
    %v549 = vld [vmem:[#allocation2 + $0x9c0] sm:$0xff]
    %v550 = vld [vmem:[#allocation2 + $0x9c8] sm:$0xff]
    %v551 = vld [vmem:[#allocation2 + $0x9d0] sm:$0xff]
    %v552 = vld [vmem:[#allocation2 + $0x9d8] sm:$0xff]
    %v553 = vld [vmem:[#allocation2 + $0x9e0] sm:$0xff]
    %v554 = vld [vmem:[#allocation2 + $0x9e8] sm:$0xff]
    %v555 = vld [vmem:[#allocation2 + $0x9f0] sm:$0xff]
    %v556 = vld [vmem:[#allocation2 + $0x9f8] sm:$0xff]
    %v557 = vld [vmem:[#allocation2 + $0xa00] sm:$0xff]
    %v558 = vld [vmem:[#allocation2 + $0xa08] sm:$0xff]
    %v559 = vld [vmem:[#allocation2 + $0xa10] sm:$0xff]
    %v560 = vld [vmem:[#allocation2 + $0xa18] sm:$0xff]
    %v561 = vld [vmem:[#allocation2 + $0xa20] sm:$0xff]
    %v562 = vld [vmem:[#allocation2 + $0xa28] sm:$0xff]
    %v563 = vld [vmem:[#allocation2 + $0xa30] sm:$0xff]
    %v564 = vld [vmem:[#allocation2 + $0xa38] sm:$0xff]
    %v565 = vld [vmem:[#allocation2 + $0xa40] sm:$0xff]
    %v566 = vld [vmem:[#allocation2 + $0xa48] sm:$0xff]
    %v567 = vld [vmem:[#allocation2 + $0xa50] sm:$0xff]
    %v568 = vld [vmem:[#allocation2 + $0xa58] sm:$0xff]
    %v569 = vld [vmem:[#allocation2 + $0xa60] sm:$0xff]
    %v570 = vld [vmem:[#allocation2 + $0xa68] sm:$0xff]
    %v571 = vld [vmem:[#allocation2 + $0xa70] sm:$0xff]
    %v572 = vld [vmem:[#allocation2 + $0xa78] sm:$0xff]
    %v573 = vld [vmem:[#allocation2 + $0xa80] sm:$0xff]
    %v574 = vld [vmem:[#allocation2 + $0xa88] sm:$0xff]
    %v575 = vld [vmem:[#allocation2 + $0xa90] sm:$0xff]
    %v576 = vld [vmem:[#allocation2 + $0xa98] sm:$0xff]
    %v577 = vld [vmem:[#allocation2 + $0xaa0] sm:$0xff]
    %v578 = vld [vmem:[#allocation2 + $0xaa8] sm:$0xff]
    %v579 = vld [vmem:[#allocation2 + $0xab0] sm:$0xff]
    %v580 = vld [vmem:[#allocation2 + $0xab8] sm:$0xff]
    %v581 = vld [vmem:[#allocation2 + $0xac0] sm:$0xff]
    %v582 = vld [vmem:[#allocation2 + $0xac8] sm:$0xff]
    %v583 = vld [vmem:[#allocation2 + $0xad0] sm:$0xff]
    %v584 = vld [vmem:[#allocation2 + $0xad8] sm:$0xff]
    %v585 = vld [vmem:[#allocation2 + $0xae0] sm:$0xff]
    %v586 = vld [vmem:[#allocation2 + $0xae8] sm:$0xff]
    %v587 = vld [vmem:[#allocation2 + $0xaf0] sm:$0xff]
    %v588 = vld [vmem:[#allocation2 + $0xaf8] sm:$0xff]
    %v589 = vld [vmem:[#allocation2 + $0xb00] sm:$0xff]
    %v590 = vld [vmem:[#allocation2 + $0xb08] sm:$0xff]
    %v591 = vld [vmem:[#allocation2 + $0xb10] sm:$0xff]
    %v592 = vld [vmem:[#allocation2 + $0xb18] sm:$0xff]
    %v593 = vld [vmem:[#allocation2 + $0xb20] sm:$0xff]
    %v594 = vld [vmem:[#allocation2 + $0xb28] sm:$0xff]
    %v595 = vld [vmem:[#allocation2 + $0xb30] sm:$0xff]
    %v596 = vld [vmem:[#allocation2 + $0xb38] sm:$0xff]
    %v597 = vld [vmem:[#allocation2 + $0xb40] sm:$0xff]
    %v598 = vld [vmem:[#allocation2 + $0xb48] sm:$0xff]
    %v599 = vld [vmem:[#allocation2 + $0xb50] sm:$0xff]
    %v600 = vld [vmem:[#allocation2 + $0xb58] sm:$0xff]
    %v601 = vld [vmem:[#allocation2 + $0xb60] sm:$0xff]
    %v602 = vld [vmem:[#allocation2 + $0xb68] sm:$0xff]
    %v603 = vld [vmem:[#allocation2 + $0xb70] sm:$0xff]
    %v604 = vld [vmem:[#allocation2 + $0xb78] sm:$0xff]
    %v605 = vld [vmem:[#allocation2 + $0xb80] sm:$0xff]
    %v606 = vld [vmem:[#allocation2 + $0xb88] sm:$0xff]
    %v607 = vld [vmem:[#allocation2 + $0xb90] sm:$0xff]
    %v608 = vld [vmem:[#allocation2 + $0xb98] sm:$0xff]
    %v609 = vld [vmem:[#allocation2 + $0xba0] sm:$0xff]
    %v610 = vld [vmem:[#allocation2 + $0xba8] sm:$0xff]
    %v611 = vld [vmem:[#allocation2 + $0xbb0] sm:$0xff]
    %v612 = vld [vmem:[#allocation2 + $0xbb8] sm:$0xff]
    %v613 = vld [vmem:[#allocation2 + $0xbc0] sm:$0xff]
    %v614 = vld [vmem:[#allocation2 + $0xbc8] sm:$0xff]
    %v615 = vld [vmem:[#allocation2 + $0xbd0] sm:$0xff]
    %v616 = vld [vmem:[#allocation2 + $0xbd8] sm:$0xff]
    %v617 = vld [vmem:[#allocation2 + $0xbe0] sm:$0xff]
    %v618 = vld [vmem:[#allocation2 + $0xbe8] sm:$0xff]
    %v619 = vld [vmem:[#allocation2 + $0xbf0] sm:$0xff]
    %v620 = vld [vmem:[#allocation2 + $0xbf8] sm:$0xff]
    %v621 = vld [vmem:[#allocation2 + $0xc00] sm:$0xff]
    %v622 = vld [vmem:[#allocation2 + $0xc08] sm:$0xff]
    %v623 = vld [vmem:[#allocation2 + $0xc10] sm:$0xff]
    %v624 = vld [vmem:[#allocation2 + $0xc18] sm:$0xff]
    %v625 = vld [vmem:[#allocation2 + $0xc20] sm:$0xff]
    %v626 = vld [vmem:[#allocation2 + $0xc28] sm:$0xff]
    %v627 = vld [vmem:[#allocation2 + $0xc30] sm:$0xff]
    %v628 = vld [vmem:[#allocation2 + $0xc38] sm:$0xff]
    %v629 = vld [vmem:[#allocation2 + $0xc40] sm:$0xff]
    %v630 = vld [vmem:[#allocation2 + $0xc48] sm:$0xff]
    %v631 = vld [vmem:[#allocation2 + $0xc50] sm:$0xff]
    %v632 = vld [vmem:[#allocation2 + $0xc58] sm:$0xff]
    %v633 = vld [vmem:[#allocation2 + $0xc60] sm:$0xff]
    %v634 = vld [vmem:[#allocation2 + $0xc68] sm:$0xff]
    %v635 = vld [vmem:[#allocation2 + $0xc70] sm:$0xff]
    %v636 = vld [vmem:[#allocation2 + $0xc78] sm:$0xff]
    %v637 = vld [vmem:[#allocation2 + $0xc80] sm:$0xff]
    %v638 = vld [vmem:[#allocation2 + $0xc88] sm:$0xff]
    %v639 = vld [vmem:[#allocation2 + $0xc90] sm:$0xff]
    %v640 = vld [vmem:[#allocation2 + $0xc98] sm:$0xff]
    %v641 = vld [vmem:[#allocation2 + $0xca0] sm:$0xff]
    %v642 = vld [vmem:[#allocation2 + $0xca8] sm:$0xff]
    %v643 = vld [vmem:[#allocation2 + $0xcb0] sm:$0xff]
    %v644 = vld [vmem:[#allocation2 + $0xcb8] sm:$0xff]
    %v645 = vld [vmem:[#allocation2 + $0xcc0] sm:$0xff]
    %v646 = vld [vmem:[#allocation2 + $0xcc8] sm:$0xff]
    %v647 = vld [vmem:[#allocation2 + $0xcd0] sm:$0xff]
    %v648 = vld [vmem:[#allocation2 + $0xcd8] sm:$0xff]
    %v649 = vld [vmem:[#allocation2 + $0xce0] sm:$0xff]
    %v650 = vld [vmem:[#allocation2 + $0xce8] sm:$0xff]
    %v651 = vld [vmem:[#allocation2 + $0xcf0] sm:$0xff]
    %v652 = vld [vmem:[#allocation2 + $0xcf8] sm:$0xff]
    %v653 = vld [vmem:[#allocation2 + $0xd00] sm:$0xff]
    %v654 = vld [vmem:[#allocation2 + $0xd08] sm:$0xff]
    %v655 = vld [vmem:[#allocation2 + $0xd10] sm:$0xff]
    %v656 = vld [vmem:[#allocation2 + $0xd18] sm:$0xff]
    %v657 = vld [vmem:[#allocation2 + $0xd20] sm:$0xff]
    %v658 = vld [vmem:[#allocation2 + $0xd28] sm:$0xff]
    %v659 = vld [vmem:[#allocation2 + $0xd30] sm:$0xff]
    %v660 = vld [vmem:[#allocation2 + $0xd38] sm:$0xff]
    %v661 = vld [vmem:[#allocation2 + $0xd40] sm:$0xff]
    %v662 = vld [vmem:[#allocation2 + $0xd48] sm:$0xff]
    %v663 = vld [vmem:[#allocation2 + $0xd50] sm:$0xff]
    %v664 = vld [vmem:[#allocation2 + $0xd58] sm:$0xff]
    %v665 = vld [vmem:[#allocation2 + $0xd60] sm:$0xff]
    %v666 = vld [vmem:[#allocation2 + $0xd68] sm:$0xff]
    %v667 = vld [vmem:[#allocation2 + $0xd70] sm:$0xff]
    %v668 = vld [vmem:[#allocation2 + $0xd78] sm:$0xff]
    %v669 = vld [vmem:[#allocation2 + $0xd80] sm:$0xff]
    %v670 = vld [vmem:[#allocation2 + $0xd88] sm:$0xff]
    %v671 = vld [vmem:[#allocation2 + $0xd90] sm:$0xff]
    %v672 = vld [vmem:[#allocation2 + $0xd98] sm:$0xff]
    %v673 = vld [vmem:[#allocation2 + $0xda0] sm:$0xff]
    %v674 = vld [vmem:[#allocation2 + $0xda8] sm:$0xff]
    %v675 = vld [vmem:[#allocation2 + $0xdb0] sm:$0xff]
    %v676 = vld [vmem:[#allocation2 + $0xdb8] sm:$0xff]
    %v677 = vld [vmem:[#allocation2 + $0xdc0] sm:$0xff]
    %v678 = vld [vmem:[#allocation2 + $0xdc8] sm:$0xff]
    %v679 = vld [vmem:[#allocation2 + $0xdd0] sm:$0xff]
    %v680 = vld [vmem:[#allocation2 + $0xdd8] sm:$0xff]
    %v681 = vld [vmem:[#allocation2 + $0xde0] sm:$0xff]
    %v682 = vld [vmem:[#allocation2 + $0xde8] sm:$0xff]
    %v683 = vld [vmem:[#allocation2 + $0xdf0] sm:$0xff]
    %v684 = vld [vmem:[#allocation2 + $0xdf8] sm:$0xff]
    %v685 = vld [vmem:[#allocation2 + $0xe00] sm:$0xff]
    %v686 = vld [vmem:[#allocation2 + $0xe08] sm:$0xff]
    %v687 = vld [vmem:[#allocation2 + $0xe10] sm:$0xff]
    %v688 = vld [vmem:[#allocation2 + $0xe18] sm:$0xff]
    %v689 = vld [vmem:[#allocation2 + $0xe20] sm:$0xff]
    %v690 = vld [vmem:[#allocation2 + $0xe28] sm:$0xff]
    %v691 = vld [vmem:[#allocation2 + $0xe30] sm:$0xff]
    %v692 = vld [vmem:[#allocation2 + $0xe38] sm:$0xff]
    %v693 = vld [vmem:[#allocation2 + $0xe40] sm:$0xff]
    %v694 = vld [vmem:[#allocation2 + $0xe48] sm:$0xff]
    %v695 = vld [vmem:[#allocation2 + $0xe50] sm:$0xff]
    %v696 = vld [vmem:[#allocation2 + $0xe58] sm:$0xff]
    %v697 = vld [vmem:[#allocation2 + $0xe60] sm:$0xff]
    %v698 = vld [vmem:[#allocation2 + $0xe68] sm:$0xff]
    %v699 = vld [vmem:[#allocation2 + $0xe70] sm:$0xff]
    %v700 = vld [vmem:[#allocation2 + $0xe78] sm:$0xff]
    %v701 = vld [vmem:[#allocation2 + $0xe80] sm:$0xff]
    %v702 = vld [vmem:[#allocation2 + $0xe88] sm:$0xff]
    %v703 = vld [vmem:[#allocation2 + $0xe90] sm:$0xff]
    %v704 = vld [vmem:[#allocation2 + $0xe98] sm:$0xff]
    %v705 = vld [vmem:[#allocation2 + $0xea0] sm:$0xff]
    %v706 = vld [vmem:[#allocation2 + $0xea8] sm:$0xff]
    %v707 = vld [vmem:[#allocation2 + $0xeb0] sm:$0xff]
    %v708 = vld [vmem:[#allocation2 + $0xeb8] sm:$0xff]
    %v709 = vld [vmem:[#allocation2 + $0xec0] sm:$0xff]
    %v710 = vld [vmem:[#allocation2 + $0xec8] sm:$0xff]
    %v711 = vld [vmem:[#allocation2 + $0xed0] sm:$0xff]
    %v712 = vld [vmem:[#allocation2 + $0xed8] sm:$0xff]
    %v713 = vld [vmem:[#allocation2 + $0xee0] sm:$0xff]
    %v714 = vld [vmem:[#allocation2 + $0xee8] sm:$0xff]
    %v715 = vld [vmem:[#allocation2 + $0xef0] sm:$0xff]
    %v716 = vld [vmem:[#allocation2 + $0xef8] sm:$0xff]
    %v717 = vld [vmem:[#allocation2 + $0xf00] sm:$0xff]
    %v718 = vld [vmem:[#allocation2 + $0xf08] sm:$0xff]
    %v719 = vld [vmem:[#allocation2 + $0xf10] sm:$0xff]
    %v720 = vld [vmem:[#allocation2 + $0xf18] sm:$0xff]
    %v721 = vld [vmem:[#allocation2 + $0xf20] sm:$0xff]
    %v722 = vld [vmem:[#allocation2 + $0xf28] sm:$0xff]
    %v723 = vld [vmem:[#allocation2 + $0xf30] sm:$0xff]
    %v724 = vld [vmem:[#allocation2 + $0xf38] sm:$0xff]
    %v725 = vld [vmem:[#allocation2 + $0xf40] sm:$0xff]
    %v726 = vld [vmem:[#allocation2 + $0xf48] sm:$0xff]
    %v727 = vld [vmem:[#allocation2 + $0xf50] sm:$0xff]
    %v728 = vld [vmem:[#allocation2 + $0xf58] sm:$0xff]
    %v729 = vld [vmem:[#allocation2 + $0xf60] sm:$0xff]
    %v730 = vld [vmem:[#allocation2 + $0xf68] sm:$0xff]
    %v731 = vld [vmem:[#allocation2 + $0xf70] sm:$0xff]
    %v732 = vld [vmem:[#allocation2 + $0xf78] sm:$0xff]
    %v733 = vld [vmem:[#allocation2 + $0xf80] sm:$0xff]
    %v734 = vld [vmem:[#allocation2 + $0xf88] sm:$0xff]
    %v735 = vld [vmem:[#allocation2 + $0xf90] sm:$0xff]
    %v736 = vld [vmem:[#allocation2 + $0xf98] sm:$0xff]
    %v737 = vld [vmem:[#allocation2 + $0xfa0] sm:$0xff]
    %v738 = vld [vmem:[#allocation2 + $0xfa8] sm:$0xff]
    %v739 = vld [vmem:[#allocation2 + $0xfb0] sm:$0xff]
    %v740 = vld [vmem:[#allocation2 + $0xfb8] sm:$0xff]
    %v741 = vld [vmem:[#allocation2 + $0xfc0] sm:$0xff]
    %v742 = vld [vmem:[#allocation2 + $0xfc8] sm:$0xff]
    %v743 = vld [vmem:[#allocation2 + $0xfd0] sm:$0xff]
    %v744 = vld [vmem:[#allocation2 + $0xfd8] sm:$0xff]
    %v745 = vld [vmem:[#allocation2 + $0xfe0] sm:$0xff]
    %v746 = vld [vmem:[#allocation2 + $0xfe8] sm:$0xff]
    %v747 = vld [vmem:[#allocation2 + $0xff0] sm:$0xff]
    %v748 = vld [vmem:[#allocation2 + $0xff8] sm:$0xff]
    %v749 = vld [vmem:[#allocation2 + $0x1000] sm:$0xff]
    %v750 = vld [vmem:[#allocation2 + $0x1008] sm:$0xff]
    %v751 = vld [vmem:[#allocation2 + $0x1010] sm:$0xff]
    %v752 = vld [vmem:[#allocation2 + $0x1018] sm:$0xff]
    %v753 = vld [vmem:[#allocation2 + $0x1020] sm:$0xff]
    %v754 = vld [vmem:[#allocation2 + $0x1028] sm:$0xff]
    %v755 = vld [vmem:[#allocation2 + $0x1030] sm:$0xff]
    %v756 = vld [vmem:[#allocation2 + $0x1038] sm:$0xff]
    %v757 = vld [vmem:[#allocation2 + $0x1040] sm:$0xff]
    %v758 = vld [vmem:[#allocation2 + $0x1048] sm:$0xff]
    %v759 = vld [vmem:[#allocation2 + $0x1050] sm:$0xff]
    %v760 = vld [vmem:[#allocation2 + $0x1058] sm:$0xff]
    %v761 = vld [vmem:[#allocation2 + $0x1060] sm:$0xff]
    %v762 = vld [vmem:[#allocation2 + $0x1068] sm:$0xff]
    %v763 = vld [vmem:[#allocation2 + $0x1070] sm:$0xff]
    %v764 = vld [vmem:[#allocation2 + $0x1078] sm:$0xff]
    %v765 = vld [vmem:[#allocation2 + $0x1080] sm:$0xff]
    %v766 = vld [vmem:[#allocation2 + $0x1088] sm:$0xff]
    %v767 = vld [vmem:[#allocation2 + $0x1090] sm:$0xff]
    %v768 = vld [vmem:[#allocation2 + $0x1098] sm:$0xff]
    %v769 = vld [vmem:[#allocation2 + $0x10a0] sm:$0xff]
    %v770 = vld [vmem:[#allocation2 + $0x10a8] sm:$0xff]
    %v771 = vld [vmem:[#allocation2 + $0x10b0] sm:$0xff]
    %v772 = vld [vmem:[#allocation2 + $0x10b8] sm:$0xff]
    %v773 = vld [vmem:[#allocation2 + $0x10c0] sm:$0xff]
    %v774 = vld [vmem:[#allocation2 + $0x10c8] sm:$0xff]
    %v775 = vld [vmem:[#allocation2 + $0x10d0] sm:$0xff]
    %v776 = vld [vmem:[#allocation2 + $0x10d8] sm:$0xff]
    %v777 = vld [vmem:[#allocation2 + $0x10e0] sm:$0xff]
    %v778 = vld [vmem:[#allocation2 + $0x10e8] sm:$0xff]
    %v779 = vld [vmem:[#allocation2 + $0x10f0] sm:$0xff]
    %v780 = vld [vmem:[#allocation2 + $0x10f8] sm:$0xff]
    %v781 = vld [vmem:[#allocation2 + $0x1100] sm:$0xff]
    %v782 = vld [vmem:[#allocation2 + $0x1108] sm:$0xff]
    %v783 = vld [vmem:[#allocation2 + $0x1110] sm:$0xff]
    %v784 = vld [vmem:[#allocation2 + $0x1118] sm:$0xff]
    %v785 = vld [vmem:[#allocation2 + $0x1120] sm:$0xff]
    %v786 = vld [vmem:[#allocation2 + $0x1128] sm:$0xff]
    %v787 = vld [vmem:[#allocation2 + $0x1130] sm:$0xff]
    %v788 = vld [vmem:[#allocation2 + $0x1138] sm:$0xff]
    %v789 = vld [vmem:[#allocation2 + $0x1140] sm:$0xff]
    %v790 = vld [vmem:[#allocation2 + $0x1148] sm:$0xff]
    %v791 = vld [vmem:[#allocation2 + $0x1150] sm:$0xff]
    %v792 = vld [vmem:[#allocation2 + $0x1158] sm:$0xff]
    %v793 = vld [vmem:[#allocation2 + $0x1160] sm:$0xff]
    %v794 = vld [vmem:[#allocation2 + $0x1168] sm:$0xff]
    %v795 = vld [vmem:[#allocation2 + $0x1170] sm:$0xff]
    %v796 = vld [vmem:[#allocation2 + $0x1178] sm:$0xff]
    %v797 = vld [vmem:[#allocation2 + $0x1180] sm:$0xff]
    %v798 = vld [vmem:[#allocation2 + $0x1188] sm:$0xff]
    %v799 = vld [vmem:[#allocation2 + $0x1190] sm:$0xff]
    %v800 = vld [vmem:[#allocation2 + $0x1198] sm:$0xff]
    %v801 = vld [vmem:[#allocation2 + $0x11a0] sm:$0xff]
    %v802 = vld [vmem:[#allocation2 + $0x11a8] sm:$0xff]
    %v803 = vld [vmem:[#allocation2 + $0x11b0] sm:$0xff]
    %v804 = vld [vmem:[#allocation2 + $0x11b8] sm:$0xff]
    %v805 = vld [vmem:[#allocation2 + $0x11c0] sm:$0xff]
    %v806 = vld [vmem:[#allocation2 + $0x11c8] sm:$0xff]
    %v807 = vld [vmem:[#allocation2 + $0x11d0] sm:$0xff]
    %v808 = vld [vmem:[#allocation2 + $0x11d8] sm:$0xff]
    %v809 = vld [vmem:[#allocation2 + $0x11e0] sm:$0xff]
    %v810 = vld [vmem:[#allocation2 + $0x11e8] sm:$0xff]
    %v811 = vld [vmem:[#allocation2 + $0x11f0] sm:$0xff]
    %v812 = vld [vmem:[#allocation2 + $0x11f8] sm:$0xff]
    %813 = vmatprep.subr.mxu0 0.0
    %814 = vmatpush1.msra.mxu0 %v188
    %815 = vmatprep.subr.mxu0 0.0
    %816 = vmatpush1.msra.mxu0 %v187
    %817 = vmatprep.subr.mxu0 0.0
    %818 = vmatpush1.msra.mxu0 %v186
    %819 = vmatprep.subr.mxu0 0.0
    %820 = vmatpush1.msra.mxu0 %v185
    %821 = vmatprep.subr.mxu0 0.0
    %822 = vmatpush1.msra.mxu0 %v184
    %823 = vmatprep.subr.mxu0 0.0
    %824 = vmatpush1.msra.mxu0 %v183
    %825 = vmatprep.subr.mxu0 0.0
    %826 = vmatpush1.msra.mxu0 %v182
    %827 = vmatprep.subr.mxu0 0.0
    %828 = vmatpush1.msra.mxu0 %v181
    %829 = vmatprep.subr.mxu0 0.0
    %830 = vmatpush1.msra.mxu0 %v180
    %831 = vmatprep.subr.mxu0 0.0
    %832 = vmatpush1.msra.mxu0 %v179
    %833 = vmatprep.subr.mxu0 0.0
    %834 = vmatpush1.msra.mxu0 %v178
    %835 = vmatprep.subr.mxu0 0.0
    %836 = vmatpush1.msra.mxu0 %v177
    %837 = vmatprep.subr.mxu0 0.0
    %838 = vmatpush1.msra.mxu0 %v176
    %839 = vmatprep.subr.mxu0 0.0
    %840 = vmatpush1.msra.mxu0 %v175
    %841 = vmatprep.subr.mxu0 0.0
    %842 = vmatpush1.msra.mxu0 %v174
    %843 = vmatprep.subr.mxu0 0.0
    %844 = vmatpush1.msra.mxu0 %v173
    %845 = vmatprep.subr.mxu0 0.0
    %846 = vmatpush2.msra.mxu0 %v204
    %847 = vmatprep.subr.mxu0 0.0
    %848 = vmatpush2.msra.mxu0 %v203
    %849 = vmatprep.subr.mxu0 0.0
    %850 = vmatpush2.msra.mxu0 %v202
    %851 = vmatprep.subr.mxu0 0.0
    %852 = vmatpush2.msra.mxu0 %v201
    %853 = vmatprep.subr.mxu0 0.0
    %854 = vmatpush2.msra.mxu0 %v200
    %855 = vmatprep.subr.mxu0 0.0
    %856 = vmatpush2.msra.mxu0 %v199
    %857 = vmatprep.subr.mxu0 0.0
    %858 = vmatpush2.msra.mxu0 %v198
    %859 = vmatprep.subr.mxu0 0.0
    %860 = vmatpush2.msra.mxu0 %v197
    %861 = vmatprep.subr.mxu0 0.0
    %862 = vmatpush2.msra.mxu0 %v196
    %863 = vmatprep.subr.mxu0 0.0
    %864 = vmatpush2.msra.mxu0 %v195
    %865 = vmatprep.subr.mxu0 0.0
    %866 = vmatpush2.msra.mxu0 %v194
    %867 = vmatprep.subr.mxu0 0.0
    %868 = vmatpush2.msra.mxu0 %v193
    %869 = vmatprep.subr.mxu0 0.0
    %870 = vmatpush2.msra.mxu0 %v192
    %871 = vmatprep.subr.mxu0 0.0
    %872 = vmatpush2.msra.mxu0 %v191
    %873 = vmatprep.subr.mxu0 0.0
    %874 = vmatpush2.msra.mxu0 %v190
    %875 = vmatprep.subr.mxu0 0.0
    %876 = vmatpush2.msra.mxu0 %v189
    %877 = vmatprep.mubr.f32.mxu0 %v238
    %878 = vmatmul.mubr.f32.gmra.mxu0 %v237
    %v879 = vpop.f32.mrf.mxu0
    %v880 = vadd.f32 0.0, %v879
    %v881 = vpop.f32.mrf.mxu0
    %882 = vmatprep.mubr.f32.mxu0 %v242
    %883 = vmatmul.mubr.f32.gmra.mxu0 %v241
    %v884 = vpop.f32.mrf.mxu0
    %v885 = vadd.f32 0.0, %v884
    %v886 = vpop.f32.mrf.mxu0
    %887 = vmatprep.mubr.f32.mxu0 %v246
    %888 = vmatmul.mubr.f32.gmra.mxu0 %v245
    %v889 = vpop.f32.mrf.mxu0
    %v890 = vadd.f32 0.0, %v889
    %v891 = vpop.f32.mrf.mxu0
    %892 = vmatprep.mubr.f32.mxu0 %v250
    %893 = vmatmul.mubr.f32.gmra.mxu0 %v249
    %v894 = vpop.f32.mrf.mxu0
    %v895 = vadd.f32 0.0, %v894
    %v896 = vpop.f32.mrf.mxu0
    %897 = vmatprep.mubr.f32.mxu0 %v254
    %898 = vmatmul.mubr.f32.gmra.mxu0 %v253
    %v899 = vpop.f32.mrf.mxu0
    %v900 = vadd.f32 0.0, %v899
    %v901 = vpop.f32.mrf.mxu0
    %902 = vmatprep.mubr.f32.mxu0 %v258
    %903 = vmatmul.mubr.f32.gmra.mxu0 %v257
    %v904 = vpop.f32.mrf.mxu0
    %v905 = vadd.f32 0.0, %v904
    %v906 = vpop.f32.mrf.mxu0
    %907 = vmatprep.mubr.f32.mxu0 %v262
    %908 = vmatmul.mubr.f32.gmra.mxu0 %v261
    %v909 = vpop.f32.mrf.mxu0
    %v910 = vadd.f32 0.0, %v909
    %v911 = vpop.f32.mrf.mxu0
    %912 = vmatprep.mubr.f32.mxu0 %v266
    %913 = vmatmul.mubr.f32.gmra.mxu0 %v265
    %v914 = vpop.f32.mrf.mxu0
    %v915 = vadd.f32 0.0, %v914
    %v916 = vpop.f32.mrf.mxu0
    %917 = vmatprep.mubr.f32.mxu0 %v270
    %918 = vmatmul.mubr.f32.gmra.mxu0 %v269
    %v919 = vpop.f32.mrf.mxu0
    %v920 = vadd.f32 0.0, %v919
    %v921 = vpop.f32.mrf.mxu0
    %922 = vmatprep.mubr.f32.mxu0 %v274
    %923 = vmatmul.mubr.f32.gmra.mxu0 %v273
    %v924 = vpop.f32.mrf.mxu0
    %v925 = vadd.f32 0.0, %v924
    %v926 = vpop.f32.mrf.mxu0
    %927 = vmatprep.mubr.f32.mxu0 %v278
    %928 = vmatmul.mubr.f32.gmra.mxu0 %v277
    %v929 = vpop.f32.mrf.mxu0
    %v930 = vadd.f32 0.0, %v929
    %v931 = vpop.f32.mrf.mxu0
    %932 = vmatprep.mubr.f32.mxu0 %v282
    %933 = vmatmul.mubr.f32.gmra.mxu0 %v281
    %v934 = vpop.f32.mrf.mxu0
    %v935 = vadd.f32 0.0, %v934
    %v936 = vpop.f32.mrf.mxu0
    %937 = vmatprep.mubr.f32.mxu0 %v286
    %938 = vmatmul.mubr.f32.gmra.mxu0 %v285
    %v939 = vpop.f32.mrf.mxu0
    %v940 = vadd.f32 0.0, %v939
    %v941 = vpop.f32.mrf.mxu0
    %942 = vmatprep.mubr.f32.mxu0 %v290
    %943 = vmatmul.mubr.f32.gmra.mxu0 %v289
    %v944 = vpop.f32.mrf.mxu0
    %v945 = vadd.f32 0.0, %v944
    %v946 = vpop.f32.mrf.mxu0
    %947 = vmatprep.mubr.f32.mxu0 %v294
    %948 = vmatmul.mubr.f32.gmra.mxu0 %v293
    %v949 = vpop.f32.mrf.mxu0
    %v950 = vadd.f32 0.0, %v949
    %v951 = vpop.f32.mrf.mxu0
    %952 = vmatprep.mubr.f32.mxu0 %v298
    %953 = vmatmul.mubr.f32.gmra.mxu0 %v297
    %v954 = vpop.f32.mrf.mxu0
    %v955 = vadd.f32 0.0, %v954
    %v956 = vpop.f32.mrf.mxu0
    %957 = vmatprep.mubr.f32.mxu0 %v302
    %958 = vmatmul.mubr.f32.gmra.mxu0 %v301
    %v959 = vpop.f32.mrf.mxu0
    %v960 = vadd.f32 0.0, %v959
    %v961 = vpop.f32.mrf.mxu0
    %962 = vmatprep.mubr.f32.mxu0 %v306
    %963 = vmatmul.mubr.f32.gmra.mxu0 %v305
    %v964 = vpop.f32.mrf.mxu0
    %v965 = vadd.f32 0.0, %v964
    %v966 = vpop.f32.mrf.mxu0
    %967 = vmatprep.mubr.f32.mxu0 %v310
    %968 = vmatmul.mubr.f32.gmra.mxu0 %v309
    %v969 = vpop.f32.mrf.mxu0
    %v970 = vadd.f32 0.0, %v969
    %v971 = vpop.f32.mrf.mxu0
    %972 = vmatprep.mubr.f32.mxu0 %v314
    %973 = vmatmul.mubr.f32.gmra.mxu0 %v313
    %v974 = vpop.f32.mrf.mxu0
    %v975 = vadd.f32 0.0, %v974
    %v976 = vpop.f32.mrf.mxu0
    %977 = vmatprep.mubr.f32.mxu0 %v318
    %978 = vmatmul.mubr.f32.gmra.mxu0 %v317
    %v979 = vpop.f32.mrf.mxu0
    %v980 = vadd.f32 0.0, %v979
    %v981 = vpop.f32.mrf.mxu0
    %982 = vmatprep.mubr.f32.mxu0 %v322
    %983 = vmatmul.mubr.f32.gmra.mxu0 %v321
    %v984 = vpop.f32.mrf.mxu0
    %v985 = vadd.f32 0.0, %v984
    %v986 = vpop.f32.mrf.mxu0
    %987 = vmatprep.mubr.f32.mxu0 %v326
    %988 = vmatmul.mubr.f32.gmra.mxu0 %v325
    %v989 = vpop.f32.mrf.mxu0
    %v990 = vadd.f32 0.0, %v989
    %v991 = vpop.f32.mrf.mxu0
    %992 = vmatprep.mubr.f32.mxu0 %v330
    %993 = vmatmul.mubr.f32.gmra.mxu0 %v329
    %v994 = vpop.f32.mrf.mxu0
    %v995 = vadd.f32 0.0, %v994
    %v996 = vpop.f32.mrf.mxu0
    %997 = vmatprep.mubr.f32.mxu0 %v334
    %998 = vmatmul.mubr.f32.gmra.mxu0 %v333
    %v999 = vpop.f32.mrf.mxu0
    %v1000 = vadd.f32 0.0, %v999
    %v1001 = vpop.f32.mrf.mxu0
    %1002 = vmatprep.mubr.f32.mxu0 %v338
    %1003 = vmatmul.mubr.f32.gmra.mxu0 %v337
    %v1004 = vpop.f32.mrf.mxu0
    %v1005 = vadd.f32 0.0, %v1004
    %v1006 = vpop.f32.mrf.mxu0
    %1007 = vmatprep.mubr.f32.mxu0 %v342
    %1008 = vmatmul.mubr.f32.gmra.mxu0 %v341
    %v1009 = vpop.f32.mrf.mxu0
    %v1010 = vadd.f32 0.0, %v1009
    %v1011 = vpop.f32.mrf.mxu0
    %1012 = vmatprep.mubr.f32.mxu0 %v346
    %1013 = vmatmul.mubr.f32.gmra.mxu0 %v345
    %v1014 = vpop.f32.mrf.mxu0
    %v1015 = vadd.f32 0.0, %v1014
    %v1016 = vpop.f32.mrf.mxu0
    %1017 = vmatprep.mubr.f32.mxu0 %v350
    %1018 = vmatmul.mubr.f32.gmra.mxu0 %v349
    %v1019 = vpop.f32.mrf.mxu0
    %v1020 = vadd.f32 0.0, %v1019
    %v1021 = vpop.f32.mrf.mxu0
    %1022 = vmatprep.mubr.f32.mxu0 %v354
    %1023 = vmatmul.mubr.f32.gmra.mxu0 %v353
    %v1024 = vpop.f32.mrf.mxu0
    %v1025 = vadd.f32 0.0, %v1024
    %v1026 = vpop.f32.mrf.mxu0
    %1027 = vmatprep.mubr.f32.mxu0 %v358
    %1028 = vmatmul.mubr.f32.gmra.mxu0 %v357
    %v1029 = vpop.f32.mrf.mxu0
    %v1030 = vadd.f32 0.0, %v1029
    %v1031 = vpop.f32.mrf.mxu0
    %1032 = vmatprep.mubr.f32.mxu0 %v362
    %1033 = vmatmul.mubr.f32.gmra.mxu0 %v361
    %v1034 = vpop.f32.mrf.mxu0
    %v1035 = vadd.f32 0.0, %v1034
    %v1036 = vpop.f32.mrf.mxu0
    %1037 = vmatprep.mubr.f32.mxu0 %v366
    %1038 = vmatmul.mubr.f32.gmra.mxu0 %v365
    %v1039 = vpop.f32.mrf.mxu0
    %v1040 = vadd.f32 0.0, %v1039
    %v1041 = vpop.f32.mrf.mxu0
    %1042 = vmatprep.mubr.f32.mxu0 %v370
    %1043 = vmatmul.mubr.f32.gmra.mxu0 %v369
    %v1044 = vpop.f32.mrf.mxu0
    %v1045 = vadd.f32 0.0, %v1044
    %v1046 = vpop.f32.mrf.mxu0
    %1047 = vmatprep.mubr.f32.mxu0 %v374
    %1048 = vmatmul.mubr.f32.gmra.mxu0 %v373
    %v1049 = vpop.f32.mrf.mxu0
    %v1050 = vadd.f32 0.0, %v1049
    %v1051 = vpop.f32.mrf.mxu0
    %1052 = vmatprep.mubr.f32.mxu0 %v378
    %1053 = vmatmul.mubr.f32.gmra.mxu0 %v377
    %v1054 = vpop.f32.mrf.mxu0
    %v1055 = vadd.f32 0.0, %v1054
    %v1056 = vpop.f32.mrf.mxu0
    %1057 = vmatprep.mubr.f32.mxu0 %v382
    %1058 = vmatmul.mubr.f32.gmra.mxu0 %v381
    %v1059 = vpop.f32.mrf.mxu0
    %v1060 = vadd.f32 0.0, %v1059
    %v1061 = vpop.f32.mrf.mxu0
    %1062 = vmatprep.mubr.f32.mxu0 %v386
    %1063 = vmatmul.mubr.f32.gmra.mxu0 %v385
    %v1064 = vpop.f32.mrf.mxu0
    %v1065 = vadd.f32 0.0, %v1064
    %v1066 = vpop.f32.mrf.mxu0
    %1067 = vmatprep.mubr.f32.mxu0 %v390
    %1068 = vmatmul.mubr.f32.gmra.mxu0 %v389
    %v1069 = vpop.f32.mrf.mxu0
    %v1070 = vadd.f32 0.0, %v1069
    %v1071 = vpop.f32.mrf.mxu0
    %1072 = vmatprep.mubr.f32.mxu0 %v394
    %1073 = vmatmul.mubr.f32.gmra.mxu0 %v393
    %v1074 = vpop.f32.mrf.mxu0
    %v1075 = vadd.f32 0.0, %v1074
    %v1076 = vpop.f32.mrf.mxu0
    %1077 = vmatprep.mubr.f32.mxu0 %v398
    %1078 = vmatmul.mubr.f32.gmra.mxu0 %v397
    %v1079 = vpop.f32.mrf.mxu0
    %v1080 = vadd.f32 0.0, %v1079
    %v1081 = vpop.f32.mrf.mxu0
    %1082 = vmatprep.mubr.f32.mxu0 %v402
    %1083 = vmatmul.mubr.f32.gmra.mxu0 %v401
    %v1084 = vpop.f32.mrf.mxu0
    %v1085 = vadd.f32 0.0, %v1084
    %v1086 = vpop.f32.mrf.mxu0
    %1087 = vmatprep.mubr.f32.mxu0 %v406
    %1088 = vmatmul.mubr.f32.gmra.mxu0 %v405
    %v1089 = vpop.f32.mrf.mxu0
    %v1090 = vadd.f32 0.0, %v1089
    %v1091 = vpop.f32.mrf.mxu0
    %1092 = vmatprep.mubr.f32.mxu0 %v410
    %1093 = vmatmul.mubr.f32.gmra.mxu0 %v409
    %v1094 = vpop.f32.mrf.mxu0
    %v1095 = vadd.f32 0.0, %v1094
    %v1096 = vpop.f32.mrf.mxu0
    %1097 = vmatprep.mubr.f32.mxu0 %v414
    %1098 = vmatmul.mubr.f32.gmra.mxu0 %v413
    %v1099 = vpop.f32.mrf.mxu0
    %v1100 = vadd.f32 0.0, %v1099
    %v1101 = vpop.f32.mrf.mxu0
    %1102 = vmatprep.mubr.f32.mxu0 %v418
    %1103 = vmatmul.mubr.f32.gmra.mxu0 %v417
    %v1104 = vpop.f32.mrf.mxu0
    %v1105 = vadd.f32 0.0, %v1104
    %v1106 = vpop.f32.mrf.mxu0
    %1107 = vmatprep.mubr.f32.mxu0 %v422
    %1108 = vmatmul.mubr.f32.gmra.mxu0 %v421
    %v1109 = vpop.f32.mrf.mxu0
    %v1110 = vadd.f32 0.0, %v1109
    %v1111 = vpop.f32.mrf.mxu0
    %1112 = vmatprep.mubr.f32.mxu0 %v426
    %1113 = vmatmul.mubr.f32.gmra.mxu0 %v425
    %v1114 = vpop.f32.mrf.mxu0
    %v1115 = vadd.f32 0.0, %v1114
    %v1116 = vpop.f32.mrf.mxu0
    %1117 = vmatprep.mubr.f32.mxu0 %v430
    %1118 = vmatmul.mubr.f32.gmra.mxu0 %v429
    %v1119 = vpop.f32.mrf.mxu0
    %v1120 = vadd.f32 0.0, %v1119
    %v1121 = vpop.f32.mrf.mxu0
    %1122 = vmatprep.mubr.f32.mxu0 %v434
    %1123 = vmatmul.mubr.f32.gmra.mxu0 %v433
    %v1124 = vpop.f32.mrf.mxu0
    %v1125 = vadd.f32 0.0, %v1124
    %v1126 = vpop.f32.mrf.mxu0
    %1127 = vmatprep.mubr.f32.mxu0 %v438
    %1128 = vmatmul.mubr.f32.gmra.mxu0 %v437
    %v1129 = vpop.f32.mrf.mxu0
    %v1130 = vadd.f32 0.0, %v1129
    %v1131 = vpop.f32.mrf.mxu0
    %1132 = vmatprep.mubr.f32.mxu0 %v442
    %1133 = vmatmul.mubr.f32.gmra.mxu0 %v441
    %v1134 = vpop.f32.mrf.mxu0
    %v1135 = vadd.f32 0.0, %v1134
    %v1136 = vpop.f32.mrf.mxu0
    %1137 = vmatprep.mubr.f32.mxu0 %v446
    %1138 = vmatmul.mubr.f32.gmra.mxu0 %v445
    %v1139 = vpop.f32.mrf.mxu0
    %v1140 = vadd.f32 0.0, %v1139
    %v1141 = vpop.f32.mrf.mxu0
    %1142 = vmatprep.mubr.f32.mxu0 %v450
    %1143 = vmatmul.mubr.f32.gmra.mxu0 %v449
    %v1144 = vpop.f32.mrf.mxu0
    %v1145 = vadd.f32 0.0, %v1144
    %v1146 = vpop.f32.mrf.mxu0
    %1147 = vmatprep.mubr.f32.mxu0 %v454
    %1148 = vmatmul.mubr.f32.gmra.mxu0 %v453
    %v1149 = vpop.f32.mrf.mxu0
    %v1150 = vadd.f32 0.0, %v1149
    %v1151 = vpop.f32.mrf.mxu0
    %1152 = vmatprep.mubr.f32.mxu0 %v458
    %1153 = vmatmul.mubr.f32.gmra.mxu0 %v457
    %v1154 = vpop.f32.mrf.mxu0
    %v1155 = vadd.f32 0.0, %v1154
    %v1156 = vpop.f32.mrf.mxu0
    %1157 = vmatprep.mubr.f32.mxu0 %v462
    %1158 = vmatmul.mubr.f32.gmra.mxu0 %v461
    %v1159 = vpop.f32.mrf.mxu0
    %v1160 = vadd.f32 0.0, %v1159
    %v1161 = vpop.f32.mrf.mxu0
    %1162 = vmatprep.mubr.f32.mxu0 %v466
    %1163 = vmatmul.mubr.f32.gmra.mxu0 %v465
    %v1164 = vpop.f32.mrf.mxu0
    %v1165 = vadd.f32 0.0, %v1164
    %v1166 = vpop.f32.mrf.mxu0
    %1167 = vmatprep.mubr.f32.mxu0 %v470
    %1168 = vmatmul.mubr.f32.gmra.mxu0 %v469
    %v1169 = vpop.f32.mrf.mxu0
    %v1170 = vadd.f32 0.0, %v1169
    %v1171 = vpop.f32.mrf.mxu0
    %1172 = vmatprep.mubr.f32.mxu0 %v474
    %1173 = vmatmul.mubr.f32.gmra.mxu0 %v473
    %v1174 = vpop.f32.mrf.mxu0
    %v1175 = vadd.f32 0.0, %v1174
    %v1176 = vpop.f32.mrf.mxu0
    %1177 = vmatprep.mubr.f32.mxu0 %v478
    %1178 = vmatmul.mubr.f32.gmra.mxu0 %v477
    %v1179 = vpop.f32.mrf.mxu0
    %v1180 = vadd.f32 0.0, %v1179
    %v1181 = vpop.f32.mrf.mxu0
    %1182 = vmatprep.mubr.f32.mxu0 %v482
    %1183 = vmatmul.mubr.f32.gmra.mxu0 %v481
    %v1184 = vpop.f32.mrf.mxu0
    %v1185 = vadd.f32 0.0, %v1184
    %v1186 = vpop.f32.mrf.mxu0
    %1187 = vmatprep.mubr.f32.mxu0 %v486
    %1188 = vmatmul.mubr.f32.gmra.mxu0 %v485
    %v1189 = vpop.f32.mrf.mxu0
    %v1190 = vadd.f32 0.0, %v1189
    %v1191 = vpop.f32.mrf.mxu0
    %1192 = vmatprep.mubr.f32.mxu0 %v490
    %1193 = vmatmul.mubr.f32.gmra.mxu0 %v489
    %v1194 = vpop.f32.mrf.mxu0
    %v1195 = vadd.f32 0.0, %v1194
    %v1196 = vpop.f32.mrf.mxu0
    %1197 = vmatprep.mubr.f32.mxu0 %v494
    %1198 = vmatmul.mubr.f32.gmra.mxu0 %v493
    %v1199 = vpop.f32.mrf.mxu0
    %v1200 = vadd.f32 0.0, %v1199
    %v1201 = vpop.f32.mrf.mxu0
    %1202 = vmatprep.mubr.f32.mxu0 %v498
    %1203 = vmatmul.mubr.f32.gmra.mxu0 %v497
    %v1204 = vpop.f32.mrf.mxu0
    %v1205 = vadd.f32 0.0, %v1204
    %v1206 = vpop.f32.mrf.mxu0
    %1207 = vmatprep.mubr.f32.mxu0 %v502
    %1208 = vmatmul.mubr.f32.gmra.mxu0 %v501
    %v1209 = vpop.f32.mrf.mxu0
    %v1210 = vadd.f32 0.0, %v1209
    %v1211 = vpop.f32.mrf.mxu0
    %1212 = vmatprep.mubr.f32.mxu0 %v506
    %1213 = vmatmul.mubr.f32.gmra.mxu0 %v505
    %v1214 = vpop.f32.mrf.mxu0
    %v1215 = vadd.f32 0.0, %v1214
    %v1216 = vpop.f32.mrf.mxu0
    %1217 = vmatprep.mubr.f32.mxu0 %v510
    %1218 = vmatmul.mubr.f32.gmra.mxu0 %v509
    %v1219 = vpop.f32.mrf.mxu0
    %v1220 = vadd.f32 0.0, %v1219
    %v1221 = vpop.f32.mrf.mxu0
    %1222 = vmatprep.mubr.f32.mxu0 %v514
    %1223 = vmatmul.mubr.f32.gmra.mxu0 %v513
    %v1224 = vpop.f32.mrf.mxu0
    %v1225 = vadd.f32 0.0, %v1224
    %v1226 = vpop.f32.mrf.mxu0
    %1227 = vmatprep.mubr.f32.mxu0 %v518
    %1228 = vmatmul.mubr.f32.gmra.mxu0 %v517
    %v1229 = vpop.f32.mrf.mxu0
    %v1230 = vadd.f32 0.0, %v1229
    %v1231 = vpop.f32.mrf.mxu0
    %1232 = vmatprep.mubr.f32.mxu0 %v522
    %1233 = vmatmul.mubr.f32.gmra.mxu0 %v521
    %v1234 = vpop.f32.mrf.mxu0
    %v1235 = vadd.f32 0.0, %v1234
    %v1236 = vpop.f32.mrf.mxu0
    %1237 = vmatprep.mubr.f32.mxu0 %v526
    %1238 = vmatmul.mubr.f32.gmra.mxu0 %v525
    %v1239 = vpop.f32.mrf.mxu0
    %v1240 = vadd.f32 0.0, %v1239
    %v1241 = vpop.f32.mrf.mxu0
    %1242 = vmatprep.mubr.f32.mxu0 %v530
    %1243 = vmatmul.mubr.f32.gmra.mxu0 %v529
    %v1244 = vpop.f32.mrf.mxu0
    %v1245 = vadd.f32 0.0, %v1244
    %v1246 = vpop.f32.mrf.mxu0
    %1247 = vmatprep.mubr.f32.mxu0 %v534
    %1248 = vmatmul.mubr.f32.gmra.mxu0 %v533
    %v1249 = vpop.f32.mrf.mxu0
    %v1250 = vadd.f32 0.0, %v1249
    %v1251 = vpop.f32.mrf.mxu0
    %1252 = vmatprep.mubr.f32.mxu0 %v538
    %1253 = vmatmul.mubr.f32.gmra.mxu0 %v537
    %v1254 = vpop.f32.mrf.mxu0
    %v1255 = vadd.f32 0.0, %v1254
    %v1256 = vpop.f32.mrf.mxu0
    %1257 = vmatprep.mubr.f32.mxu0 %v542
    %1258 = vmatmul.mubr.f32.gmra.mxu0 %v541
    %v1259 = vpop.f32.mrf.mxu0
    %v1260 = vadd.f32 0.0, %v1259
    %v1261 = vpop.f32.mrf.mxu0
    %1262 = vmatprep.mubr.f32.mxu0 %v546
    %1263 = vmatmul.mubr.f32.gmra.mxu0 %v545
    %v1264 = vpop.f32.mrf.mxu0
    %v1265 = vadd.f32 0.0, %v1264
    %v1266 = vpop.f32.mrf.mxu0
    %1267 = vmatprep.mubr.f32.mxu0 %v550
    %1268 = vmatmul.mubr.f32.gmra.mxu0 %v549
    %v1269 = vpop.f32.mrf.mxu0
    %v1270 = vadd.f32 0.0, %v1269
    %v1271 = vpop.f32.mrf.mxu0
    %1272 = vmatprep.mubr.f32.mxu0 %v554
    %1273 = vmatmul.mubr.f32.gmra.mxu0 %v553
    %v1274 = vpop.f32.mrf.mxu0
    %v1275 = vadd.f32 0.0, %v1274
    %v1276 = vpop.f32.mrf.mxu0
    %1277 = vmatprep.mubr.f32.mxu0 %v558
    %1278 = vmatmul.mubr.f32.gmra.mxu0 %v557
    %v1279 = vpop.f32.mrf.mxu0
    %v1280 = vadd.f32 0.0, %v1279
    %v1281 = vpop.f32.mrf.mxu0
    %1282 = vmatprep.mubr.f32.mxu0 %v562
    %1283 = vmatmul.mubr.f32.gmra.mxu0 %v561
    %v1284 = vpop.f32.mrf.mxu0
    %v1285 = vadd.f32 0.0, %v1284
    %v1286 = vpop.f32.mrf.mxu0
    %1287 = vmatprep.mubr.f32.mxu0 %v566
    %1288 = vmatmul.mubr.f32.gmra.mxu0 %v565
    %v1289 = vpop.f32.mrf.mxu0
    %v1290 = vadd.f32 0.0, %v1289
    %v1291 = vpop.f32.mrf.mxu0
    %1292 = vmatprep.mubr.f32.mxu0 %v570
    %1293 = vmatmul.mubr.f32.gmra.mxu0 %v569
    %v1294 = vpop.f32.mrf.mxu0
    %v1295 = vadd.f32 0.0, %v1294
    %v1296 = vpop.f32.mrf.mxu0
    %1297 = vmatprep.mubr.f32.mxu0 %v574
    %1298 = vmatmul.mubr.f32.gmra.mxu0 %v573
    %v1299 = vpop.f32.mrf.mxu0
    %v1300 = vadd.f32 0.0, %v1299
    %v1301 = vpop.f32.mrf.mxu0
    %1302 = vmatprep.mubr.f32.mxu0 %v578
    %1303 = vmatmul.mubr.f32.gmra.mxu0 %v577
    %v1304 = vpop.f32.mrf.mxu0
    %v1305 = vadd.f32 0.0, %v1304
    %v1306 = vpop.f32.mrf.mxu0
    %1307 = vmatprep.mubr.f32.mxu0 %v582
    %1308 = vmatmul.mubr.f32.gmra.mxu0 %v581
    %v1309 = vpop.f32.mrf.mxu0
    %v1310 = vadd.f32 0.0, %v1309
    %v1311 = vpop.f32.mrf.mxu0
    %1312 = vmatprep.mubr.f32.mxu0 %v586
    %1313 = vmatmul.mubr.f32.gmra.mxu0 %v585
    %v1314 = vpop.f32.mrf.mxu0
    %v1315 = vadd.f32 0.0, %v1314
    %v1316 = vpop.f32.mrf.mxu0
    %1317 = vmatprep.mubr.f32.mxu0 %v590
    %1318 = vmatmul.mubr.f32.gmra.mxu0 %v589
    %v1319 = vpop.f32.mrf.mxu0
    %v1320 = vadd.f32 0.0, %v1319
    %v1321 = vpop.f32.mrf.mxu0
    %1322 = vmatprep.mubr.f32.mxu0 %v594
    %1323 = vmatmul.mubr.f32.gmra.mxu0 %v593
    %v1324 = vpop.f32.mrf.mxu0
    %v1325 = vadd.f32 0.0, %v1324
    %v1326 = vpop.f32.mrf.mxu0
    %1327 = vmatprep.mubr.f32.mxu0 %v598
    %1328 = vmatmul.mubr.f32.gmra.mxu0 %v597
    %v1329 = vpop.f32.mrf.mxu0
    %v1330 = vadd.f32 0.0, %v1329
    %v1331 = vpop.f32.mrf.mxu0
    %1332 = vmatprep.mubr.f32.mxu0 %v602
    %1333 = vmatmul.mubr.f32.gmra.mxu0 %v601
    %v1334 = vpop.f32.mrf.mxu0
    %v1335 = vadd.f32 0.0, %v1334
    %v1336 = vpop.f32.mrf.mxu0
    %1337 = vmatprep.mubr.f32.mxu0 %v606
    %1338 = vmatmul.mubr.f32.gmra.mxu0 %v605
    %v1339 = vpop.f32.mrf.mxu0
    %v1340 = vadd.f32 0.0, %v1339
    %v1341 = vpop.f32.mrf.mxu0
    %1342 = vmatprep.mubr.f32.mxu0 %v610
    %1343 = vmatmul.mubr.f32.gmra.mxu0 %v609
    %v1344 = vpop.f32.mrf.mxu0
    %v1345 = vadd.f32 0.0, %v1344
    %v1346 = vpop.f32.mrf.mxu0
    %1347 = vmatprep.mubr.f32.mxu0 %v614
    %1348 = vmatmul.mubr.f32.gmra.mxu0 %v613
    %v1349 = vpop.f32.mrf.mxu0
    %v1350 = vadd.f32 0.0, %v1349
    %v1351 = vpop.f32.mrf.mxu0
    %1352 = vmatprep.mubr.f32.mxu0 %v618
    %1353 = vmatmul.mubr.f32.gmra.mxu0 %v617
    %v1354 = vpop.f32.mrf.mxu0
    %v1355 = vadd.f32 0.0, %v1354
    %v1356 = vpop.f32.mrf.mxu0
    %1357 = vmatprep.mubr.f32.mxu0 %v622
    %1358 = vmatmul.mubr.f32.gmra.mxu0 %v621
    %v1359 = vpop.f32.mrf.mxu0
    %v1360 = vadd.f32 0.0, %v1359
    %v1361 = vpop.f32.mrf.mxu0
    %1362 = vmatprep.mubr.f32.mxu0 %v626
    %1363 = vmatmul.mubr.f32.gmra.mxu0 %v625
    %v1364 = vpop.f32.mrf.mxu0
    %v1365 = vadd.f32 0.0, %v1364
    %v1366 = vpop.f32.mrf.mxu0
    %1367 = vmatprep.mubr.f32.mxu0 %v630
    %1368 = vmatmul.mubr.f32.gmra.mxu0 %v629
    %v1369 = vpop.f32.mrf.mxu0
    %v1370 = vadd.f32 0.0, %v1369
    %v1371 = vpop.f32.mrf.mxu0
    %1372 = vmatprep.mubr.f32.mxu0 %v634
    %1373 = vmatmul.mubr.f32.gmra.mxu0 %v633
    %v1374 = vpop.f32.mrf.mxu0
    %v1375 = vadd.f32 0.0, %v1374
    %v1376 = vpop.f32.mrf.mxu0
    %1377 = vmatprep.mubr.f32.mxu0 %v638
    %1378 = vmatmul.mubr.f32.gmra.mxu0 %v637
    %v1379 = vpop.f32.mrf.mxu0
    %v1380 = vadd.f32 0.0, %v1379
    %v1381 = vpop.f32.mrf.mxu0
    %1382 = vmatprep.mubr.f32.mxu0 %v642
    %1383 = vmatmul.mubr.f32.gmra.mxu0 %v641
    %v1384 = vpop.f32.mrf.mxu0
    %v1385 = vadd.f32 0.0, %v1384
    %v1386 = vpop.f32.mrf.mxu0
    %1387 = vmatprep.mubr.f32.mxu0 %v646
    %1388 = vmatmul.mubr.f32.gmra.mxu0 %v645
    %v1389 = vpop.f32.mrf.mxu0
    %v1390 = vadd.f32 0.0, %v1389
    %v1391 = vpop.f32.mrf.mxu0
    %1392 = vmatprep.mubr.f32.mxu0 %v650
    %1393 = vmatmul.mubr.f32.gmra.mxu0 %v649
    %v1394 = vpop.f32.mrf.mxu0
    %v1395 = vadd.f32 0.0, %v1394
    %v1396 = vpop.f32.mrf.mxu0
    %1397 = vmatprep.mubr.f32.mxu0 %v654
    %1398 = vmatmul.mubr.f32.gmra.mxu0 %v653
    %v1399 = vpop.f32.mrf.mxu0
    %v1400 = vadd.f32 0.0, %v1399
    %v1401 = vpop.f32.mrf.mxu0
    %1402 = vmatprep.mubr.f32.mxu0 %v658
    %1403 = vmatmul.mubr.f32.gmra.mxu0 %v657
    %v1404 = vpop.f32.mrf.mxu0
    %v1405 = vadd.f32 0.0, %v1404
    %v1406 = vpop.f32.mrf.mxu0
    %1407 = vmatprep.mubr.f32.mxu0 %v662
    %1408 = vmatmul.mubr.f32.gmra.mxu0 %v661
    %v1409 = vpop.f32.mrf.mxu0
    %v1410 = vadd.f32 0.0, %v1409
    %v1411 = vpop.f32.mrf.mxu0
    %1412 = vmatprep.mubr.f32.mxu0 %v666
    %1413 = vmatmul.mubr.f32.gmra.mxu0 %v665
    %v1414 = vpop.f32.mrf.mxu0
    %v1415 = vadd.f32 0.0, %v1414
    %v1416 = vpop.f32.mrf.mxu0
    %1417 = vmatprep.mubr.f32.mxu0 %v670
    %1418 = vmatmul.mubr.f32.gmra.mxu0 %v669
    %v1419 = vpop.f32.mrf.mxu0
    %v1420 = vadd.f32 0.0, %v1419
    %v1421 = vpop.f32.mrf.mxu0
    %1422 = vmatprep.mubr.f32.mxu0 %v674
    %1423 = vmatmul.mubr.f32.gmra.mxu0 %v673
    %v1424 = vpop.f32.mrf.mxu0
    %v1425 = vadd.f32 0.0, %v1424
    %v1426 = vpop.f32.mrf.mxu0
    %1427 = vmatprep.mubr.f32.mxu0 %v678
    %1428 = vmatmul.mubr.f32.gmra.mxu0 %v677
    %v1429 = vpop.f32.mrf.mxu0
    %v1430 = vadd.f32 0.0, %v1429
    %v1431 = vpop.f32.mrf.mxu0
    %1432 = vmatprep.mubr.f32.mxu0 %v682
    %1433 = vmatmul.mubr.f32.gmra.mxu0 %v681
    %v1434 = vpop.f32.mrf.mxu0
    %v1435 = vadd.f32 0.0, %v1434
    %v1436 = vpop.f32.mrf.mxu0
    %1437 = vmatprep.mubr.f32.mxu0 %v686
    %1438 = vmatmul.mubr.f32.gmra.mxu0 %v685
    %v1439 = vpop.f32.mrf.mxu0
    %v1440 = vadd.f32 0.0, %v1439
    %v1441 = vpop.f32.mrf.mxu0
    %1442 = vmatprep.mubr.f32.mxu0 %v690
    %1443 = vmatmul.mubr.f32.gmra.mxu0 %v689
    %v1444 = vpop.f32.mrf.mxu0
    %v1445 = vadd.f32 0.0, %v1444
    %v1446 = vpop.f32.mrf.mxu0
    %1447 = vmatprep.mubr.f32.mxu0 %v694
    %1448 = vmatmul.mubr.f32.gmra.mxu0 %v693
    %v1449 = vpop.f32.mrf.mxu0
    %v1450 = vadd.f32 0.0, %v1449
    %v1451 = vpop.f32.mrf.mxu0
    %1452 = vmatprep.mubr.f32.mxu0 %v698
    %1453 = vmatmul.mubr.f32.gmra.mxu0 %v697
    %v1454 = vpop.f32.mrf.mxu0
    %v1455 = vadd.f32 0.0, %v1454
    %v1456 = vpop.f32.mrf.mxu0
    %1457 = vmatprep.mubr.f32.mxu0 %v702
    %1458 = vmatmul.mubr.f32.gmra.mxu0 %v701
    %v1459 = vpop.f32.mrf.mxu0
    %v1460 = vadd.f32 0.0, %v1459
    %v1461 = vpop.f32.mrf.mxu0
    %1462 = vmatprep.mubr.f32.mxu0 %v706
    %1463 = vmatmul.mubr.f32.gmra.mxu0 %v705
    %v1464 = vpop.f32.mrf.mxu0
    %v1465 = vadd.f32 0.0, %v1464
    %v1466 = vpop.f32.mrf.mxu0
    %1467 = vmatprep.mubr.f32.mxu0 %v710
    %1468 = vmatmul.mubr.f32.gmra.mxu0 %v709
    %v1469 = vpop.f32.mrf.mxu0
    %v1470 = vadd.f32 0.0, %v1469
    %v1471 = vpop.f32.mrf.mxu0
    %1472 = vmatprep.mubr.f32.mxu0 %v714
    %1473 = vmatmul.mubr.f32.gmra.mxu0 %v713
    %v1474 = vpop.f32.mrf.mxu0
    %v1475 = vadd.f32 0.0, %v1474
    %v1476 = vpop.f32.mrf.mxu0
    %1477 = vmatprep.mubr.f32.mxu0 %v718
    %1478 = vmatmul.mubr.f32.gmra.mxu0 %v717
    %v1479 = vpop.f32.mrf.mxu0
    %v1480 = vadd.f32 0.0, %v1479
    %v1481 = vpop.f32.mrf.mxu0
    %1482 = vmatprep.mubr.f32.mxu0 %v722
    %1483 = vmatmul.mubr.f32.gmra.mxu0 %v721
    %v1484 = vpop.f32.mrf.mxu0
    %v1485 = vadd.f32 0.0, %v1484
    %v1486 = vpop.f32.mrf.mxu0
    %1487 = vmatprep.mubr.f32.mxu0 %v726
    %1488 = vmatmul.mubr.f32.gmra.mxu0 %v725
    %v1489 = vpop.f32.mrf.mxu0
    %v1490 = vadd.f32 0.0, %v1489
    %v1491 = vpop.f32.mrf.mxu0
    %1492 = vmatprep.mubr.f32.mxu0 %v730
    %1493 = vmatmul.mubr.f32.gmra.mxu0 %v729
    %v1494 = vpop.f32.mrf.mxu0
    %v1495 = vadd.f32 0.0, %v1494
    %v1496 = vpop.f32.mrf.mxu0
    %1497 = vmatprep.mubr.f32.mxu0 %v734
    %1498 = vmatmul.mubr.f32.gmra.mxu0 %v733
    %v1499 = vpop.f32.mrf.mxu0
    %v1500 = vadd.f32 0.0, %v1499
    %v1501 = vpop.f32.mrf.mxu0
    %1502 = vmatprep.mubr.f32.mxu0 %v738
    %1503 = vmatmul.mubr.f32.gmra.mxu0 %v737
    %v1504 = vpop.f32.mrf.mxu0
    %v1505 = vadd.f32 0.0, %v1504
    %v1506 = vpop.f32.mrf.mxu0
    %1507 = vmatprep.mubr.f32.mxu0 %v742
    %1508 = vmatmul.mubr.f32.gmra.mxu0 %v741
    %v1509 = vpop.f32.mrf.mxu0
    %v1510 = vadd.f32 0.0, %v1509
    %v1511 = vpop.f32.mrf.mxu0
    %1512 = vmatprep.mubr.f32.mxu0 %v746
    %1513 = vmatmul.mubr.f32.gmra.mxu0 %v745
    %v1514 = vpop.f32.mrf.mxu0
    %v1515 = vadd.f32 0.0, %v1514
    %v1516 = vpop.f32.mrf.mxu0
    %1517 = vmatprep.mubr.f32.mxu0 %v750
    %1518 = vmatmul.mubr.f32.gmra.mxu0 %v749
    %v1519 = vpop.f32.mrf.mxu0
    %v1520 = vadd.f32 0.0, %v1519
    %v1521 = vpop.f32.mrf.mxu0
    %1522 = vmatprep.mubr.f32.mxu0 %v754
    %1523 = vmatmul.mubr.f32.gmra.mxu0 %v753
    %v1524 = vpop.f32.mrf.mxu0
    %v1525 = vadd.f32 0.0, %v1524
    %v1526 = vpop.f32.mrf.mxu0
    %1527 = vmatprep.mubr.f32.mxu0 %v758
    %1528 = vmatmul.mubr.f32.gmra.mxu0 %v757
    %v1529 = vpop.f32.mrf.mxu0
    %v1530 = vadd.f32 0.0, %v1529
    %v1531 = vpop.f32.mrf.mxu0
    %1532 = vmatprep.mubr.f32.mxu0 %v762
    %1533 = vmatmul.mubr.f32.gmra.mxu0 %v761
    %v1534 = vpop.f32.mrf.mxu0
    %v1535 = vadd.f32 0.0, %v1534
    %v1536 = vpop.f32.mrf.mxu0
    %1537 = vmatprep.mubr.f32.mxu0 %v766
    %1538 = vmatmul.mubr.f32.gmra.mxu0 %v765
    %v1539 = vpop.f32.mrf.mxu0
    %v1540 = vadd.f32 0.0, %v1539
    %v1541 = vpop.f32.mrf.mxu0
    %1542 = vmatprep.mubr.f32.mxu0 %v770
    %1543 = vmatmul.mubr.f32.gmra.mxu0 %v769
    %v1544 = vpop.f32.mrf.mxu0
    %v1545 = vadd.f32 0.0, %v1544
    %v1546 = vpop.f32.mrf.mxu0
    %1547 = vmatprep.mubr.f32.mxu0 %v774
    %1548 = vmatmul.mubr.f32.gmra.mxu0 %v773
    %v1549 = vpop.f32.mrf.mxu0
    %v1550 = vadd.f32 0.0, %v1549
    %v1551 = vpop.f32.mrf.mxu0
    %1552 = vmatprep.mubr.f32.mxu0 %v778
    %1553 = vmatmul.mubr.f32.gmra.mxu0 %v777
    %v1554 = vpop.f32.mrf.mxu0
    %v1555 = vadd.f32 0.0, %v1554
    %v1556 = vpop.f32.mrf.mxu0
    %1557 = vmatprep.mubr.f32.mxu0 %v782
    %1558 = vmatmul.mubr.f32.gmra.mxu0 %v781
    %v1559 = vpop.f32.mrf.mxu0
    %v1560 = vadd.f32 0.0, %v1559
    %v1561 = vpop.f32.mrf.mxu0
    %1562 = vmatprep.mubr.f32.mxu0 %v786
    %1563 = vmatmul.mubr.f32.gmra.mxu0 %v785
    %v1564 = vpop.f32.mrf.mxu0
    %v1565 = vadd.f32 0.0, %v1564
    %v1566 = vpop.f32.mrf.mxu0
    %1567 = vmatprep.mubr.f32.mxu0 %v790
    %1568 = vmatmul.mubr.f32.gmra.mxu0 %v789
    %v1569 = vpop.f32.mrf.mxu0
    %v1570 = vadd.f32 0.0, %v1569
    %v1571 = vpop.f32.mrf.mxu0
    %1572 = vmatprep.mubr.f32.mxu0 %v794
    %1573 = vmatmul.mubr.f32.gmra.mxu0 %v793
    %v1574 = vpop.f32.mrf.mxu0
    %v1575 = vadd.f32 0.0, %v1574
    %v1576 = vpop.f32.mrf.mxu0
    %1577 = vmatprep.mubr.f32.mxu0 %v798
    %1578 = vmatmul.mubr.f32.gmra.mxu0 %v797
    %v1579 = vpop.f32.mrf.mxu0
    %v1580 = vadd.f32 0.0, %v1579
    %v1581 = vpop.f32.mrf.mxu0
    %1582 = vmatprep.mubr.f32.mxu0 %v802
    %1583 = vmatmul.mubr.f32.gmra.mxu0 %v801
    %v1584 = vpop.f32.mrf.mxu0
    %v1585 = vadd.f32 0.0, %v1584
    %v1586 = vpop.f32.mrf.mxu0
    %1587 = vmatprep.mubr.f32.mxu0 %v806
    %1588 = vmatmul.mubr.f32.gmra.mxu0 %v805
    %v1589 = vpop.f32.mrf.mxu0
    %v1590 = vadd.f32 0.0, %v1589
    %v1591 = vpop.f32.mrf.mxu0
    %1592 = vmatprep.mubr.f32.mxu0 %v810
    %1593 = vmatmul.mubr.f32.gmra.mxu0 %v809
    %v1594 = vpop.f32.mrf.mxu0
    %v1595 = vadd.f32 0.0, %v1594
    %v1596 = vpop.f32.mrf.mxu0
    %1597 = vdwg.mxu0
    %1598 = vmatprep.subr.mxu0 0.0
    %1599 = vmatpush1.msra.mxu0 %v220
    %1600 = vmatprep.subr.mxu0 0.0
    %1601 = vmatpush1.msra.mxu0 %v219
    %1602 = vmatprep.subr.mxu0 0.0
    %1603 = vmatpush1.msra.mxu0 %v218
    %1604 = vmatprep.subr.mxu0 0.0
    %1605 = vmatpush1.msra.mxu0 %v217
    %1606 = vmatprep.subr.mxu0 0.0
    %1607 = vmatpush1.msra.mxu0 %v216
    %1608 = vmatprep.subr.mxu0 0.0
    %1609 = vmatpush1.msra.mxu0 %v215
    %1610 = vmatprep.subr.mxu0 0.0
    %1611 = vmatpush1.msra.mxu0 %v214
    %1612 = vmatprep.subr.mxu0 0.0
    %1613 = vmatpush1.msra.mxu0 %v213
    %1614 = vmatprep.subr.mxu0 0.0
    %1615 = vmatpush1.msra.mxu0 %v212
    %1616 = vmatprep.subr.mxu0 0.0
    %1617 = vmatpush1.msra.mxu0 %v211
    %1618 = vmatprep.subr.mxu0 0.0
    %1619 = vmatpush1.msra.mxu0 %v210
    %1620 = vmatprep.subr.mxu0 0.0
    %1621 = vmatpush1.msra.mxu0 %v209
    %1622 = vmatprep.subr.mxu0 0.0
    %1623 = vmatpush1.msra.mxu0 %v208
    %1624 = vmatprep.subr.mxu0 0.0
    %1625 = vmatpush1.msra.mxu0 %v207
    %1626 = vmatprep.subr.mxu0 0.0
    %1627 = vmatpush1.msra.mxu0 %v206
    %1628 = vmatprep.subr.mxu0 0.0
    %1629 = vmatpush1.msra.mxu0 %v205
    %1630 = vmatprep.subr.mxu0 0.0
    %1631 = vmatpush2.msra.mxu0 %v236
    %1632 = vmatprep.subr.mxu0 0.0
    %1633 = vmatpush2.msra.mxu0 %v235
    %1634 = vmatprep.subr.mxu0 0.0
    %1635 = vmatpush2.msra.mxu0 %v234
    %1636 = vmatprep.subr.mxu0 0.0
    %1637 = vmatpush2.msra.mxu0 %v233
    %1638 = vmatprep.subr.mxu0 0.0
    %1639 = vmatpush2.msra.mxu0 %v232
    %1640 = vmatprep.subr.mxu0 0.0
    %1641 = vmatpush2.msra.mxu0 %v231
    %1642 = vmatprep.subr.mxu0 0.0
    %1643 = vmatpush2.msra.mxu0 %v230
    %1644 = vmatprep.subr.mxu0 0.0
    %1645 = vmatpush2.msra.mxu0 %v229
    %1646 = vmatprep.subr.mxu0 0.0
    %1647 = vmatpush2.msra.mxu0 %v228
    %1648 = vmatprep.subr.mxu0 0.0
    %1649 = vmatpush2.msra.mxu0 %v227
    %1650 = vmatprep.subr.mxu0 0.0
    %1651 = vmatpush2.msra.mxu0 %v226
    %1652 = vmatprep.subr.mxu0 0.0
    %1653 = vmatpush2.msra.mxu0 %v225
    %1654 = vmatprep.subr.mxu0 0.0
    %1655 = vmatpush2.msra.mxu0 %v224
    %1656 = vmatprep.subr.mxu0 0.0
    %1657 = vmatpush2.msra.mxu0 %v223
    %1658 = vmatprep.subr.mxu0 0.0
    %1659 = vmatpush2.msra.mxu0 %v222
    %1660 = vmatprep.subr.mxu0 0.0
    %1661 = vmatpush2.msra.mxu0 %v221
    %1662 = vmatprep.mubr.f32.mxu0 %v240
    %1663 = vmatmul.mubr.f32.gmra.mxu0 %v239
    %v1664 = vpop.f32.mrf.mxu0
    %v1665 = vadd.f32 %v880, %v1664
    %v1666 = vpop.f32.mrf.mxu0
    %1667 = vmatprep.mubr.f32.mxu0 %v244
    %1668 = vmatmul.mubr.f32.gmra.mxu0 %v243
    %v1669 = vpop.f32.mrf.mxu0
    %v1670 = vadd.f32 %v885, %v1669
    %v1671 = vpop.f32.mrf.mxu0
    %1672 = vmatprep.mubr.f32.mxu0 %v248
    %1673 = vmatmul.mubr.f32.gmra.mxu0 %v247
    %v1674 = vpop.f32.mrf.mxu0
    %v1675 = vadd.f32 %v890, %v1674
    %v1676 = vpop.f32.mrf.mxu0
    %1677 = vmatprep.mubr.f32.mxu0 %v252
    %1678 = vmatmul.mubr.f32.gmra.mxu0 %v251
    %v1679 = vpop.f32.mrf.mxu0
    %v1680 = vadd.f32 %v895, %v1679
    %v1681 = vpop.f32.mrf.mxu0
    %1682 = vmatprep.mubr.f32.mxu0 %v256
    %1683 = vmatmul.mubr.f32.gmra.mxu0 %v255
    %v1684 = vpop.f32.mrf.mxu0
    %v1685 = vadd.f32 %v900, %v1684
    %v1686 = vpop.f32.mrf.mxu0
    %1687 = vmatprep.mubr.f32.mxu0 %v260
    %1688 = vmatmul.mubr.f32.gmra.mxu0 %v259
    %v1689 = vpop.f32.mrf.mxu0
    %v1690 = vadd.f32 %v905, %v1689
    %v1691 = vpop.f32.mrf.mxu0
    %1692 = vmatprep.mubr.f32.mxu0 %v264
    %1693 = vmatmul.mubr.f32.gmra.mxu0 %v263
    %v1694 = vpop.f32.mrf.mxu0
    %v1695 = vadd.f32 %v910, %v1694
    %v1696 = vpop.f32.mrf.mxu0
    %1697 = vmatprep.mubr.f32.mxu0 %v268
    %1698 = vmatmul.mubr.f32.gmra.mxu0 %v267
    %v1699 = vpop.f32.mrf.mxu0
    %v1700 = vadd.f32 %v915, %v1699
    %v1701 = vpop.f32.mrf.mxu0
    %1702 = vmatprep.mubr.f32.mxu0 %v272
    %1703 = vmatmul.mubr.f32.gmra.mxu0 %v271
    %v1704 = vpop.f32.mrf.mxu0
    %v1705 = vadd.f32 %v920, %v1704
    %v1706 = vpop.f32.mrf.mxu0
    %1707 = vmatprep.mubr.f32.mxu0 %v276
    %1708 = vmatmul.mubr.f32.gmra.mxu0 %v275
    %v1709 = vpop.f32.mrf.mxu0
    %v1710 = vadd.f32 %v925, %v1709
    %v1711 = vpop.f32.mrf.mxu0
    %1712 = vmatprep.mubr.f32.mxu0 %v280
    %1713 = vmatmul.mubr.f32.gmra.mxu0 %v279
    %v1714 = vpop.f32.mrf.mxu0
    %v1715 = vadd.f32 %v930, %v1714
    %v1716 = vpop.f32.mrf.mxu0
    %1717 = vmatprep.mubr.f32.mxu0 %v284
    %1718 = vmatmul.mubr.f32.gmra.mxu0 %v283
    %v1719 = vpop.f32.mrf.mxu0
    %v1720 = vadd.f32 %v935, %v1719
    %v1721 = vpop.f32.mrf.mxu0
    %1722 = vmatprep.mubr.f32.mxu0 %v288
    %1723 = vmatmul.mubr.f32.gmra.mxu0 %v287
    %v1724 = vpop.f32.mrf.mxu0
    %v1725 = vadd.f32 %v940, %v1724
    %v1726 = vpop.f32.mrf.mxu0
    %1727 = vmatprep.mubr.f32.mxu0 %v292
    %1728 = vmatmul.mubr.f32.gmra.mxu0 %v291
    %v1729 = vpop.f32.mrf.mxu0
    %v1730 = vadd.f32 %v945, %v1729
    %v1731 = vpop.f32.mrf.mxu0
    %1732 = vmatprep.mubr.f32.mxu0 %v296
    %1733 = vmatmul.mubr.f32.gmra.mxu0 %v295
    %v1734 = vpop.f32.mrf.mxu0
    %v1735 = vadd.f32 %v950, %v1734
    %v1736 = vpop.f32.mrf.mxu0
    %1737 = vmatprep.mubr.f32.mxu0 %v300
    %1738 = vmatmul.mubr.f32.gmra.mxu0 %v299
    %v1739 = vpop.f32.mrf.mxu0
    %v1740 = vadd.f32 %v955, %v1739
    %v1741 = vpop.f32.mrf.mxu0
    %1742 = vmatprep.mubr.f32.mxu0 %v304
    %1743 = vmatmul.mubr.f32.gmra.mxu0 %v303
    %v1744 = vpop.f32.mrf.mxu0
    %v1745 = vadd.f32 %v960, %v1744
    %v1746 = vpop.f32.mrf.mxu0
    %1747 = vmatprep.mubr.f32.mxu0 %v308
    %1748 = vmatmul.mubr.f32.gmra.mxu0 %v307
    %v1749 = vpop.f32.mrf.mxu0
    %v1750 = vadd.f32 %v965, %v1749
    %v1751 = vpop.f32.mrf.mxu0
    %1752 = vmatprep.mubr.f32.mxu0 %v312
    %1753 = vmatmul.mubr.f32.gmra.mxu0 %v311
    %v1754 = vpop.f32.mrf.mxu0
    %v1755 = vadd.f32 %v970, %v1754
    %v1756 = vpop.f32.mrf.mxu0
    %1757 = vmatprep.mubr.f32.mxu0 %v316
    %1758 = vmatmul.mubr.f32.gmra.mxu0 %v315
    %v1759 = vpop.f32.mrf.mxu0
    %v1760 = vadd.f32 %v975, %v1759
    %v1761 = vpop.f32.mrf.mxu0
    %1762 = vmatprep.mubr.f32.mxu0 %v320
    %1763 = vmatmul.mubr.f32.gmra.mxu0 %v319
    %v1764 = vpop.f32.mrf.mxu0
    %v1765 = vadd.f32 %v980, %v1764
    %v1766 = vpop.f32.mrf.mxu0
    %1767 = vmatprep.mubr.f32.mxu0 %v324
    %1768 = vmatmul.mubr.f32.gmra.mxu0 %v323
    %v1769 = vpop.f32.mrf.mxu0
    %v1770 = vadd.f32 %v985, %v1769
    %v1771 = vpop.f32.mrf.mxu0
    %1772 = vmatprep.mubr.f32.mxu0 %v328
    %1773 = vmatmul.mubr.f32.gmra.mxu0 %v327
    %v1774 = vpop.f32.mrf.mxu0
    %v1775 = vadd.f32 %v990, %v1774
    %v1776 = vpop.f32.mrf.mxu0
    %1777 = vmatprep.mubr.f32.mxu0 %v332
    %1778 = vmatmul.mubr.f32.gmra.mxu0 %v331
    %v1779 = vpop.f32.mrf.mxu0
    %v1780 = vadd.f32 %v995, %v1779
    %v1781 = vpop.f32.mrf.mxu0
    %1782 = vmatprep.mubr.f32.mxu0 %v336
    %1783 = vmatmul.mubr.f32.gmra.mxu0 %v335
    %v1784 = vpop.f32.mrf.mxu0
    %v1785 = vadd.f32 %v1000, %v1784
    %v1786 = vpop.f32.mrf.mxu0
    %1787 = vmatprep.mubr.f32.mxu0 %v340
    %1788 = vmatmul.mubr.f32.gmra.mxu0 %v339
    %v1789 = vpop.f32.mrf.mxu0
    %v1790 = vadd.f32 %v1005, %v1789
    %v1791 = vpop.f32.mrf.mxu0
    %1792 = vmatprep.mubr.f32.mxu0 %v344
    %1793 = vmatmul.mubr.f32.gmra.mxu0 %v343
    %v1794 = vpop.f32.mrf.mxu0
    %v1795 = vadd.f32 %v1010, %v1794
    %v1796 = vpop.f32.mrf.mxu0
    %1797 = vmatprep.mubr.f32.mxu0 %v348
    %1798 = vmatmul.mubr.f32.gmra.mxu0 %v347
    %v1799 = vpop.f32.mrf.mxu0
    %v1800 = vadd.f32 %v1015, %v1799
    %v1801 = vpop.f32.mrf.mxu0
    %1802 = vmatprep.mubr.f32.mxu0 %v352
    %1803 = vmatmul.mubr.f32.gmra.mxu0 %v351
    %v1804 = vpop.f32.mrf.mxu0
    %v1805 = vadd.f32 %v1020, %v1804
    %v1806 = vpop.f32.mrf.mxu0
    %1807 = vmatprep.mubr.f32.mxu0 %v356
    %1808 = vmatmul.mubr.f32.gmra.mxu0 %v355
    %v1809 = vpop.f32.mrf.mxu0
    %v1810 = vadd.f32 %v1025, %v1809
    %v1811 = vpop.f32.mrf.mxu0
    %1812 = vmatprep.mubr.f32.mxu0 %v360
    %1813 = vmatmul.mubr.f32.gmra.mxu0 %v359
    %v1814 = vpop.f32.mrf.mxu0
    %v1815 = vadd.f32 %v1030, %v1814
    %v1816 = vpop.f32.mrf.mxu0
    %1817 = vmatprep.mubr.f32.mxu0 %v364
    %1818 = vmatmul.mubr.f32.gmra.mxu0 %v363
    %v1819 = vpop.f32.mrf.mxu0
    %v1820 = vadd.f32 %v1035, %v1819
    %v1821 = vpop.f32.mrf.mxu0
    %1822 = vmatprep.mubr.f32.mxu0 %v368
    %1823 = vmatmul.mubr.f32.gmra.mxu0 %v367
    %v1824 = vpop.f32.mrf.mxu0
    %v1825 = vadd.f32 %v1040, %v1824
    %v1826 = vpop.f32.mrf.mxu0
    %1827 = vmatprep.mubr.f32.mxu0 %v372
    %1828 = vmatmul.mubr.f32.gmra.mxu0 %v371
    %v1829 = vpop.f32.mrf.mxu0
    %v1830 = vadd.f32 %v1045, %v1829
    %v1831 = vpop.f32.mrf.mxu0
    %1832 = vmatprep.mubr.f32.mxu0 %v376
    %1833 = vmatmul.mubr.f32.gmra.mxu0 %v375
    %v1834 = vpop.f32.mrf.mxu0
    %v1835 = vadd.f32 %v1050, %v1834
    %v1836 = vpop.f32.mrf.mxu0
    %1837 = vmatprep.mubr.f32.mxu0 %v380
    %1838 = vmatmul.mubr.f32.gmra.mxu0 %v379
    %v1839 = vpop.f32.mrf.mxu0
    %v1840 = vadd.f32 %v1055, %v1839
    %v1841 = vpop.f32.mrf.mxu0
    %1842 = vmatprep.mubr.f32.mxu0 %v384
    %1843 = vmatmul.mubr.f32.gmra.mxu0 %v383
    %v1844 = vpop.f32.mrf.mxu0
    %v1845 = vadd.f32 %v1060, %v1844
    %v1846 = vpop.f32.mrf.mxu0
    %1847 = vmatprep.mubr.f32.mxu0 %v388
    %1848 = vmatmul.mubr.f32.gmra.mxu0 %v387
    %v1849 = vpop.f32.mrf.mxu0
    %v1850 = vadd.f32 %v1065, %v1849
    %v1851 = vpop.f32.mrf.mxu0
    %1852 = vmatprep.mubr.f32.mxu0 %v392
    %1853 = vmatmul.mubr.f32.gmra.mxu0 %v391
    %v1854 = vpop.f32.mrf.mxu0
    %v1855 = vadd.f32 %v1070, %v1854
    %v1856 = vpop.f32.mrf.mxu0
    %1857 = vmatprep.mubr.f32.mxu0 %v396
    %1858 = vmatmul.mubr.f32.gmra.mxu0 %v395
    %v1859 = vpop.f32.mrf.mxu0
    %v1860 = vadd.f32 %v1075, %v1859
    %v1861 = vpop.f32.mrf.mxu0
    %1862 = vmatprep.mubr.f32.mxu0 %v400
    %1863 = vmatmul.mubr.f32.gmra.mxu0 %v399
    %v1864 = vpop.f32.mrf.mxu0
    %v1865 = vadd.f32 %v1080, %v1864
    %v1866 = vpop.f32.mrf.mxu0
    %1867 = vmatprep.mubr.f32.mxu0 %v404
    %1868 = vmatmul.mubr.f32.gmra.mxu0 %v403
    %v1869 = vpop.f32.mrf.mxu0
    %v1870 = vadd.f32 %v1085, %v1869
    %v1871 = vpop.f32.mrf.mxu0
    %1872 = vmatprep.mubr.f32.mxu0 %v408
    %1873 = vmatmul.mubr.f32.gmra.mxu0 %v407
    %v1874 = vpop.f32.mrf.mxu0
    %v1875 = vadd.f32 %v1090, %v1874
    %v1876 = vpop.f32.mrf.mxu0
    %1877 = vmatprep.mubr.f32.mxu0 %v412
    %1878 = vmatmul.mubr.f32.gmra.mxu0 %v411
    %v1879 = vpop.f32.mrf.mxu0
    %v1880 = vadd.f32 %v1095, %v1879
    %v1881 = vpop.f32.mrf.mxu0
    %1882 = vmatprep.mubr.f32.mxu0 %v416
    %1883 = vmatmul.mubr.f32.gmra.mxu0 %v415
    %v1884 = vpop.f32.mrf.mxu0
    %v1885 = vadd.f32 %v1100, %v1884
    %v1886 = vpop.f32.mrf.mxu0
    %1887 = vmatprep.mubr.f32.mxu0 %v420
    %1888 = vmatmul.mubr.f32.gmra.mxu0 %v419
    %v1889 = vpop.f32.mrf.mxu0
    %v1890 = vadd.f32 %v1105, %v1889
    %v1891 = vpop.f32.mrf.mxu0
    %1892 = vmatprep.mubr.f32.mxu0 %v424
    %1893 = vmatmul.mubr.f32.gmra.mxu0 %v423
    %v1894 = vpop.f32.mrf.mxu0
    %v1895 = vadd.f32 %v1110, %v1894
    %v1896 = vpop.f32.mrf.mxu0
    %1897 = vmatprep.mubr.f32.mxu0 %v428
    %1898 = vmatmul.mubr.f32.gmra.mxu0 %v427
    %v1899 = vpop.f32.mrf.mxu0
    %v1900 = vadd.f32 %v1115, %v1899
    %v1901 = vpop.f32.mrf.mxu0
    %1902 = vmatprep.mubr.f32.mxu0 %v432
    %1903 = vmatmul.mubr.f32.gmra.mxu0 %v431
    %v1904 = vpop.f32.mrf.mxu0
    %v1905 = vadd.f32 %v1120, %v1904
    %v1906 = vpop.f32.mrf.mxu0
    %1907 = vmatprep.mubr.f32.mxu0 %v436
    %1908 = vmatmul.mubr.f32.gmra.mxu0 %v435
    %v1909 = vpop.f32.mrf.mxu0
    %v1910 = vadd.f32 %v1125, %v1909
    %v1911 = vpop.f32.mrf.mxu0
    %1912 = vmatprep.mubr.f32.mxu0 %v440
    %1913 = vmatmul.mubr.f32.gmra.mxu0 %v439
    %v1914 = vpop.f32.mrf.mxu0
    %v1915 = vadd.f32 %v1130, %v1914
    %v1916 = vpop.f32.mrf.mxu0
    %1917 = vmatprep.mubr.f32.mxu0 %v444
    %1918 = vmatmul.mubr.f32.gmra.mxu0 %v443
    %v1919 = vpop.f32.mrf.mxu0
    %v1920 = vadd.f32 %v1135, %v1919
    %v1921 = vpop.f32.mrf.mxu0
    %1922 = vmatprep.mubr.f32.mxu0 %v448
    %1923 = vmatmul.mubr.f32.gmra.mxu0 %v447
    %v1924 = vpop.f32.mrf.mxu0
    %v1925 = vadd.f32 %v1140, %v1924
    %v1926 = vpop.f32.mrf.mxu0
    %1927 = vmatprep.mubr.f32.mxu0 %v452
    %1928 = vmatmul.mubr.f32.gmra.mxu0 %v451
    %v1929 = vpop.f32.mrf.mxu0
    %v1930 = vadd.f32 %v1145, %v1929
    %v1931 = vpop.f32.mrf.mxu0
    %1932 = vmatprep.mubr.f32.mxu0 %v456
    %1933 = vmatmul.mubr.f32.gmra.mxu0 %v455
    %v1934 = vpop.f32.mrf.mxu0
    %v1935 = vadd.f32 %v1150, %v1934
    %v1936 = vpop.f32.mrf.mxu0
    %1937 = vmatprep.mubr.f32.mxu0 %v460
    %1938 = vmatmul.mubr.f32.gmra.mxu0 %v459
    %v1939 = vpop.f32.mrf.mxu0
    %v1940 = vadd.f32 %v1155, %v1939
    %v1941 = vpop.f32.mrf.mxu0
    %1942 = vmatprep.mubr.f32.mxu0 %v464
    %1943 = vmatmul.mubr.f32.gmra.mxu0 %v463
    %v1944 = vpop.f32.mrf.mxu0
    %v1945 = vadd.f32 %v1160, %v1944
    %v1946 = vpop.f32.mrf.mxu0
    %1947 = vmatprep.mubr.f32.mxu0 %v468
    %1948 = vmatmul.mubr.f32.gmra.mxu0 %v467
    %v1949 = vpop.f32.mrf.mxu0
    %v1950 = vadd.f32 %v1165, %v1949
    %v1951 = vpop.f32.mrf.mxu0
    %1952 = vmatprep.mubr.f32.mxu0 %v472
    %1953 = vmatmul.mubr.f32.gmra.mxu0 %v471
    %v1954 = vpop.f32.mrf.mxu0
    %v1955 = vadd.f32 %v1170, %v1954
    %v1956 = vpop.f32.mrf.mxu0
    %1957 = vmatprep.mubr.f32.mxu0 %v476
    %1958 = vmatmul.mubr.f32.gmra.mxu0 %v475
    %v1959 = vpop.f32.mrf.mxu0
    %v1960 = vadd.f32 %v1175, %v1959
    %v1961 = vpop.f32.mrf.mxu0
    %1962 = vmatprep.mubr.f32.mxu0 %v480
    %1963 = vmatmul.mubr.f32.gmra.mxu0 %v479
    %v1964 = vpop.f32.mrf.mxu0
    %v1965 = vadd.f32 %v1180, %v1964
    %v1966 = vpop.f32.mrf.mxu0
    %1967 = vmatprep.mubr.f32.mxu0 %v484
    %1968 = vmatmul.mubr.f32.gmra.mxu0 %v483
    %v1969 = vpop.f32.mrf.mxu0
    %v1970 = vadd.f32 %v1185, %v1969
    %v1971 = vpop.f32.mrf.mxu0
    %1972 = vmatprep.mubr.f32.mxu0 %v488
    %1973 = vmatmul.mubr.f32.gmra.mxu0 %v487
    %v1974 = vpop.f32.mrf.mxu0
    %v1975 = vadd.f32 %v1190, %v1974
    %v1976 = vpop.f32.mrf.mxu0
    %1977 = vmatprep.mubr.f32.mxu0 %v492
    %1978 = vmatmul.mubr.f32.gmra.mxu0 %v491
    %v1979 = vpop.f32.mrf.mxu0
    %v1980 = vadd.f32 %v1195, %v1979
    %v1981 = vpop.f32.mrf.mxu0
    %1982 = vmatprep.mubr.f32.mxu0 %v496
    %1983 = vmatmul.mubr.f32.gmra.mxu0 %v495
    %v1984 = vpop.f32.mrf.mxu0
    %v1985 = vadd.f32 %v1200, %v1984
    %v1986 = vpop.f32.mrf.mxu0
    %1987 = vmatprep.mubr.f32.mxu0 %v500
    %1988 = vmatmul.mubr.f32.gmra.mxu0 %v499
    %v1989 = vpop.f32.mrf.mxu0
    %v1990 = vadd.f32 %v1205, %v1989
    %v1991 = vpop.f32.mrf.mxu0
    %1992 = vmatprep.mubr.f32.mxu0 %v504
    %1993 = vmatmul.mubr.f32.gmra.mxu0 %v503
    %v1994 = vpop.f32.mrf.mxu0
    %v1995 = vadd.f32 %v1210, %v1994
    %v1996 = vpop.f32.mrf.mxu0
    %1997 = vmatprep.mubr.f32.mxu0 %v508
    %1998 = vmatmul.mubr.f32.gmra.mxu0 %v507
    %v1999 = vpop.f32.mrf.mxu0
    %v2000 = vadd.f32 %v1215, %v1999
    %v2001 = vpop.f32.mrf.mxu0
    %2002 = vmatprep.mubr.f32.mxu0 %v512
    %2003 = vmatmul.mubr.f32.gmra.mxu0 %v511
    %v2004 = vpop.f32.mrf.mxu0
    %v2005 = vadd.f32 %v1220, %v2004
    %v2006 = vpop.f32.mrf.mxu0
    %2007 = vmatprep.mubr.f32.mxu0 %v516
    %2008 = vmatmul.mubr.f32.gmra.mxu0 %v515
    %v2009 = vpop.f32.mrf.mxu0
    %v2010 = vadd.f32 %v1225, %v2009
    %v2011 = vpop.f32.mrf.mxu0
    %2012 = vmatprep.mubr.f32.mxu0 %v520
    %2013 = vmatmul.mubr.f32.gmra.mxu0 %v519
    %v2014 = vpop.f32.mrf.mxu0
    %v2015 = vadd.f32 %v1230, %v2014
    %v2016 = vpop.f32.mrf.mxu0
    %2017 = vmatprep.mubr.f32.mxu0 %v524
    %2018 = vmatmul.mubr.f32.gmra.mxu0 %v523
    %v2019 = vpop.f32.mrf.mxu0
    %v2020 = vadd.f32 %v1235, %v2019
    %v2021 = vpop.f32.mrf.mxu0
    %2022 = vmatprep.mubr.f32.mxu0 %v528
    %2023 = vmatmul.mubr.f32.gmra.mxu0 %v527
    %v2024 = vpop.f32.mrf.mxu0
    %v2025 = vadd.f32 %v1240, %v2024
    %v2026 = vpop.f32.mrf.mxu0
    %2027 = vmatprep.mubr.f32.mxu0 %v532
    %2028 = vmatmul.mubr.f32.gmra.mxu0 %v531
    %v2029 = vpop.f32.mrf.mxu0
    %v2030 = vadd.f32 %v1245, %v2029
    %v2031 = vpop.f32.mrf.mxu0
    %2032 = vmatprep.mubr.f32.mxu0 %v536
    %2033 = vmatmul.mubr.f32.gmra.mxu0 %v535
    %v2034 = vpop.f32.mrf.mxu0
    %v2035 = vadd.f32 %v1250, %v2034
    %v2036 = vpop.f32.mrf.mxu0
    %2037 = vmatprep.mubr.f32.mxu0 %v540
    %2038 = vmatmul.mubr.f32.gmra.mxu0 %v539
    %v2039 = vpop.f32.mrf.mxu0
    %v2040 = vadd.f32 %v1255, %v2039
    %v2041 = vpop.f32.mrf.mxu0
    %2042 = vmatprep.mubr.f32.mxu0 %v544
    %2043 = vmatmul.mubr.f32.gmra.mxu0 %v543
    %v2044 = vpop.f32.mrf.mxu0
    %v2045 = vadd.f32 %v1260, %v2044
    %v2046 = vpop.f32.mrf.mxu0
    %2047 = vmatprep.mubr.f32.mxu0 %v548
    %2048 = vmatmul.mubr.f32.gmra.mxu0 %v547
    %v2049 = vpop.f32.mrf.mxu0
    %v2050 = vadd.f32 %v1265, %v2049
    %v2051 = vpop.f32.mrf.mxu0
    %2052 = vmatprep.mubr.f32.mxu0 %v552
    %2053 = vmatmul.mubr.f32.gmra.mxu0 %v551
    %v2054 = vpop.f32.mrf.mxu0
    %v2055 = vadd.f32 %v1270, %v2054
    %v2056 = vpop.f32.mrf.mxu0
    %2057 = vmatprep.mubr.f32.mxu0 %v556
    %2058 = vmatmul.mubr.f32.gmra.mxu0 %v555
    %v2059 = vpop.f32.mrf.mxu0
    %v2060 = vadd.f32 %v1275, %v2059
    %v2061 = vpop.f32.mrf.mxu0
    %2062 = vmatprep.mubr.f32.mxu0 %v560
    %2063 = vmatmul.mubr.f32.gmra.mxu0 %v559
    %v2064 = vpop.f32.mrf.mxu0
    %v2065 = vadd.f32 %v1280, %v2064
    %v2066 = vpop.f32.mrf.mxu0
    %2067 = vmatprep.mubr.f32.mxu0 %v564
    %2068 = vmatmul.mubr.f32.gmra.mxu0 %v563
    %v2069 = vpop.f32.mrf.mxu0
    %v2070 = vadd.f32 %v1285, %v2069
    %v2071 = vpop.f32.mrf.mxu0
    %2072 = vmatprep.mubr.f32.mxu0 %v568
    %2073 = vmatmul.mubr.f32.gmra.mxu0 %v567
    %v2074 = vpop.f32.mrf.mxu0
    %v2075 = vadd.f32 %v1290, %v2074
    %v2076 = vpop.f32.mrf.mxu0
    %2077 = vmatprep.mubr.f32.mxu0 %v572
    %2078 = vmatmul.mubr.f32.gmra.mxu0 %v571
    %v2079 = vpop.f32.mrf.mxu0
    %v2080 = vadd.f32 %v1295, %v2079
    %v2081 = vpop.f32.mrf.mxu0
    %2082 = vmatprep.mubr.f32.mxu0 %v576
    %2083 = vmatmul.mubr.f32.gmra.mxu0 %v575
    %v2084 = vpop.f32.mrf.mxu0
    %v2085 = vadd.f32 %v1300, %v2084
    %v2086 = vpop.f32.mrf.mxu0
    %2087 = vmatprep.mubr.f32.mxu0 %v580
    %2088 = vmatmul.mubr.f32.gmra.mxu0 %v579
    %v2089 = vpop.f32.mrf.mxu0
    %v2090 = vadd.f32 %v1305, %v2089
    %v2091 = vpop.f32.mrf.mxu0
    %2092 = vmatprep.mubr.f32.mxu0 %v584
    %2093 = vmatmul.mubr.f32.gmra.mxu0 %v583
    %v2094 = vpop.f32.mrf.mxu0
    %v2095 = vadd.f32 %v1310, %v2094
    %v2096 = vpop.f32.mrf.mxu0
    %2097 = vmatprep.mubr.f32.mxu0 %v588
    %2098 = vmatmul.mubr.f32.gmra.mxu0 %v587
    %v2099 = vpop.f32.mrf.mxu0
    %v2100 = vadd.f32 %v1315, %v2099
    %v2101 = vpop.f32.mrf.mxu0
    %2102 = vmatprep.mubr.f32.mxu0 %v592
    %2103 = vmatmul.mubr.f32.gmra.mxu0 %v591
    %v2104 = vpop.f32.mrf.mxu0
    %v2105 = vadd.f32 %v1320, %v2104
    %v2106 = vpop.f32.mrf.mxu0
    %2107 = vmatprep.mubr.f32.mxu0 %v596
    %2108 = vmatmul.mubr.f32.gmra.mxu0 %v595
    %v2109 = vpop.f32.mrf.mxu0
    %v2110 = vadd.f32 %v1325, %v2109
    %v2111 = vpop.f32.mrf.mxu0
    %2112 = vmatprep.mubr.f32.mxu0 %v600
    %2113 = vmatmul.mubr.f32.gmra.mxu0 %v599
    %v2114 = vpop.f32.mrf.mxu0
    %v2115 = vadd.f32 %v1330, %v2114
    %v2116 = vpop.f32.mrf.mxu0
    %2117 = vmatprep.mubr.f32.mxu0 %v604
    %2118 = vmatmul.mubr.f32.gmra.mxu0 %v603
    %v2119 = vpop.f32.mrf.mxu0
    %v2120 = vadd.f32 %v1335, %v2119
    %v2121 = vpop.f32.mrf.mxu0
    %2122 = vmatprep.mubr.f32.mxu0 %v608
    %2123 = vmatmul.mubr.f32.gmra.mxu0 %v607
    %v2124 = vpop.f32.mrf.mxu0
    %v2125 = vadd.f32 %v1340, %v2124
    %v2126 = vpop.f32.mrf.mxu0
    %2127 = vmatprep.mubr.f32.mxu0 %v612
    %2128 = vmatmul.mubr.f32.gmra.mxu0 %v611
    %v2129 = vpop.f32.mrf.mxu0
    %v2130 = vadd.f32 %v1345, %v2129
    %v2131 = vpop.f32.mrf.mxu0
    %2132 = vmatprep.mubr.f32.mxu0 %v616
    %2133 = vmatmul.mubr.f32.gmra.mxu0 %v615
    %v2134 = vpop.f32.mrf.mxu0
    %v2135 = vadd.f32 %v1350, %v2134
    %v2136 = vpop.f32.mrf.mxu0
    %2137 = vmatprep.mubr.f32.mxu0 %v620
    %2138 = vmatmul.mubr.f32.gmra.mxu0 %v619
    %v2139 = vpop.f32.mrf.mxu0
    %v2140 = vadd.f32 %v1355, %v2139
    %v2141 = vpop.f32.mrf.mxu0
    %2142 = vmatprep.mubr.f32.mxu0 %v624
    %2143 = vmatmul.mubr.f32.gmra.mxu0 %v623
    %v2144 = vpop.f32.mrf.mxu0
    %v2145 = vadd.f32 %v1360, %v2144
    %v2146 = vpop.f32.mrf.mxu0
    %2147 = vmatprep.mubr.f32.mxu0 %v628
    %2148 = vmatmul.mubr.f32.gmra.mxu0 %v627
    %v2149 = vpop.f32.mrf.mxu0
    %v2150 = vadd.f32 %v1365, %v2149
    %v2151 = vpop.f32.mrf.mxu0
    %2152 = vmatprep.mubr.f32.mxu0 %v632
    %2153 = vmatmul.mubr.f32.gmra.mxu0 %v631
    %v2154 = vpop.f32.mrf.mxu0
    %v2155 = vadd.f32 %v1370, %v2154
    %v2156 = vpop.f32.mrf.mxu0
    %2157 = vmatprep.mubr.f32.mxu0 %v636
    %2158 = vmatmul.mubr.f32.gmra.mxu0 %v635
    %v2159 = vpop.f32.mrf.mxu0
    %v2160 = vadd.f32 %v1375, %v2159
    %v2161 = vpop.f32.mrf.mxu0
    %2162 = vmatprep.mubr.f32.mxu0 %v640
    %2163 = vmatmul.mubr.f32.gmra.mxu0 %v639
    %v2164 = vpop.f32.mrf.mxu0
    %v2165 = vadd.f32 %v1380, %v2164
    %v2166 = vpop.f32.mrf.mxu0
    %2167 = vmatprep.mubr.f32.mxu0 %v644
    %2168 = vmatmul.mubr.f32.gmra.mxu0 %v643
    %v2169 = vpop.f32.mrf.mxu0
    %v2170 = vadd.f32 %v1385, %v2169
    %v2171 = vpop.f32.mrf.mxu0
    %2172 = vmatprep.mubr.f32.mxu0 %v648
    %2173 = vmatmul.mubr.f32.gmra.mxu0 %v647
    %v2174 = vpop.f32.mrf.mxu0
    %v2175 = vadd.f32 %v1390, %v2174
    %v2176 = vpop.f32.mrf.mxu0
    %2177 = vmatprep.mubr.f32.mxu0 %v652
    %2178 = vmatmul.mubr.f32.gmra.mxu0 %v651
    %v2179 = vpop.f32.mrf.mxu0
    %v2180 = vadd.f32 %v1395, %v2179
    %v2181 = vpop.f32.mrf.mxu0
    %2182 = vmatprep.mubr.f32.mxu0 %v656
    %2183 = vmatmul.mubr.f32.gmra.mxu0 %v655
    %v2184 = vpop.f32.mrf.mxu0
    %v2185 = vadd.f32 %v1400, %v2184
    %v2186 = vpop.f32.mrf.mxu0
    %2187 = vmatprep.mubr.f32.mxu0 %v660
    %2188 = vmatmul.mubr.f32.gmra.mxu0 %v659
    %v2189 = vpop.f32.mrf.mxu0
    %v2190 = vadd.f32 %v1405, %v2189
    %v2191 = vpop.f32.mrf.mxu0
    %2192 = vmatprep.mubr.f32.mxu0 %v664
    %2193 = vmatmul.mubr.f32.gmra.mxu0 %v663
    %v2194 = vpop.f32.mrf.mxu0
    %v2195 = vadd.f32 %v1410, %v2194
    %v2196 = vpop.f32.mrf.mxu0
    %2197 = vmatprep.mubr.f32.mxu0 %v668
    %2198 = vmatmul.mubr.f32.gmra.mxu0 %v667
    %v2199 = vpop.f32.mrf.mxu0
    %v2200 = vadd.f32 %v1415, %v2199
    %v2201 = vpop.f32.mrf.mxu0
    %2202 = vmatprep.mubr.f32.mxu0 %v672
    %2203 = vmatmul.mubr.f32.gmra.mxu0 %v671
    %v2204 = vpop.f32.mrf.mxu0
    %v2205 = vadd.f32 %v1420, %v2204
    %v2206 = vpop.f32.mrf.mxu0
    %2207 = vmatprep.mubr.f32.mxu0 %v676
    %2208 = vmatmul.mubr.f32.gmra.mxu0 %v675
    %v2209 = vpop.f32.mrf.mxu0
    %v2210 = vadd.f32 %v1425, %v2209
    %v2211 = vpop.f32.mrf.mxu0
    %2212 = vmatprep.mubr.f32.mxu0 %v680
    %2213 = vmatmul.mubr.f32.gmra.mxu0 %v679
    %v2214 = vpop.f32.mrf.mxu0
    %v2215 = vadd.f32 %v1430, %v2214
    %v2216 = vpop.f32.mrf.mxu0
    %2217 = vmatprep.mubr.f32.mxu0 %v684
    %2218 = vmatmul.mubr.f32.gmra.mxu0 %v683
    %v2219 = vpop.f32.mrf.mxu0
    %v2220 = vadd.f32 %v1435, %v2219
    %v2221 = vpop.f32.mrf.mxu0
    %2222 = vmatprep.mubr.f32.mxu0 %v688
    %2223 = vmatmul.mubr.f32.gmra.mxu0 %v687
    %v2224 = vpop.f32.mrf.mxu0
    %v2225 = vadd.f32 %v1440, %v2224
    %v2226 = vpop.f32.mrf.mxu0
    %2227 = vmatprep.mubr.f32.mxu0 %v692
    %2228 = vmatmul.mubr.f32.gmra.mxu0 %v691
    %v2229 = vpop.f32.mrf.mxu0
    %v2230 = vadd.f32 %v1445, %v2229
    %v2231 = vpop.f32.mrf.mxu0
    %2232 = vmatprep.mubr.f32.mxu0 %v696
    %2233 = vmatmul.mubr.f32.gmra.mxu0 %v695
    %v2234 = vpop.f32.mrf.mxu0
    %v2235 = vadd.f32 %v1450, %v2234
    %v2236 = vpop.f32.mrf.mxu0
    %2237 = vmatprep.mubr.f32.mxu0 %v700
    %2238 = vmatmul.mubr.f32.gmra.mxu0 %v699
    %v2239 = vpop.f32.mrf.mxu0
    %v2240 = vadd.f32 %v1455, %v2239
    %v2241 = vpop.f32.mrf.mxu0
    %2242 = vmatprep.mubr.f32.mxu0 %v704
    %2243 = vmatmul.mubr.f32.gmra.mxu0 %v703
    %v2244 = vpop.f32.mrf.mxu0
    %v2245 = vadd.f32 %v1460, %v2244
    %v2246 = vpop.f32.mrf.mxu0
    %2247 = vmatprep.mubr.f32.mxu0 %v708
    %2248 = vmatmul.mubr.f32.gmra.mxu0 %v707
    %v2249 = vpop.f32.mrf.mxu0
    %v2250 = vadd.f32 %v1465, %v2249
    %v2251 = vpop.f32.mrf.mxu0
    %2252 = vmatprep.mubr.f32.mxu0 %v712
    %2253 = vmatmul.mubr.f32.gmra.mxu0 %v711
    %v2254 = vpop.f32.mrf.mxu0
    %v2255 = vadd.f32 %v1470, %v2254
    %v2256 = vpop.f32.mrf.mxu0
    %2257 = vmatprep.mubr.f32.mxu0 %v716
    %2258 = vmatmul.mubr.f32.gmra.mxu0 %v715
    %v2259 = vpop.f32.mrf.mxu0
    %v2260 = vadd.f32 %v1475, %v2259
    %v2261 = vpop.f32.mrf.mxu0
    %2262 = vmatprep.mubr.f32.mxu0 %v720
    %2263 = vmatmul.mubr.f32.gmra.mxu0 %v719
    %v2264 = vpop.f32.mrf.mxu0
    %v2265 = vadd.f32 %v1480, %v2264
    %v2266 = vpop.f32.mrf.mxu0
    %2267 = vmatprep.mubr.f32.mxu0 %v724
    %2268 = vmatmul.mubr.f32.gmra.mxu0 %v723
    %v2269 = vpop.f32.mrf.mxu0
    %v2270 = vadd.f32 %v1485, %v2269
    %v2271 = vpop.f32.mrf.mxu0
    %2272 = vmatprep.mubr.f32.mxu0 %v728
    %2273 = vmatmul.mubr.f32.gmra.mxu0 %v727
    %v2274 = vpop.f32.mrf.mxu0
    %v2275 = vadd.f32 %v1490, %v2274
    %v2276 = vpop.f32.mrf.mxu0
    %2277 = vmatprep.mubr.f32.mxu0 %v732
    %2278 = vmatmul.mubr.f32.gmra.mxu0 %v731
    %v2279 = vpop.f32.mrf.mxu0
    %v2280 = vadd.f32 %v1495, %v2279
    %v2281 = vpop.f32.mrf.mxu0
    %2282 = vmatprep.mubr.f32.mxu0 %v736
    %2283 = vmatmul.mubr.f32.gmra.mxu0 %v735
    %v2284 = vpop.f32.mrf.mxu0
    %v2285 = vadd.f32 %v1500, %v2284
    %v2286 = vpop.f32.mrf.mxu0
    %2287 = vmatprep.mubr.f32.mxu0 %v740
    %2288 = vmatmul.mubr.f32.gmra.mxu0 %v739
    %v2289 = vpop.f32.mrf.mxu0
    %v2290 = vadd.f32 %v1505, %v2289
    %v2291 = vpop.f32.mrf.mxu0
    %2292 = vmatprep.mubr.f32.mxu0 %v744
    %2293 = vmatmul.mubr.f32.gmra.mxu0 %v743
    %v2294 = vpop.f32.mrf.mxu0
    %v2295 = vadd.f32 %v1510, %v2294
    %v2296 = vpop.f32.mrf.mxu0
    %2297 = vmatprep.mubr.f32.mxu0 %v748
    %2298 = vmatmul.mubr.f32.gmra.mxu0 %v747
    %v2299 = vpop.f32.mrf.mxu0
    %v2300 = vadd.f32 %v1515, %v2299
    %v2301 = vpop.f32.mrf.mxu0
    %2302 = vmatprep.mubr.f32.mxu0 %v752
    %2303 = vmatmul.mubr.f32.gmra.mxu0 %v751
    %v2304 = vpop.f32.mrf.mxu0
    %v2305 = vadd.f32 %v1520, %v2304
    %v2306 = vpop.f32.mrf.mxu0
    %2307 = vmatprep.mubr.f32.mxu0 %v756
    %2308 = vmatmul.mubr.f32.gmra.mxu0 %v755
    %v2309 = vpop.f32.mrf.mxu0
    %v2310 = vadd.f32 %v1525, %v2309
    %v2311 = vpop.f32.mrf.mxu0
    %2312 = vmatprep.mubr.f32.mxu0 %v760
    %2313 = vmatmul.mubr.f32.gmra.mxu0 %v759
    %v2314 = vpop.f32.mrf.mxu0
    %v2315 = vadd.f32 %v1530, %v2314
    %v2316 = vpop.f32.mrf.mxu0
    %2317 = vmatprep.mubr.f32.mxu0 %v764
    %2318 = vmatmul.mubr.f32.gmra.mxu0 %v763
    %v2319 = vpop.f32.mrf.mxu0
    %v2320 = vadd.f32 %v1535, %v2319
    %v2321 = vpop.f32.mrf.mxu0
    %2322 = vmatprep.mubr.f32.mxu0 %v768
    %2323 = vmatmul.mubr.f32.gmra.mxu0 %v767
    %v2324 = vpop.f32.mrf.mxu0
    %v2325 = vadd.f32 %v1540, %v2324
    %v2326 = vpop.f32.mrf.mxu0
    %2327 = vmatprep.mubr.f32.mxu0 %v772
    %2328 = vmatmul.mubr.f32.gmra.mxu0 %v771
    %v2329 = vpop.f32.mrf.mxu0
    %v2330 = vadd.f32 %v1545, %v2329
    %v2331 = vpop.f32.mrf.mxu0
    %2332 = vmatprep.mubr.f32.mxu0 %v776
    %2333 = vmatmul.mubr.f32.gmra.mxu0 %v775
    %v2334 = vpop.f32.mrf.mxu0
    %v2335 = vadd.f32 %v1550, %v2334
    %v2336 = vpop.f32.mrf.mxu0
    %2337 = vmatprep.mubr.f32.mxu0 %v780
    %2338 = vmatmul.mubr.f32.gmra.mxu0 %v779
    %v2339 = vpop.f32.mrf.mxu0
    %v2340 = vadd.f32 %v1555, %v2339
    %v2341 = vpop.f32.mrf.mxu0
    %2342 = vmatprep.mubr.f32.mxu0 %v784
    %2343 = vmatmul.mubr.f32.gmra.mxu0 %v783
    %v2344 = vpop.f32.mrf.mxu0
    %v2345 = vadd.f32 %v1560, %v2344
    %v2346 = vpop.f32.mrf.mxu0
    %2347 = vmatprep.mubr.f32.mxu0 %v788
    %2348 = vmatmul.mubr.f32.gmra.mxu0 %v787
    %v2349 = vpop.f32.mrf.mxu0
    %v2350 = vadd.f32 %v1565, %v2349
    %v2351 = vpop.f32.mrf.mxu0
    %2352 = vmatprep.mubr.f32.mxu0 %v792
    %2353 = vmatmul.mubr.f32.gmra.mxu0 %v791
    %v2354 = vpop.f32.mrf.mxu0
    %v2355 = vadd.f32 %v1570, %v2354
    %v2356 = vpop.f32.mrf.mxu0
    %2357 = vmatprep.mubr.f32.mxu0 %v796
    %2358 = vmatmul.mubr.f32.gmra.mxu0 %v795
    %v2359 = vpop.f32.mrf.mxu0
    %v2360 = vadd.f32 %v1575, %v2359
    %v2361 = vpop.f32.mrf.mxu0
    %2362 = vmatprep.mubr.f32.mxu0 %v800
    %2363 = vmatmul.mubr.f32.gmra.mxu0 %v799
    %v2364 = vpop.f32.mrf.mxu0
    %v2365 = vadd.f32 %v1580, %v2364
    %v2366 = vpop.f32.mrf.mxu0
    %2367 = vmatprep.mubr.f32.mxu0 %v804
    %2368 = vmatmul.mubr.f32.gmra.mxu0 %v803
    %v2369 = vpop.f32.mrf.mxu0
    %v2370 = vadd.f32 %v1585, %v2369
    %v2371 = vpop.f32.mrf.mxu0
    %2372 = vmatprep.mubr.f32.mxu0 %v808
    %2373 = vmatmul.mubr.f32.gmra.mxu0 %v807
    %v2374 = vpop.f32.mrf.mxu0
    %v2375 = vadd.f32 %v1590, %v2374
    %v2376 = vpop.f32.mrf.mxu0
    %2377 = vmatprep.mubr.f32.mxu0 %v812
    %2378 = vmatmul.mubr.f32.gmra.mxu0 %v811
    %v2379 = vpop.f32.mrf.mxu0
    %v2380 = vadd.f32 %v1595, %v2379
    %v2381 = vpop.f32.mrf.mxu0
    %2382 = vdwg.mxu0
    %v2383 = vld [vmem:[#allocation5] sm:$0xf]
    %s2384 = scalar_lea.vmem [#allocation5], 4
    %v2385 = vld [vmem:[%s2384] sm:$0xf]
    %vm2386 = vcmask 31744
    %v2388 = vsel %vm2386, %v1745, 0
    %v2391 = vsel %vm2386, %v1750, 0
    %v2394 = vsel %vm2386, %v1755, 0
    %v2397 = vsel %vm2386, %v1760, 0
    %v2400 = vsel %vm2386, %v1765, 0
    %v2403 = vsel %vm2386, %v1770, 0
    %v2406 = vsel %vm2386, %v1775, 0
    %v2409 = vsel %vm2386, %v1780, 0
    %v2412 = vsel %vm2386, %v1785, 0
    %v2415 = vsel %vm2386, %v1790, 0
    %v2418 = vsel %vm2386, %v1795, 0
    %v2421 = vsel %vm2386, %v1800, 0
    %v2424 = vsel %vm2386, %v1805, 0
    %v2427 = vsel %vm2386, %v1810, 0
    %v2430 = vsel %vm2386, %v1815, 0
    %v2433 = vsel %vm2386, %v1820, 0
    %vm2435 = vcmask 1043456
    %v2437 = vsel %vm2435, %v2385, 0
    %2439 = vmatprep.subr.mxu0 0.0
    %2440 = vmatpush1.msra.mxu0 0.0
    %2441 = vmatprep.subr.mxu0 0.0
    %2442 = vmatpush1.msra.mxu0 0.0
    %2443 = vmatprep.subr.mxu0 0.0
    %2444 = vmatpush1.msra.mxu0 0.0
    %2445 = vmatprep.subr.mxu0 0.0
    %2446 = vmatpush1.msra.mxu0 0.0
    %2447 = vmatprep.subr.mxu0 0.0
    %2448 = vmatpush1.msra.mxu0 0.0
    %2449 = vmatprep.subr.mxu0 0.0
    %2450 = vmatpush1.msra.mxu0 0.0
    %2451 = vmatprep.subr.mxu0 0.0
    %2452 = vmatpush1.msra.mxu0 0.0
    %2453 = vmatprep.subr.mxu0 0.0
    %2454 = vmatpush1.msra.mxu0 0.0
    %2455 = vmatprep.subr.mxu0 0.0
    %2456 = vmatpush1.msra.mxu0 0.0
    %2457 = vmatprep.subr.mxu0 0.0
    %2458 = vmatpush1.msra.mxu0 0.0
    %2459 = vmatprep.subr.mxu0 0.0
    %2460 = vmatpush1.msra.mxu0 0.0
    %2461 = vmatprep.subr.mxu0 0.0
    %2462 = vmatpush1.msra.mxu0 0.0
    %2463 = vmatprep.subr.mxu0 0.0
    %2464 = vmatpush1.msra.mxu0 0.0
    %2465 = vmatprep.subr.mxu0 0.0
    %2466 = vmatpush1.msra.mxu0 0.0
    %2467 = vmatprep.subr.mxu0 0.0
    %2468 = vmatpush1.msra.mxu0 0.0
    %2469 = vmatprep.subr.mxu0 0.0
    %2470 = vmatpush1.msra.mxu0 %v2437
    %2471 = vmatprep.subr.mxu0 0.0
    %2472 = vmatpush2.msra.mxu0 0.0
    %2473 = vmatprep.subr.mxu0 0.0
    %2474 = vmatpush2.msra.mxu0 0.0
    %2475 = vmatprep.subr.mxu0 0.0
    %2476 = vmatpush2.msra.mxu0 0.0
    %2477 = vmatprep.subr.mxu0 0.0
    %2478 = vmatpush2.msra.mxu0 0.0
    %2479 = vmatprep.subr.mxu0 0.0
    %2480 = vmatpush2.msra.mxu0 0.0
    %2481 = vmatprep.subr.mxu0 0.0
    %2482 = vmatpush2.msra.mxu0 0.0
    %2483 = vmatprep.subr.mxu0 0.0
    %2484 = vmatpush2.msra.mxu0 0.0
    %2485 = vmatprep.subr.mxu0 0.0
    %2486 = vmatpush2.msra.mxu0 0.0
    %2487 = vmatprep.subr.mxu0 0.0
    %2488 = vmatpush2.msra.mxu0 0.0
    %2489 = vmatprep.subr.mxu0 0.0
    %2490 = vmatpush2.msra.mxu0 0.0
    %2491 = vmatprep.subr.mxu0 0.0
    %2492 = vmatpush2.msra.mxu0 0.0
    %2493 = vmatprep.subr.mxu0 0.0
    %2494 = vmatpush2.msra.mxu0 0.0
    %2495 = vmatprep.subr.mxu0 0.0
    %2496 = vmatpush2.msra.mxu0 0.0
    %2497 = vmatprep.subr.mxu0 0.0
    %2498 = vmatpush2.msra.mxu0 0.0
    %2499 = vmatprep.subr.mxu0 0.0
    %2500 = vmatpush2.msra.mxu0 0.0
    %2501 = vmatprep.subr.mxu0 0.0
    %2502 = vmatpush2.msra.mxu0 0.0
    %2503 = vmatprep.mubr.f32.mxu0 0.0
    %2504 = vmatmul.mubr.f32.gmra.mxu0 %v2388
    %v2505 = vpop.f32.mrf.mxu0
    %v2506 = vadd.f32 0.0, %v2505
    %v2507 = vpop.f32.mrf.mxu0
    %2508 = vmatprep.mubr.f32.mxu0 0.0
    %2509 = vmatmul.mubr.f32.gmra.mxu0 %v2391
    %v2510 = vpop.f32.mrf.mxu0
    %v2511 = vadd.f32 0.0, %v2510
    %v2512 = vpop.f32.mrf.mxu0
    %2513 = vmatprep.mubr.f32.mxu0 0.0
    %2514 = vmatmul.mubr.f32.gmra.mxu0 %v2394
    %v2515 = vpop.f32.mrf.mxu0
    %v2516 = vadd.f32 0.0, %v2515
    %v2517 = vpop.f32.mrf.mxu0
    %2518 = vmatprep.mubr.f32.mxu0 0.0
    %2519 = vmatmul.mubr.f32.gmra.mxu0 %v2397
    %v2520 = vpop.f32.mrf.mxu0
    %v2521 = vadd.f32 0.0, %v2520
    %v2522 = vpop.f32.mrf.mxu0
    %2523 = vmatprep.mubr.f32.mxu0 0.0
    %2524 = vmatmul.mubr.f32.gmra.mxu0 %v2400
    %v2525 = vpop.f32.mrf.mxu0
    %v2526 = vadd.f32 0.0, %v2525
    %v2527 = vpop.f32.mrf.mxu0
    %2528 = vmatprep.mubr.f32.mxu0 0.0
    %2529 = vmatmul.mubr.f32.gmra.mxu0 %v2403
    %v2530 = vpop.f32.mrf.mxu0
    %v2531 = vadd.f32 0.0, %v2530
    %v2532 = vpop.f32.mrf.mxu0
    %2533 = vmatprep.mubr.f32.mxu0 0.0
    %2534 = vmatmul.mubr.f32.gmra.mxu0 %v2406
    %v2535 = vpop.f32.mrf.mxu0
    %v2536 = vadd.f32 0.0, %v2535
    %v2537 = vpop.f32.mrf.mxu0
    %2538 = vmatprep.mubr.f32.mxu0 0.0
    %2539 = vmatmul.mubr.f32.gmra.mxu0 %v2409
    %v2540 = vpop.f32.mrf.mxu0
    %v2541 = vadd.f32 0.0, %v2540
    %v2542 = vpop.f32.mrf.mxu0
    %2543 = vmatprep.mubr.f32.mxu0 0.0
    %2544 = vmatmul.mubr.f32.gmra.mxu0 %v2412
    %v2545 = vpop.f32.mrf.mxu0
    %v2546 = vadd.f32 0.0, %v2545
    %v2547 = vpop.f32.mrf.mxu0
    %2548 = vmatprep.mubr.f32.mxu0 0.0
    %2549 = vmatmul.mubr.f32.gmra.mxu0 %v2415
    %v2550 = vpop.f32.mrf.mxu0
    %v2551 = vadd.f32 0.0, %v2550
    %v2552 = vpop.f32.mrf.mxu0
    %2553 = vmatprep.mubr.f32.mxu0 0.0
    %2554 = vmatmul.mubr.f32.gmra.mxu0 %v2418
    %v2555 = vpop.f32.mrf.mxu0
    %v2556 = vadd.f32 0.0, %v2555
    %v2557 = vpop.f32.mrf.mxu0
    %2558 = vmatprep.mubr.f32.mxu0 0.0
    %2559 = vmatmul.mubr.f32.gmra.mxu0 %v2421
    %v2560 = vpop.f32.mrf.mxu0
    %v2561 = vadd.f32 0.0, %v2560
    %v2562 = vpop.f32.mrf.mxu0
    %2563 = vmatprep.mubr.f32.mxu0 0.0
    %2564 = vmatmul.mubr.f32.gmra.mxu0 %v2424
    %v2565 = vpop.f32.mrf.mxu0
    %v2566 = vadd.f32 0.0, %v2565
    %v2567 = vpop.f32.mrf.mxu0
    %2568 = vmatprep.mubr.f32.mxu0 0.0
    %2569 = vmatmul.mubr.f32.gmra.mxu0 %v2427
    %v2570 = vpop.f32.mrf.mxu0
    %v2571 = vadd.f32 0.0, %v2570
    %v2572 = vpop.f32.mrf.mxu0
    %2573 = vmatprep.mubr.f32.mxu0 0.0
    %2574 = vmatmul.mubr.f32.gmra.mxu0 %v2430
    %v2575 = vpop.f32.mrf.mxu0
    %v2576 = vadd.f32 0.0, %v2575
    %v2577 = vpop.f32.mrf.mxu0
    %2578 = vmatprep.mubr.f32.mxu0 0.0
    %2579 = vmatmul.mubr.f32.gmra.mxu0 %v2433
    %v2580 = vpop.f32.mrf.mxu0
    %v2581 = vadd.f32 0.0, %v2580
    %v2582 = vpop.f32.mrf.mxu0
    %2583 = vdwg.mxu0
    %v2585 = vsel %vm2386, %v1665, 0
    %v2588 = vsel %vm2386, %v1670, 0
    %v2591 = vsel %vm2386, %v1675, 0
    %v2594 = vsel %vm2386, %v1680, 0
    %v2597 = vsel %vm2386, %v1685, 0
    %v2600 = vsel %vm2386, %v1690, 0
    %v2603 = vsel %vm2386, %v1695, 0
    %v2606 = vsel %vm2386, %v1700, 0
    %v2609 = vsel %vm2386, %v1705, 0
    %v2612 = vsel %vm2386, %v1710, 0
    %v2615 = vsel %vm2386, %v1715, 0
    %v2618 = vsel %vm2386, %v1720, 0
    %v2621 = vsel %vm2386, %v1725, 0
    %v2624 = vsel %vm2386, %v1730, 0
    %v2627 = vsel %vm2386, %v1735, 0
    %v2630 = vsel %vm2386, %v1740, 0
    %v2633 = vsel %vm2435, %v2383, 0
    %2635 = vmatprep.subr.mxu0 0.0
    %2636 = vmatpush1.msra.mxu0 0.0
    %2637 = vmatprep.subr.mxu0 0.0
    %2638 = vmatpush1.msra.mxu0 0.0
    %2639 = vmatprep.subr.mxu0 0.0
    %2640 = vmatpush1.msra.mxu0 0.0
    %2641 = vmatprep.subr.mxu0 0.0
    %2642 = vmatpush1.msra.mxu0 0.0
    %2643 = vmatprep.subr.mxu0 0.0
    %2644 = vmatpush1.msra.mxu0 0.0
    %2645 = vmatprep.subr.mxu0 0.0
    %2646 = vmatpush1.msra.mxu0 0.0
    %2647 = vmatprep.subr.mxu0 0.0
    %2648 = vmatpush1.msra.mxu0 0.0
    %2649 = vmatprep.subr.mxu0 0.0
    %2650 = vmatpush1.msra.mxu0 0.0
    %2651 = vmatprep.subr.mxu0 0.0
    %2652 = vmatpush1.msra.mxu0 0.0
    %2653 = vmatprep.subr.mxu0 0.0
    %2654 = vmatpush1.msra.mxu0 0.0
    %2655 = vmatprep.subr.mxu0 0.0
    %2656 = vmatpush1.msra.mxu0 0.0
    %2657 = vmatprep.subr.mxu0 0.0
    %2658 = vmatpush1.msra.mxu0 0.0
    %2659 = vmatprep.subr.mxu0 0.0
    %2660 = vmatpush1.msra.mxu0 0.0
    %2661 = vmatprep.subr.mxu0 0.0
    %2662 = vmatpush1.msra.mxu0 0.0
    %2663 = vmatprep.subr.mxu0 0.0
    %2664 = vmatpush1.msra.mxu0 0.0
    %2665 = vmatprep.subr.mxu0 0.0
    %2666 = vmatpush1.msra.mxu0 %v2633
    %2667 = vmatprep.subr.mxu0 0.0
    %2668 = vmatpush2.msra.mxu0 0.0
    %2669 = vmatprep.subr.mxu0 0.0
    %2670 = vmatpush2.msra.mxu0 0.0
    %2671 = vmatprep.subr.mxu0 0.0
    %2672 = vmatpush2.msra.mxu0 0.0
    %2673 = vmatprep.subr.mxu0 0.0
    %2674 = vmatpush2.msra.mxu0 0.0
    %2675 = vmatprep.subr.mxu0 0.0
    %2676 = vmatpush2.msra.mxu0 0.0
    %2677 = vmatprep.subr.mxu0 0.0
    %2678 = vmatpush2.msra.mxu0 0.0
    %2679 = vmatprep.subr.mxu0 0.0
    %2680 = vmatpush2.msra.mxu0 0.0
    %2681 = vmatprep.subr.mxu0 0.0
    %2682 = vmatpush2.msra.mxu0 0.0
    %2683 = vmatprep.subr.mxu0 0.0
    %2684 = vmatpush2.msra.mxu0 0.0
    %2685 = vmatprep.subr.mxu0 0.0
    %2686 = vmatpush2.msra.mxu0 0.0
    %2687 = vmatprep.subr.mxu0 0.0
    %2688 = vmatpush2.msra.mxu0 0.0
    %2689 = vmatprep.subr.mxu0 0.0
    %2690 = vmatpush2.msra.mxu0 0.0
    %2691 = vmatprep.subr.mxu0 0.0
    %2692 = vmatpush2.msra.mxu0 0.0
    %2693 = vmatprep.subr.mxu0 0.0
    %2694 = vmatpush2.msra.mxu0 0.0
    %2695 = vmatprep.subr.mxu0 0.0
    %2696 = vmatpush2.msra.mxu0 0.0
    %2697 = vmatprep.subr.mxu0 0.0
    %2698 = vmatpush2.msra.mxu0 0.0
    %2699 = vmatprep.mubr.f32.mxu0 0.0
    %2700 = vmatmul.mubr.f32.gmra.mxu0 %v2585
    %v2701 = vpop.f32.mrf.mxu0
    %v2702 = vadd.f32 %v2506, %v2701
    %v2703 = vpop.f32.mrf.mxu0
    %2704 = vmatprep.mubr.f32.mxu0 0.0
    %2705 = vmatmul.mubr.f32.gmra.mxu0 %v2588
    %v2706 = vpop.f32.mrf.mxu0
    %v2707 = vadd.f32 %v2511, %v2706
    %v2708 = vpop.f32.mrf.mxu0
    %2709 = vmatprep.mubr.f32.mxu0 0.0
    %2710 = vmatmul.mubr.f32.gmra.mxu0 %v2591
    %v2711 = vpop.f32.mrf.mxu0
    %v2712 = vadd.f32 %v2516, %v2711
    %v2713 = vpop.f32.mrf.mxu0
    %2714 = vmatprep.mubr.f32.mxu0 0.0
    %2715 = vmatmul.mubr.f32.gmra.mxu0 %v2594
    %v2716 = vpop.f32.mrf.mxu0
    %v2717 = vadd.f32 %v2521, %v2716
    %v2718 = vpop.f32.mrf.mxu0
    %2719 = vmatprep.mubr.f32.mxu0 0.0
    %2720 = vmatmul.mubr.f32.gmra.mxu0 %v2597
    %v2721 = vpop.f32.mrf.mxu0
    %v2722 = vadd.f32 %v2526, %v2721
    %v2723 = vpop.f32.mrf.mxu0
    %2724 = vmatprep.mubr.f32.mxu0 0.0
    %2725 = vmatmul.mubr.f32.gmra.mxu0 %v2600
    %v2726 = vpop.f32.mrf.mxu0
    %v2727 = vadd.f32 %v2531, %v2726
    %v2728 = vpop.f32.mrf.mxu0
    %2729 = vmatprep.mubr.f32.mxu0 0.0
    %2730 = vmatmul.mubr.f32.gmra.mxu0 %v2603
    %v2731 = vpop.f32.mrf.mxu0
    %v2732 = vadd.f32 %v2536, %v2731
    %v2733 = vpop.f32.mrf.mxu0
    %2734 = vmatprep.mubr.f32.mxu0 0.0
    %2735 = vmatmul.mubr.f32.gmra.mxu0 %v2606
    %v2736 = vpop.f32.mrf.mxu0
    %v2737 = vadd.f32 %v2541, %v2736
    %v2738 = vpop.f32.mrf.mxu0
    %2739 = vmatprep.mubr.f32.mxu0 0.0
    %2740 = vmatmul.mubr.f32.gmra.mxu0 %v2609
    %v2741 = vpop.f32.mrf.mxu0
    %v2742 = vadd.f32 %v2546, %v2741
    %v2743 = vpop.f32.mrf.mxu0
    %2744 = vmatprep.mubr.f32.mxu0 0.0
    %2745 = vmatmul.mubr.f32.gmra.mxu0 %v2612
    %v2746 = vpop.f32.mrf.mxu0
    %v2747 = vadd.f32 %v2551, %v2746
    %v2748 = vpop.f32.mrf.mxu0
    %2749 = vmatprep.mubr.f32.mxu0 0.0
    %2750 = vmatmul.mubr.f32.gmra.mxu0 %v2615
    %v2751 = vpop.f32.mrf.mxu0
    %v2752 = vadd.f32 %v2556, %v2751
    %v2753 = vpop.f32.mrf.mxu0
    %2754 = vmatprep.mubr.f32.mxu0 0.0
    %2755 = vmatmul.mubr.f32.gmra.mxu0 %v2618
    %v2756 = vpop.f32.mrf.mxu0
    %v2757 = vadd.f32 %v2561, %v2756
    %v2758 = vpop.f32.mrf.mxu0
    %2759 = vmatprep.mubr.f32.mxu0 0.0
    %2760 = vmatmul.mubr.f32.gmra.mxu0 %v2621
    %v2761 = vpop.f32.mrf.mxu0
    %v2762 = vadd.f32 %v2566, %v2761
    %v2763 = vpop.f32.mrf.mxu0
    %2764 = vmatprep.mubr.f32.mxu0 0.0
    %2765 = vmatmul.mubr.f32.gmra.mxu0 %v2624
    %v2766 = vpop.f32.mrf.mxu0
    %v2767 = vadd.f32 %v2571, %v2766
    %v2768 = vpop.f32.mrf.mxu0
    %2769 = vmatprep.mubr.f32.mxu0 0.0
    %2770 = vmatmul.mubr.f32.gmra.mxu0 %v2627
    %v2771 = vpop.f32.mrf.mxu0
    %v2772 = vadd.f32 %v2576, %v2771
    %v2773 = vpop.f32.mrf.mxu0
    %2774 = vmatprep.mubr.f32.mxu0 0.0
    %2775 = vmatmul.mubr.f32.gmra.mxu0 %v2630
    %v2776 = vpop.f32.mrf.mxu0
    %v2777 = vadd.f32 %v2581, %v2776
    %v2778 = vpop.f32.mrf.mxu0
    %2779 = vdwg.mxu0
    %s2780 = scalar_lea.vmem [#allocation5], 8
    %v2781 = vld [vmem:[%s2780] sm:$0xf]
    %v2783 = vsel %vm2386, %v1825, 0
    %v2786 = vsel %vm2386, %v1830, 0
    %v2789 = vsel %vm2386, %v1835, 0
    %v2792 = vsel %vm2386, %v1840, 0
    %v2795 = vsel %vm2386, %v1845, 0
    %v2798 = vsel %vm2386, %v1850, 0
    %v2801 = vsel %vm2386, %v1855, 0
    %v2804 = vsel %vm2386, %v1860, 0
    %v2807 = vsel %vm2386, %v1865, 0
    %v2810 = vsel %vm2386, %v1870, 0
    %v2813 = vsel %vm2386, %v1875, 0
    %v2816 = vsel %vm2386, %v1880, 0
    %v2819 = vsel %vm2386, %v1885, 0
    %v2822 = vsel %vm2386, %v1890, 0
    %v2825 = vsel %vm2386, %v1895, 0
    %v2828 = vsel %vm2386, %v1900, 0
    %v2831 = vsel %vm2435, %v2781, 0
    %2833 = vmatprep.subr.mxu0 0.0
    %2834 = vmatpush1.msra.mxu0 0.0
    %2835 = vmatprep.subr.mxu0 0.0
    %2836 = vmatpush1.msra.mxu0 0.0
    %2837 = vmatprep.subr.mxu0 0.0
    %2838 = vmatpush1.msra.mxu0 0.0
    %2839 = vmatprep.subr.mxu0 0.0
    %2840 = vmatpush1.msra.mxu0 0.0
    %2841 = vmatprep.subr.mxu0 0.0
    %2842 = vmatpush1.msra.mxu0 0.0
    %2843 = vmatprep.subr.mxu0 0.0
    %2844 = vmatpush1.msra.mxu0 0.0
    %2845 = vmatprep.subr.mxu0 0.0
    %2846 = vmatpush1.msra.mxu0 0.0
    %2847 = vmatprep.subr.mxu0 0.0
    %2848 = vmatpush1.msra.mxu0 0.0
    %2849 = vmatprep.subr.mxu0 0.0
    %2850 = vmatpush1.msra.mxu0 0.0
    %2851 = vmatprep.subr.mxu0 0.0
    %2852 = vmatpush1.msra.mxu0 0.0
    %2853 = vmatprep.subr.mxu0 0.0
    %2854 = vmatpush1.msra.mxu0 0.0
    %2855 = vmatprep.subr.mxu0 0.0
    %2856 = vmatpush1.msra.mxu0 0.0
    %2857 = vmatprep.subr.mxu0 0.0
    %2858 = vmatpush1.msra.mxu0 0.0
    %2859 = vmatprep.subr.mxu0 0.0
    %2860 = vmatpush1.msra.mxu0 0.0
    %2861 = vmatprep.subr.mxu0 0.0
    %2862 = vmatpush1.msra.mxu0 0.0
    %2863 = vmatprep.subr.mxu0 0.0
    %2864 = vmatpush1.msra.mxu0 %v2831
    %2865 = vmatprep.subr.mxu0 0.0
    %2866 = vmatpush2.msra.mxu0 0.0
    %2867 = vmatprep.subr.mxu0 0.0
    %2868 = vmatpush2.msra.mxu0 0.0
    %2869 = vmatprep.subr.mxu0 0.0
    %2870 = vmatpush2.msra.mxu0 0.0
    %2871 = vmatprep.subr.mxu0 0.0
    %2872 = vmatpush2.msra.mxu0 0.0
    %2873 = vmatprep.subr.mxu0 0.0
    %2874 = vmatpush2.msra.mxu0 0.0
    %2875 = vmatprep.subr.mxu0 0.0
    %2876 = vmatpush2.msra.mxu0 0.0
    %2877 = vmatprep.subr.mxu0 0.0
    %2878 = vmatpush2.msra.mxu0 0.0
    %2879 = vmatprep.subr.mxu0 0.0
    %2880 = vmatpush2.msra.mxu0 0.0
    %2881 = vmatprep.subr.mxu0 0.0
    %2882 = vmatpush2.msra.mxu0 0.0
    %2883 = vmatprep.subr.mxu0 0.0
    %2884 = vmatpush2.msra.mxu0 0.0
    %2885 = vmatprep.subr.mxu0 0.0
    %2886 = vmatpush2.msra.mxu0 0.0
    %2887 = vmatprep.subr.mxu0 0.0
    %2888 = vmatpush2.msra.mxu0 0.0
    %2889 = vmatprep.subr.mxu0 0.0
    %2890 = vmatpush2.msra.mxu0 0.0
    %2891 = vmatprep.subr.mxu0 0.0
    %2892 = vmatpush2.msra.mxu0 0.0
    %2893 = vmatprep.subr.mxu0 0.0
    %2894 = vmatpush2.msra.mxu0 0.0
    %2895 = vmatprep.subr.mxu0 0.0
    %2896 = vmatpush2.msra.mxu0 0.0
    %2897 = vmatprep.mubr.f32.mxu0 0.0
    %2898 = vmatmul.mubr.f32.gmra.mxu0 %v2783
    %v2899 = vpop.f32.mrf.mxu0
    %v2900 = vadd.f32 0.0, %v2899
    %v2901 = vpop.f32.mrf.mxu0
    %2902 = vmatprep.mubr.f32.mxu0 0.0
    %2903 = vmatmul.mubr.f32.gmra.mxu0 %v2786
    %v2904 = vpop.f32.mrf.mxu0
    %v2905 = vadd.f32 0.0, %v2904
    %v2906 = vpop.f32.mrf.mxu0
    %2907 = vmatprep.mubr.f32.mxu0 0.0
    %2908 = vmatmul.mubr.f32.gmra.mxu0 %v2789
    %v2909 = vpop.f32.mrf.mxu0
    %v2910 = vadd.f32 0.0, %v2909
    %v2911 = vpop.f32.mrf.mxu0
    %2912 = vmatprep.mubr.f32.mxu0 0.0
    %2913 = vmatmul.mubr.f32.gmra.mxu0 %v2792
    %v2914 = vpop.f32.mrf.mxu0
    %v2915 = vadd.f32 0.0, %v2914
    %v2916 = vpop.f32.mrf.mxu0
    %2917 = vmatprep.mubr.f32.mxu0 0.0
    %2918 = vmatmul.mubr.f32.gmra.mxu0 %v2795
    %v2919 = vpop.f32.mrf.mxu0
    %v2920 = vadd.f32 0.0, %v2919
    %v2921 = vpop.f32.mrf.mxu0
    %2922 = vmatprep.mubr.f32.mxu0 0.0
    %2923 = vmatmul.mubr.f32.gmra.mxu0 %v2798
    %v2924 = vpop.f32.mrf.mxu0
    %v2925 = vadd.f32 0.0, %v2924
    %v2926 = vpop.f32.mrf.mxu0
    %2927 = vmatprep.mubr.f32.mxu0 0.0
    %2928 = vmatmul.mubr.f32.gmra.mxu0 %v2801
    %v2929 = vpop.f32.mrf.mxu0
    %v2930 = vadd.f32 0.0, %v2929
    %v2931 = vpop.f32.mrf.mxu0
    %2932 = vmatprep.mubr.f32.mxu0 0.0
    %2933 = vmatmul.mubr.f32.gmra.mxu0 %v2804
    %v2934 = vpop.f32.mrf.mxu0
    %v2935 = vadd.f32 0.0, %v2934
    %v2936 = vpop.f32.mrf.mxu0
    %2937 = vmatprep.mubr.f32.mxu0 0.0
    %2938 = vmatmul.mubr.f32.gmra.mxu0 %v2807
    %v2939 = vpop.f32.mrf.mxu0
    %v2940 = vadd.f32 0.0, %v2939
    %v2941 = vpop.f32.mrf.mxu0
    %2942 = vmatprep.mubr.f32.mxu0 0.0
    %2943 = vmatmul.mubr.f32.gmra.mxu0 %v2810
    %v2944 = vpop.f32.mrf.mxu0
    %v2945 = vadd.f32 0.0, %v2944
    %v2946 = vpop.f32.mrf.mxu0
    %2947 = vmatprep.mubr.f32.mxu0 0.0
    %2948 = vmatmul.mubr.f32.gmra.mxu0 %v2813
    %v2949 = vpop.f32.mrf.mxu0
    %v2950 = vadd.f32 0.0, %v2949
    %v2951 = vpop.f32.mrf.mxu0
    %2952 = vmatprep.mubr.f32.mxu0 0.0
    %2953 = vmatmul.mubr.f32.gmra.mxu0 %v2816
    %v2954 = vpop.f32.mrf.mxu0
    %v2955 = vadd.f32 0.0, %v2954
    %v2956 = vpop.f32.mrf.mxu0
    %2957 = vmatprep.mubr.f32.mxu0 0.0
    %2958 = vmatmul.mubr.f32.gmra.mxu0 %v2819
    %v2959 = vpop.f32.mrf.mxu0
    %v2960 = vadd.f32 0.0, %v2959
    %v2961 = vpop.f32.mrf.mxu0
    %2962 = vmatprep.mubr.f32.mxu0 0.0
    %2963 = vmatmul.mubr.f32.gmra.mxu0 %v2822
    %v2964 = vpop.f32.mrf.mxu0
    %v2965 = vadd.f32 0.0, %v2964
    %v2966 = vpop.f32.mrf.mxu0
    %2967 = vmatprep.mubr.f32.mxu0 0.0
    %2968 = vmatmul.mubr.f32.gmra.mxu0 %v2825
    %v2969 = vpop.f32.mrf.mxu0
    %v2970 = vadd.f32 0.0, %v2969
    %v2971 = vpop.f32.mrf.mxu0
    %2972 = vmatprep.mubr.f32.mxu0 0.0
    %2973 = vmatmul.mubr.f32.gmra.mxu0 %v2828
    %v2974 = vpop.f32.mrf.mxu0
    %v2975 = vadd.f32 0.0, %v2974
    %v2976 = vpop.f32.mrf.mxu0
    %2977 = vdwg.mxu0
    %v2978 = vadd.f32 %v2702, %v2900
    %v2979 = vadd.f32 %v2707, %v2905
    %v2980 = vadd.f32 %v2712, %v2910
    %v2981 = vadd.f32 %v2717, %v2915
    %v2982 = vadd.f32 %v2722, %v2920
    %v2983 = vadd.f32 %v2727, %v2925
    %v2984 = vadd.f32 %v2732, %v2930
    %v2985 = vadd.f32 %v2737, %v2935
    %v2986 = vadd.f32 %v2742, %v2940
    %v2987 = vadd.f32 %v2747, %v2945
    %v2988 = vadd.f32 %v2752, %v2950
    %v2989 = vadd.f32 %v2757, %v2955
    %v2990 = vadd.f32 %v2762, %v2960
    %v2991 = vadd.f32 %v2767, %v2965
    %v2992 = vadd.f32 %v2772, %v2970
    %v2993 = vadd.f32 %v2777, %v2975
    %s2994 = scalar_lea.vmem [#allocation5], 12
    %v2995 = vld [vmem:[%s2994] sm:$0xf]
    %v2997 = vsel %vm2386, %v1905, 0
    %v3000 = vsel %vm2386, %v1910, 0
    %v3003 = vsel %vm2386, %v1915, 0
    %v3006 = vsel %vm2386, %v1920, 0
    %v3009 = vsel %vm2386, %v1925, 0
    %v3012 = vsel %vm2386, %v1930, 0
    %v3015 = vsel %vm2386, %v1935, 0
    %v3018 = vsel %vm2386, %v1940, 0
    %v3021 = vsel %vm2386, %v1945, 0
    %v3024 = vsel %vm2386, %v1950, 0
    %v3027 = vsel %vm2386, %v1955, 0
    %v3030 = vsel %vm2386, %v1960, 0
    %v3033 = vsel %vm2386, %v1965, 0
    %v3036 = vsel %vm2386, %v1970, 0
    %v3039 = vsel %vm2386, %v1975, 0
    %v3042 = vsel %vm2386, %v1980, 0
    %v3045 = vsel %vm2435, %v2995, 0
    %3047 = vmatprep.subr.mxu0 0.0
    %3048 = vmatpush1.msra.mxu0 0.0
    %3049 = vmatprep.subr.mxu0 0.0
    %3050 = vmatpush1.msra.mxu0 0.0
    %3051 = vmatprep.subr.mxu0 0.0
    %3052 = vmatpush1.msra.mxu0 0.0
    %3053 = vmatprep.subr.mxu0 0.0
    %3054 = vmatpush1.msra.mxu0 0.0
    %3055 = vmatprep.subr.mxu0 0.0
    %3056 = vmatpush1.msra.mxu0 0.0
    %3057 = vmatprep.subr.mxu0 0.0
    %3058 = vmatpush1.msra.mxu0 0.0
    %3059 = vmatprep.subr.mxu0 0.0
    %3060 = vmatpush1.msra.mxu0 0.0
    %3061 = vmatprep.subr.mxu0 0.0
    %3062 = vmatpush1.msra.mxu0 0.0
    %3063 = vmatprep.subr.mxu0 0.0
    %3064 = vmatpush1.msra.mxu0 0.0
    %3065 = vmatprep.subr.mxu0 0.0
    %3066 = vmatpush1.msra.mxu0 0.0
    %3067 = vmatprep.subr.mxu0 0.0
    %3068 = vmatpush1.msra.mxu0 0.0
    %3069 = vmatprep.subr.mxu0 0.0
    %3070 = vmatpush1.msra.mxu0 0.0
    %3071 = vmatprep.subr.mxu0 0.0
    %3072 = vmatpush1.msra.mxu0 0.0
    %3073 = vmatprep.subr.mxu0 0.0
    %3074 = vmatpush1.msra.mxu0 0.0
    %3075 = vmatprep.subr.mxu0 0.0
    %3076 = vmatpush1.msra.mxu0 0.0
    %3077 = vmatprep.subr.mxu0 0.0
    %3078 = vmatpush1.msra.mxu0 %v3045
    %3079 = vmatprep.subr.mxu0 0.0
    %3080 = vmatpush2.msra.mxu0 0.0
    %3081 = vmatprep.subr.mxu0 0.0
    %3082 = vmatpush2.msra.mxu0 0.0
    %3083 = vmatprep.subr.mxu0 0.0
    %3084 = vmatpush2.msra.mxu0 0.0
    %3085 = vmatprep.subr.mxu0 0.0
    %3086 = vmatpush2.msra.mxu0 0.0
    %3087 = vmatprep.subr.mxu0 0.0
    %3088 = vmatpush2.msra.mxu0 0.0
    %3089 = vmatprep.subr.mxu0 0.0
    %3090 = vmatpush2.msra.mxu0 0.0
    %3091 = vmatprep.subr.mxu0 0.0
    %3092 = vmatpush2.msra.mxu0 0.0
    %3093 = vmatprep.subr.mxu0 0.0
    %3094 = vmatpush2.msra.mxu0 0.0
    %3095 = vmatprep.subr.mxu0 0.0
    %3096 = vmatpush2.msra.mxu0 0.0
    %3097 = vmatprep.subr.mxu0 0.0
    %3098 = vmatpush2.msra.mxu0 0.0
    %3099 = vmatprep.subr.mxu0 0.0
    %3100 = vmatpush2.msra.mxu0 0.0
    %3101 = vmatprep.subr.mxu0 0.0
    %3102 = vmatpush2.msra.mxu0 0.0
    %3103 = vmatprep.subr.mxu0 0.0
    %3104 = vmatpush2.msra.mxu0 0.0
    %3105 = vmatprep.subr.mxu0 0.0
    %3106 = vmatpush2.msra.mxu0 0.0
    %3107 = vmatprep.subr.mxu0 0.0
    %3108 = vmatpush2.msra.mxu0 0.0
    %3109 = vmatprep.subr.mxu0 0.0
    %3110 = vmatpush2.msra.mxu0 0.0
    %3111 = vmatprep.mubr.f32.mxu0 0.0
    %3112 = vmatmul.mubr.f32.gmra.mxu0 %v2997
    %v3113 = vpop.f32.mrf.mxu0
    %v3114 = vadd.f32 0.0, %v3113
    %v3115 = vpop.f32.mrf.mxu0
    %3116 = vmatprep.mubr.f32.mxu0 0.0
    %3117 = vmatmul.mubr.f32.gmra.mxu0 %v3000
    %v3118 = vpop.f32.mrf.mxu0
    %v3119 = vadd.f32 0.0, %v3118
    %v3120 = vpop.f32.mrf.mxu0
    %3121 = vmatprep.mubr.f32.mxu0 0.0
    %3122 = vmatmul.mubr.f32.gmra.mxu0 %v3003
    %v3123 = vpop.f32.mrf.mxu0
    %v3124 = vadd.f32 0.0, %v3123
    %v3125 = vpop.f32.mrf.mxu0
    %3126 = vmatprep.mubr.f32.mxu0 0.0
    %3127 = vmatmul.mubr.f32.gmra.mxu0 %v3006
    %v3128 = vpop.f32.mrf.mxu0
    %v3129 = vadd.f32 0.0, %v3128
    %v3130 = vpop.f32.mrf.mxu0
    %3131 = vmatprep.mubr.f32.mxu0 0.0
    %3132 = vmatmul.mubr.f32.gmra.mxu0 %v3009
    %v3133 = vpop.f32.mrf.mxu0
    %v3134 = vadd.f32 0.0, %v3133
    %v3135 = vpop.f32.mrf.mxu0
    %3136 = vmatprep.mubr.f32.mxu0 0.0
    %3137 = vmatmul.mubr.f32.gmra.mxu0 %v3012
    %v3138 = vpop.f32.mrf.mxu0
    %v3139 = vadd.f32 0.0, %v3138
    %v3140 = vpop.f32.mrf.mxu0
    %3141 = vmatprep.mubr.f32.mxu0 0.0
    %3142 = vmatmul.mubr.f32.gmra.mxu0 %v3015
    %v3143 = vpop.f32.mrf.mxu0
    %v3144 = vadd.f32 0.0, %v3143
    %v3145 = vpop.f32.mrf.mxu0
    %3146 = vmatprep.mubr.f32.mxu0 0.0
    %3147 = vmatmul.mubr.f32.gmra.mxu0 %v3018
    %v3148 = vpop.f32.mrf.mxu0
    %v3149 = vadd.f32 0.0, %v3148
    %v3150 = vpop.f32.mrf.mxu0
    %3151 = vmatprep.mubr.f32.mxu0 0.0
    %3152 = vmatmul.mubr.f32.gmra.mxu0 %v3021
    %v3153 = vpop.f32.mrf.mxu0
    %v3154 = vadd.f32 0.0, %v3153
    %v3155 = vpop.f32.mrf.mxu0
    %3156 = vmatprep.mubr.f32.mxu0 0.0
    %3157 = vmatmul.mubr.f32.gmra.mxu0 %v3024
    %v3158 = vpop.f32.mrf.mxu0
    %v3159 = vadd.f32 0.0, %v3158
    %v3160 = vpop.f32.mrf.mxu0
    %3161 = vmatprep.mubr.f32.mxu0 0.0
    %3162 = vmatmul.mubr.f32.gmra.mxu0 %v3027
    %v3163 = vpop.f32.mrf.mxu0
    %v3164 = vadd.f32 0.0, %v3163
    %v3165 = vpop.f32.mrf.mxu0
    %3166 = vmatprep.mubr.f32.mxu0 0.0
    %3167 = vmatmul.mubr.f32.gmra.mxu0 %v3030
    %v3168 = vpop.f32.mrf.mxu0
    %v3169 = vadd.f32 0.0, %v3168
    %v3170 = vpop.f32.mrf.mxu0
    %3171 = vmatprep.mubr.f32.mxu0 0.0
    %3172 = vmatmul.mubr.f32.gmra.mxu0 %v3033
    %v3173 = vpop.f32.mrf.mxu0
    %v3174 = vadd.f32 0.0, %v3173
    %v3175 = vpop.f32.mrf.mxu0
    %3176 = vmatprep.mubr.f32.mxu0 0.0
    %3177 = vmatmul.mubr.f32.gmra.mxu0 %v3036
    %v3178 = vpop.f32.mrf.mxu0
    %v3179 = vadd.f32 0.0, %v3178
    %v3180 = vpop.f32.mrf.mxu0
    %3181 = vmatprep.mubr.f32.mxu0 0.0
    %3182 = vmatmul.mubr.f32.gmra.mxu0 %v3039
    %v3183 = vpop.f32.mrf.mxu0
    %v3184 = vadd.f32 0.0, %v3183
    %v3185 = vpop.f32.mrf.mxu0
    %3186 = vmatprep.mubr.f32.mxu0 0.0
    %3187 = vmatmul.mubr.f32.gmra.mxu0 %v3042
    %v3188 = vpop.f32.mrf.mxu0
    %v3189 = vadd.f32 0.0, %v3188
    %v3190 = vpop.f32.mrf.mxu0
    %3191 = vdwg.mxu0
    %v3192 = vadd.f32 %v2978, %v3114
    %v3193 = vadd.f32 %v2979, %v3119
    %v3194 = vadd.f32 %v2980, %v3124
    %v3195 = vadd.f32 %v2981, %v3129
    %v3196 = vadd.f32 %v2982, %v3134
    %v3197 = vadd.f32 %v2983, %v3139
    %v3198 = vadd.f32 %v2984, %v3144
    %v3199 = vadd.f32 %v2985, %v3149
    %v3200 = vadd.f32 %v2986, %v3154
    %v3201 = vadd.f32 %v2987, %v3159
    %v3202 = vadd.f32 %v2988, %v3164
    %v3203 = vadd.f32 %v2989, %v3169
    %v3204 = vadd.f32 %v2990, %v3174
    %v3205 = vadd.f32 %v2991, %v3179
    %v3206 = vadd.f32 %v2992, %v3184
    %v3207 = vadd.f32 %v2993, %v3189
    %s3208 = scalar_lea.vmem [#allocation5], 16
    %v3209 = vld [vmem:[%s3208] sm:$0xf]
    %v3211 = vsel %vm2386, %v1985, 0
    %v3214 = vsel %vm2386, %v1990, 0
    %v3217 = vsel %vm2386, %v1995, 0
    %v3220 = vsel %vm2386, %v2000, 0
    %v3223 = vsel %vm2386, %v2005, 0
    %v3226 = vsel %vm2386, %v2010, 0
    %v3229 = vsel %vm2386, %v2015, 0
    %v3232 = vsel %vm2386, %v2020, 0
    %v3235 = vsel %vm2386, %v2025, 0
    %v3238 = vsel %vm2386, %v2030, 0
    %v3241 = vsel %vm2386, %v2035, 0
    %v3244 = vsel %vm2386, %v2040, 0
    %v3247 = vsel %vm2386, %v2045, 0
    %v3250 = vsel %vm2386, %v2050, 0
    %v3253 = vsel %vm2386, %v2055, 0
    %v3256 = vsel %vm2386, %v2060, 0
    %v3259 = vsel %vm2435, %v3209, 0
    %3261 = vmatprep.subr.mxu0 0.0
    %3262 = vmatpush1.msra.mxu0 0.0
    %3263 = vmatprep.subr.mxu0 0.0
    %3264 = vmatpush1.msra.mxu0 0.0
    %3265 = vmatprep.subr.mxu0 0.0
    %3266 = vmatpush1.msra.mxu0 0.0
    %3267 = vmatprep.subr.mxu0 0.0
    %3268 = vmatpush1.msra.mxu0 0.0
    %3269 = vmatprep.subr.mxu0 0.0
    %3270 = vmatpush1.msra.mxu0 0.0
    %3271 = vmatprep.subr.mxu0 0.0
    %3272 = vmatpush1.msra.mxu0 0.0
    %3273 = vmatprep.subr.mxu0 0.0
    %3274 = vmatpush1.msra.mxu0 0.0
    %3275 = vmatprep.subr.mxu0 0.0
    %3276 = vmatpush1.msra.mxu0 0.0
    %3277 = vmatprep.subr.mxu0 0.0
    %3278 = vmatpush1.msra.mxu0 0.0
    %3279 = vmatprep.subr.mxu0 0.0
    %3280 = vmatpush1.msra.mxu0 0.0
    %3281 = vmatprep.subr.mxu0 0.0
    %3282 = vmatpush1.msra.mxu0 0.0
    %3283 = vmatprep.subr.mxu0 0.0
    %3284 = vmatpush1.msra.mxu0 0.0
    %3285 = vmatprep.subr.mxu0 0.0
    %3286 = vmatpush1.msra.mxu0 0.0
    %3287 = vmatprep.subr.mxu0 0.0
    %3288 = vmatpush1.msra.mxu0 0.0
    %3289 = vmatprep.subr.mxu0 0.0
    %3290 = vmatpush1.msra.mxu0 0.0
    %3291 = vmatprep.subr.mxu0 0.0
    %3292 = vmatpush1.msra.mxu0 %v3259
    %3293 = vmatprep.subr.mxu0 0.0
    %3294 = vmatpush2.msra.mxu0 0.0
    %3295 = vmatprep.subr.mxu0 0.0
    %3296 = vmatpush2.msra.mxu0 0.0
    %3297 = vmatprep.subr.mxu0 0.0
    %3298 = vmatpush2.msra.mxu0 0.0
    %3299 = vmatprep.subr.mxu0 0.0
    %3300 = vmatpush2.msra.mxu0 0.0
    %3301 = vmatprep.subr.mxu0 0.0
    %3302 = vmatpush2.msra.mxu0 0.0
    %3303 = vmatprep.subr.mxu0 0.0
    %3304 = vmatpush2.msra.mxu0 0.0
    %3305 = vmatprep.subr.mxu0 0.0
    %3306 = vmatpush2.msra.mxu0 0.0
    %3307 = vmatprep.subr.mxu0 0.0
    %3308 = vmatpush2.msra.mxu0 0.0
    %3309 = vmatprep.subr.mxu0 0.0
    %3310 = vmatpush2.msra.mxu0 0.0
    %3311 = vmatprep.subr.mxu0 0.0
    %3312 = vmatpush2.msra.mxu0 0.0
    %3313 = vmatprep.subr.mxu0 0.0
    %3314 = vmatpush2.msra.mxu0 0.0
    %3315 = vmatprep.subr.mxu0 0.0
    %3316 = vmatpush2.msra.mxu0 0.0
    %3317 = vmatprep.subr.mxu0 0.0
    %3318 = vmatpush2.msra.mxu0 0.0
    %3319 = vmatprep.subr.mxu0 0.0
    %3320 = vmatpush2.msra.mxu0 0.0
    %3321 = vmatprep.subr.mxu0 0.0
    %3322 = vmatpush2.msra.mxu0 0.0
    %3323 = vmatprep.subr.mxu0 0.0
    %3324 = vmatpush2.msra.mxu0 0.0
    %3325 = vmatprep.mubr.f32.mxu0 0.0
    %3326 = vmatmul.mubr.f32.gmra.mxu0 %v3211
    %v3327 = vpop.f32.mrf.mxu0
    %v3328 = vadd.f32 0.0, %v3327
    %v3329 = vpop.f32.mrf.mxu0
    %3330 = vmatprep.mubr.f32.mxu0 0.0
    %3331 = vmatmul.mubr.f32.gmra.mxu0 %v3214
    %v3332 = vpop.f32.mrf.mxu0
    %v3333 = vadd.f32 0.0, %v3332
    %v3334 = vpop.f32.mrf.mxu0
    %3335 = vmatprep.mubr.f32.mxu0 0.0
    %3336 = vmatmul.mubr.f32.gmra.mxu0 %v3217
    %v3337 = vpop.f32.mrf.mxu0
    %v3338 = vadd.f32 0.0, %v3337
    %v3339 = vpop.f32.mrf.mxu0
    %3340 = vmatprep.mubr.f32.mxu0 0.0
    %3341 = vmatmul.mubr.f32.gmra.mxu0 %v3220
    %v3342 = vpop.f32.mrf.mxu0
    %v3343 = vadd.f32 0.0, %v3342
    %v3344 = vpop.f32.mrf.mxu0
    %3345 = vmatprep.mubr.f32.mxu0 0.0
    %3346 = vmatmul.mubr.f32.gmra.mxu0 %v3223
    %v3347 = vpop.f32.mrf.mxu0
    %v3348 = vadd.f32 0.0, %v3347
    %v3349 = vpop.f32.mrf.mxu0
    %3350 = vmatprep.mubr.f32.mxu0 0.0
    %3351 = vmatmul.mubr.f32.gmra.mxu0 %v3226
    %v3352 = vpop.f32.mrf.mxu0
    %v3353 = vadd.f32 0.0, %v3352
    %v3354 = vpop.f32.mrf.mxu0
    %3355 = vmatprep.mubr.f32.mxu0 0.0
    %3356 = vmatmul.mubr.f32.gmra.mxu0 %v3229
    %v3357 = vpop.f32.mrf.mxu0
    %v3358 = vadd.f32 0.0, %v3357
    %v3359 = vpop.f32.mrf.mxu0
    %3360 = vmatprep.mubr.f32.mxu0 0.0
    %3361 = vmatmul.mubr.f32.gmra.mxu0 %v3232
    %v3362 = vpop.f32.mrf.mxu0
    %v3363 = vadd.f32 0.0, %v3362
    %v3364 = vpop.f32.mrf.mxu0
    %3365 = vmatprep.mubr.f32.mxu0 0.0
    %3366 = vmatmul.mubr.f32.gmra.mxu0 %v3235
    %v3367 = vpop.f32.mrf.mxu0
    %v3368 = vadd.f32 0.0, %v3367
    %v3369 = vpop.f32.mrf.mxu0
    %3370 = vmatprep.mubr.f32.mxu0 0.0
    %3371 = vmatmul.mubr.f32.gmra.mxu0 %v3238
    %v3372 = vpop.f32.mrf.mxu0
    %v3373 = vadd.f32 0.0, %v3372
    %v3374 = vpop.f32.mrf.mxu0
    %3375 = vmatprep.mubr.f32.mxu0 0.0
    %3376 = vmatmul.mubr.f32.gmra.mxu0 %v3241
    %v3377 = vpop.f32.mrf.mxu0
    %v3378 = vadd.f32 0.0, %v3377
    %v3379 = vpop.f32.mrf.mxu0
    %3380 = vmatprep.mubr.f32.mxu0 0.0
    %3381 = vmatmul.mubr.f32.gmra.mxu0 %v3244
    %v3382 = vpop.f32.mrf.mxu0
    %v3383 = vadd.f32 0.0, %v3382
    %v3384 = vpop.f32.mrf.mxu0
    %3385 = vmatprep.mubr.f32.mxu0 0.0
    %3386 = vmatmul.mubr.f32.gmra.mxu0 %v3247
    %v3387 = vpop.f32.mrf.mxu0
    %v3388 = vadd.f32 0.0, %v3387
    %v3389 = vpop.f32.mrf.mxu0
    %3390 = vmatprep.mubr.f32.mxu0 0.0
    %3391 = vmatmul.mubr.f32.gmra.mxu0 %v3250
    %v3392 = vpop.f32.mrf.mxu0
    %v3393 = vadd.f32 0.0, %v3392
    %v3394 = vpop.f32.mrf.mxu0
    %3395 = vmatprep.mubr.f32.mxu0 0.0
    %3396 = vmatmul.mubr.f32.gmra.mxu0 %v3253
    %v3397 = vpop.f32.mrf.mxu0
    %v3398 = vadd.f32 0.0, %v3397
    %v3399 = vpop.f32.mrf.mxu0
    %3400 = vmatprep.mubr.f32.mxu0 0.0
    %3401 = vmatmul.mubr.f32.gmra.mxu0 %v3256
    %v3402 = vpop.f32.mrf.mxu0
    %v3403 = vadd.f32 0.0, %v3402
    %v3404 = vpop.f32.mrf.mxu0
    %3405 = vdwg.mxu0
    %v3406 = vadd.f32 %v3192, %v3328
    %v3407 = vadd.f32 %v3193, %v3333
    %v3408 = vadd.f32 %v3194, %v3338
    %v3409 = vadd.f32 %v3195, %v3343
    %v3410 = vadd.f32 %v3196, %v3348
    %v3411 = vadd.f32 %v3197, %v3353
    %v3412 = vadd.f32 %v3198, %v3358
    %v3413 = vadd.f32 %v3199, %v3363
    %v3414 = vadd.f32 %v3200, %v3368
    %v3415 = vadd.f32 %v3201, %v3373
    %v3416 = vadd.f32 %v3202, %v3378
    %v3417 = vadd.f32 %v3203, %v3383
    %v3418 = vadd.f32 %v3204, %v3388
    %v3419 = vadd.f32 %v3205, %v3393
    %v3420 = vadd.f32 %v3206, %v3398
    %v3421 = vadd.f32 %v3207, %v3403
    %s3422 = scalar_lea.vmem [#allocation5], 20
    %v3423 = vld [vmem:[%s3422] sm:$0xf]
    %v3425 = vsel %vm2386, %v2065, 0
    %v3428 = vsel %vm2386, %v2070, 0
    %v3431 = vsel %vm2386, %v2075, 0
    %v3434 = vsel %vm2386, %v2080, 0
    %v3437 = vsel %vm2386, %v2085, 0
    %v3440 = vsel %vm2386, %v2090, 0
    %v3443 = vsel %vm2386, %v2095, 0
    %v3446 = vsel %vm2386, %v2100, 0
    %v3449 = vsel %vm2386, %v2105, 0
    %v3452 = vsel %vm2386, %v2110, 0
    %v3455 = vsel %vm2386, %v2115, 0
    %v3458 = vsel %vm2386, %v2120, 0
    %v3461 = vsel %vm2386, %v2125, 0
    %v3464 = vsel %vm2386, %v2130, 0
    %v3467 = vsel %vm2386, %v2135, 0
    %v3470 = vsel %vm2386, %v2140, 0
    %v3473 = vsel %vm2435, %v3423, 0
    %3475 = vmatprep.subr.mxu0 0.0
    %3476 = vmatpush1.msra.mxu0 0.0
    %3477 = vmatprep.subr.mxu0 0.0
    %3478 = vmatpush1.msra.mxu0 0.0
    %3479 = vmatprep.subr.mxu0 0.0
    %3480 = vmatpush1.msra.mxu0 0.0
    %3481 = vmatprep.subr.mxu0 0.0
    %3482 = vmatpush1.msra.mxu0 0.0
    %3483 = vmatprep.subr.mxu0 0.0
    %3484 = vmatpush1.msra.mxu0 0.0
    %3485 = vmatprep.subr.mxu0 0.0
    %3486 = vmatpush1.msra.mxu0 0.0
    %3487 = vmatprep.subr.mxu0 0.0
    %3488 = vmatpush1.msra.mxu0 0.0
    %3489 = vmatprep.subr.mxu0 0.0
    %3490 = vmatpush1.msra.mxu0 0.0
    %3491 = vmatprep.subr.mxu0 0.0
    %3492 = vmatpush1.msra.mxu0 0.0
    %3493 = vmatprep.subr.mxu0 0.0
    %3494 = vmatpush1.msra.mxu0 0.0
    %3495 = vmatprep.subr.mxu0 0.0
    %3496 = vmatpush1.msra.mxu0 0.0
    %3497 = vmatprep.subr.mxu0 0.0
    %3498 = vmatpush1.msra.mxu0 0.0
    %3499 = vmatprep.subr.mxu0 0.0
    %3500 = vmatpush1.msra.mxu0 0.0
    %3501 = vmatprep.subr.mxu0 0.0
    %3502 = vmatpush1.msra.mxu0 0.0
    %3503 = vmatprep.subr.mxu0 0.0
    %3504 = vmatpush1.msra.mxu0 0.0
    %3505 = vmatprep.subr.mxu0 0.0
    %3506 = vmatpush1.msra.mxu0 %v3473
    %3507 = vmatprep.subr.mxu0 0.0
    %3508 = vmatpush2.msra.mxu0 0.0
    %3509 = vmatprep.subr.mxu0 0.0
    %3510 = vmatpush2.msra.mxu0 0.0
    %3511 = vmatprep.subr.mxu0 0.0
    %3512 = vmatpush2.msra.mxu0 0.0
    %3513 = vmatprep.subr.mxu0 0.0
    %3514 = vmatpush2.msra.mxu0 0.0
    %3515 = vmatprep.subr.mxu0 0.0
    %3516 = vmatpush2.msra.mxu0 0.0
    %3517 = vmatprep.subr.mxu0 0.0
    %3518 = vmatpush2.msra.mxu0 0.0
    %3519 = vmatprep.subr.mxu0 0.0
    %3520 = vmatpush2.msra.mxu0 0.0
    %3521 = vmatprep.subr.mxu0 0.0
    %3522 = vmatpush2.msra.mxu0 0.0
    %3523 = vmatprep.subr.mxu0 0.0
    %3524 = vmatpush2.msra.mxu0 0.0
    %3525 = vmatprep.subr.mxu0 0.0
    %3526 = vmatpush2.msra.mxu0 0.0
    %3527 = vmatprep.subr.mxu0 0.0
    %3528 = vmatpush2.msra.mxu0 0.0
    %3529 = vmatprep.subr.mxu0 0.0
    %3530 = vmatpush2.msra.mxu0 0.0
    %3531 = vmatprep.subr.mxu0 0.0
    %3532 = vmatpush2.msra.mxu0 0.0
    %3533 = vmatprep.subr.mxu0 0.0
    %3534 = vmatpush2.msra.mxu0 0.0
    %3535 = vmatprep.subr.mxu0 0.0
    %3536 = vmatpush2.msra.mxu0 0.0
    %3537 = vmatprep.subr.mxu0 0.0
    %3538 = vmatpush2.msra.mxu0 0.0
    %3539 = vmatprep.mubr.f32.mxu0 0.0
    %3540 = vmatmul.mubr.f32.gmra.mxu0 %v3425
    %v3541 = vpop.f32.mrf.mxu0
    %v3542 = vadd.f32 0.0, %v3541
    %v3543 = vpop.f32.mrf.mxu0
    %3544 = vmatprep.mubr.f32.mxu0 0.0
    %3545 = vmatmul.mubr.f32.gmra.mxu0 %v3428
    %v3546 = vpop.f32.mrf.mxu0
    %v3547 = vadd.f32 0.0, %v3546
    %v3548 = vpop.f32.mrf.mxu0
    %3549 = vmatprep.mubr.f32.mxu0 0.0
    %3550 = vmatmul.mubr.f32.gmra.mxu0 %v3431
    %v3551 = vpop.f32.mrf.mxu0
    %v3552 = vadd.f32 0.0, %v3551
    %v3553 = vpop.f32.mrf.mxu0
    %3554 = vmatprep.mubr.f32.mxu0 0.0
    %3555 = vmatmul.mubr.f32.gmra.mxu0 %v3434
    %v3556 = vpop.f32.mrf.mxu0
    %v3557 = vadd.f32 0.0, %v3556
    %v3558 = vpop.f32.mrf.mxu0
    %3559 = vmatprep.mubr.f32.mxu0 0.0
    %3560 = vmatmul.mubr.f32.gmra.mxu0 %v3437
    %v3561 = vpop.f32.mrf.mxu0
    %v3562 = vadd.f32 0.0, %v3561
    %v3563 = vpop.f32.mrf.mxu0
    %3564 = vmatprep.mubr.f32.mxu0 0.0
    %3565 = vmatmul.mubr.f32.gmra.mxu0 %v3440
    %v3566 = vpop.f32.mrf.mxu0
    %v3567 = vadd.f32 0.0, %v3566
    %v3568 = vpop.f32.mrf.mxu0
    %3569 = vmatprep.mubr.f32.mxu0 0.0
    %3570 = vmatmul.mubr.f32.gmra.mxu0 %v3443
    %v3571 = vpop.f32.mrf.mxu0
    %v3572 = vadd.f32 0.0, %v3571
    %v3573 = vpop.f32.mrf.mxu0
    %3574 = vmatprep.mubr.f32.mxu0 0.0
    %3575 = vmatmul.mubr.f32.gmra.mxu0 %v3446
    %v3576 = vpop.f32.mrf.mxu0
    %v3577 = vadd.f32 0.0, %v3576
    %v3578 = vpop.f32.mrf.mxu0
    %3579 = vmatprep.mubr.f32.mxu0 0.0
    %3580 = vmatmul.mubr.f32.gmra.mxu0 %v3449
    %v3581 = vpop.f32.mrf.mxu0
    %v3582 = vadd.f32 0.0, %v3581
    %v3583 = vpop.f32.mrf.mxu0
    %3584 = vmatprep.mubr.f32.mxu0 0.0
    %3585 = vmatmul.mubr.f32.gmra.mxu0 %v3452
    %v3586 = vpop.f32.mrf.mxu0
    %v3587 = vadd.f32 0.0, %v3586
    %v3588 = vpop.f32.mrf.mxu0
    %3589 = vmatprep.mubr.f32.mxu0 0.0
    %3590 = vmatmul.mubr.f32.gmra.mxu0 %v3455
    %v3591 = vpop.f32.mrf.mxu0
    %v3592 = vadd.f32 0.0, %v3591
    %v3593 = vpop.f32.mrf.mxu0
    %3594 = vmatprep.mubr.f32.mxu0 0.0
    %3595 = vmatmul.mubr.f32.gmra.mxu0 %v3458
    %v3596 = vpop.f32.mrf.mxu0
    %v3597 = vadd.f32 0.0, %v3596
    %v3598 = vpop.f32.mrf.mxu0
    %3599 = vmatprep.mubr.f32.mxu0 0.0
    %3600 = vmatmul.mubr.f32.gmra.mxu0 %v3461
    %v3601 = vpop.f32.mrf.mxu0
    %v3602 = vadd.f32 0.0, %v3601
    %v3603 = vpop.f32.mrf.mxu0
    %3604 = vmatprep.mubr.f32.mxu0 0.0
    %3605 = vmatmul.mubr.f32.gmra.mxu0 %v3464
    %v3606 = vpop.f32.mrf.mxu0
    %v3607 = vadd.f32 0.0, %v3606
    %v3608 = vpop.f32.mrf.mxu0
    %3609 = vmatprep.mubr.f32.mxu0 0.0
    %3610 = vmatmul.mubr.f32.gmra.mxu0 %v3467
    %v3611 = vpop.f32.mrf.mxu0
    %v3612 = vadd.f32 0.0, %v3611
    %v3613 = vpop.f32.mrf.mxu0
    %3614 = vmatprep.mubr.f32.mxu0 0.0
    %3615 = vmatmul.mubr.f32.gmra.mxu0 %v3470
    %v3616 = vpop.f32.mrf.mxu0
    %v3617 = vadd.f32 0.0, %v3616
    %v3618 = vpop.f32.mrf.mxu0
    %3619 = vdwg.mxu0
    %v3620 = vadd.f32 %v3406, %v3542
    %v3621 = vadd.f32 %v3407, %v3547
    %v3622 = vadd.f32 %v3408, %v3552
    %v3623 = vadd.f32 %v3409, %v3557
    %v3624 = vadd.f32 %v3410, %v3562
    %v3625 = vadd.f32 %v3411, %v3567
    %v3626 = vadd.f32 %v3412, %v3572
    %v3627 = vadd.f32 %v3413, %v3577
    %v3628 = vadd.f32 %v3414, %v3582
    %v3629 = vadd.f32 %v3415, %v3587
    %v3630 = vadd.f32 %v3416, %v3592
    %v3631 = vadd.f32 %v3417, %v3597
    %v3632 = vadd.f32 %v3418, %v3602
    %v3633 = vadd.f32 %v3419, %v3607
    %v3634 = vadd.f32 %v3420, %v3612
    %v3635 = vadd.f32 %v3421, %v3617
    %s3636 = scalar_lea.vmem [#allocation5], 24
    %v3637 = vld [vmem:[%s3636] sm:$0xf]
    %v3639 = vsel %vm2386, %v2145, 0
    %v3642 = vsel %vm2386, %v2150, 0
    %v3645 = vsel %vm2386, %v2155, 0
    %v3648 = vsel %vm2386, %v2160, 0
    %v3651 = vsel %vm2386, %v2165, 0
    %v3654 = vsel %vm2386, %v2170, 0
    %v3657 = vsel %vm2386, %v2175, 0
    %v3660 = vsel %vm2386, %v2180, 0
    %v3663 = vsel %vm2386, %v2185, 0
    %v3666 = vsel %vm2386, %v2190, 0
    %v3669 = vsel %vm2386, %v2195, 0
    %v3672 = vsel %vm2386, %v2200, 0
    %v3675 = vsel %vm2386, %v2205, 0
    %v3678 = vsel %vm2386, %v2210, 0
    %v3681 = vsel %vm2386, %v2215, 0
    %v3684 = vsel %vm2386, %v2220, 0
    %v3687 = vsel %vm2435, %v3637, 0
    %3689 = vmatprep.subr.mxu0 0.0
    %3690 = vmatpush1.msra.mxu0 0.0
    %3691 = vmatprep.subr.mxu0 0.0
    %3692 = vmatpush1.msra.mxu0 0.0
    %3693 = vmatprep.subr.mxu0 0.0
    %3694 = vmatpush1.msra.mxu0 0.0
    %3695 = vmatprep.subr.mxu0 0.0
    %3696 = vmatpush1.msra.mxu0 0.0
    %3697 = vmatprep.subr.mxu0 0.0
    %3698 = vmatpush1.msra.mxu0 0.0
    %3699 = vmatprep.subr.mxu0 0.0
    %3700 = vmatpush1.msra.mxu0 0.0
    %3701 = vmatprep.subr.mxu0 0.0
    %3702 = vmatpush1.msra.mxu0 0.0
    %3703 = vmatprep.subr.mxu0 0.0
    %3704 = vmatpush1.msra.mxu0 0.0
    %3705 = vmatprep.subr.mxu0 0.0
    %3706 = vmatpush1.msra.mxu0 0.0
    %3707 = vmatprep.subr.mxu0 0.0
    %3708 = vmatpush1.msra.mxu0 0.0
    %3709 = vmatprep.subr.mxu0 0.0
    %3710 = vmatpush1.msra.mxu0 0.0
    %3711 = vmatprep.subr.mxu0 0.0
    %3712 = vmatpush1.msra.mxu0 0.0
    %3713 = vmatprep.subr.mxu0 0.0
    %3714 = vmatpush1.msra.mxu0 0.0
    %3715 = vmatprep.subr.mxu0 0.0
    %3716 = vmatpush1.msra.mxu0 0.0
    %3717 = vmatprep.subr.mxu0 0.0
    %3718 = vmatpush1.msra.mxu0 0.0
    %3719 = vmatprep.subr.mxu0 0.0
    %3720 = vmatpush1.msra.mxu0 %v3687
    %3721 = vmatprep.subr.mxu0 0.0
    %3722 = vmatpush2.msra.mxu0 0.0
    %3723 = vmatprep.subr.mxu0 0.0
    %3724 = vmatpush2.msra.mxu0 0.0
    %3725 = vmatprep.subr.mxu0 0.0
    %3726 = vmatpush2.msra.mxu0 0.0
    %3727 = vmatprep.subr.mxu0 0.0
    %3728 = vmatpush2.msra.mxu0 0.0
    %3729 = vmatprep.subr.mxu0 0.0
    %3730 = vmatpush2.msra.mxu0 0.0
    %3731 = vmatprep.subr.mxu0 0.0
    %3732 = vmatpush2.msra.mxu0 0.0
    %3733 = vmatprep.subr.mxu0 0.0
    %3734 = vmatpush2.msra.mxu0 0.0
    %3735 = vmatprep.subr.mxu0 0.0
    %3736 = vmatpush2.msra.mxu0 0.0
    %3737 = vmatprep.subr.mxu0 0.0
    %3738 = vmatpush2.msra.mxu0 0.0
    %3739 = vmatprep.subr.mxu0 0.0
    %3740 = vmatpush2.msra.mxu0 0.0
    %3741 = vmatprep.subr.mxu0 0.0
    %3742 = vmatpush2.msra.mxu0 0.0
    %3743 = vmatprep.subr.mxu0 0.0
    %3744 = vmatpush2.msra.mxu0 0.0
    %3745 = vmatprep.subr.mxu0 0.0
    %3746 = vmatpush2.msra.mxu0 0.0
    %3747 = vmatprep.subr.mxu0 0.0
    %3748 = vmatpush2.msra.mxu0 0.0
    %3749 = vmatprep.subr.mxu0 0.0
    %3750 = vmatpush2.msra.mxu0 0.0
    %3751 = vmatprep.subr.mxu0 0.0
    %3752 = vmatpush2.msra.mxu0 0.0
    %3753 = vmatprep.mubr.f32.mxu0 0.0
    %3754 = vmatmul.mubr.f32.gmra.mxu0 %v3639
    %v3755 = vpop.f32.mrf.mxu0
    %v3756 = vadd.f32 0.0, %v3755
    %v3757 = vpop.f32.mrf.mxu0
    %3758 = vmatprep.mubr.f32.mxu0 0.0
    %3759 = vmatmul.mubr.f32.gmra.mxu0 %v3642
    %v3760 = vpop.f32.mrf.mxu0
    %v3761 = vadd.f32 0.0, %v3760
    %v3762 = vpop.f32.mrf.mxu0
    %3763 = vmatprep.mubr.f32.mxu0 0.0
    %3764 = vmatmul.mubr.f32.gmra.mxu0 %v3645
    %v3765 = vpop.f32.mrf.mxu0
    %v3766 = vadd.f32 0.0, %v3765
    %v3767 = vpop.f32.mrf.mxu0
    %3768 = vmatprep.mubr.f32.mxu0 0.0
    %3769 = vmatmul.mubr.f32.gmra.mxu0 %v3648
    %v3770 = vpop.f32.mrf.mxu0
    %v3771 = vadd.f32 0.0, %v3770
    %v3772 = vpop.f32.mrf.mxu0
    %3773 = vmatprep.mubr.f32.mxu0 0.0
    %3774 = vmatmul.mubr.f32.gmra.mxu0 %v3651
    %v3775 = vpop.f32.mrf.mxu0
    %v3776 = vadd.f32 0.0, %v3775
    %v3777 = vpop.f32.mrf.mxu0
    %3778 = vmatprep.mubr.f32.mxu0 0.0
    %3779 = vmatmul.mubr.f32.gmra.mxu0 %v3654
    %v3780 = vpop.f32.mrf.mxu0
    %v3781 = vadd.f32 0.0, %v3780
    %v3782 = vpop.f32.mrf.mxu0
    %3783 = vmatprep.mubr.f32.mxu0 0.0
    %3784 = vmatmul.mubr.f32.gmra.mxu0 %v3657
    %v3785 = vpop.f32.mrf.mxu0
    %v3786 = vadd.f32 0.0, %v3785
    %v3787 = vpop.f32.mrf.mxu0
    %3788 = vmatprep.mubr.f32.mxu0 0.0
    %3789 = vmatmul.mubr.f32.gmra.mxu0 %v3660
    %v3790 = vpop.f32.mrf.mxu0
    %v3791 = vadd.f32 0.0, %v3790
    %v3792 = vpop.f32.mrf.mxu0
    %3793 = vmatprep.mubr.f32.mxu0 0.0
    %3794 = vmatmul.mubr.f32.gmra.mxu0 %v3663
    %v3795 = vpop.f32.mrf.mxu0
    %v3796 = vadd.f32 0.0, %v3795
    %v3797 = vpop.f32.mrf.mxu0
    %3798 = vmatprep.mubr.f32.mxu0 0.0
    %3799 = vmatmul.mubr.f32.gmra.mxu0 %v3666
    %v3800 = vpop.f32.mrf.mxu0
    %v3801 = vadd.f32 0.0, %v3800
    %v3802 = vpop.f32.mrf.mxu0
    %3803 = vmatprep.mubr.f32.mxu0 0.0
    %3804 = vmatmul.mubr.f32.gmra.mxu0 %v3669
    %v3805 = vpop.f32.mrf.mxu0
    %v3806 = vadd.f32 0.0, %v3805
    %v3807 = vpop.f32.mrf.mxu0
    %3808 = vmatprep.mubr.f32.mxu0 0.0
    %3809 = vmatmul.mubr.f32.gmra.mxu0 %v3672
    %v3810 = vpop.f32.mrf.mxu0
    %v3811 = vadd.f32 0.0, %v3810
    %v3812 = vpop.f32.mrf.mxu0
    %3813 = vmatprep.mubr.f32.mxu0 0.0
    %3814 = vmatmul.mubr.f32.gmra.mxu0 %v3675
    %v3815 = vpop.f32.mrf.mxu0
    %v3816 = vadd.f32 0.0, %v3815
    %v3817 = vpop.f32.mrf.mxu0
    %3818 = vmatprep.mubr.f32.mxu0 0.0
    %3819 = vmatmul.mubr.f32.gmra.mxu0 %v3678
    %v3820 = vpop.f32.mrf.mxu0
    %v3821 = vadd.f32 0.0, %v3820
    %v3822 = vpop.f32.mrf.mxu0
    %3823 = vmatprep.mubr.f32.mxu0 0.0
    %3824 = vmatmul.mubr.f32.gmra.mxu0 %v3681
    %v3825 = vpop.f32.mrf.mxu0
    %v3826 = vadd.f32 0.0, %v3825
    %v3827 = vpop.f32.mrf.mxu0
    %3828 = vmatprep.mubr.f32.mxu0 0.0
    %3829 = vmatmul.mubr.f32.gmra.mxu0 %v3684
    %v3830 = vpop.f32.mrf.mxu0
    %v3831 = vadd.f32 0.0, %v3830
    %v3832 = vpop.f32.mrf.mxu0
    %3833 = vdwg.mxu0
    %v3834 = vadd.f32 %v3620, %v3756
    %v3835 = vadd.f32 %v3621, %v3761
    %v3836 = vadd.f32 %v3622, %v3766
    %v3837 = vadd.f32 %v3623, %v3771
    %v3838 = vadd.f32 %v3624, %v3776
    %v3839 = vadd.f32 %v3625, %v3781
    %v3840 = vadd.f32 %v3626, %v3786
    %v3841 = vadd.f32 %v3627, %v3791
    %v3842 = vadd.f32 %v3628, %v3796
    %v3843 = vadd.f32 %v3629, %v3801
    %v3844 = vadd.f32 %v3630, %v3806
    %v3845 = vadd.f32 %v3631, %v3811
    %v3846 = vadd.f32 %v3632, %v3816
    %v3847 = vadd.f32 %v3633, %v3821
    %v3848 = vadd.f32 %v3634, %v3826
    %v3849 = vadd.f32 %v3635, %v3831
    %s3850 = scalar_lea.vmem [#allocation5], 28
    %v3851 = vld [vmem:[%s3850] sm:$0xf]
    %v3853 = vsel %vm2386, %v2225, 0
    %v3856 = vsel %vm2386, %v2230, 0
    %v3859 = vsel %vm2386, %v2235, 0
    %v3862 = vsel %vm2386, %v2240, 0
    %v3865 = vsel %vm2386, %v2245, 0
    %v3868 = vsel %vm2386, %v2250, 0
    %v3871 = vsel %vm2386, %v2255, 0
    %v3874 = vsel %vm2386, %v2260, 0
    %v3877 = vsel %vm2386, %v2265, 0
    %v3880 = vsel %vm2386, %v2270, 0
    %v3883 = vsel %vm2386, %v2275, 0
    %v3886 = vsel %vm2386, %v2280, 0
    %v3889 = vsel %vm2386, %v2285, 0
    %v3892 = vsel %vm2386, %v2290, 0
    %v3895 = vsel %vm2386, %v2295, 0
    %v3898 = vsel %vm2386, %v2300, 0
    %v3901 = vsel %vm2435, %v3851, 0
    %3903 = vmatprep.subr.mxu0 0.0
    %3904 = vmatpush1.msra.mxu0 0.0
    %3905 = vmatprep.subr.mxu0 0.0
    %3906 = vmatpush1.msra.mxu0 0.0
    %3907 = vmatprep.subr.mxu0 0.0
    %3908 = vmatpush1.msra.mxu0 0.0
    %3909 = vmatprep.subr.mxu0 0.0
    %3910 = vmatpush1.msra.mxu0 0.0
    %3911 = vmatprep.subr.mxu0 0.0
    %3912 = vmatpush1.msra.mxu0 0.0
    %3913 = vmatprep.subr.mxu0 0.0
    %3914 = vmatpush1.msra.mxu0 0.0
    %3915 = vmatprep.subr.mxu0 0.0
    %3916 = vmatpush1.msra.mxu0 0.0
    %3917 = vmatprep.subr.mxu0 0.0
    %3918 = vmatpush1.msra.mxu0 0.0
    %3919 = vmatprep.subr.mxu0 0.0
    %3920 = vmatpush1.msra.mxu0 0.0
    %3921 = vmatprep.subr.mxu0 0.0
    %3922 = vmatpush1.msra.mxu0 0.0
    %3923 = vmatprep.subr.mxu0 0.0
    %3924 = vmatpush1.msra.mxu0 0.0
    %3925 = vmatprep.subr.mxu0 0.0
    %3926 = vmatpush1.msra.mxu0 0.0
    %3927 = vmatprep.subr.mxu0 0.0
    %3928 = vmatpush1.msra.mxu0 0.0
    %3929 = vmatprep.subr.mxu0 0.0
    %3930 = vmatpush1.msra.mxu0 0.0
    %3931 = vmatprep.subr.mxu0 0.0
    %3932 = vmatpush1.msra.mxu0 0.0
    %3933 = vmatprep.subr.mxu0 0.0
    %3934 = vmatpush1.msra.mxu0 %v3901
    %3935 = vmatprep.subr.mxu0 0.0
    %3936 = vmatpush2.msra.mxu0 0.0
    %3937 = vmatprep.subr.mxu0 0.0
    %3938 = vmatpush2.msra.mxu0 0.0
    %3939 = vmatprep.subr.mxu0 0.0
    %3940 = vmatpush2.msra.mxu0 0.0
    %3941 = vmatprep.subr.mxu0 0.0
    %3942 = vmatpush2.msra.mxu0 0.0
    %3943 = vmatprep.subr.mxu0 0.0
    %3944 = vmatpush2.msra.mxu0 0.0
    %3945 = vmatprep.subr.mxu0 0.0
    %3946 = vmatpush2.msra.mxu0 0.0
    %3947 = vmatprep.subr.mxu0 0.0
    %3948 = vmatpush2.msra.mxu0 0.0
    %3949 = vmatprep.subr.mxu0 0.0
    %3950 = vmatpush2.msra.mxu0 0.0
    %3951 = vmatprep.subr.mxu0 0.0
    %3952 = vmatpush2.msra.mxu0 0.0
    %3953 = vmatprep.subr.mxu0 0.0
    %3954 = vmatpush2.msra.mxu0 0.0
    %3955 = vmatprep.subr.mxu0 0.0
    %3956 = vmatpush2.msra.mxu0 0.0
    %3957 = vmatprep.subr.mxu0 0.0
    %3958 = vmatpush2.msra.mxu0 0.0
    %3959 = vmatprep.subr.mxu0 0.0
    %3960 = vmatpush2.msra.mxu0 0.0
    %3961 = vmatprep.subr.mxu0 0.0
    %3962 = vmatpush2.msra.mxu0 0.0
    %3963 = vmatprep.subr.mxu0 0.0
    %3964 = vmatpush2.msra.mxu0 0.0
    %3965 = vmatprep.subr.mxu0 0.0
    %3966 = vmatpush2.msra.mxu0 0.0
    %3967 = vmatprep.mubr.f32.mxu0 0.0
    %3968 = vmatmul.mubr.f32.gmra.mxu0 %v3853
    %v3969 = vpop.f32.mrf.mxu0
    %v3970 = vadd.f32 0.0, %v3969
    %v3971 = vpop.f32.mrf.mxu0
    %3972 = vmatprep.mubr.f32.mxu0 0.0
    %3973 = vmatmul.mubr.f32.gmra.mxu0 %v3856
    %v3974 = vpop.f32.mrf.mxu0
    %v3975 = vadd.f32 0.0, %v3974
    %v3976 = vpop.f32.mrf.mxu0
    %3977 = vmatprep.mubr.f32.mxu0 0.0
    %3978 = vmatmul.mubr.f32.gmra.mxu0 %v3859
    %v3979 = vpop.f32.mrf.mxu0
    %v3980 = vadd.f32 0.0, %v3979
    %v3981 = vpop.f32.mrf.mxu0
    %3982 = vmatprep.mubr.f32.mxu0 0.0
    %3983 = vmatmul.mubr.f32.gmra.mxu0 %v3862
    %v3984 = vpop.f32.mrf.mxu0
    %v3985 = vadd.f32 0.0, %v3984
    %v3986 = vpop.f32.mrf.mxu0
    %3987 = vmatprep.mubr.f32.mxu0 0.0
    %3988 = vmatmul.mubr.f32.gmra.mxu0 %v3865
    %v3989 = vpop.f32.mrf.mxu0
    %v3990 = vadd.f32 0.0, %v3989
    %v3991 = vpop.f32.mrf.mxu0
    %3992 = vmatprep.mubr.f32.mxu0 0.0
    %3993 = vmatmul.mubr.f32.gmra.mxu0 %v3868
    %v3994 = vpop.f32.mrf.mxu0
    %v3995 = vadd.f32 0.0, %v3994
    %v3996 = vpop.f32.mrf.mxu0
    %3997 = vmatprep.mubr.f32.mxu0 0.0
    %3998 = vmatmul.mubr.f32.gmra.mxu0 %v3871
    %v3999 = vpop.f32.mrf.mxu0
    %v4000 = vadd.f32 0.0, %v3999
    %v4001 = vpop.f32.mrf.mxu0
    %4002 = vmatprep.mubr.f32.mxu0 0.0
    %4003 = vmatmul.mubr.f32.gmra.mxu0 %v3874
    %v4004 = vpop.f32.mrf.mxu0
    %v4005 = vadd.f32 0.0, %v4004
    %v4006 = vpop.f32.mrf.mxu0
    %4007 = vmatprep.mubr.f32.mxu0 0.0
    %4008 = vmatmul.mubr.f32.gmra.mxu0 %v3877
    %v4009 = vpop.f32.mrf.mxu0
    %v4010 = vadd.f32 0.0, %v4009
    %v4011 = vpop.f32.mrf.mxu0
    %4012 = vmatprep.mubr.f32.mxu0 0.0
    %4013 = vmatmul.mubr.f32.gmra.mxu0 %v3880
    %v4014 = vpop.f32.mrf.mxu0
    %v4015 = vadd.f32 0.0, %v4014
    %v4016 = vpop.f32.mrf.mxu0
    %4017 = vmatprep.mubr.f32.mxu0 0.0
    %4018 = vmatmul.mubr.f32.gmra.mxu0 %v3883
    %v4019 = vpop.f32.mrf.mxu0
    %v4020 = vadd.f32 0.0, %v4019
    %v4021 = vpop.f32.mrf.mxu0
    %4022 = vmatprep.mubr.f32.mxu0 0.0
    %4023 = vmatmul.mubr.f32.gmra.mxu0 %v3886
    %v4024 = vpop.f32.mrf.mxu0
    %v4025 = vadd.f32 0.0, %v4024
    %v4026 = vpop.f32.mrf.mxu0
    %4027 = vmatprep.mubr.f32.mxu0 0.0
    %4028 = vmatmul.mubr.f32.gmra.mxu0 %v3889
    %v4029 = vpop.f32.mrf.mxu0
    %v4030 = vadd.f32 0.0, %v4029
    %v4031 = vpop.f32.mrf.mxu0
    %4032 = vmatprep.mubr.f32.mxu0 0.0
    %4033 = vmatmul.mubr.f32.gmra.mxu0 %v3892
    %v4034 = vpop.f32.mrf.mxu0
    %v4035 = vadd.f32 0.0, %v4034
    %v4036 = vpop.f32.mrf.mxu0
    %4037 = vmatprep.mubr.f32.mxu0 0.0
    %4038 = vmatmul.mubr.f32.gmra.mxu0 %v3895
    %v4039 = vpop.f32.mrf.mxu0
    %v4040 = vadd.f32 0.0, %v4039
    %v4041 = vpop.f32.mrf.mxu0
    %4042 = vmatprep.mubr.f32.mxu0 0.0
    %4043 = vmatmul.mubr.f32.gmra.mxu0 %v3898
    %v4044 = vpop.f32.mrf.mxu0
    %v4045 = vadd.f32 0.0, %v4044
    %v4046 = vpop.f32.mrf.mxu0
    %4047 = vdwg.mxu0
    %v4048 = vadd.f32 %v3834, %v3970
    %v4049 = vadd.f32 %v3835, %v3975
    %v4050 = vadd.f32 %v3836, %v3980
    %v4051 = vadd.f32 %v3837, %v3985
    %v4052 = vadd.f32 %v3838, %v3990
    %v4053 = vadd.f32 %v3839, %v3995
    %v4054 = vadd.f32 %v3840, %v4000
    %v4055 = vadd.f32 %v3841, %v4005
    %v4056 = vadd.f32 %v3842, %v4010
    %v4057 = vadd.f32 %v3843, %v4015
    %v4058 = vadd.f32 %v3844, %v4020
    %v4059 = vadd.f32 %v3845, %v4025
    %v4060 = vadd.f32 %v3846, %v4030
    %v4061 = vadd.f32 %v3847, %v4035
    %v4062 = vadd.f32 %v3848, %v4040
    %v4063 = vadd.f32 %v3849, %v4045
    %s4064 = scalar_lea.vmem [#allocation5], 32
    %v4065 = vld [vmem:[%s4064] sm:$0xf]
    %v4067 = vsel %vm2386, %v2305, 0
    %v4070 = vsel %vm2386, %v2310, 0
    %v4073 = vsel %vm2386, %v2315, 0
    %v4076 = vsel %vm2386, %v2320, 0
    %v4079 = vsel %vm2386, %v2325, 0
    %v4082 = vsel %vm2386, %v2330, 0
    %v4085 = vsel %vm2386, %v2335, 0
    %v4088 = vsel %vm2386, %v2340, 0
    %v4091 = vsel %vm2386, %v2345, 0
    %v4094 = vsel %vm2386, %v2350, 0
    %v4097 = vsel %vm2386, %v2355, 0
    %v4100 = vsel %vm2386, %v2360, 0
    %v4103 = vsel %vm2386, %v2365, 0
    %v4106 = vsel %vm2386, %v2370, 0
    %v4109 = vsel %vm2386, %v2375, 0
    %v4112 = vsel %vm2386, %v2380, 0
    %v4115 = vsel %vm2435, %v4065, 0
    %4117 = vmatprep.subr.mxu0 0.0
    %4118 = vmatpush1.msra.mxu0 0.0
    %4119 = vmatprep.subr.mxu0 0.0
    %4120 = vmatpush1.msra.mxu0 0.0
    %4121 = vmatprep.subr.mxu0 0.0
    %4122 = vmatpush1.msra.mxu0 0.0
    %4123 = vmatprep.subr.mxu0 0.0
    %4124 = vmatpush1.msra.mxu0 0.0
    %4125 = vmatprep.subr.mxu0 0.0
    %4126 = vmatpush1.msra.mxu0 0.0
    %4127 = vmatprep.subr.mxu0 0.0
    %4128 = vmatpush1.msra.mxu0 0.0
    %4129 = vmatprep.subr.mxu0 0.0
    %4130 = vmatpush1.msra.mxu0 0.0
    %4131 = vmatprep.subr.mxu0 0.0
    %4132 = vmatpush1.msra.mxu0 0.0
    %4133 = vmatprep.subr.mxu0 0.0
    %4134 = vmatpush1.msra.mxu0 0.0
    %4135 = vmatprep.subr.mxu0 0.0
    %4136 = vmatpush1.msra.mxu0 0.0
    %4137 = vmatprep.subr.mxu0 0.0
    %4138 = vmatpush1.msra.mxu0 0.0
    %4139 = vmatprep.subr.mxu0 0.0
    %4140 = vmatpush1.msra.mxu0 0.0
    %4141 = vmatprep.subr.mxu0 0.0
    %4142 = vmatpush1.msra.mxu0 0.0
    %4143 = vmatprep.subr.mxu0 0.0
    %4144 = vmatpush1.msra.mxu0 0.0
    %4145 = vmatprep.subr.mxu0 0.0
    %4146 = vmatpush1.msra.mxu0 0.0
    %4147 = vmatprep.subr.mxu0 0.0
    %4148 = vmatpush1.msra.mxu0 %v4115
    %4149 = vmatprep.subr.mxu0 0.0
    %4150 = vmatpush2.msra.mxu0 0.0
    %4151 = vmatprep.subr.mxu0 0.0
    %4152 = vmatpush2.msra.mxu0 0.0
    %4153 = vmatprep.subr.mxu0 0.0
    %4154 = vmatpush2.msra.mxu0 0.0
    %4155 = vmatprep.subr.mxu0 0.0
    %4156 = vmatpush2.msra.mxu0 0.0
    %4157 = vmatprep.subr.mxu0 0.0
    %4158 = vmatpush2.msra.mxu0 0.0
    %4159 = vmatprep.subr.mxu0 0.0
    %4160 = vmatpush2.msra.mxu0 0.0
    %4161 = vmatprep.subr.mxu0 0.0
    %4162 = vmatpush2.msra.mxu0 0.0
    %4163 = vmatprep.subr.mxu0 0.0
    %4164 = vmatpush2.msra.mxu0 0.0
    %4165 = vmatprep.subr.mxu0 0.0
    %4166 = vmatpush2.msra.mxu0 0.0
    %4167 = vmatprep.subr.mxu0 0.0
    %4168 = vmatpush2.msra.mxu0 0.0
    %4169 = vmatprep.subr.mxu0 0.0
    %4170 = vmatpush2.msra.mxu0 0.0
    %4171 = vmatprep.subr.mxu0 0.0
    %4172 = vmatpush2.msra.mxu0 0.0
    %4173 = vmatprep.subr.mxu0 0.0
    %4174 = vmatpush2.msra.mxu0 0.0
    %4175 = vmatprep.subr.mxu0 0.0
    %4176 = vmatpush2.msra.mxu0 0.0
    %4177 = vmatprep.subr.mxu0 0.0
    %4178 = vmatpush2.msra.mxu0 0.0
    %4179 = vmatprep.subr.mxu0 0.0
    %4180 = vmatpush2.msra.mxu0 0.0
    %4181 = vmatprep.mubr.f32.mxu0 0.0
    %4182 = vmatmul.mubr.f32.gmra.mxu0 %v4067
    %v4183 = vpop.f32.mrf.mxu0
    %v4184 = vadd.f32 0.0, %v4183
    %v4185 = vpop.f32.mrf.mxu0
    %4186 = vmatprep.mubr.f32.mxu0 0.0
    %4187 = vmatmul.mubr.f32.gmra.mxu0 %v4070
    %v4188 = vpop.f32.mrf.mxu0
    %v4189 = vadd.f32 0.0, %v4188
    %v4190 = vpop.f32.mrf.mxu0
    %4191 = vmatprep.mubr.f32.mxu0 0.0
    %4192 = vmatmul.mubr.f32.gmra.mxu0 %v4073
    %v4193 = vpop.f32.mrf.mxu0
    %v4194 = vadd.f32 0.0, %v4193
    %v4195 = vpop.f32.mrf.mxu0
    %4196 = vmatprep.mubr.f32.mxu0 0.0
    %4197 = vmatmul.mubr.f32.gmra.mxu0 %v4076
    %v4198 = vpop.f32.mrf.mxu0
    %v4199 = vadd.f32 0.0, %v4198
    %v4200 = vpop.f32.mrf.mxu0
    %4201 = vmatprep.mubr.f32.mxu0 0.0
    %4202 = vmatmul.mubr.f32.gmra.mxu0 %v4079
    %v4203 = vpop.f32.mrf.mxu0
    %v4204 = vadd.f32 0.0, %v4203
    %v4205 = vpop.f32.mrf.mxu0
    %4206 = vmatprep.mubr.f32.mxu0 0.0
    %4207 = vmatmul.mubr.f32.gmra.mxu0 %v4082
    %v4208 = vpop.f32.mrf.mxu0
    %v4209 = vadd.f32 0.0, %v4208
    %v4210 = vpop.f32.mrf.mxu0
    %4211 = vmatprep.mubr.f32.mxu0 0.0
    %4212 = vmatmul.mubr.f32.gmra.mxu0 %v4085
    %v4213 = vpop.f32.mrf.mxu0
    %v4214 = vadd.f32 0.0, %v4213
    %v4215 = vpop.f32.mrf.mxu0
    %4216 = vmatprep.mubr.f32.mxu0 0.0
    %4217 = vmatmul.mubr.f32.gmra.mxu0 %v4088
    %v4218 = vpop.f32.mrf.mxu0
    %v4219 = vadd.f32 0.0, %v4218
    %v4220 = vpop.f32.mrf.mxu0
    %4221 = vmatprep.mubr.f32.mxu0 0.0
    %4222 = vmatmul.mubr.f32.gmra.mxu0 %v4091
    %v4223 = vpop.f32.mrf.mxu0
    %v4224 = vadd.f32 0.0, %v4223
    %v4225 = vpop.f32.mrf.mxu0
    %4226 = vmatprep.mubr.f32.mxu0 0.0
    %4227 = vmatmul.mubr.f32.gmra.mxu0 %v4094
    %v4228 = vpop.f32.mrf.mxu0
    %v4229 = vadd.f32 0.0, %v4228
    %v4230 = vpop.f32.mrf.mxu0
    %4231 = vmatprep.mubr.f32.mxu0 0.0
    %4232 = vmatmul.mubr.f32.gmra.mxu0 %v4097
    %v4233 = vpop.f32.mrf.mxu0
    %v4234 = vadd.f32 0.0, %v4233
    %v4235 = vpop.f32.mrf.mxu0
    %4236 = vmatprep.mubr.f32.mxu0 0.0
    %4237 = vmatmul.mubr.f32.gmra.mxu0 %v4100
    %v4238 = vpop.f32.mrf.mxu0
    %v4239 = vadd.f32 0.0, %v4238
    %v4240 = vpop.f32.mrf.mxu0
    %4241 = vmatprep.mubr.f32.mxu0 0.0
    %4242 = vmatmul.mubr.f32.gmra.mxu0 %v4103
    %v4243 = vpop.f32.mrf.mxu0
    %v4244 = vadd.f32 0.0, %v4243
    %v4245 = vpop.f32.mrf.mxu0
    %4246 = vmatprep.mubr.f32.mxu0 0.0
    %4247 = vmatmul.mubr.f32.gmra.mxu0 %v4106
    %v4248 = vpop.f32.mrf.mxu0
    %v4249 = vadd.f32 0.0, %v4248
    %v4250 = vpop.f32.mrf.mxu0
    %4251 = vmatprep.mubr.f32.mxu0 0.0
    %4252 = vmatmul.mubr.f32.gmra.mxu0 %v4109
    %v4253 = vpop.f32.mrf.mxu0
    %v4254 = vadd.f32 0.0, %v4253
    %v4255 = vpop.f32.mrf.mxu0
    %4256 = vmatprep.mubr.f32.mxu0 0.0
    %4257 = vmatmul.mubr.f32.gmra.mxu0 %v4112
    %v4258 = vpop.f32.mrf.mxu0
    %v4259 = vadd.f32 0.0, %v4258
    %v4260 = vpop.f32.mrf.mxu0
    %4261 = vdwg.mxu0
    %v4262 = vadd.f32 %v4048, %v4184
    %v4263 = vadd.f32 %v4049, %v4189
    %v4264 = vadd.f32 %v4050, %v4194
    %v4265 = vadd.f32 %v4051, %v4199
    %v4266 = vadd.f32 %v4052, %v4204
    %v4267 = vadd.f32 %v4053, %v4209
    %v4268 = vadd.f32 %v4054, %v4214
    %v4269 = vadd.f32 %v4055, %v4219
    %v4270 = vadd.f32 %v4056, %v4224
    %v4271 = vadd.f32 %v4057, %v4229
    %v4272 = vadd.f32 %v4058, %v4234
    %v4273 = vadd.f32 %v4059, %v4239
    %v4274 = vadd.f32 %v4060, %v4244
    %v4275 = vadd.f32 %v4061, %v4249
    %v4276 = vadd.f32 %v4062, %v4254
    %v4277 = vadd.f32 %v4063, %v4259
    %v4278 = vld [vmem:[#allocation7] sm:$0x1]
    %v4280 = vlaneseq
    %v4281 = vshrl.u32 %v4280, 7
    %v4282 = vsub.s32 0, %v4281
    %v4283 = vrot.slane %v4278, %v4282
    %v4285 = vadd.f32 %v4262, %v4283
    %v4286 = vadd.f32 %v4263, %v4283
    %v4287 = vadd.f32 %v4264, %v4283
    %v4288 = vadd.f32 %v4265, %v4283
    %v4289 = vadd.f32 %v4266, %v4283
    %v4290 = vadd.f32 %v4267, %v4283
    %v4291 = vadd.f32 %v4268, %v4283
    %v4292 = vadd.f32 %v4269, %v4283
    %v4293 = vadd.f32 %v4270, %v4283
    %v4294 = vadd.f32 %v4271, %v4283
    %v4295 = vadd.f32 %v4272, %v4283
    %v4296 = vadd.f32 %v4273, %v4283
    %v4297 = vadd.f32 %v4274, %v4283
    %v4298 = vadd.f32 %v4275, %v4283
    %v4299 = vadd.f32 %v4276, %v4283
    %v4300 = vadd.f32 %v4277, %v4283
    %v4301 = vmax.f32 %v4285, 0.0
    %v4302 = vmax.f32 %v4286, 0.0
    %v4303 = vmax.f32 %v4287, 0.0
    %v4304 = vmax.f32 %v4288, 0.0
    %v4305 = vmax.f32 %v4289, 0.0
    %v4306 = vmax.f32 %v4290, 0.0
    %v4307 = vmax.f32 %v4291, 0.0
    %v4308 = vmax.f32 %v4292, 0.0
    %v4309 = vmax.f32 %v4293, 0.0
    %v4310 = vmax.f32 %v4294, 0.0
    %v4311 = vmax.f32 %v4295, 0.0
    %v4312 = vmax.f32 %v4296, 0.0
    %v4313 = vmax.f32 %v4297, 0.0
    %v4314 = vmax.f32 %v4298, 0.0
    %v4315 = vmax.f32 %v4299, 0.0
    %v4316 = vmax.f32 %v4300, 0.0
    %v4317 = vld [vmem:[#allocation8] sm:$0xff]
    %v4318 = vld [vmem:[#allocation8 + $0x8] sm:$0xff]
    %v4319 = vld [vmem:[#allocation8 + $0x10] sm:$0xff]
    %v4320 = vld [vmem:[#allocation8 + $0x18] sm:$0xff]
    %v4321 = vld [vmem:[#allocation8 + $0x20] sm:$0xff]
    %v4322 = vld [vmem:[#allocation8 + $0x28] sm:$0xff]
    %v4323 = vld [vmem:[#allocation8 + $0x30] sm:$0xff]
    %v4324 = vld [vmem:[#allocation8 + $0x38] sm:$0xff]
    %v4325 = vld [vmem:[#allocation8 + $0x40] sm:$0xff]
    %v4326 = vld [vmem:[#allocation8 + $0x48] sm:$0xff]
    %v4327 = vld [vmem:[#allocation8 + $0x50] sm:$0xff]
    %v4328 = vld [vmem:[#allocation8 + $0x58] sm:$0xff]
    %v4329 = vld [vmem:[#allocation8 + $0x60] sm:$0xff]
    %v4330 = vld [vmem:[#allocation8 + $0x68] sm:$0xff]
    %v4331 = vld [vmem:[#allocation8 + $0x70] sm:$0xff]
    %v4332 = vld [vmem:[#allocation8 + $0x78] sm:$0xff]
    %v4333 = vld [vmem:[#allocation8 + $0x80] sm:$0xff]
    %v4334 = vld [vmem:[#allocation8 + $0x88] sm:$0xff]
    %v4335 = vld [vmem:[#allocation8 + $0x90] sm:$0xff]
    %v4336 = vld [vmem:[#allocation8 + $0x98] sm:$0xff]
    %v4337 = vld [vmem:[#allocation8 + $0xa0] sm:$0xff]
    %v4338 = vld [vmem:[#allocation8 + $0xa8] sm:$0xff]
    %v4339 = vld [vmem:[#allocation8 + $0xb0] sm:$0xff]
    %v4340 = vld [vmem:[#allocation8 + $0xb8] sm:$0xff]
    %v4341 = vld [vmem:[#allocation8 + $0xc0] sm:$0xff]
    %v4342 = vld [vmem:[#allocation8 + $0xc8] sm:$0xff]
    %v4343 = vld [vmem:[#allocation8 + $0xd0] sm:$0xff]
    %v4344 = vld [vmem:[#allocation8 + $0xd8] sm:$0xff]
    %v4345 = vld [vmem:[#allocation8 + $0xe0] sm:$0xff]
    %v4346 = vld [vmem:[#allocation8 + $0xe8] sm:$0xff]
    %v4347 = vld [vmem:[#allocation8 + $0xf0] sm:$0xff]
    %v4348 = vld [vmem:[#allocation8 + $0xf8] sm:$0xff]
    %v4349 = vld [vmem:[#allocation8 + $0x100] sm:$0xff]
    %v4350 = vld [vmem:[#allocation8 + $0x108] sm:$0xff]
    %v4351 = vld [vmem:[#allocation8 + $0x110] sm:$0xff]
    %v4352 = vld [vmem:[#allocation8 + $0x118] sm:$0xff]
    %4353 = vmatprep.subr.mxu0 0.0
    %4354 = vmatpush1.msra.mxu0 %v4316
    %4355 = vmatprep.subr.mxu0 0.0
    %4356 = vmatpush1.msra.mxu0 %v4315
    %4357 = vmatprep.subr.mxu0 0.0
    %4358 = vmatpush1.msra.mxu0 %v4314
    %4359 = vmatprep.subr.mxu0 0.0
    %4360 = vmatpush1.msra.mxu0 %v4313
    %4361 = vmatprep.subr.mxu0 0.0
    %4362 = vmatpush1.msra.mxu0 %v4312
    %4363 = vmatprep.subr.mxu0 0.0
    %4364 = vmatpush1.msra.mxu0 %v4311
    %4365 = vmatprep.subr.mxu0 0.0
    %4366 = vmatpush1.msra.mxu0 %v4310
    %4367 = vmatprep.subr.mxu0 0.0
    %4368 = vmatpush1.msra.mxu0 %v4309
    %4369 = vmatprep.subr.mxu0 0.0
    %4370 = vmatpush1.msra.mxu0 %v4308
    %4371 = vmatprep.subr.mxu0 0.0
    %4372 = vmatpush1.msra.mxu0 %v4307
    %4373 = vmatprep.subr.mxu0 0.0
    %4374 = vmatpush1.msra.mxu0 %v4306
    %4375 = vmatprep.subr.mxu0 0.0
    %4376 = vmatpush1.msra.mxu0 %v4305
    %4377 = vmatprep.subr.mxu0 0.0
    %4378 = vmatpush1.msra.mxu0 %v4304
    %4379 = vmatprep.subr.mxu0 0.0
    %4380 = vmatpush1.msra.mxu0 %v4303
    %4381 = vmatprep.subr.mxu0 0.0
    %4382 = vmatpush1.msra.mxu0 %v4302
    %4383 = vmatprep.subr.mxu0 0.0
    %4384 = vmatpush1.msra.mxu0 %v4301
    %4385 = vmatprep.subr.mxu0 0.0
    %4386 = vmatpush2.msra.mxu0 0.0
    %4387 = vmatprep.subr.mxu0 0.0
    %4388 = vmatpush2.msra.mxu0 0.0
    %4389 = vmatprep.subr.mxu0 0.0
    %4390 = vmatpush2.msra.mxu0 0.0
    %4391 = vmatprep.subr.mxu0 0.0
    %4392 = vmatpush2.msra.mxu0 0.0
    %4393 = vmatprep.subr.mxu0 0.0
    %4394 = vmatpush2.msra.mxu0 0.0
    %4395 = vmatprep.subr.mxu0 0.0
    %4396 = vmatpush2.msra.mxu0 0.0
    %4397 = vmatprep.subr.mxu0 0.0
    %4398 = vmatpush2.msra.mxu0 0.0
    %4399 = vmatprep.subr.mxu0 0.0
    %4400 = vmatpush2.msra.mxu0 0.0
    %4401 = vmatprep.subr.mxu0 0.0
    %4402 = vmatpush2.msra.mxu0 0.0
    %4403 = vmatprep.subr.mxu0 0.0
    %4404 = vmatpush2.msra.mxu0 0.0
    %4405 = vmatprep.subr.mxu0 0.0
    %4406 = vmatpush2.msra.mxu0 0.0
    %4407 = vmatprep.subr.mxu0 0.0
    %4408 = vmatpush2.msra.mxu0 0.0
    %4409 = vmatprep.subr.mxu0 0.0
    %4410 = vmatpush2.msra.mxu0 0.0
    %4411 = vmatprep.subr.mxu0 0.0
    %4412 = vmatpush2.msra.mxu0 0.0
    %4413 = vmatprep.subr.mxu0 0.0
    %4414 = vmatpush2.msra.mxu0 0.0
    %4415 = vmatprep.subr.mxu0 0.0
    %4416 = vmatpush2.msra.mxu0 0.0
    %4417 = vmatprep.mubr.f32.mxu0 0.0
    %4418 = vmatmul.mubr.f32.gmra.mxu0 %v4317
    %v4419 = vpop.f32.mrf.mxu0
    %v4420 = vadd.f32 0.0, %v4419
    %v4421 = vpop.f32.mrf.mxu0
    %4422 = vmatprep.mubr.f32.mxu0 0.0
    %4423 = vmatmul.mubr.f32.gmra.mxu0 %v4318
    %v4424 = vpop.f32.mrf.mxu0
    %v4425 = vadd.f32 0.0, %v4424
    %v4426 = vpop.f32.mrf.mxu0
    %4427 = vmatprep.mubr.f32.mxu0 0.0
    %4428 = vmatmul.mubr.f32.gmra.mxu0 %v4319
    %v4429 = vpop.f32.mrf.mxu0
    %v4430 = vadd.f32 0.0, %v4429
    %v4431 = vpop.f32.mrf.mxu0
    %4432 = vmatprep.mubr.f32.mxu0 0.0
    %4433 = vmatmul.mubr.f32.gmra.mxu0 %v4320
    %v4434 = vpop.f32.mrf.mxu0
    %v4435 = vadd.f32 0.0, %v4434
    %v4436 = vpop.f32.mrf.mxu0
    %4437 = vmatprep.mubr.f32.mxu0 0.0
    %4438 = vmatmul.mubr.f32.gmra.mxu0 %v4321
    %v4439 = vpop.f32.mrf.mxu0
    %v4440 = vadd.f32 0.0, %v4439
    %v4441 = vpop.f32.mrf.mxu0
    %4442 = vmatprep.mubr.f32.mxu0 0.0
    %4443 = vmatmul.mubr.f32.gmra.mxu0 %v4322
    %v4444 = vpop.f32.mrf.mxu0
    %v4445 = vadd.f32 0.0, %v4444
    %v4446 = vpop.f32.mrf.mxu0
    %4447 = vmatprep.mubr.f32.mxu0 0.0
    %4448 = vmatmul.mubr.f32.gmra.mxu0 %v4323
    %v4449 = vpop.f32.mrf.mxu0
    %v4450 = vadd.f32 0.0, %v4449
    %v4451 = vpop.f32.mrf.mxu0
    %4452 = vmatprep.mubr.f32.mxu0 0.0
    %4453 = vmatmul.mubr.f32.gmra.mxu0 %v4324
    %v4454 = vpop.f32.mrf.mxu0
    %v4455 = vadd.f32 0.0, %v4454
    %v4456 = vpop.f32.mrf.mxu0
    %4457 = vmatprep.mubr.f32.mxu0 0.0
    %4458 = vmatmul.mubr.f32.gmra.mxu0 %v4325
    %v4459 = vpop.f32.mrf.mxu0
    %v4460 = vadd.f32 0.0, %v4459
    %v4461 = vpop.f32.mrf.mxu0
    %4462 = vmatprep.mubr.f32.mxu0 0.0
    %4463 = vmatmul.mubr.f32.gmra.mxu0 %v4326
    %v4464 = vpop.f32.mrf.mxu0
    %v4465 = vadd.f32 0.0, %v4464
    %v4466 = vpop.f32.mrf.mxu0
    %4467 = vmatprep.mubr.f32.mxu0 0.0
    %4468 = vmatmul.mubr.f32.gmra.mxu0 %v4327
    %v4469 = vpop.f32.mrf.mxu0
    %v4470 = vadd.f32 0.0, %v4469
    %v4471 = vpop.f32.mrf.mxu0
    %4472 = vmatprep.mubr.f32.mxu0 0.0
    %4473 = vmatmul.mubr.f32.gmra.mxu0 %v4328
    %v4474 = vpop.f32.mrf.mxu0
    %v4475 = vadd.f32 0.0, %v4474
    %v4476 = vpop.f32.mrf.mxu0
    %4477 = vmatprep.mubr.f32.mxu0 0.0
    %4478 = vmatmul.mubr.f32.gmra.mxu0 %v4329
    %v4479 = vpop.f32.mrf.mxu0
    %v4480 = vadd.f32 0.0, %v4479
    %v4481 = vpop.f32.mrf.mxu0
    %4482 = vmatprep.mubr.f32.mxu0 0.0
    %4483 = vmatmul.mubr.f32.gmra.mxu0 %v4330
    %v4484 = vpop.f32.mrf.mxu0
    %v4485 = vadd.f32 0.0, %v4484
    %v4486 = vpop.f32.mrf.mxu0
    %4487 = vmatprep.mubr.f32.mxu0 0.0
    %4488 = vmatmul.mubr.f32.gmra.mxu0 %v4331
    %v4489 = vpop.f32.mrf.mxu0
    %v4490 = vadd.f32 0.0, %v4489
    %v4491 = vpop.f32.mrf.mxu0
    %4492 = vmatprep.mubr.f32.mxu0 0.0
    %4493 = vmatmul.mubr.f32.gmra.mxu0 %v4332
    %v4494 = vpop.f32.mrf.mxu0
    %v4495 = vadd.f32 0.0, %v4494
    %v4496 = vpop.f32.mrf.mxu0
    %4497 = vmatprep.mubr.f32.mxu0 0.0
    %4498 = vmatmul.mubr.f32.gmra.mxu0 %v4333
    %v4499 = vpop.f32.mrf.mxu0
    %v4500 = vadd.f32 0.0, %v4499
    %v4501 = vpop.f32.mrf.mxu0
    %4502 = vmatprep.mubr.f32.mxu0 0.0
    %4503 = vmatmul.mubr.f32.gmra.mxu0 %v4334
    %v4504 = vpop.f32.mrf.mxu0
    %v4505 = vadd.f32 0.0, %v4504
    %v4506 = vpop.f32.mrf.mxu0
    %4507 = vmatprep.mubr.f32.mxu0 0.0
    %4508 = vmatmul.mubr.f32.gmra.mxu0 %v4335
    %v4509 = vpop.f32.mrf.mxu0
    %v4510 = vadd.f32 0.0, %v4509
    %v4511 = vpop.f32.mrf.mxu0
    %4512 = vmatprep.mubr.f32.mxu0 0.0
    %4513 = vmatmul.mubr.f32.gmra.mxu0 %v4336
    %v4514 = vpop.f32.mrf.mxu0
    %v4515 = vadd.f32 0.0, %v4514
    %v4516 = vpop.f32.mrf.mxu0
    %4517 = vmatprep.mubr.f32.mxu0 0.0
    %4518 = vmatmul.mubr.f32.gmra.mxu0 %v4337
    %v4519 = vpop.f32.mrf.mxu0
    %v4520 = vadd.f32 0.0, %v4519
    %v4521 = vpop.f32.mrf.mxu0
    %4522 = vmatprep.mubr.f32.mxu0 0.0
    %4523 = vmatmul.mubr.f32.gmra.mxu0 %v4338
    %v4524 = vpop.f32.mrf.mxu0
    %v4525 = vadd.f32 0.0, %v4524
    %v4526 = vpop.f32.mrf.mxu0
    %4527 = vmatprep.mubr.f32.mxu0 0.0
    %4528 = vmatmul.mubr.f32.gmra.mxu0 %v4339
    %v4529 = vpop.f32.mrf.mxu0
    %v4530 = vadd.f32 0.0, %v4529
    %v4531 = vpop.f32.mrf.mxu0
    %4532 = vmatprep.mubr.f32.mxu0 0.0
    %4533 = vmatmul.mubr.f32.gmra.mxu0 %v4340
    %v4534 = vpop.f32.mrf.mxu0
    %v4535 = vadd.f32 0.0, %v4534
    %v4536 = vpop.f32.mrf.mxu0
    %4537 = vmatprep.mubr.f32.mxu0 0.0
    %4538 = vmatmul.mubr.f32.gmra.mxu0 %v4341
    %v4539 = vpop.f32.mrf.mxu0
    %v4540 = vadd.f32 0.0, %v4539
    %v4541 = vpop.f32.mrf.mxu0
    %4542 = vmatprep.mubr.f32.mxu0 0.0
    %4543 = vmatmul.mubr.f32.gmra.mxu0 %v4342
    %v4544 = vpop.f32.mrf.mxu0
    %v4545 = vadd.f32 0.0, %v4544
    %v4546 = vpop.f32.mrf.mxu0
    %4547 = vmatprep.mubr.f32.mxu0 0.0
    %4548 = vmatmul.mubr.f32.gmra.mxu0 %v4343
    %v4549 = vpop.f32.mrf.mxu0
    %v4550 = vadd.f32 0.0, %v4549
    %v4551 = vpop.f32.mrf.mxu0
    %4552 = vmatprep.mubr.f32.mxu0 0.0
    %4553 = vmatmul.mubr.f32.gmra.mxu0 %v4344
    %v4554 = vpop.f32.mrf.mxu0
    %v4555 = vadd.f32 0.0, %v4554
    %v4556 = vpop.f32.mrf.mxu0
    %4557 = vmatprep.mubr.f32.mxu0 0.0
    %4558 = vmatmul.mubr.f32.gmra.mxu0 %v4345
    %v4559 = vpop.f32.mrf.mxu0
    %v4560 = vadd.f32 0.0, %v4559
    %v4561 = vpop.f32.mrf.mxu0
    %4562 = vmatprep.mubr.f32.mxu0 0.0
    %4563 = vmatmul.mubr.f32.gmra.mxu0 %v4346
    %v4564 = vpop.f32.mrf.mxu0
    %v4565 = vadd.f32 0.0, %v4564
    %v4566 = vpop.f32.mrf.mxu0
    %4567 = vmatprep.mubr.f32.mxu0 0.0
    %4568 = vmatmul.mubr.f32.gmra.mxu0 %v4347
    %v4569 = vpop.f32.mrf.mxu0
    %v4570 = vadd.f32 0.0, %v4569
    %v4571 = vpop.f32.mrf.mxu0
    %4572 = vmatprep.mubr.f32.mxu0 0.0
    %4573 = vmatmul.mubr.f32.gmra.mxu0 %v4348
    %v4574 = vpop.f32.mrf.mxu0
    %v4575 = vadd.f32 0.0, %v4574
    %v4576 = vpop.f32.mrf.mxu0
    %4577 = vmatprep.mubr.f32.mxu0 0.0
    %4578 = vmatmul.mubr.f32.gmra.mxu0 %v4349
    %v4579 = vpop.f32.mrf.mxu0
    %v4580 = vadd.f32 0.0, %v4579
    %v4581 = vpop.f32.mrf.mxu0
    %4582 = vmatprep.mubr.f32.mxu0 0.0
    %4583 = vmatmul.mubr.f32.gmra.mxu0 %v4350
    %v4584 = vpop.f32.mrf.mxu0
    %v4585 = vadd.f32 0.0, %v4584
    %v4586 = vpop.f32.mrf.mxu0
    %4587 = vmatprep.mubr.f32.mxu0 0.0
    %4588 = vmatmul.mubr.f32.gmra.mxu0 %v4351
    %v4589 = vpop.f32.mrf.mxu0
    %v4590 = vadd.f32 0.0, %v4589
    %v4591 = vpop.f32.mrf.mxu0
    %4592 = vmatprep.mubr.f32.mxu0 0.0
    %4593 = vmatmul.mubr.f32.gmra.mxu0 %v4352
    %v4594 = vpop.f32.mrf.mxu0
    %v4595 = vadd.f32 0.0, %v4594
    %v4596 = vpop.f32.mrf.mxu0
    %4597 = vdwg.mxu0
    %v4598 = vld [vmem:[#allocation10] sm:$0xff]
    %v4599 = vld [vmem:[#allocation10 + $0x8] sm:$0xff]
    %v4600 = vld [vmem:[#allocation10 + $0x10] sm:$0xff]
    %v4601 = vld [vmem:[#allocation10 + $0x18] sm:$0xff]
    %s4602 = scalar_lea.vmem [#allocation10], 32
    %v4603 = vld [vmem:[%s4602] sm:$0xff]
    %v4604 = vld [vmem:[%s4602 + $0x8] sm:$0xff]
    %v4605 = vld [vmem:[%s4602 + $0x10] sm:$0xff]
    %v4606 = vld [vmem:[%s4602 + $0x18] sm:$0xff]
    %vm4607 = vcmask 261120
    %v4609 = vsel %vm4607, %v4440, 0
    %v4612 = vsel %vm4607, %v4445, 0
    %v4615 = vsel %vm4607, %v4450, 0
    %v4618 = vsel %vm4607, %v4455, 0
    %4620 = vmatprep.subr.mxu0 0.0
    %4621 = vmatpush1.msra.mxu0 0.0
    %4622 = vmatprep.subr.mxu0 0.0
    %4623 = vmatpush1.msra.mxu0 0.0
    %4624 = vmatprep.subr.mxu0 0.0
    %4625 = vmatpush1.msra.mxu0 0.0
    %4626 = vmatprep.subr.mxu0 0.0
    %4627 = vmatpush1.msra.mxu0 0.0
    %4628 = vmatprep.subr.mxu0 0.0
    %4629 = vmatpush1.msra.mxu0 0.0
    %4630 = vmatprep.subr.mxu0 0.0
    %4631 = vmatpush1.msra.mxu0 0.0
    %4632 = vmatprep.subr.mxu0 0.0
    %4633 = vmatpush1.msra.mxu0 0.0
    %4634 = vmatprep.subr.mxu0 0.0
    %4635 = vmatpush1.msra.mxu0 0.0
    %4636 = vmatprep.subr.mxu0 0.0
    %4637 = vmatpush1.msra.mxu0 0.0
    %4638 = vmatprep.subr.mxu0 0.0
    %4639 = vmatpush1.msra.mxu0 0.0
    %4640 = vmatprep.subr.mxu0 0.0
    %4641 = vmatpush1.msra.mxu0 0.0
    %4642 = vmatprep.subr.mxu0 0.0
    %4643 = vmatpush1.msra.mxu0 0.0
    %4644 = vmatprep.subr.mxu0 0.0
    %4645 = vmatpush1.msra.mxu0 %v4606
    %4646 = vmatprep.subr.mxu0 0.0
    %4647 = vmatpush1.msra.mxu0 %v4605
    %4648 = vmatprep.subr.mxu0 0.0
    %4649 = vmatpush1.msra.mxu0 %v4604
    %4650 = vmatprep.subr.mxu0 0.0
    %4651 = vmatpush1.msra.mxu0 %v4603
    %4652 = vmatprep.subr.mxu0 0.0
    %4653 = vmatpush2.msra.mxu0 0.0
    %4654 = vmatprep.subr.mxu0 0.0
    %4655 = vmatpush2.msra.mxu0 0.0
    %4656 = vmatprep.subr.mxu0 0.0
    %4657 = vmatpush2.msra.mxu0 0.0
    %4658 = vmatprep.subr.mxu0 0.0
    %4659 = vmatpush2.msra.mxu0 0.0
    %4660 = vmatprep.subr.mxu0 0.0
    %4661 = vmatpush2.msra.mxu0 0.0
    %4662 = vmatprep.subr.mxu0 0.0
    %4663 = vmatpush2.msra.mxu0 0.0
    %4664 = vmatprep.subr.mxu0 0.0
    %4665 = vmatpush2.msra.mxu0 0.0
    %4666 = vmatprep.subr.mxu0 0.0
    %4667 = vmatpush2.msra.mxu0 0.0
    %4668 = vmatprep.subr.mxu0 0.0
    %4669 = vmatpush2.msra.mxu0 0.0
    %4670 = vmatprep.subr.mxu0 0.0
    %4671 = vmatpush2.msra.mxu0 0.0
    %4672 = vmatprep.subr.mxu0 0.0
    %4673 = vmatpush2.msra.mxu0 0.0
    %4674 = vmatprep.subr.mxu0 0.0
    %4675 = vmatpush2.msra.mxu0 0.0
    %4676 = vmatprep.subr.mxu0 0.0
    %4677 = vmatpush2.msra.mxu0 0.0
    %4678 = vmatprep.subr.mxu0 0.0
    %4679 = vmatpush2.msra.mxu0 0.0
    %4680 = vmatprep.subr.mxu0 0.0
    %4681 = vmatpush2.msra.mxu0 0.0
    %4682 = vmatprep.subr.mxu0 0.0
    %4683 = vmatpush2.msra.mxu0 0.0
    %4684 = vmatprep.mubr.f32.mxu0 0.0
    %4685 = vmatmul.mubr.f32.gmra.mxu0 %v4609
    %v4686 = vpop.f32.mrf.mxu0
    %v4687 = vadd.f32 0.0, %v4686
    %v4688 = vpop.f32.mrf.mxu0
    %4689 = vmatprep.mubr.f32.mxu0 0.0
    %4690 = vmatmul.mubr.f32.gmra.mxu0 %v4612
    %v4691 = vpop.f32.mrf.mxu0
    %v4692 = vadd.f32 0.0, %v4691
    %v4693 = vpop.f32.mrf.mxu0
    %4694 = vmatprep.mubr.f32.mxu0 0.0
    %4695 = vmatmul.mubr.f32.gmra.mxu0 %v4615
    %v4696 = vpop.f32.mrf.mxu0
    %v4697 = vadd.f32 0.0, %v4696
    %v4698 = vpop.f32.mrf.mxu0
    %4699 = vmatprep.mubr.f32.mxu0 0.0
    %4700 = vmatmul.mubr.f32.gmra.mxu0 %v4618
    %v4701 = vpop.f32.mrf.mxu0
    %v4702 = vadd.f32 0.0, %v4701
    %v4703 = vpop.f32.mrf.mxu0
    %4704 = vdwg.mxu0
    %v4706 = vsel %vm4607, %v4420, 0
    %v4709 = vsel %vm4607, %v4425, 0
    %v4712 = vsel %vm4607, %v4430, 0
    %v4715 = vsel %vm4607, %v4435, 0
    %4717 = vmatprep.subr.mxu0 0.0
    %4718 = vmatpush1.msra.mxu0 0.0
    %4719 = vmatprep.subr.mxu0 0.0
    %4720 = vmatpush1.msra.mxu0 0.0
    %4721 = vmatprep.subr.mxu0 0.0
    %4722 = vmatpush1.msra.mxu0 0.0
    %4723 = vmatprep.subr.mxu0 0.0
    %4724 = vmatpush1.msra.mxu0 0.0
    %4725 = vmatprep.subr.mxu0 0.0
    %4726 = vmatpush1.msra.mxu0 0.0
    %4727 = vmatprep.subr.mxu0 0.0
    %4728 = vmatpush1.msra.mxu0 0.0
    %4729 = vmatprep.subr.mxu0 0.0
    %4730 = vmatpush1.msra.mxu0 0.0
    %4731 = vmatprep.subr.mxu0 0.0
    %4732 = vmatpush1.msra.mxu0 0.0
    %4733 = vmatprep.subr.mxu0 0.0
    %4734 = vmatpush1.msra.mxu0 0.0
    %4735 = vmatprep.subr.mxu0 0.0
    %4736 = vmatpush1.msra.mxu0 0.0
    %4737 = vmatprep.subr.mxu0 0.0
    %4738 = vmatpush1.msra.mxu0 0.0
    %4739 = vmatprep.subr.mxu0 0.0
    %4740 = vmatpush1.msra.mxu0 0.0
    %4741 = vmatprep.subr.mxu0 0.0
    %4742 = vmatpush1.msra.mxu0 %v4601
    %4743 = vmatprep.subr.mxu0 0.0
    %4744 = vmatpush1.msra.mxu0 %v4600
    %4745 = vmatprep.subr.mxu0 0.0
    %4746 = vmatpush1.msra.mxu0 %v4599
    %4747 = vmatprep.subr.mxu0 0.0
    %4748 = vmatpush1.msra.mxu0 %v4598
    %4749 = vmatprep.subr.mxu0 0.0
    %4750 = vmatpush2.msra.mxu0 0.0
    %4751 = vmatprep.subr.mxu0 0.0
    %4752 = vmatpush2.msra.mxu0 0.0
    %4753 = vmatprep.subr.mxu0 0.0
    %4754 = vmatpush2.msra.mxu0 0.0
    %4755 = vmatprep.subr.mxu0 0.0
    %4756 = vmatpush2.msra.mxu0 0.0
    %4757 = vmatprep.subr.mxu0 0.0
    %4758 = vmatpush2.msra.mxu0 0.0
    %4759 = vmatprep.subr.mxu0 0.0
    %4760 = vmatpush2.msra.mxu0 0.0
    %4761 = vmatprep.subr.mxu0 0.0
    %4762 = vmatpush2.msra.mxu0 0.0
    %4763 = vmatprep.subr.mxu0 0.0
    %4764 = vmatpush2.msra.mxu0 0.0
    %4765 = vmatprep.subr.mxu0 0.0
    %4766 = vmatpush2.msra.mxu0 0.0
    %4767 = vmatprep.subr.mxu0 0.0
    %4768 = vmatpush2.msra.mxu0 0.0
    %4769 = vmatprep.subr.mxu0 0.0
    %4770 = vmatpush2.msra.mxu0 0.0
    %4771 = vmatprep.subr.mxu0 0.0
    %4772 = vmatpush2.msra.mxu0 0.0
    %4773 = vmatprep.subr.mxu0 0.0
    %4774 = vmatpush2.msra.mxu0 0.0
    %4775 = vmatprep.subr.mxu0 0.0
    %4776 = vmatpush2.msra.mxu0 0.0
    %4777 = vmatprep.subr.mxu0 0.0
    %4778 = vmatpush2.msra.mxu0 0.0
    %4779 = vmatprep.subr.mxu0 0.0
    %4780 = vmatpush2.msra.mxu0 0.0
    %4781 = vmatprep.mubr.f32.mxu0 0.0
    %4782 = vmatmul.mubr.f32.gmra.mxu0 %v4706
    %v4783 = vpop.f32.mrf.mxu0
    %v4784 = vadd.f32 %v4687, %v4783
    %v4785 = vpop.f32.mrf.mxu0
    %4786 = vmatprep.mubr.f32.mxu0 0.0
    %4787 = vmatmul.mubr.f32.gmra.mxu0 %v4709
    %v4788 = vpop.f32.mrf.mxu0
    %v4789 = vadd.f32 %v4692, %v4788
    %v4790 = vpop.f32.mrf.mxu0
    %4791 = vmatprep.mubr.f32.mxu0 0.0
    %4792 = vmatmul.mubr.f32.gmra.mxu0 %v4712
    %v4793 = vpop.f32.mrf.mxu0
    %v4794 = vadd.f32 %v4697, %v4793
    %v4795 = vpop.f32.mrf.mxu0
    %4796 = vmatprep.mubr.f32.mxu0 0.0
    %4797 = vmatmul.mubr.f32.gmra.mxu0 %v4715
    %v4798 = vpop.f32.mrf.mxu0
    %v4799 = vadd.f32 %v4702, %v4798
    %v4800 = vpop.f32.mrf.mxu0
    %4801 = vdwg.mxu0
    %s4802 = scalar_lea.vmem [#allocation10], 64
    %v4803 = vld [vmem:[%s4802] sm:$0xff]
    %v4804 = vld [vmem:[%s4802 + $0x8] sm:$0xff]
    %v4805 = vld [vmem:[%s4802 + $0x10] sm:$0xff]
    %v4806 = vld [vmem:[%s4802 + $0x18] sm:$0xff]
    %v4808 = vsel %vm4607, %v4460, 0
    %v4811 = vsel %vm4607, %v4465, 0
    %v4814 = vsel %vm4607, %v4470, 0
    %v4817 = vsel %vm4607, %v4475, 0
    %4819 = vmatprep.subr.mxu0 0.0
    %4820 = vmatpush1.msra.mxu0 0.0
    %4821 = vmatprep.subr.mxu0 0.0
    %4822 = vmatpush1.msra.mxu0 0.0
    %4823 = vmatprep.subr.mxu0 0.0
    %4824 = vmatpush1.msra.mxu0 0.0
    %4825 = vmatprep.subr.mxu0 0.0
    %4826 = vmatpush1.msra.mxu0 0.0
    %4827 = vmatprep.subr.mxu0 0.0
    %4828 = vmatpush1.msra.mxu0 0.0
    %4829 = vmatprep.subr.mxu0 0.0
    %4830 = vmatpush1.msra.mxu0 0.0
    %4831 = vmatprep.subr.mxu0 0.0
    %4832 = vmatpush1.msra.mxu0 0.0
    %4833 = vmatprep.subr.mxu0 0.0
    %4834 = vmatpush1.msra.mxu0 0.0
    %4835 = vmatprep.subr.mxu0 0.0
    %4836 = vmatpush1.msra.mxu0 0.0
    %4837 = vmatprep.subr.mxu0 0.0
    %4838 = vmatpush1.msra.mxu0 0.0
    %4839 = vmatprep.subr.mxu0 0.0
    %4840 = vmatpush1.msra.mxu0 0.0
    %4841 = vmatprep.subr.mxu0 0.0
    %4842 = vmatpush1.msra.mxu0 0.0
    %4843 = vmatprep.subr.mxu0 0.0
    %4844 = vmatpush1.msra.mxu0 %v4806
    %4845 = vmatprep.subr.mxu0 0.0
    %4846 = vmatpush1.msra.mxu0 %v4805
    %4847 = vmatprep.subr.mxu0 0.0
    %4848 = vmatpush1.msra.mxu0 %v4804
    %4849 = vmatprep.subr.mxu0 0.0
    %4850 = vmatpush1.msra.mxu0 %v4803
    %4851 = vmatprep.subr.mxu0 0.0
    %4852 = vmatpush2.msra.mxu0 0.0
    %4853 = vmatprep.subr.mxu0 0.0
    %4854 = vmatpush2.msra.mxu0 0.0
    %4855 = vmatprep.subr.mxu0 0.0
    %4856 = vmatpush2.msra.mxu0 0.0
    %4857 = vmatprep.subr.mxu0 0.0
    %4858 = vmatpush2.msra.mxu0 0.0
    %4859 = vmatprep.subr.mxu0 0.0
    %4860 = vmatpush2.msra.mxu0 0.0
    %4861 = vmatprep.subr.mxu0 0.0
    %4862 = vmatpush2.msra.mxu0 0.0
    %4863 = vmatprep.subr.mxu0 0.0
    %4864 = vmatpush2.msra.mxu0 0.0
    %4865 = vmatprep.subr.mxu0 0.0
    %4866 = vmatpush2.msra.mxu0 0.0
    %4867 = vmatprep.subr.mxu0 0.0
    %4868 = vmatpush2.msra.mxu0 0.0
    %4869 = vmatprep.subr.mxu0 0.0
    %4870 = vmatpush2.msra.mxu0 0.0
    %4871 = vmatprep.subr.mxu0 0.0
    %4872 = vmatpush2.msra.mxu0 0.0
    %4873 = vmatprep.subr.mxu0 0.0
    %4874 = vmatpush2.msra.mxu0 0.0
    %4875 = vmatprep.subr.mxu0 0.0
    %4876 = vmatpush2.msra.mxu0 0.0
    %4877 = vmatprep.subr.mxu0 0.0
    %4878 = vmatpush2.msra.mxu0 0.0
    %4879 = vmatprep.subr.mxu0 0.0
    %4880 = vmatpush2.msra.mxu0 0.0
    %4881 = vmatprep.subr.mxu0 0.0
    %4882 = vmatpush2.msra.mxu0 0.0
    %4883 = vmatprep.mubr.f32.mxu0 0.0
    %4884 = vmatmul.mubr.f32.gmra.mxu0 %v4808
    %v4885 = vpop.f32.mrf.mxu0
    %v4886 = vadd.f32 0.0, %v4885
    %v4887 = vpop.f32.mrf.mxu0
    %4888 = vmatprep.mubr.f32.mxu0 0.0
    %4889 = vmatmul.mubr.f32.gmra.mxu0 %v4811
    %v4890 = vpop.f32.mrf.mxu0
    %v4891 = vadd.f32 0.0, %v4890
    %v4892 = vpop.f32.mrf.mxu0
    %4893 = vmatprep.mubr.f32.mxu0 0.0
    %4894 = vmatmul.mubr.f32.gmra.mxu0 %v4814
    %v4895 = vpop.f32.mrf.mxu0
    %v4896 = vadd.f32 0.0, %v4895
    %v4897 = vpop.f32.mrf.mxu0
    %4898 = vmatprep.mubr.f32.mxu0 0.0
    %4899 = vmatmul.mubr.f32.gmra.mxu0 %v4817
    %v4900 = vpop.f32.mrf.mxu0
    %v4901 = vadd.f32 0.0, %v4900
    %v4902 = vpop.f32.mrf.mxu0
    %4903 = vdwg.mxu0
    %v4904 = vadd.f32 %v4784, %v4886
    %v4905 = vadd.f32 %v4789, %v4891
    %v4906 = vadd.f32 %v4794, %v4896
    %v4907 = vadd.f32 %v4799, %v4901
    %s4908 = scalar_lea.vmem [#allocation10], 96
    %v4909 = vld [vmem:[%s4908] sm:$0xff]
    %v4910 = vld [vmem:[%s4908 + $0x8] sm:$0xff]
    %v4911 = vld [vmem:[%s4908 + $0x10] sm:$0xff]
    %v4912 = vld [vmem:[%s4908 + $0x18] sm:$0xff]
    %v4914 = vsel %vm4607, %v4480, 0
    %v4917 = vsel %vm4607, %v4485, 0
    %v4920 = vsel %vm4607, %v4490, 0
    %v4923 = vsel %vm4607, %v4495, 0
    %4925 = vmatprep.subr.mxu0 0.0
    %4926 = vmatpush1.msra.mxu0 0.0
    %4927 = vmatprep.subr.mxu0 0.0
    %4928 = vmatpush1.msra.mxu0 0.0
    %4929 = vmatprep.subr.mxu0 0.0
    %4930 = vmatpush1.msra.mxu0 0.0
    %4931 = vmatprep.subr.mxu0 0.0
    %4932 = vmatpush1.msra.mxu0 0.0
    %4933 = vmatprep.subr.mxu0 0.0
    %4934 = vmatpush1.msra.mxu0 0.0
    %4935 = vmatprep.subr.mxu0 0.0
    %4936 = vmatpush1.msra.mxu0 0.0
    %4937 = vmatprep.subr.mxu0 0.0
    %4938 = vmatpush1.msra.mxu0 0.0
    %4939 = vmatprep.subr.mxu0 0.0
    %4940 = vmatpush1.msra.mxu0 0.0
    %4941 = vmatprep.subr.mxu0 0.0
    %4942 = vmatpush1.msra.mxu0 0.0
    %4943 = vmatprep.subr.mxu0 0.0
    %4944 = vmatpush1.msra.mxu0 0.0
    %4945 = vmatprep.subr.mxu0 0.0
    %4946 = vmatpush1.msra.mxu0 0.0
    %4947 = vmatprep.subr.mxu0 0.0
    %4948 = vmatpush1.msra.mxu0 0.0
    %4949 = vmatprep.subr.mxu0 0.0
    %4950 = vmatpush1.msra.mxu0 %v4912
    %4951 = vmatprep.subr.mxu0 0.0
    %4952 = vmatpush1.msra.mxu0 %v4911
    %4953 = vmatprep.subr.mxu0 0.0
    %4954 = vmatpush1.msra.mxu0 %v4910
    %4955 = vmatprep.subr.mxu0 0.0
    %4956 = vmatpush1.msra.mxu0 %v4909
    %4957 = vmatprep.subr.mxu0 0.0
    %4958 = vmatpush2.msra.mxu0 0.0
    %4959 = vmatprep.subr.mxu0 0.0
    %4960 = vmatpush2.msra.mxu0 0.0
    %4961 = vmatprep.subr.mxu0 0.0
    %4962 = vmatpush2.msra.mxu0 0.0
    %4963 = vmatprep.subr.mxu0 0.0
    %4964 = vmatpush2.msra.mxu0 0.0
    %4965 = vmatprep.subr.mxu0 0.0
    %4966 = vmatpush2.msra.mxu0 0.0
    %4967 = vmatprep.subr.mxu0 0.0
    %4968 = vmatpush2.msra.mxu0 0.0
    %4969 = vmatprep.subr.mxu0 0.0
    %4970 = vmatpush2.msra.mxu0 0.0
    %4971 = vmatprep.subr.mxu0 0.0
    %4972 = vmatpush2.msra.mxu0 0.0
    %4973 = vmatprep.subr.mxu0 0.0
    %4974 = vmatpush2.msra.mxu0 0.0
    %4975 = vmatprep.subr.mxu0 0.0
    %4976 = vmatpush2.msra.mxu0 0.0
    %4977 = vmatprep.subr.mxu0 0.0
    %4978 = vmatpush2.msra.mxu0 0.0
    %4979 = vmatprep.subr.mxu0 0.0
    %4980 = vmatpush2.msra.mxu0 0.0
    %4981 = vmatprep.subr.mxu0 0.0
    %4982 = vmatpush2.msra.mxu0 0.0
    %4983 = vmatprep.subr.mxu0 0.0
    %4984 = vmatpush2.msra.mxu0 0.0
    %4985 = vmatprep.subr.mxu0 0.0
    %4986 = vmatpush2.msra.mxu0 0.0
    %4987 = vmatprep.subr.mxu0 0.0
    %4988 = vmatpush2.msra.mxu0 0.0
    %4989 = vmatprep.mubr.f32.mxu0 0.0
    %4990 = vmatmul.mubr.f32.gmra.mxu0 %v4914
    %v4991 = vpop.f32.mrf.mxu0
    %v4992 = vadd.f32 0.0, %v4991
    %v4993 = vpop.f32.mrf.mxu0
    %4994 = vmatprep.mubr.f32.mxu0 0.0
    %4995 = vmatmul.mubr.f32.gmra.mxu0 %v4917
    %v4996 = vpop.f32.mrf.mxu0
    %v4997 = vadd.f32 0.0, %v4996
    %v4998 = vpop.f32.mrf.mxu0
    %4999 = vmatprep.mubr.f32.mxu0 0.0
    %5000 = vmatmul.mubr.f32.gmra.mxu0 %v4920
    %v5001 = vpop.f32.mrf.mxu0
    %v5002 = vadd.f32 0.0, %v5001
    %v5003 = vpop.f32.mrf.mxu0
    %5004 = vmatprep.mubr.f32.mxu0 0.0
    %5005 = vmatmul.mubr.f32.gmra.mxu0 %v4923
    %v5006 = vpop.f32.mrf.mxu0
    %v5007 = vadd.f32 0.0, %v5006
    %v5008 = vpop.f32.mrf.mxu0
    %5009 = vdwg.mxu0
    %v5010 = vadd.f32 %v4904, %v4992
    %v5011 = vadd.f32 %v4905, %v4997
    %v5012 = vadd.f32 %v4906, %v5002
    %v5013 = vadd.f32 %v4907, %v5007
    %s5014 = scalar_lea.vmem [#allocation10], 128
    %v5015 = vld [vmem:[%s5014] sm:$0xff]
    %v5016 = vld [vmem:[%s5014 + $0x8] sm:$0xff]
    %v5017 = vld [vmem:[%s5014 + $0x10] sm:$0xff]
    %v5018 = vld [vmem:[%s5014 + $0x18] sm:$0xff]
    %v5020 = vsel %vm4607, %v4500, 0
    %v5023 = vsel %vm4607, %v4505, 0
    %v5026 = vsel %vm4607, %v4510, 0
    %v5029 = vsel %vm4607, %v4515, 0
    %5031 = vmatprep.subr.mxu0 0.0
    %5032 = vmatpush1.msra.mxu0 0.0
    %5033 = vmatprep.subr.mxu0 0.0
    %5034 = vmatpush1.msra.mxu0 0.0
    %5035 = vmatprep.subr.mxu0 0.0
    %5036 = vmatpush1.msra.mxu0 0.0
    %5037 = vmatprep.subr.mxu0 0.0
    %5038 = vmatpush1.msra.mxu0 0.0
    %5039 = vmatprep.subr.mxu0 0.0
    %5040 = vmatpush1.msra.mxu0 0.0
    %5041 = vmatprep.subr.mxu0 0.0
    %5042 = vmatpush1.msra.mxu0 0.0
    %5043 = vmatprep.subr.mxu0 0.0
    %5044 = vmatpush1.msra.mxu0 0.0
    %5045 = vmatprep.subr.mxu0 0.0
    %5046 = vmatpush1.msra.mxu0 0.0
    %5047 = vmatprep.subr.mxu0 0.0
    %5048 = vmatpush1.msra.mxu0 0.0
    %5049 = vmatprep.subr.mxu0 0.0
    %5050 = vmatpush1.msra.mxu0 0.0
    %5051 = vmatprep.subr.mxu0 0.0
    %5052 = vmatpush1.msra.mxu0 0.0
    %5053 = vmatprep.subr.mxu0 0.0
    %5054 = vmatpush1.msra.mxu0 0.0
    %5055 = vmatprep.subr.mxu0 0.0
    %5056 = vmatpush1.msra.mxu0 %v5018
    %5057 = vmatprep.subr.mxu0 0.0
    %5058 = vmatpush1.msra.mxu0 %v5017
    %5059 = vmatprep.subr.mxu0 0.0
    %5060 = vmatpush1.msra.mxu0 %v5016
    %5061 = vmatprep.subr.mxu0 0.0
    %5062 = vmatpush1.msra.mxu0 %v5015
    %5063 = vmatprep.subr.mxu0 0.0
    %5064 = vmatpush2.msra.mxu0 0.0
    %5065 = vmatprep.subr.mxu0 0.0
    %5066 = vmatpush2.msra.mxu0 0.0
    %5067 = vmatprep.subr.mxu0 0.0
    %5068 = vmatpush2.msra.mxu0 0.0
    %5069 = vmatprep.subr.mxu0 0.0
    %5070 = vmatpush2.msra.mxu0 0.0
    %5071 = vmatprep.subr.mxu0 0.0
    %5072 = vmatpush2.msra.mxu0 0.0
    %5073 = vmatprep.subr.mxu0 0.0
    %5074 = vmatpush2.msra.mxu0 0.0
    %5075 = vmatprep.subr.mxu0 0.0
    %5076 = vmatpush2.msra.mxu0 0.0
    %5077 = vmatprep.subr.mxu0 0.0
    %5078 = vmatpush2.msra.mxu0 0.0
    %5079 = vmatprep.subr.mxu0 0.0
    %5080 = vmatpush2.msra.mxu0 0.0
    %5081 = vmatprep.subr.mxu0 0.0
    %5082 = vmatpush2.msra.mxu0 0.0
    %5083 = vmatprep.subr.mxu0 0.0
    %5084 = vmatpush2.msra.mxu0 0.0
    %5085 = vmatprep.subr.mxu0 0.0
    %5086 = vmatpush2.msra.mxu0 0.0
    %5087 = vmatprep.subr.mxu0 0.0
    %5088 = vmatpush2.msra.mxu0 0.0
    %5089 = vmatprep.subr.mxu0 0.0
    %5090 = vmatpush2.msra.mxu0 0.0
    %5091 = vmatprep.subr.mxu0 0.0
    %5092 = vmatpush2.msra.mxu0 0.0
    %5093 = vmatprep.subr.mxu0 0.0
    %5094 = vmatpush2.msra.mxu0 0.0
    %5095 = vmatprep.mubr.f32.mxu0 0.0
    %5096 = vmatmul.mubr.f32.gmra.mxu0 %v5020
    %v5097 = vpop.f32.mrf.mxu0
    %v5098 = vadd.f32 0.0, %v5097
    %v5099 = vpop.f32.mrf.mxu0
    %5100 = vmatprep.mubr.f32.mxu0 0.0
    %5101 = vmatmul.mubr.f32.gmra.mxu0 %v5023
    %v5102 = vpop.f32.mrf.mxu0
    %v5103 = vadd.f32 0.0, %v5102
    %v5104 = vpop.f32.mrf.mxu0
    %5105 = vmatprep.mubr.f32.mxu0 0.0
    %5106 = vmatmul.mubr.f32.gmra.mxu0 %v5026
    %v5107 = vpop.f32.mrf.mxu0
    %v5108 = vadd.f32 0.0, %v5107
    %v5109 = vpop.f32.mrf.mxu0
    %5110 = vmatprep.mubr.f32.mxu0 0.0
    %5111 = vmatmul.mubr.f32.gmra.mxu0 %v5029
    %v5112 = vpop.f32.mrf.mxu0
    %v5113 = vadd.f32 0.0, %v5112
    %v5114 = vpop.f32.mrf.mxu0
    %5115 = vdwg.mxu0
    %v5116 = vadd.f32 %v5010, %v5098
    %v5117 = vadd.f32 %v5011, %v5103
    %v5118 = vadd.f32 %v5012, %v5108
    %v5119 = vadd.f32 %v5013, %v5113
    %s5120 = scalar_lea.vmem [#allocation10], 160
    %v5121 = vld [vmem:[%s5120] sm:$0xff]
    %v5122 = vld [vmem:[%s5120 + $0x8] sm:$0xff]
    %v5123 = vld [vmem:[%s5120 + $0x10] sm:$0xff]
    %v5124 = vld [vmem:[%s5120 + $0x18] sm:$0xff]
    %v5126 = vsel %vm4607, %v4520, 0
    %v5129 = vsel %vm4607, %v4525, 0
    %v5132 = vsel %vm4607, %v4530, 0
    %v5135 = vsel %vm4607, %v4535, 0
    %5137 = vmatprep.subr.mxu0 0.0
    %5138 = vmatpush1.msra.mxu0 0.0
    %5139 = vmatprep.subr.mxu0 0.0
    %5140 = vmatpush1.msra.mxu0 0.0
    %5141 = vmatprep.subr.mxu0 0.0
    %5142 = vmatpush1.msra.mxu0 0.0
    %5143 = vmatprep.subr.mxu0 0.0
    %5144 = vmatpush1.msra.mxu0 0.0
    %5145 = vmatprep.subr.mxu0 0.0
    %5146 = vmatpush1.msra.mxu0 0.0
    %5147 = vmatprep.subr.mxu0 0.0
    %5148 = vmatpush1.msra.mxu0 0.0
    %5149 = vmatprep.subr.mxu0 0.0
    %5150 = vmatpush1.msra.mxu0 0.0
    %5151 = vmatprep.subr.mxu0 0.0
    %5152 = vmatpush1.msra.mxu0 0.0
    %5153 = vmatprep.subr.mxu0 0.0
    %5154 = vmatpush1.msra.mxu0 0.0
    %5155 = vmatprep.subr.mxu0 0.0
    %5156 = vmatpush1.msra.mxu0 0.0
    %5157 = vmatprep.subr.mxu0 0.0
    %5158 = vmatpush1.msra.mxu0 0.0
    %5159 = vmatprep.subr.mxu0 0.0
    %5160 = vmatpush1.msra.mxu0 0.0
    %5161 = vmatprep.subr.mxu0 0.0
    %5162 = vmatpush1.msra.mxu0 %v5124
    %5163 = vmatprep.subr.mxu0 0.0
    %5164 = vmatpush1.msra.mxu0 %v5123
    %5165 = vmatprep.subr.mxu0 0.0
    %5166 = vmatpush1.msra.mxu0 %v5122
    %5167 = vmatprep.subr.mxu0 0.0
    %5168 = vmatpush1.msra.mxu0 %v5121
    %5169 = vmatprep.subr.mxu0 0.0
    %5170 = vmatpush2.msra.mxu0 0.0
    %5171 = vmatprep.subr.mxu0 0.0
    %5172 = vmatpush2.msra.mxu0 0.0
    %5173 = vmatprep.subr.mxu0 0.0
    %5174 = vmatpush2.msra.mxu0 0.0
    %5175 = vmatprep.subr.mxu0 0.0
    %5176 = vmatpush2.msra.mxu0 0.0
    %5177 = vmatprep.subr.mxu0 0.0
    %5178 = vmatpush2.msra.mxu0 0.0
    %5179 = vmatprep.subr.mxu0 0.0
    %5180 = vmatpush2.msra.mxu0 0.0
    %5181 = vmatprep.subr.mxu0 0.0
    %5182 = vmatpush2.msra.mxu0 0.0
    %5183 = vmatprep.subr.mxu0 0.0
    %5184 = vmatpush2.msra.mxu0 0.0
    %5185 = vmatprep.subr.mxu0 0.0
    %5186 = vmatpush2.msra.mxu0 0.0
    %5187 = vmatprep.subr.mxu0 0.0
    %5188 = vmatpush2.msra.mxu0 0.0
    %5189 = vmatprep.subr.mxu0 0.0
    %5190 = vmatpush2.msra.mxu0 0.0
    %5191 = vmatprep.subr.mxu0 0.0
    %5192 = vmatpush2.msra.mxu0 0.0
    %5193 = vmatprep.subr.mxu0 0.0
    %5194 = vmatpush2.msra.mxu0 0.0
    %5195 = vmatprep.subr.mxu0 0.0
    %5196 = vmatpush2.msra.mxu0 0.0
    %5197 = vmatprep.subr.mxu0 0.0
    %5198 = vmatpush2.msra.mxu0 0.0
    %5199 = vmatprep.subr.mxu0 0.0
    %5200 = vmatpush2.msra.mxu0 0.0
    %5201 = vmatprep.mubr.f32.mxu0 0.0
    %5202 = vmatmul.mubr.f32.gmra.mxu0 %v5126
    %v5203 = vpop.f32.mrf.mxu0
    %v5204 = vadd.f32 0.0, %v5203
    %v5205 = vpop.f32.mrf.mxu0
    %5206 = vmatprep.mubr.f32.mxu0 0.0
    %5207 = vmatmul.mubr.f32.gmra.mxu0 %v5129
    %v5208 = vpop.f32.mrf.mxu0
    %v5209 = vadd.f32 0.0, %v5208
    %v5210 = vpop.f32.mrf.mxu0
    %5211 = vmatprep.mubr.f32.mxu0 0.0
    %5212 = vmatmul.mubr.f32.gmra.mxu0 %v5132
    %v5213 = vpop.f32.mrf.mxu0
    %v5214 = vadd.f32 0.0, %v5213
    %v5215 = vpop.f32.mrf.mxu0
    %5216 = vmatprep.mubr.f32.mxu0 0.0
    %5217 = vmatmul.mubr.f32.gmra.mxu0 %v5135
    %v5218 = vpop.f32.mrf.mxu0
    %v5219 = vadd.f32 0.0, %v5218
    %v5220 = vpop.f32.mrf.mxu0
    %5221 = vdwg.mxu0
    %v5222 = vadd.f32 %v5116, %v5204
    %v5223 = vadd.f32 %v5117, %v5209
    %v5224 = vadd.f32 %v5118, %v5214
    %v5225 = vadd.f32 %v5119, %v5219
    %s5226 = scalar_lea.vmem [#allocation10], 192
    %v5227 = vld [vmem:[%s5226] sm:$0xff]
    %v5228 = vld [vmem:[%s5226 + $0x8] sm:$0xff]
    %v5229 = vld [vmem:[%s5226 + $0x10] sm:$0xff]
    %v5230 = vld [vmem:[%s5226 + $0x18] sm:$0xff]
    %v5232 = vsel %vm4607, %v4540, 0
    %v5235 = vsel %vm4607, %v4545, 0
    %v5238 = vsel %vm4607, %v4550, 0
    %v5241 = vsel %vm4607, %v4555, 0
    %5243 = vmatprep.subr.mxu0 0.0
    %5244 = vmatpush1.msra.mxu0 0.0
    %5245 = vmatprep.subr.mxu0 0.0
    %5246 = vmatpush1.msra.mxu0 0.0
    %5247 = vmatprep.subr.mxu0 0.0
    %5248 = vmatpush1.msra.mxu0 0.0
    %5249 = vmatprep.subr.mxu0 0.0
    %5250 = vmatpush1.msra.mxu0 0.0
    %5251 = vmatprep.subr.mxu0 0.0
    %5252 = vmatpush1.msra.mxu0 0.0
    %5253 = vmatprep.subr.mxu0 0.0
    %5254 = vmatpush1.msra.mxu0 0.0
    %5255 = vmatprep.subr.mxu0 0.0
    %5256 = vmatpush1.msra.mxu0 0.0
    %5257 = vmatprep.subr.mxu0 0.0
    %5258 = vmatpush1.msra.mxu0 0.0
    %5259 = vmatprep.subr.mxu0 0.0
    %5260 = vmatpush1.msra.mxu0 0.0
    %5261 = vmatprep.subr.mxu0 0.0
    %5262 = vmatpush1.msra.mxu0 0.0
    %5263 = vmatprep.subr.mxu0 0.0
    %5264 = vmatpush1.msra.mxu0 0.0
    %5265 = vmatprep.subr.mxu0 0.0
    %5266 = vmatpush1.msra.mxu0 0.0
    %5267 = vmatprep.subr.mxu0 0.0
    %5268 = vmatpush1.msra.mxu0 %v5230
    %5269 = vmatprep.subr.mxu0 0.0
    %5270 = vmatpush1.msra.mxu0 %v5229
    %5271 = vmatprep.subr.mxu0 0.0
    %5272 = vmatpush1.msra.mxu0 %v5228
    %5273 = vmatprep.subr.mxu0 0.0
    %5274 = vmatpush1.msra.mxu0 %v5227
    %5275 = vmatprep.subr.mxu0 0.0
    %5276 = vmatpush2.msra.mxu0 0.0
    %5277 = vmatprep.subr.mxu0 0.0
    %5278 = vmatpush2.msra.mxu0 0.0
    %5279 = vmatprep.subr.mxu0 0.0
    %5280 = vmatpush2.msra.mxu0 0.0
    %5281 = vmatprep.subr.mxu0 0.0
    %5282 = vmatpush2.msra.mxu0 0.0
    %5283 = vmatprep.subr.mxu0 0.0
    %5284 = vmatpush2.msra.mxu0 0.0
    %5285 = vmatprep.subr.mxu0 0.0
    %5286 = vmatpush2.msra.mxu0 0.0
    %5287 = vmatprep.subr.mxu0 0.0
    %5288 = vmatpush2.msra.mxu0 0.0
    %5289 = vmatprep.subr.mxu0 0.0
    %5290 = vmatpush2.msra.mxu0 0.0
    %5291 = vmatprep.subr.mxu0 0.0
    %5292 = vmatpush2.msra.mxu0 0.0
    %5293 = vmatprep.subr.mxu0 0.0
    %5294 = vmatpush2.msra.mxu0 0.0
    %5295 = vmatprep.subr.mxu0 0.0
    %5296 = vmatpush2.msra.mxu0 0.0
    %5297 = vmatprep.subr.mxu0 0.0
    %5298 = vmatpush2.msra.mxu0 0.0
    %5299 = vmatprep.subr.mxu0 0.0
    %5300 = vmatpush2.msra.mxu0 0.0
    %5301 = vmatprep.subr.mxu0 0.0
    %5302 = vmatpush2.msra.mxu0 0.0
    %5303 = vmatprep.subr.mxu0 0.0
    %5304 = vmatpush2.msra.mxu0 0.0
    %5305 = vmatprep.subr.mxu0 0.0
    %5306 = vmatpush2.msra.mxu0 0.0
    %5307 = vmatprep.mubr.f32.mxu0 0.0
    %5308 = vmatmul.mubr.f32.gmra.mxu0 %v5232
    %v5309 = vpop.f32.mrf.mxu0
    %v5310 = vadd.f32 0.0, %v5309
    %v5311 = vpop.f32.mrf.mxu0
    %5312 = vmatprep.mubr.f32.mxu0 0.0
    %5313 = vmatmul.mubr.f32.gmra.mxu0 %v5235
    %v5314 = vpop.f32.mrf.mxu0
    %v5315 = vadd.f32 0.0, %v5314
    %v5316 = vpop.f32.mrf.mxu0
    %5317 = vmatprep.mubr.f32.mxu0 0.0
    %5318 = vmatmul.mubr.f32.gmra.mxu0 %v5238
    %v5319 = vpop.f32.mrf.mxu0
    %v5320 = vadd.f32 0.0, %v5319
    %v5321 = vpop.f32.mrf.mxu0
    %5322 = vmatprep.mubr.f32.mxu0 0.0
    %5323 = vmatmul.mubr.f32.gmra.mxu0 %v5241
    %v5324 = vpop.f32.mrf.mxu0
    %v5325 = vadd.f32 0.0, %v5324
    %v5326 = vpop.f32.mrf.mxu0
    %5327 = vdwg.mxu0
    %v5328 = vadd.f32 %v5222, %v5310
    %v5329 = vadd.f32 %v5223, %v5315
    %v5330 = vadd.f32 %v5224, %v5320
    %v5331 = vadd.f32 %v5225, %v5325
    %s5332 = scalar_lea.vmem [#allocation10], 224
    %v5333 = vld [vmem:[%s5332] sm:$0xff]
    %v5334 = vld [vmem:[%s5332 + $0x8] sm:$0xff]
    %v5335 = vld [vmem:[%s5332 + $0x10] sm:$0xff]
    %v5336 = vld [vmem:[%s5332 + $0x18] sm:$0xff]
    %v5338 = vsel %vm4607, %v4560, 0
    %v5341 = vsel %vm4607, %v4565, 0
    %v5344 = vsel %vm4607, %v4570, 0
    %v5347 = vsel %vm4607, %v4575, 0
    %5349 = vmatprep.subr.mxu0 0.0
    %5350 = vmatpush1.msra.mxu0 0.0
    %5351 = vmatprep.subr.mxu0 0.0
    %5352 = vmatpush1.msra.mxu0 0.0
    %5353 = vmatprep.subr.mxu0 0.0
    %5354 = vmatpush1.msra.mxu0 0.0
    %5355 = vmatprep.subr.mxu0 0.0
    %5356 = vmatpush1.msra.mxu0 0.0
    %5357 = vmatprep.subr.mxu0 0.0
    %5358 = vmatpush1.msra.mxu0 0.0
    %5359 = vmatprep.subr.mxu0 0.0
    %5360 = vmatpush1.msra.mxu0 0.0
    %5361 = vmatprep.subr.mxu0 0.0
    %5362 = vmatpush1.msra.mxu0 0.0
    %5363 = vmatprep.subr.mxu0 0.0
    %5364 = vmatpush1.msra.mxu0 0.0
    %5365 = vmatprep.subr.mxu0 0.0
    %5366 = vmatpush1.msra.mxu0 0.0
    %5367 = vmatprep.subr.mxu0 0.0
    %5368 = vmatpush1.msra.mxu0 0.0
    %5369 = vmatprep.subr.mxu0 0.0
    %5370 = vmatpush1.msra.mxu0 0.0
    %5371 = vmatprep.subr.mxu0 0.0
    %5372 = vmatpush1.msra.mxu0 0.0
    %5373 = vmatprep.subr.mxu0 0.0
    %5374 = vmatpush1.msra.mxu0 %v5336
    %5375 = vmatprep.subr.mxu0 0.0
    %5376 = vmatpush1.msra.mxu0 %v5335
    %5377 = vmatprep.subr.mxu0 0.0
    %5378 = vmatpush1.msra.mxu0 %v5334
    %5379 = vmatprep.subr.mxu0 0.0
    %5380 = vmatpush1.msra.mxu0 %v5333
    %5381 = vmatprep.subr.mxu0 0.0
    %5382 = vmatpush2.msra.mxu0 0.0
    %5383 = vmatprep.subr.mxu0 0.0
    %5384 = vmatpush2.msra.mxu0 0.0
    %5385 = vmatprep.subr.mxu0 0.0
    %5386 = vmatpush2.msra.mxu0 0.0
    %5387 = vmatprep.subr.mxu0 0.0
    %5388 = vmatpush2.msra.mxu0 0.0
    %5389 = vmatprep.subr.mxu0 0.0
    %5390 = vmatpush2.msra.mxu0 0.0
    %5391 = vmatprep.subr.mxu0 0.0
    %5392 = vmatpush2.msra.mxu0 0.0
    %5393 = vmatprep.subr.mxu0 0.0
    %5394 = vmatpush2.msra.mxu0 0.0
    %5395 = vmatprep.subr.mxu0 0.0
    %5396 = vmatpush2.msra.mxu0 0.0
    %5397 = vmatprep.subr.mxu0 0.0
    %5398 = vmatpush2.msra.mxu0 0.0
    %5399 = vmatprep.subr.mxu0 0.0
    %5400 = vmatpush2.msra.mxu0 0.0
    %5401 = vmatprep.subr.mxu0 0.0
    %5402 = vmatpush2.msra.mxu0 0.0
    %5403 = vmatprep.subr.mxu0 0.0
    %5404 = vmatpush2.msra.mxu0 0.0
    %5405 = vmatprep.subr.mxu0 0.0
    %5406 = vmatpush2.msra.mxu0 0.0
    %5407 = vmatprep.subr.mxu0 0.0
    %5408 = vmatpush2.msra.mxu0 0.0
    %5409 = vmatprep.subr.mxu0 0.0
    %5410 = vmatpush2.msra.mxu0 0.0
    %5411 = vmatprep.subr.mxu0 0.0
    %5412 = vmatpush2.msra.mxu0 0.0
    %5413 = vmatprep.mubr.f32.mxu0 0.0
    %5414 = vmatmul.mubr.f32.gmra.mxu0 %v5338
    %v5415 = vpop.f32.mrf.mxu0
    %v5416 = vadd.f32 0.0, %v5415
    %v5417 = vpop.f32.mrf.mxu0
    %5418 = vmatprep.mubr.f32.mxu0 0.0
    %5419 = vmatmul.mubr.f32.gmra.mxu0 %v5341
    %v5420 = vpop.f32.mrf.mxu0
    %v5421 = vadd.f32 0.0, %v5420
    %v5422 = vpop.f32.mrf.mxu0
    %5423 = vmatprep.mubr.f32.mxu0 0.0
    %5424 = vmatmul.mubr.f32.gmra.mxu0 %v5344
    %v5425 = vpop.f32.mrf.mxu0
    %v5426 = vadd.f32 0.0, %v5425
    %v5427 = vpop.f32.mrf.mxu0
    %5428 = vmatprep.mubr.f32.mxu0 0.0
    %5429 = vmatmul.mubr.f32.gmra.mxu0 %v5347
    %v5430 = vpop.f32.mrf.mxu0
    %v5431 = vadd.f32 0.0, %v5430
    %v5432 = vpop.f32.mrf.mxu0
    %5433 = vdwg.mxu0
    %v5434 = vadd.f32 %v5328, %v5416
    %v5435 = vadd.f32 %v5329, %v5421
    %v5436 = vadd.f32 %v5330, %v5426
    %v5437 = vadd.f32 %v5331, %v5431
    %s5438 = scalar_lea.vmem [#allocation10], 256
    %v5439 = vld [vmem:[%s5438] sm:$0xff]
    %v5440 = vld [vmem:[%s5438 + $0x8] sm:$0xff]
    %v5441 = vld [vmem:[%s5438 + $0x10] sm:$0xff]
    %v5442 = vld [vmem:[%s5438 + $0x18] sm:$0xff]
    %v5444 = vsel %vm4607, %v4580, 0
    %v5447 = vsel %vm4607, %v4585, 0
    %v5450 = vsel %vm4607, %v4590, 0
    %v5453 = vsel %vm4607, %v4595, 0
    %5455 = vmatprep.subr.mxu0 0.0
    %5456 = vmatpush1.msra.mxu0 0.0
    %5457 = vmatprep.subr.mxu0 0.0
    %5458 = vmatpush1.msra.mxu0 0.0
    %5459 = vmatprep.subr.mxu0 0.0
    %5460 = vmatpush1.msra.mxu0 0.0
    %5461 = vmatprep.subr.mxu0 0.0
    %5462 = vmatpush1.msra.mxu0 0.0
    %5463 = vmatprep.subr.mxu0 0.0
    %5464 = vmatpush1.msra.mxu0 0.0
    %5465 = vmatprep.subr.mxu0 0.0
    %5466 = vmatpush1.msra.mxu0 0.0
    %5467 = vmatprep.subr.mxu0 0.0
    %5468 = vmatpush1.msra.mxu0 0.0
    %5469 = vmatprep.subr.mxu0 0.0
    %5470 = vmatpush1.msra.mxu0 0.0
    %5471 = vmatprep.subr.mxu0 0.0
    %5472 = vmatpush1.msra.mxu0 0.0
    %5473 = vmatprep.subr.mxu0 0.0
    %5474 = vmatpush1.msra.mxu0 0.0
    %5475 = vmatprep.subr.mxu0 0.0
    %5476 = vmatpush1.msra.mxu0 0.0
    %5477 = vmatprep.subr.mxu0 0.0
    %5478 = vmatpush1.msra.mxu0 0.0
    %5479 = vmatprep.subr.mxu0 0.0
    %5480 = vmatpush1.msra.mxu0 %v5442
    %5481 = vmatprep.subr.mxu0 0.0
    %5482 = vmatpush1.msra.mxu0 %v5441
    %5483 = vmatprep.subr.mxu0 0.0
    %5484 = vmatpush1.msra.mxu0 %v5440
    %5485 = vmatprep.subr.mxu0 0.0
    %5486 = vmatpush1.msra.mxu0 %v5439
    %5487 = vmatprep.subr.mxu0 0.0
    %5488 = vmatpush2.msra.mxu0 0.0
    %5489 = vmatprep.subr.mxu0 0.0
    %5490 = vmatpush2.msra.mxu0 0.0
    %5491 = vmatprep.subr.mxu0 0.0
    %5492 = vmatpush2.msra.mxu0 0.0
    %5493 = vmatprep.subr.mxu0 0.0
    %5494 = vmatpush2.msra.mxu0 0.0
    %5495 = vmatprep.subr.mxu0 0.0
    %5496 = vmatpush2.msra.mxu0 0.0
    %5497 = vmatprep.subr.mxu0 0.0
    %5498 = vmatpush2.msra.mxu0 0.0
    %5499 = vmatprep.subr.mxu0 0.0
    %5500 = vmatpush2.msra.mxu0 0.0
    %5501 = vmatprep.subr.mxu0 0.0
    %5502 = vmatpush2.msra.mxu0 0.0
    %5503 = vmatprep.subr.mxu0 0.0
    %5504 = vmatpush2.msra.mxu0 0.0
    %5505 = vmatprep.subr.mxu0 0.0
    %5506 = vmatpush2.msra.mxu0 0.0
    %5507 = vmatprep.subr.mxu0 0.0
    %5508 = vmatpush2.msra.mxu0 0.0
    %5509 = vmatprep.subr.mxu0 0.0
    %5510 = vmatpush2.msra.mxu0 0.0
    %5511 = vmatprep.subr.mxu0 0.0
    %5512 = vmatpush2.msra.mxu0 0.0
    %5513 = vmatprep.subr.mxu0 0.0
    %5514 = vmatpush2.msra.mxu0 0.0
    %5515 = vmatprep.subr.mxu0 0.0
    %5516 = vmatpush2.msra.mxu0 0.0
    %5517 = vmatprep.subr.mxu0 0.0
    %5518 = vmatpush2.msra.mxu0 0.0
    %5519 = vmatprep.mubr.f32.mxu0 0.0
    %5520 = vmatmul.mubr.f32.gmra.mxu0 %v5444
    %v5521 = vpop.f32.mrf.mxu0
    %v5522 = vadd.f32 0.0, %v5521
    %v5523 = vpop.f32.mrf.mxu0
    %5524 = vmatprep.mubr.f32.mxu0 0.0
    %5525 = vmatmul.mubr.f32.gmra.mxu0 %v5447
    %v5526 = vpop.f32.mrf.mxu0
    %v5527 = vadd.f32 0.0, %v5526
    %v5528 = vpop.f32.mrf.mxu0
    %5529 = vmatprep.mubr.f32.mxu0 0.0
    %5530 = vmatmul.mubr.f32.gmra.mxu0 %v5450
    %v5531 = vpop.f32.mrf.mxu0
    %v5532 = vadd.f32 0.0, %v5531
    %v5533 = vpop.f32.mrf.mxu0
    %5534 = vmatprep.mubr.f32.mxu0 0.0
    %5535 = vmatmul.mubr.f32.gmra.mxu0 %v5453
    %v5536 = vpop.f32.mrf.mxu0
    %v5537 = vadd.f32 0.0, %v5536
    %v5538 = vpop.f32.mrf.mxu0
    %5539 = vdwg.mxu0
    %v5540 = vadd.f32 %v5434, %v5522
    %v5541 = vadd.f32 %v5435, %v5527
    %v5542 = vadd.f32 %v5436, %v5532
    %v5543 = vadd.f32 %v5437, %v5537
    %v5544 = vld [vmem:[#allocation11] sm:$0x1]
    %v5546 = vlaneseq
    %v5547 = vshrl.u32 %v5546, 7
    %v5548 = vsub.s32 0, %v5547
    %v5549 = vrot.slane %v5544, %v5548
    %v5551 = vadd.f32 %v5540, %v5549
    %v5552 = vadd.f32 %v5541, %v5549
    %v5553 = vadd.f32 %v5542, %v5549
    %v5554 = vadd.f32 %v5543, %v5549
    %v5555 = vmax.f32 %v5551, 0.0
    %v5556 = vmax.f32 %v5552, 0.0
    %v5557 = vmax.f32 %v5553, 0.0
    %v5558 = vmax.f32 %v5554, 0.0
    %v5559 = vld [vmem:[%s7] sm:$0xff]
    %v5560 = vld [vmem:[%s7 + $0x8] sm:$0xff]
    %v5561 = vld [vmem:[%s7 + $0x10] sm:$0xff]
    %v5562 = vld [vmem:[%s7 + $0x18] sm:$0xff]
    %v5563 = vld [vmem:[%s7 + $0x20] sm:$0xff]
    %v5564 = vld [vmem:[%s7 + $0x28] sm:$0xff]
    %v5565 = vld [vmem:[%s7 + $0x30] sm:$0xff]
    %v5566 = vld [vmem:[%s7 + $0x38] sm:$0xff]
    %v5567 = vld [vmem:[%s7 + $0x40] sm:$0xff]
    %v5569 = vsel %vm4607, %v5559, 0
    %v5572 = vsel %vm4607, %v5560, 0
    %v5575 = vsel %vm4607, %v5561, 0
    %v5578 = vsel %vm4607, %v5562, 0
    %v5581 = vsel %vm4607, %v5563, 0
    %v5584 = vsel %vm4607, %v5564, 0
    %v5587 = vsel %vm4607, %v5565, 0
    %v5590 = vsel %vm4607, %v5566, 0
    %v5593 = vsel %vm4607, %v5567, 0
    %5595 = vmatprep.subr.mxu0 0.0
    %5596 = vmatpush1.msra.mxu0 0.0
    %5597 = vmatprep.subr.mxu0 0.0
    %5598 = vmatpush1.msra.mxu0 0.0
    %5599 = vmatprep.subr.mxu0 0.0
    %5600 = vmatpush1.msra.mxu0 0.0
    %5601 = vmatprep.subr.mxu0 0.0
    %5602 = vmatpush1.msra.mxu0 0.0
    %5603 = vmatprep.subr.mxu0 0.0
    %5604 = vmatpush1.msra.mxu0 0.0
    %5605 = vmatprep.subr.mxu0 0.0
    %5606 = vmatpush1.msra.mxu0 0.0
    %5607 = vmatprep.subr.mxu0 0.0
    %5608 = vmatpush1.msra.mxu0 0.0
    %5609 = vmatprep.subr.mxu0 0.0
    %5610 = vmatpush1.msra.mxu0 0.0
    %5611 = vmatprep.subr.mxu0 0.0
    %5612 = vmatpush1.msra.mxu0 0.0
    %5613 = vmatprep.subr.mxu0 0.0
    %5614 = vmatpush1.msra.mxu0 0.0
    %5615 = vmatprep.subr.mxu0 0.0
    %5616 = vmatpush1.msra.mxu0 0.0
    %5617 = vmatprep.subr.mxu0 0.0
    %5618 = vmatpush1.msra.mxu0 0.0
    %5619 = vmatprep.subr.mxu0 0.0
    %5620 = vmatpush1.msra.mxu0 %v5558
    %5621 = vmatprep.subr.mxu0 0.0
    %5622 = vmatpush1.msra.mxu0 %v5557
    %5623 = vmatprep.subr.mxu0 0.0
    %5624 = vmatpush1.msra.mxu0 %v5556
    %5625 = vmatprep.subr.mxu0 0.0
    %5626 = vmatpush1.msra.mxu0 %v5555
    %5627 = vmatprep.subr.mxu0 0.0
    %5628 = vmatpush2.msra.mxu0 0.0
    %5629 = vmatprep.subr.mxu0 0.0
    %5630 = vmatpush2.msra.mxu0 0.0
    %5631 = vmatprep.subr.mxu0 0.0
    %5632 = vmatpush2.msra.mxu0 0.0
    %5633 = vmatprep.subr.mxu0 0.0
    %5634 = vmatpush2.msra.mxu0 0.0
    %5635 = vmatprep.subr.mxu0 0.0
    %5636 = vmatpush2.msra.mxu0 0.0
    %5637 = vmatprep.subr.mxu0 0.0
    %5638 = vmatpush2.msra.mxu0 0.0
    %5639 = vmatprep.subr.mxu0 0.0
    %5640 = vmatpush2.msra.mxu0 0.0
    %5641 = vmatprep.subr.mxu0 0.0
    %5642 = vmatpush2.msra.mxu0 0.0
    %5643 = vmatprep.subr.mxu0 0.0
    %5644 = vmatpush2.msra.mxu0 0.0
    %5645 = vmatprep.subr.mxu0 0.0
    %5646 = vmatpush2.msra.mxu0 0.0
    %5647 = vmatprep.subr.mxu0 0.0
    %5648 = vmatpush2.msra.mxu0 0.0
    %5649 = vmatprep.subr.mxu0 0.0
    %5650 = vmatpush2.msra.mxu0 0.0
    %5651 = vmatprep.subr.mxu0 0.0
    %5652 = vmatpush2.msra.mxu0 0.0
    %5653 = vmatprep.subr.mxu0 0.0
    %5654 = vmatpush2.msra.mxu0 0.0
    %5655 = vmatprep.subr.mxu0 0.0
    %5656 = vmatpush2.msra.mxu0 0.0
    %5657 = vmatprep.subr.mxu0 0.0
    %5658 = vmatpush2.msra.mxu0 0.0
    %5659 = vmatprep.mubr.f32.mxu0 0.0
    %5660 = vmatmul.mubr.f32.gmra.mxu0 %v5569
    %v5661 = vpop.f32.mrf.mxu0
    %v5662 = vadd.f32 0.0, %v5661
    %v5663 = vpop.f32.mrf.mxu0
    %5664 = vmatprep.mubr.f32.mxu0 0.0
    %5665 = vmatmul.mubr.f32.gmra.mxu0 %v5572
    %v5666 = vpop.f32.mrf.mxu0
    %v5667 = vadd.f32 0.0, %v5666
    %v5668 = vpop.f32.mrf.mxu0
    %5669 = vmatprep.mubr.f32.mxu0 0.0
    %5670 = vmatmul.mubr.f32.gmra.mxu0 %v5575
    %v5671 = vpop.f32.mrf.mxu0
    %v5672 = vadd.f32 0.0, %v5671
    %v5673 = vpop.f32.mrf.mxu0
    %5674 = vmatprep.mubr.f32.mxu0 0.0
    %5675 = vmatmul.mubr.f32.gmra.mxu0 %v5578
    %v5676 = vpop.f32.mrf.mxu0
    %v5677 = vadd.f32 0.0, %v5676
    %v5678 = vpop.f32.mrf.mxu0
    %5679 = vmatprep.mubr.f32.mxu0 0.0
    %5680 = vmatmul.mubr.f32.gmra.mxu0 %v5581
    %v5681 = vpop.f32.mrf.mxu0
    %v5682 = vadd.f32 0.0, %v5681
    %v5683 = vpop.f32.mrf.mxu0
    %5684 = vmatprep.mubr.f32.mxu0 0.0
    %5685 = vmatmul.mubr.f32.gmra.mxu0 %v5584
    %v5686 = vpop.f32.mrf.mxu0
    %v5687 = vadd.f32 0.0, %v5686
    %v5688 = vpop.f32.mrf.mxu0
    %5689 = vmatprep.mubr.f32.mxu0 0.0
    %5690 = vmatmul.mubr.f32.gmra.mxu0 %v5587
    %v5691 = vpop.f32.mrf.mxu0
    %v5692 = vadd.f32 0.0, %v5691
    %v5693 = vpop.f32.mrf.mxu0
    %5694 = vmatprep.mubr.f32.mxu0 0.0
    %5695 = vmatmul.mubr.f32.gmra.mxu0 %v5590
    %v5696 = vpop.f32.mrf.mxu0
    %v5697 = vadd.f32 0.0, %v5696
    %v5698 = vpop.f32.mrf.mxu0
    %5699 = vmatprep.mubr.f32.mxu0 0.0
    %5700 = vmatmul.mubr.f32.gmra.mxu0 %v5593
    %v5701 = vpop.f32.mrf.mxu0
    %v5702 = vadd.f32 0.0, %v5701
    %v5703 = vpop.f32.mrf.mxu0
    %5704 = vdwg.mxu0
    %v5705 = vld [vmem:[#allocation13] sm:$0xff]
    %v5706 = vld [vmem:[#allocation13 + $0x8] sm:$0xff]
    %v5707 = vld [vmem:[#allocation13 + $0x10] sm:$0xff]
    %v5708 = vld [vmem:[#allocation13 + $0x18] sm:$0xff]
    %v5709 = vld [vmem:[#allocation13 + $0x20] sm:$0xff]
    %v5710 = vld [vmem:[#allocation13 + $0x28] sm:$0xff]
    %v5711 = vld [vmem:[#allocation13 + $0x30] sm:$0xff]
    %v5712 = vld [vmem:[#allocation13 + $0x38] sm:$0xff]
    %s5713 = scalar_lea.vmem [#allocation13], 64
    %v5714 = vld [vmem:[%s5713] sm:$0xff]
    %v5715 = vld [vmem:[%s5713 + $0x8] sm:$0xff]
    %v5716 = vld [vmem:[%s5713 + $0x10] sm:$0xff]
    %v5717 = vld [vmem:[%s5713 + $0x18] sm:$0xff]
    %v5718 = vld [vmem:[%s5713 + $0x20] sm:$0xff]
    %v5719 = vld [vmem:[%s5713 + $0x28] sm:$0xff]
    %v5720 = vld [vmem:[%s5713 + $0x30] sm:$0xff]
    %v5721 = vld [vmem:[%s5713 + $0x38] sm:$0xff]
    %vm5722 = vcmask 523264
    %v5724 = vsel %vm5722, %v5667, 0
    %5726 = vmatprep.subr.mxu0 0.0
    %5727 = vmatpush1.msra.mxu0 0.0
    %5728 = vmatprep.subr.mxu0 0.0
    %5729 = vmatpush1.msra.mxu0 0.0
    %5730 = vmatprep.subr.mxu0 0.0
    %5731 = vmatpush1.msra.mxu0 0.0
    %5732 = vmatprep.subr.mxu0 0.0
    %5733 = vmatpush1.msra.mxu0 0.0
    %5734 = vmatprep.subr.mxu0 0.0
    %5735 = vmatpush1.msra.mxu0 0.0
    %5736 = vmatprep.subr.mxu0 0.0
    %5737 = vmatpush1.msra.mxu0 0.0
    %5738 = vmatprep.subr.mxu0 0.0
    %5739 = vmatpush1.msra.mxu0 0.0
    %5740 = vmatprep.subr.mxu0 0.0
    %5741 = vmatpush1.msra.mxu0 0.0
    %5742 = vmatprep.subr.mxu0 0.0
    %5743 = vmatpush1.msra.mxu0 %v5721
    %5744 = vmatprep.subr.mxu0 0.0
    %5745 = vmatpush1.msra.mxu0 %v5720
    %5746 = vmatprep.subr.mxu0 0.0
    %5747 = vmatpush1.msra.mxu0 %v5719
    %5748 = vmatprep.subr.mxu0 0.0
    %5749 = vmatpush1.msra.mxu0 %v5718
    %5750 = vmatprep.subr.mxu0 0.0
    %5751 = vmatpush1.msra.mxu0 %v5717
    %5752 = vmatprep.subr.mxu0 0.0
    %5753 = vmatpush1.msra.mxu0 %v5716
    %5754 = vmatprep.subr.mxu0 0.0
    %5755 = vmatpush1.msra.mxu0 %v5715
    %5756 = vmatprep.subr.mxu0 0.0
    %5757 = vmatpush1.msra.mxu0 %v5714
    %5758 = vmatprep.subr.mxu0 0.0
    %5759 = vmatpush2.msra.mxu0 0.0
    %5760 = vmatprep.subr.mxu0 0.0
    %5761 = vmatpush2.msra.mxu0 0.0
    %5762 = vmatprep.subr.mxu0 0.0
    %5763 = vmatpush2.msra.mxu0 0.0
    %5764 = vmatprep.subr.mxu0 0.0
    %5765 = vmatpush2.msra.mxu0 0.0
    %5766 = vmatprep.subr.mxu0 0.0
    %5767 = vmatpush2.msra.mxu0 0.0
    %5768 = vmatprep.subr.mxu0 0.0
    %5769 = vmatpush2.msra.mxu0 0.0
    %5770 = vmatprep.subr.mxu0 0.0
    %5771 = vmatpush2.msra.mxu0 0.0
    %5772 = vmatprep.subr.mxu0 0.0
    %5773 = vmatpush2.msra.mxu0 0.0
    %5774 = vmatprep.subr.mxu0 0.0
    %5775 = vmatpush2.msra.mxu0 0.0
    %5776 = vmatprep.subr.mxu0 0.0
    %5777 = vmatpush2.msra.mxu0 0.0
    %5778 = vmatprep.subr.mxu0 0.0
    %5779 = vmatpush2.msra.mxu0 0.0
    %5780 = vmatprep.subr.mxu0 0.0
    %5781 = vmatpush2.msra.mxu0 0.0
    %5782 = vmatprep.subr.mxu0 0.0
    %5783 = vmatpush2.msra.mxu0 0.0
    %5784 = vmatprep.subr.mxu0 0.0
    %5785 = vmatpush2.msra.mxu0 0.0
    %5786 = vmatprep.subr.mxu0 0.0
    %5787 = vmatpush2.msra.mxu0 0.0
    %5788 = vmatprep.subr.mxu0 0.0
    %5789 = vmatpush2.msra.mxu0 0.0
    %5790 = vmatprep.mubr.f32.mxu0 0.0
    %5791 = vmatmul.mubr.f32.gmra.mxu0 %v5724
    %v5792 = vpop.f32.mrf.mxu0
    %v5793 = vadd.f32 0.0, %v5792
    %v5794 = vpop.f32.mrf.mxu0
    %5795 = vdwg.mxu0
    %v5797 = vsel %vm5722, %v5662, 0
    %5799 = vmatprep.subr.mxu0 0.0
    %5800 = vmatpush1.msra.mxu0 0.0
    %5801 = vmatprep.subr.mxu0 0.0
    %5802 = vmatpush1.msra.mxu0 0.0
    %5803 = vmatprep.subr.mxu0 0.0
    %5804 = vmatpush1.msra.mxu0 0.0
    %5805 = vmatprep.subr.mxu0 0.0
    %5806 = vmatpush1.msra.mxu0 0.0
    %5807 = vmatprep.subr.mxu0 0.0
    %5808 = vmatpush1.msra.mxu0 0.0
    %5809 = vmatprep.subr.mxu0 0.0
    %5810 = vmatpush1.msra.mxu0 0.0
    %5811 = vmatprep.subr.mxu0 0.0
    %5812 = vmatpush1.msra.mxu0 0.0
    %5813 = vmatprep.subr.mxu0 0.0
    %5814 = vmatpush1.msra.mxu0 0.0
    %5815 = vmatprep.subr.mxu0 0.0
    %5816 = vmatpush1.msra.mxu0 %v5712
    %5817 = vmatprep.subr.mxu0 0.0
    %5818 = vmatpush1.msra.mxu0 %v5711
    %5819 = vmatprep.subr.mxu0 0.0
    %5820 = vmatpush1.msra.mxu0 %v5710
    %5821 = vmatprep.subr.mxu0 0.0
    %5822 = vmatpush1.msra.mxu0 %v5709
    %5823 = vmatprep.subr.mxu0 0.0
    %5824 = vmatpush1.msra.mxu0 %v5708
    %5825 = vmatprep.subr.mxu0 0.0
    %5826 = vmatpush1.msra.mxu0 %v5707
    %5827 = vmatprep.subr.mxu0 0.0
    %5828 = vmatpush1.msra.mxu0 %v5706
    %5829 = vmatprep.subr.mxu0 0.0
    %5830 = vmatpush1.msra.mxu0 %v5705
    %5831 = vmatprep.subr.mxu0 0.0
    %5832 = vmatpush2.msra.mxu0 0.0
    %5833 = vmatprep.subr.mxu0 0.0
    %5834 = vmatpush2.msra.mxu0 0.0
    %5835 = vmatprep.subr.mxu0 0.0
    %5836 = vmatpush2.msra.mxu0 0.0
    %5837 = vmatprep.subr.mxu0 0.0
    %5838 = vmatpush2.msra.mxu0 0.0
    %5839 = vmatprep.subr.mxu0 0.0
    %5840 = vmatpush2.msra.mxu0 0.0
    %5841 = vmatprep.subr.mxu0 0.0
    %5842 = vmatpush2.msra.mxu0 0.0
    %5843 = vmatprep.subr.mxu0 0.0
    %5844 = vmatpush2.msra.mxu0 0.0
    %5845 = vmatprep.subr.mxu0 0.0
    %5846 = vmatpush2.msra.mxu0 0.0
    %5847 = vmatprep.subr.mxu0 0.0
    %5848 = vmatpush2.msra.mxu0 0.0
    %5849 = vmatprep.subr.mxu0 0.0
    %5850 = vmatpush2.msra.mxu0 0.0
    %5851 = vmatprep.subr.mxu0 0.0
    %5852 = vmatpush2.msra.mxu0 0.0
    %5853 = vmatprep.subr.mxu0 0.0
    %5854 = vmatpush2.msra.mxu0 0.0
    %5855 = vmatprep.subr.mxu0 0.0
    %5856 = vmatpush2.msra.mxu0 0.0
    %5857 = vmatprep.subr.mxu0 0.0
    %5858 = vmatpush2.msra.mxu0 0.0
    %5859 = vmatprep.subr.mxu0 0.0
    %5860 = vmatpush2.msra.mxu0 0.0
    %5861 = vmatprep.subr.mxu0 0.0
    %5862 = vmatpush2.msra.mxu0 0.0
    %5863 = vmatprep.mubr.f32.mxu0 0.0
    %5864 = vmatmul.mubr.f32.gmra.mxu0 %v5797
    %v5865 = vpop.f32.mrf.mxu0
    %v5866 = vadd.f32 %v5793, %v5865
    %v5867 = vpop.f32.mrf.mxu0
    %5868 = vdwg.mxu0
    %s5869 = scalar_lea.vmem [#allocation13], 128
    %v5870 = vld [vmem:[%s5869] sm:$0xff]
    %v5871 = vld [vmem:[%s5869 + $0x8] sm:$0xff]
    %v5872 = vld [vmem:[%s5869 + $0x10] sm:$0xff]
    %v5873 = vld [vmem:[%s5869 + $0x18] sm:$0xff]
    %v5874 = vld [vmem:[%s5869 + $0x20] sm:$0xff]
    %v5875 = vld [vmem:[%s5869 + $0x28] sm:$0xff]
    %v5876 = vld [vmem:[%s5869 + $0x30] sm:$0xff]
    %v5877 = vld [vmem:[%s5869 + $0x38] sm:$0xff]
    %v5879 = vsel %vm5722, %v5672, 0
    %5881 = vmatprep.subr.mxu0 0.0
    %5882 = vmatpush1.msra.mxu0 0.0
    %5883 = vmatprep.subr.mxu0 0.0
    %5884 = vmatpush1.msra.mxu0 0.0
    %5885 = vmatprep.subr.mxu0 0.0
    %5886 = vmatpush1.msra.mxu0 0.0
    %5887 = vmatprep.subr.mxu0 0.0
    %5888 = vmatpush1.msra.mxu0 0.0
    %5889 = vmatprep.subr.mxu0 0.0
    %5890 = vmatpush1.msra.mxu0 0.0
    %5891 = vmatprep.subr.mxu0 0.0
    %5892 = vmatpush1.msra.mxu0 0.0
    %5893 = vmatprep.subr.mxu0 0.0
    %5894 = vmatpush1.msra.mxu0 0.0
    %5895 = vmatprep.subr.mxu0 0.0
    %5896 = vmatpush1.msra.mxu0 0.0
    %5897 = vmatprep.subr.mxu0 0.0
    %5898 = vmatpush1.msra.mxu0 %v5877
    %5899 = vmatprep.subr.mxu0 0.0
    %5900 = vmatpush1.msra.mxu0 %v5876
    %5901 = vmatprep.subr.mxu0 0.0
    %5902 = vmatpush1.msra.mxu0 %v5875
    %5903 = vmatprep.subr.mxu0 0.0
    %5904 = vmatpush1.msra.mxu0 %v5874
    %5905 = vmatprep.subr.mxu0 0.0
    %5906 = vmatpush1.msra.mxu0 %v5873
    %5907 = vmatprep.subr.mxu0 0.0
    %5908 = vmatpush1.msra.mxu0 %v5872
    %5909 = vmatprep.subr.mxu0 0.0
    %5910 = vmatpush1.msra.mxu0 %v5871
    %5911 = vmatprep.subr.mxu0 0.0
    %5912 = vmatpush1.msra.mxu0 %v5870
    %5913 = vmatprep.subr.mxu0 0.0
    %5914 = vmatpush2.msra.mxu0 0.0
    %5915 = vmatprep.subr.mxu0 0.0
    %5916 = vmatpush2.msra.mxu0 0.0
    %5917 = vmatprep.subr.mxu0 0.0
    %5918 = vmatpush2.msra.mxu0 0.0
    %5919 = vmatprep.subr.mxu0 0.0
    %5920 = vmatpush2.msra.mxu0 0.0
    %5921 = vmatprep.subr.mxu0 0.0
    %5922 = vmatpush2.msra.mxu0 0.0
    %5923 = vmatprep.subr.mxu0 0.0
    %5924 = vmatpush2.msra.mxu0 0.0
    %5925 = vmatprep.subr.mxu0 0.0
    %5926 = vmatpush2.msra.mxu0 0.0
    %5927 = vmatprep.subr.mxu0 0.0
    %5928 = vmatpush2.msra.mxu0 0.0
    %5929 = vmatprep.subr.mxu0 0.0
    %5930 = vmatpush2.msra.mxu0 0.0
    %5931 = vmatprep.subr.mxu0 0.0
    %5932 = vmatpush2.msra.mxu0 0.0
    %5933 = vmatprep.subr.mxu0 0.0
    %5934 = vmatpush2.msra.mxu0 0.0
    %5935 = vmatprep.subr.mxu0 0.0
    %5936 = vmatpush2.msra.mxu0 0.0
    %5937 = vmatprep.subr.mxu0 0.0
    %5938 = vmatpush2.msra.mxu0 0.0
    %5939 = vmatprep.subr.mxu0 0.0
    %5940 = vmatpush2.msra.mxu0 0.0
    %5941 = vmatprep.subr.mxu0 0.0
    %5942 = vmatpush2.msra.mxu0 0.0
    %5943 = vmatprep.subr.mxu0 0.0
    %5944 = vmatpush2.msra.mxu0 0.0
    %5945 = vmatprep.mubr.f32.mxu0 0.0
    %5946 = vmatmul.mubr.f32.gmra.mxu0 %v5879
    %v5947 = vpop.f32.mrf.mxu0
    %v5948 = vadd.f32 0.0, %v5947
    %v5949 = vpop.f32.mrf.mxu0
    %5950 = vdwg.mxu0
    %v5951 = vadd.f32 %v5866, %v5948
    %s5952 = scalar_lea.vmem [#allocation13], 192
    %v5953 = vld [vmem:[%s5952] sm:$0xff]
    %v5954 = vld [vmem:[%s5952 + $0x8] sm:$0xff]
    %v5955 = vld [vmem:[%s5952 + $0x10] sm:$0xff]
    %v5956 = vld [vmem:[%s5952 + $0x18] sm:$0xff]
    %v5957 = vld [vmem:[%s5952 + $0x20] sm:$0xff]
    %v5958 = vld [vmem:[%s5952 + $0x28] sm:$0xff]
    %v5959 = vld [vmem:[%s5952 + $0x30] sm:$0xff]
    %v5960 = vld [vmem:[%s5952 + $0x38] sm:$0xff]
    %v5962 = vsel %vm5722, %v5677, 0
    %5964 = vmatprep.subr.mxu0 0.0
    %5965 = vmatpush1.msra.mxu0 0.0
    %5966 = vmatprep.subr.mxu0 0.0
    %5967 = vmatpush1.msra.mxu0 0.0
    %5968 = vmatprep.subr.mxu0 0.0
    %5969 = vmatpush1.msra.mxu0 0.0
    %5970 = vmatprep.subr.mxu0 0.0
    %5971 = vmatpush1.msra.mxu0 0.0
    %5972 = vmatprep.subr.mxu0 0.0
    %5973 = vmatpush1.msra.mxu0 0.0
    %5974 = vmatprep.subr.mxu0 0.0
    %5975 = vmatpush1.msra.mxu0 0.0
    %5976 = vmatprep.subr.mxu0 0.0
    %5977 = vmatpush1.msra.mxu0 0.0
    %5978 = vmatprep.subr.mxu0 0.0
    %5979 = vmatpush1.msra.mxu0 0.0
    %5980 = vmatprep.subr.mxu0 0.0
    %5981 = vmatpush1.msra.mxu0 %v5960
    %5982 = vmatprep.subr.mxu0 0.0
    %5983 = vmatpush1.msra.mxu0 %v5959
    %5984 = vmatprep.subr.mxu0 0.0
    %5985 = vmatpush1.msra.mxu0 %v5958
    %5986 = vmatprep.subr.mxu0 0.0
    %5987 = vmatpush1.msra.mxu0 %v5957
    %5988 = vmatprep.subr.mxu0 0.0
    %5989 = vmatpush1.msra.mxu0 %v5956
    %5990 = vmatprep.subr.mxu0 0.0
    %5991 = vmatpush1.msra.mxu0 %v5955
    %5992 = vmatprep.subr.mxu0 0.0
    %5993 = vmatpush1.msra.mxu0 %v5954
    %5994 = vmatprep.subr.mxu0 0.0
    %5995 = vmatpush1.msra.mxu0 %v5953
    %5996 = vmatprep.subr.mxu0 0.0
    %5997 = vmatpush2.msra.mxu0 0.0
    %5998 = vmatprep.subr.mxu0 0.0
    %5999 = vmatpush2.msra.mxu0 0.0
    %6000 = vmatprep.subr.mxu0 0.0
    %6001 = vmatpush2.msra.mxu0 0.0
    %6002 = vmatprep.subr.mxu0 0.0
    %6003 = vmatpush2.msra.mxu0 0.0
    %6004 = vmatprep.subr.mxu0 0.0
    %6005 = vmatpush2.msra.mxu0 0.0
    %6006 = vmatprep.subr.mxu0 0.0
    %6007 = vmatpush2.msra.mxu0 0.0
    %6008 = vmatprep.subr.mxu0 0.0
    %6009 = vmatpush2.msra.mxu0 0.0
    %6010 = vmatprep.subr.mxu0 0.0
    %6011 = vmatpush2.msra.mxu0 0.0
    %6012 = vmatprep.subr.mxu0 0.0
    %6013 = vmatpush2.msra.mxu0 0.0
    %6014 = vmatprep.subr.mxu0 0.0
    %6015 = vmatpush2.msra.mxu0 0.0
    %6016 = vmatprep.subr.mxu0 0.0
    %6017 = vmatpush2.msra.mxu0 0.0
    %6018 = vmatprep.subr.mxu0 0.0
    %6019 = vmatpush2.msra.mxu0 0.0
    %6020 = vmatprep.subr.mxu0 0.0
    %6021 = vmatpush2.msra.mxu0 0.0
    %6022 = vmatprep.subr.mxu0 0.0
    %6023 = vmatpush2.msra.mxu0 0.0
    %6024 = vmatprep.subr.mxu0 0.0
    %6025 = vmatpush2.msra.mxu0 0.0
    %6026 = vmatprep.subr.mxu0 0.0
    %6027 = vmatpush2.msra.mxu0 0.0
    %6028 = vmatprep.mubr.f32.mxu0 0.0
    %6029 = vmatmul.mubr.f32.gmra.mxu0 %v5962
    %v6030 = vpop.f32.mrf.mxu0
    %v6031 = vadd.f32 0.0, %v6030
    %v6032 = vpop.f32.mrf.mxu0
    %6033 = vdwg.mxu0
    %v6034 = vadd.f32 %v5951, %v6031
    %s6035 = scalar_lea.vmem [#allocation13], 256
    %v6036 = vld [vmem:[%s6035] sm:$0xff]
    %v6037 = vld [vmem:[%s6035 + $0x8] sm:$0xff]
    %v6038 = vld [vmem:[%s6035 + $0x10] sm:$0xff]
    %v6039 = vld [vmem:[%s6035 + $0x18] sm:$0xff]
    %v6040 = vld [vmem:[%s6035 + $0x20] sm:$0xff]
    %v6041 = vld [vmem:[%s6035 + $0x28] sm:$0xff]
    %v6042 = vld [vmem:[%s6035 + $0x30] sm:$0xff]
    %v6043 = vld [vmem:[%s6035 + $0x38] sm:$0xff]
    %v6045 = vsel %vm5722, %v5682, 0
    %6047 = vmatprep.subr.mxu0 0.0
    %6048 = vmatpush1.msra.mxu0 0.0
    %6049 = vmatprep.subr.mxu0 0.0
    %6050 = vmatpush1.msra.mxu0 0.0
    %6051 = vmatprep.subr.mxu0 0.0
    %6052 = vmatpush1.msra.mxu0 0.0
    %6053 = vmatprep.subr.mxu0 0.0
    %6054 = vmatpush1.msra.mxu0 0.0
    %6055 = vmatprep.subr.mxu0 0.0
    %6056 = vmatpush1.msra.mxu0 0.0
    %6057 = vmatprep.subr.mxu0 0.0
    %6058 = vmatpush1.msra.mxu0 0.0
    %6059 = vmatprep.subr.mxu0 0.0
    %6060 = vmatpush1.msra.mxu0 0.0
    %6061 = vmatprep.subr.mxu0 0.0
    %6062 = vmatpush1.msra.mxu0 0.0
    %6063 = vmatprep.subr.mxu0 0.0
    %6064 = vmatpush1.msra.mxu0 %v6043
    %6065 = vmatprep.subr.mxu0 0.0
    %6066 = vmatpush1.msra.mxu0 %v6042
    %6067 = vmatprep.subr.mxu0 0.0
    %6068 = vmatpush1.msra.mxu0 %v6041
    %6069 = vmatprep.subr.mxu0 0.0
    %6070 = vmatpush1.msra.mxu0 %v6040
    %6071 = vmatprep.subr.mxu0 0.0
    %6072 = vmatpush1.msra.mxu0 %v6039
    %6073 = vmatprep.subr.mxu0 0.0
    %6074 = vmatpush1.msra.mxu0 %v6038
    %6075 = vmatprep.subr.mxu0 0.0
    %6076 = vmatpush1.msra.mxu0 %v6037
    %6077 = vmatprep.subr.mxu0 0.0
    %6078 = vmatpush1.msra.mxu0 %v6036
    %6079 = vmatprep.subr.mxu0 0.0
    %6080 = vmatpush2.msra.mxu0 0.0
    %6081 = vmatprep.subr.mxu0 0.0
    %6082 = vmatpush2.msra.mxu0 0.0
    %6083 = vmatprep.subr.mxu0 0.0
    %6084 = vmatpush2.msra.mxu0 0.0
    %6085 = vmatprep.subr.mxu0 0.0
    %6086 = vmatpush2.msra.mxu0 0.0
    %6087 = vmatprep.subr.mxu0 0.0
    %6088 = vmatpush2.msra.mxu0 0.0
    %6089 = vmatprep.subr.mxu0 0.0
    %6090 = vmatpush2.msra.mxu0 0.0
    %6091 = vmatprep.subr.mxu0 0.0
    %6092 = vmatpush2.msra.mxu0 0.0
    %6093 = vmatprep.subr.mxu0 0.0
    %6094 = vmatpush2.msra.mxu0 0.0
    %6095 = vmatprep.subr.mxu0 0.0
    %6096 = vmatpush2.msra.mxu0 0.0
    %6097 = vmatprep.subr.mxu0 0.0
    %6098 = vmatpush2.msra.mxu0 0.0
    %6099 = vmatprep.subr.mxu0 0.0
    %6100 = vmatpush2.msra.mxu0 0.0
    %6101 = vmatprep.subr.mxu0 0.0
    %6102 = vmatpush2.msra.mxu0 0.0
    %6103 = vmatprep.subr.mxu0 0.0
    %6104 = vmatpush2.msra.mxu0 0.0
    %6105 = vmatprep.subr.mxu0 0.0
    %6106 = vmatpush2.msra.mxu0 0.0
    %6107 = vmatprep.subr.mxu0 0.0
    %6108 = vmatpush2.msra.mxu0 0.0
    %6109 = vmatprep.subr.mxu0 0.0
    %6110 = vmatpush2.msra.mxu0 0.0
    %6111 = vmatprep.mubr.f32.mxu0 0.0
    %6112 = vmatmul.mubr.f32.gmra.mxu0 %v6045
    %v6113 = vpop.f32.mrf.mxu0
    %v6114 = vadd.f32 0.0, %v6113
    %v6115 = vpop.f32.mrf.mxu0
    %6116 = vdwg.mxu0
    %v6117 = vadd.f32 %v6034, %v6114
    %s6118 = scalar_lea.vmem [#allocation13], 320
    %v6119 = vld [vmem:[%s6118] sm:$0xff]
    %v6120 = vld [vmem:[%s6118 + $0x8] sm:$0xff]
    %v6121 = vld [vmem:[%s6118 + $0x10] sm:$0xff]
    %v6122 = vld [vmem:[%s6118 + $0x18] sm:$0xff]
    %v6123 = vld [vmem:[%s6118 + $0x20] sm:$0xff]
    %v6124 = vld [vmem:[%s6118 + $0x28] sm:$0xff]
    %v6125 = vld [vmem:[%s6118 + $0x30] sm:$0xff]
    %v6126 = vld [vmem:[%s6118 + $0x38] sm:$0xff]
    %v6128 = vsel %vm5722, %v5687, 0
    %6130 = vmatprep.subr.mxu0 0.0
    %6131 = vmatpush1.msra.mxu0 0.0
    %6132 = vmatprep.subr.mxu0 0.0
    %6133 = vmatpush1.msra.mxu0 0.0
    %6134 = vmatprep.subr.mxu0 0.0
    %6135 = vmatpush1.msra.mxu0 0.0
    %6136 = vmatprep.subr.mxu0 0.0
    %6137 = vmatpush1.msra.mxu0 0.0
    %6138 = vmatprep.subr.mxu0 0.0
    %6139 = vmatpush1.msra.mxu0 0.0
    %6140 = vmatprep.subr.mxu0 0.0
    %6141 = vmatpush1.msra.mxu0 0.0
    %6142 = vmatprep.subr.mxu0 0.0
    %6143 = vmatpush1.msra.mxu0 0.0
    %6144 = vmatprep.subr.mxu0 0.0
    %6145 = vmatpush1.msra.mxu0 0.0
    %6146 = vmatprep.subr.mxu0 0.0
    %6147 = vmatpush1.msra.mxu0 %v6126
    %6148 = vmatprep.subr.mxu0 0.0
    %6149 = vmatpush1.msra.mxu0 %v6125
    %6150 = vmatprep.subr.mxu0 0.0
    %6151 = vmatpush1.msra.mxu0 %v6124
    %6152 = vmatprep.subr.mxu0 0.0
    %6153 = vmatpush1.msra.mxu0 %v6123
    %6154 = vmatprep.subr.mxu0 0.0
    %6155 = vmatpush1.msra.mxu0 %v6122
    %6156 = vmatprep.subr.mxu0 0.0
    %6157 = vmatpush1.msra.mxu0 %v6121
    %6158 = vmatprep.subr.mxu0 0.0
    %6159 = vmatpush1.msra.mxu0 %v6120
    %6160 = vmatprep.subr.mxu0 0.0
    %6161 = vmatpush1.msra.mxu0 %v6119
    %6162 = vmatprep.subr.mxu0 0.0
    %6163 = vmatpush2.msra.mxu0 0.0
    %6164 = vmatprep.subr.mxu0 0.0
    %6165 = vmatpush2.msra.mxu0 0.0
    %6166 = vmatprep.subr.mxu0 0.0
    %6167 = vmatpush2.msra.mxu0 0.0
    %6168 = vmatprep.subr.mxu0 0.0
    %6169 = vmatpush2.msra.mxu0 0.0
    %6170 = vmatprep.subr.mxu0 0.0
    %6171 = vmatpush2.msra.mxu0 0.0
    %6172 = vmatprep.subr.mxu0 0.0
    %6173 = vmatpush2.msra.mxu0 0.0
    %6174 = vmatprep.subr.mxu0 0.0
    %6175 = vmatpush2.msra.mxu0 0.0
    %6176 = vmatprep.subr.mxu0 0.0
    %6177 = vmatpush2.msra.mxu0 0.0
    %6178 = vmatprep.subr.mxu0 0.0
    %6179 = vmatpush2.msra.mxu0 0.0
    %6180 = vmatprep.subr.mxu0 0.0
    %6181 = vmatpush2.msra.mxu0 0.0
    %6182 = vmatprep.subr.mxu0 0.0
    %6183 = vmatpush2.msra.mxu0 0.0
    %6184 = vmatprep.subr.mxu0 0.0
    %6185 = vmatpush2.msra.mxu0 0.0
    %6186 = vmatprep.subr.mxu0 0.0
    %6187 = vmatpush2.msra.mxu0 0.0
    %6188 = vmatprep.subr.mxu0 0.0
    %6189 = vmatpush2.msra.mxu0 0.0
    %6190 = vmatprep.subr.mxu0 0.0
    %6191 = vmatpush2.msra.mxu0 0.0
    %6192 = vmatprep.subr.mxu0 0.0
    %6193 = vmatpush2.msra.mxu0 0.0
    %6194 = vmatprep.mubr.f32.mxu0 0.0
    %6195 = vmatmul.mubr.f32.gmra.mxu0 %v6128
    %v6196 = vpop.f32.mrf.mxu0
    %v6197 = vadd.f32 0.0, %v6196
    %v6198 = vpop.f32.mrf.mxu0
    %6199 = vdwg.mxu0
    %v6200 = vadd.f32 %v6117, %v6197
    %s6201 = scalar_lea.vmem [#allocation13], 384
    %v6202 = vld [vmem:[%s6201] sm:$0xff]
    %v6203 = vld [vmem:[%s6201 + $0x8] sm:$0xff]
    %v6204 = vld [vmem:[%s6201 + $0x10] sm:$0xff]
    %v6205 = vld [vmem:[%s6201 + $0x18] sm:$0xff]
    %v6206 = vld [vmem:[%s6201 + $0x20] sm:$0xff]
    %v6207 = vld [vmem:[%s6201 + $0x28] sm:$0xff]
    %v6208 = vld [vmem:[%s6201 + $0x30] sm:$0xff]
    %v6209 = vld [vmem:[%s6201 + $0x38] sm:$0xff]
    %v6211 = vsel %vm5722, %v5692, 0
    %6213 = vmatprep.subr.mxu0 0.0
    %6214 = vmatpush1.msra.mxu0 0.0
    %6215 = vmatprep.subr.mxu0 0.0
    %6216 = vmatpush1.msra.mxu0 0.0
    %6217 = vmatprep.subr.mxu0 0.0
    %6218 = vmatpush1.msra.mxu0 0.0
    %6219 = vmatprep.subr.mxu0 0.0
    %6220 = vmatpush1.msra.mxu0 0.0
    %6221 = vmatprep.subr.mxu0 0.0
    %6222 = vmatpush1.msra.mxu0 0.0
    %6223 = vmatprep.subr.mxu0 0.0
    %6224 = vmatpush1.msra.mxu0 0.0
    %6225 = vmatprep.subr.mxu0 0.0
    %6226 = vmatpush1.msra.mxu0 0.0
    %6227 = vmatprep.subr.mxu0 0.0
    %6228 = vmatpush1.msra.mxu0 0.0
    %6229 = vmatprep.subr.mxu0 0.0
    %6230 = vmatpush1.msra.mxu0 %v6209
    %6231 = vmatprep.subr.mxu0 0.0
    %6232 = vmatpush1.msra.mxu0 %v6208
    %6233 = vmatprep.subr.mxu0 0.0
    %6234 = vmatpush1.msra.mxu0 %v6207
    %6235 = vmatprep.subr.mxu0 0.0
    %6236 = vmatpush1.msra.mxu0 %v6206
    %6237 = vmatprep.subr.mxu0 0.0
    %6238 = vmatpush1.msra.mxu0 %v6205
    %6239 = vmatprep.subr.mxu0 0.0
    %6240 = vmatpush1.msra.mxu0 %v6204
    %6241 = vmatprep.subr.mxu0 0.0
    %6242 = vmatpush1.msra.mxu0 %v6203
    %6243 = vmatprep.subr.mxu0 0.0
    %6244 = vmatpush1.msra.mxu0 %v6202
    %6245 = vmatprep.subr.mxu0 0.0
    %6246 = vmatpush2.msra.mxu0 0.0
    %6247 = vmatprep.subr.mxu0 0.0
    %6248 = vmatpush2.msra.mxu0 0.0
    %6249 = vmatprep.subr.mxu0 0.0
    %6250 = vmatpush2.msra.mxu0 0.0
    %6251 = vmatprep.subr.mxu0 0.0
    %6252 = vmatpush2.msra.mxu0 0.0
    %6253 = vmatprep.subr.mxu0 0.0
    %6254 = vmatpush2.msra.mxu0 0.0
    %6255 = vmatprep.subr.mxu0 0.0
    %6256 = vmatpush2.msra.mxu0 0.0
    %6257 = vmatprep.subr.mxu0 0.0
    %6258 = vmatpush2.msra.mxu0 0.0
    %6259 = vmatprep.subr.mxu0 0.0
    %6260 = vmatpush2.msra.mxu0 0.0
    %6261 = vmatprep.subr.mxu0 0.0
    %6262 = vmatpush2.msra.mxu0 0.0
    %6263 = vmatprep.subr.mxu0 0.0
    %6264 = vmatpush2.msra.mxu0 0.0
    %6265 = vmatprep.subr.mxu0 0.0
    %6266 = vmatpush2.msra.mxu0 0.0
    %6267 = vmatprep.subr.mxu0 0.0
    %6268 = vmatpush2.msra.mxu0 0.0
    %6269 = vmatprep.subr.mxu0 0.0
    %6270 = vmatpush2.msra.mxu0 0.0
    %6271 = vmatprep.subr.mxu0 0.0
    %6272 = vmatpush2.msra.mxu0 0.0
    %6273 = vmatprep.subr.mxu0 0.0
    %6274 = vmatpush2.msra.mxu0 0.0
    %6275 = vmatprep.subr.mxu0 0.0
    %6276 = vmatpush2.msra.mxu0 0.0
    %6277 = vmatprep.mubr.f32.mxu0 0.0
    %6278 = vmatmul.mubr.f32.gmra.mxu0 %v6211
    %v6279 = vpop.f32.mrf.mxu0
    %v6280 = vadd.f32 0.0, %v6279
    %v6281 = vpop.f32.mrf.mxu0
    %6282 = vdwg.mxu0
    %v6283 = vadd.f32 %v6200, %v6280
    %s6284 = scalar_lea.vmem [#allocation13], 448
    %v6285 = vld [vmem:[%s6284] sm:$0xff]
    %v6286 = vld [vmem:[%s6284 + $0x8] sm:$0xff]
    %v6287 = vld [vmem:[%s6284 + $0x10] sm:$0xff]
    %v6288 = vld [vmem:[%s6284 + $0x18] sm:$0xff]
    %v6289 = vld [vmem:[%s6284 + $0x20] sm:$0xff]
    %v6290 = vld [vmem:[%s6284 + $0x28] sm:$0xff]
    %v6291 = vld [vmem:[%s6284 + $0x30] sm:$0xff]
    %v6292 = vld [vmem:[%s6284 + $0x38] sm:$0xff]
    %v6294 = vsel %vm5722, %v5697, 0
    %6296 = vmatprep.subr.mxu0 0.0
    %6297 = vmatpush1.msra.mxu0 0.0
    %6298 = vmatprep.subr.mxu0 0.0
    %6299 = vmatpush1.msra.mxu0 0.0
    %6300 = vmatprep.subr.mxu0 0.0
    %6301 = vmatpush1.msra.mxu0 0.0
    %6302 = vmatprep.subr.mxu0 0.0
    %6303 = vmatpush1.msra.mxu0 0.0
    %6304 = vmatprep.subr.mxu0 0.0
    %6305 = vmatpush1.msra.mxu0 0.0
    %6306 = vmatprep.subr.mxu0 0.0
    %6307 = vmatpush1.msra.mxu0 0.0
    %6308 = vmatprep.subr.mxu0 0.0
    %6309 = vmatpush1.msra.mxu0 0.0
    %6310 = vmatprep.subr.mxu0 0.0
    %6311 = vmatpush1.msra.mxu0 0.0
    %6312 = vmatprep.subr.mxu0 0.0
    %6313 = vmatpush1.msra.mxu0 %v6292
    %6314 = vmatprep.subr.mxu0 0.0
    %6315 = vmatpush1.msra.mxu0 %v6291
    %6316 = vmatprep.subr.mxu0 0.0
    %6317 = vmatpush1.msra.mxu0 %v6290
    %6318 = vmatprep.subr.mxu0 0.0
    %6319 = vmatpush1.msra.mxu0 %v6289
    %6320 = vmatprep.subr.mxu0 0.0
    %6321 = vmatpush1.msra.mxu0 %v6288
    %6322 = vmatprep.subr.mxu0 0.0
    %6323 = vmatpush1.msra.mxu0 %v6287
    %6324 = vmatprep.subr.mxu0 0.0
    %6325 = vmatpush1.msra.mxu0 %v6286
    %6326 = vmatprep.subr.mxu0 0.0
    %6327 = vmatpush1.msra.mxu0 %v6285
    %6328 = vmatprep.subr.mxu0 0.0
    %6329 = vmatpush2.msra.mxu0 0.0
    %6330 = vmatprep.subr.mxu0 0.0
    %6331 = vmatpush2.msra.mxu0 0.0
    %6332 = vmatprep.subr.mxu0 0.0
    %6333 = vmatpush2.msra.mxu0 0.0
    %6334 = vmatprep.subr.mxu0 0.0
    %6335 = vmatpush2.msra.mxu0 0.0
    %6336 = vmatprep.subr.mxu0 0.0
    %6337 = vmatpush2.msra.mxu0 0.0
    %6338 = vmatprep.subr.mxu0 0.0
    %6339 = vmatpush2.msra.mxu0 0.0
    %6340 = vmatprep.subr.mxu0 0.0
    %6341 = vmatpush2.msra.mxu0 0.0
    %6342 = vmatprep.subr.mxu0 0.0
    %6343 = vmatpush2.msra.mxu0 0.0
    %6344 = vmatprep.subr.mxu0 0.0
    %6345 = vmatpush2.msra.mxu0 0.0
    %6346 = vmatprep.subr.mxu0 0.0
    %6347 = vmatpush2.msra.mxu0 0.0
    %6348 = vmatprep.subr.mxu0 0.0
    %6349 = vmatpush2.msra.mxu0 0.0
    %6350 = vmatprep.subr.mxu0 0.0
    %6351 = vmatpush2.msra.mxu0 0.0
    %6352 = vmatprep.subr.mxu0 0.0
    %6353 = vmatpush2.msra.mxu0 0.0
    %6354 = vmatprep.subr.mxu0 0.0
    %6355 = vmatpush2.msra.mxu0 0.0
    %6356 = vmatprep.subr.mxu0 0.0
    %6357 = vmatpush2.msra.mxu0 0.0
    %6358 = vmatprep.subr.mxu0 0.0
    %6359 = vmatpush2.msra.mxu0 0.0
    %6360 = vmatprep.mubr.f32.mxu0 0.0
    %6361 = vmatmul.mubr.f32.gmra.mxu0 %v6294
    %v6362 = vpop.f32.mrf.mxu0
    %v6363 = vadd.f32 0.0, %v6362
    %v6364 = vpop.f32.mrf.mxu0
    %6365 = vdwg.mxu0
    %v6366 = vadd.f32 %v6283, %v6363
    %s6367 = scalar_lea.vmem [#allocation13], 512
    %v6368 = vld [vmem:[%s6367] sm:$0xff]
    %v6369 = vld [vmem:[%s6367 + $0x8] sm:$0xff]
    %v6370 = vld [vmem:[%s6367 + $0x10] sm:$0xff]
    %v6371 = vld [vmem:[%s6367 + $0x18] sm:$0xff]
    %v6372 = vld [vmem:[%s6367 + $0x20] sm:$0xff]
    %v6373 = vld [vmem:[%s6367 + $0x28] sm:$0xff]
    %v6374 = vld [vmem:[%s6367 + $0x30] sm:$0xff]
    %v6375 = vld [vmem:[%s6367 + $0x38] sm:$0xff]
    %v6377 = vsel %vm5722, %v5702, 0
    %6379 = vmatprep.subr.mxu0 0.0
    %6380 = vmatpush1.msra.mxu0 0.0
    %6381 = vmatprep.subr.mxu0 0.0
    %6382 = vmatpush1.msra.mxu0 0.0
    %6383 = vmatprep.subr.mxu0 0.0
    %6384 = vmatpush1.msra.mxu0 0.0
    %6385 = vmatprep.subr.mxu0 0.0
    %6386 = vmatpush1.msra.mxu0 0.0
    %6387 = vmatprep.subr.mxu0 0.0
    %6388 = vmatpush1.msra.mxu0 0.0
    %6389 = vmatprep.subr.mxu0 0.0
    %6390 = vmatpush1.msra.mxu0 0.0
    %6391 = vmatprep.subr.mxu0 0.0
    %6392 = vmatpush1.msra.mxu0 0.0
    %6393 = vmatprep.subr.mxu0 0.0
    %6394 = vmatpush1.msra.mxu0 0.0
    %6395 = vmatprep.subr.mxu0 0.0
    %6396 = vmatpush1.msra.mxu0 %v6375
    %6397 = vmatprep.subr.mxu0 0.0
    %6398 = vmatpush1.msra.mxu0 %v6374
    %6399 = vmatprep.subr.mxu0 0.0
    %6400 = vmatpush1.msra.mxu0 %v6373
    %6401 = vmatprep.subr.mxu0 0.0
    %6402 = vmatpush1.msra.mxu0 %v6372
    %6403 = vmatprep.subr.mxu0 0.0
    %6404 = vmatpush1.msra.mxu0 %v6371
    %6405 = vmatprep.subr.mxu0 0.0
    %6406 = vmatpush1.msra.mxu0 %v6370
    %6407 = vmatprep.subr.mxu0 0.0
    %6408 = vmatpush1.msra.mxu0 %v6369
    %6409 = vmatprep.subr.mxu0 0.0
    %6410 = vmatpush1.msra.mxu0 %v6368
    %6411 = vmatprep.subr.mxu0 0.0
    %6412 = vmatpush2.msra.mxu0 0.0
    %6413 = vmatprep.subr.mxu0 0.0
    %6414 = vmatpush2.msra.mxu0 0.0
    %6415 = vmatprep.subr.mxu0 0.0
    %6416 = vmatpush2.msra.mxu0 0.0
    %6417 = vmatprep.subr.mxu0 0.0
    %6418 = vmatpush2.msra.mxu0 0.0
    %6419 = vmatprep.subr.mxu0 0.0
    %6420 = vmatpush2.msra.mxu0 0.0
    %6421 = vmatprep.subr.mxu0 0.0
    %6422 = vmatpush2.msra.mxu0 0.0
    %6423 = vmatprep.subr.mxu0 0.0
    %6424 = vmatpush2.msra.mxu0 0.0
    %6425 = vmatprep.subr.mxu0 0.0
    %6426 = vmatpush2.msra.mxu0 0.0
    %6427 = vmatprep.subr.mxu0 0.0
    %6428 = vmatpush2.msra.mxu0 0.0
    %6429 = vmatprep.subr.mxu0 0.0
    %6430 = vmatpush2.msra.mxu0 0.0
    %6431 = vmatprep.subr.mxu0 0.0
    %6432 = vmatpush2.msra.mxu0 0.0
    %6433 = vmatprep.subr.mxu0 0.0
    %6434 = vmatpush2.msra.mxu0 0.0
    %6435 = vmatprep.subr.mxu0 0.0
    %6436 = vmatpush2.msra.mxu0 0.0
    %6437 = vmatprep.subr.mxu0 0.0
    %6438 = vmatpush2.msra.mxu0 0.0
    %6439 = vmatprep.subr.mxu0 0.0
    %6440 = vmatpush2.msra.mxu0 0.0
    %6441 = vmatprep.subr.mxu0 0.0
    %6442 = vmatpush2.msra.mxu0 0.0
    %6443 = vmatprep.mubr.f32.mxu0 0.0
    %6444 = vmatmul.mubr.f32.gmra.mxu0 %v6377
    %v6445 = vpop.f32.mrf.mxu0
    %v6446 = vadd.f32 0.0, %v6445
    %v6447 = vpop.f32.mrf.mxu0
    %6448 = vdwg.mxu0
    %v6449 = vadd.f32 %v6366, %v6446
    %v6450 = vld [vmem:[#allocation14] sm:$0x1]
    %v6452 = vlaneseq
    %v6453 = vshrl.u32 %v6452, 7
    %v6454 = vsub.s32 0, %v6453
    %v6455 = vrot.slane %v6450, %v6454
    %v6457 = vadd.f32 %v6449, %v6455
    %v6458 = vmax.f32 %v6457, 0.0
    %v6459 = vld [vmem:[#allocation16] sm:$0x3]
    %vm6460 = vcmask 64512
    %v6462 = vsel %vm6460, %v6459, 0
    %6464 = vmatprep.subr.mxu0 0.0
    %6465 = vmatpush1.msra.mxu0 0.0
    %6466 = vmatprep.subr.mxu0 0.0
    %6467 = vmatpush1.msra.mxu0 0.0
    %6468 = vmatprep.subr.mxu0 0.0
    %6469 = vmatpush1.msra.mxu0 0.0
    %6470 = vmatprep.subr.mxu0 0.0
    %6471 = vmatpush1.msra.mxu0 0.0
    %6472 = vmatprep.subr.mxu0 0.0
    %6473 = vmatpush1.msra.mxu0 0.0
    %6474 = vmatprep.subr.mxu0 0.0
    %6475 = vmatpush1.msra.mxu0 0.0
    %6476 = vmatprep.subr.mxu0 0.0
    %6477 = vmatpush1.msra.mxu0 0.0
    %6478 = vmatprep.subr.mxu0 0.0
    %6479 = vmatpush1.msra.mxu0 0.0
    %6480 = vmatprep.subr.mxu0 0.0
    %6481 = vmatpush1.msra.mxu0 0.0
    %6482 = vmatprep.subr.mxu0 0.0
    %6483 = vmatpush1.msra.mxu0 0.0
    %6484 = vmatprep.subr.mxu0 0.0
    %6485 = vmatpush1.msra.mxu0 0.0
    %6486 = vmatprep.subr.mxu0 0.0
    %6487 = vmatpush1.msra.mxu0 0.0
    %6488 = vmatprep.subr.mxu0 0.0
    %6489 = vmatpush1.msra.mxu0 0.0
    %6490 = vmatprep.subr.mxu0 0.0
    %6491 = vmatpush1.msra.mxu0 0.0
    %6492 = vmatprep.subr.mxu0 0.0
    %6493 = vmatpush1.msra.mxu0 0.0
    %6494 = vmatprep.subr.mxu0 0.0
    %6495 = vmatpush1.msra.mxu0 %v6458
    %6496 = vmatprep.subr.mxu0 0.0
    %6497 = vmatpush2.msra.mxu0 0.0
    %6498 = vmatprep.subr.mxu0 0.0
    %6499 = vmatpush2.msra.mxu0 0.0
    %6500 = vmatprep.subr.mxu0 0.0
    %6501 = vmatpush2.msra.mxu0 0.0
    %6502 = vmatprep.subr.mxu0 0.0
    %6503 = vmatpush2.msra.mxu0 0.0
    %6504 = vmatprep.subr.mxu0 0.0
    %6505 = vmatpush2.msra.mxu0 0.0
    %6506 = vmatprep.subr.mxu0 0.0
    %6507 = vmatpush2.msra.mxu0 0.0
    %6508 = vmatprep.subr.mxu0 0.0
    %6509 = vmatpush2.msra.mxu0 0.0
    %6510 = vmatprep.subr.mxu0 0.0
    %6511 = vmatpush2.msra.mxu0 0.0
    %6512 = vmatprep.subr.mxu0 0.0
    %6513 = vmatpush2.msra.mxu0 0.0
    %6514 = vmatprep.subr.mxu0 0.0
    %6515 = vmatpush2.msra.mxu0 0.0
    %6516 = vmatprep.subr.mxu0 0.0
    %6517 = vmatpush2.msra.mxu0 0.0
    %6518 = vmatprep.subr.mxu0 0.0
    %6519 = vmatpush2.msra.mxu0 0.0
    %6520 = vmatprep.subr.mxu0 0.0
    %6521 = vmatpush2.msra.mxu0 0.0
    %6522 = vmatprep.subr.mxu0 0.0
    %6523 = vmatpush2.msra.mxu0 0.0
    %6524 = vmatprep.subr.mxu0 0.0
    %6525 = vmatpush2.msra.mxu0 0.0
    %6526 = vmatprep.subr.mxu0 0.0
    %6527 = vmatpush2.msra.mxu0 0.0
    %6528 = vmatprep.mubr.f32.mxu0 0.0
    %6529 = vmatmul.mubr.f32.gmra.mxu0 %v6462
    %v6530 = vpop.f32.mrf.mxu0
    %v6531 = vadd.f32 0.0, %v6530
    %v6532 = vpop.f32.mrf.mxu0
    %6533 = vdwg.mxu0
    %v6534 = vld [vmem:[%s11] sm:$0xff]
    %v6535 = vld [vmem:[%s11 + $0x8] sm:$0xff]
    %v6536 = vld [vmem:[%s11 + $0x10] sm:$0xff]
    %v6537 = vld [vmem:[%s11 + $0x18] sm:$0xff]
    %v6538 = vld [vmem:[%s11 + $0x20] sm:$0xff]
    %v6539 = vld [vmem:[%s11 + $0x28] sm:$0xff]
    %v6540 = vld [vmem:[%s11 + $0x30] sm:$0xff]
    %v6541 = vld [vmem:[%s11 + $0x38] sm:$0xff]
    %v6542 = vld [vmem:[%s11 + $0x40] sm:$0xff]
    %v6543 = vld [vmem:[%s11 + $0x48] sm:$0xff]
    %v6544 = vld [vmem:[%s11 + $0x50] sm:$0xff]
    %v6545 = vld [vmem:[%s11 + $0x58] sm:$0xff]
    %v6546 = vld [vmem:[%s11 + $0x60] sm:$0xff]
    %v6547 = vld [vmem:[%s11 + $0x68] sm:$0xff]
    %v6548 = vld [vmem:[%s11 + $0x70] sm:$0xff]
    %v6549 = vld [vmem:[%s11 + $0x78] sm:$0xff]
    %s6550 = scalar_lea.vmem [#allocation16], 2
    %v6551 = vld [vmem:[%s6550] sm:$0x3]
    %v6553 = vsel %vm6460, %v6551, 0
    %6555 = vmatprep.subr.mxu0 0.0
    %6556 = vmatpush1.msra.mxu0 0.0
    %6557 = vmatprep.subr.mxu0 0.0
    %6558 = vmatpush1.msra.mxu0 0.0
    %6559 = vmatprep.subr.mxu0 0.0
    %6560 = vmatpush1.msra.mxu0 0.0
    %6561 = vmatprep.subr.mxu0 0.0
    %6562 = vmatpush1.msra.mxu0 0.0
    %6563 = vmatprep.subr.mxu0 0.0
    %6564 = vmatpush1.msra.mxu0 0.0
    %6565 = vmatprep.subr.mxu0 0.0
    %6566 = vmatpush1.msra.mxu0 0.0
    %6567 = vmatprep.subr.mxu0 0.0
    %6568 = vmatpush1.msra.mxu0 0.0
    %6569 = vmatprep.subr.mxu0 0.0
    %6570 = vmatpush1.msra.mxu0 0.0
    %6571 = vmatprep.subr.mxu0 0.0
    %6572 = vmatpush1.msra.mxu0 0.0
    %6573 = vmatprep.subr.mxu0 0.0
    %6574 = vmatpush1.msra.mxu0 0.0
    %6575 = vmatprep.subr.mxu0 0.0
    %6576 = vmatpush1.msra.mxu0 0.0
    %6577 = vmatprep.subr.mxu0 0.0
    %6578 = vmatpush1.msra.mxu0 0.0
    %6579 = vmatprep.subr.mxu0 0.0
    %6580 = vmatpush1.msra.mxu0 0.0
    %6581 = vmatprep.subr.mxu0 0.0
    %6582 = vmatpush1.msra.mxu0 0.0
    %6583 = vmatprep.subr.mxu0 0.0
    %6584 = vmatpush1.msra.mxu0 0.0
    %6585 = vmatprep.subr.mxu0 0.0
    %6586 = vmatpush1.msra.mxu0 %v6458
    %6587 = vmatprep.subr.mxu0 0.0
    %6588 = vmatpush2.msra.mxu0 0.0
    %6589 = vmatprep.subr.mxu0 0.0
    %6590 = vmatpush2.msra.mxu0 0.0
    %6591 = vmatprep.subr.mxu0 0.0
    %6592 = vmatpush2.msra.mxu0 0.0
    %6593 = vmatprep.subr.mxu0 0.0
    %6594 = vmatpush2.msra.mxu0 0.0
    %6595 = vmatprep.subr.mxu0 0.0
    %6596 = vmatpush2.msra.mxu0 0.0
    %6597 = vmatprep.subr.mxu0 0.0
    %6598 = vmatpush2.msra.mxu0 0.0
    %6599 = vmatprep.subr.mxu0 0.0
    %6600 = vmatpush2.msra.mxu0 0.0
    %6601 = vmatprep.subr.mxu0 0.0
    %6602 = vmatpush2.msra.mxu0 0.0
    %6603 = vmatprep.subr.mxu0 0.0
    %6604 = vmatpush2.msra.mxu0 0.0
    %6605 = vmatprep.subr.mxu0 0.0
    %6606 = vmatpush2.msra.mxu0 0.0
    %6607 = vmatprep.subr.mxu0 0.0
    %6608 = vmatpush2.msra.mxu0 0.0
    %6609 = vmatprep.subr.mxu0 0.0
    %6610 = vmatpush2.msra.mxu0 0.0
    %6611 = vmatprep.subr.mxu0 0.0
    %6612 = vmatpush2.msra.mxu0 0.0
    %6613 = vmatprep.subr.mxu0 0.0
    %6614 = vmatpush2.msra.mxu0 0.0
    %6615 = vmatprep.subr.mxu0 0.0
    %6616 = vmatpush2.msra.mxu0 0.0
    %6617 = vmatprep.subr.mxu0 0.0
    %6618 = vmatpush2.msra.mxu0 0.0
    %6619 = vmatprep.mubr.f32.mxu0 0.0
    %6620 = vmatmul.mubr.f32.gmra.mxu0 %v6553
    %v6621 = vpop.f32.mrf.mxu0
    %v6622 = vadd.f32 0.0, %v6621
    %v6623 = vpop.f32.mrf.mxu0
    %6624 = vdwg.mxu0
    %s6625 = scalar_lea.vmem %s11, 128
    %v6626 = vld [vmem:[%s6625] sm:$0xff]
    %v6627 = vld [vmem:[%s6625 + $0x8] sm:$0xff]
    %v6628 = vld [vmem:[%s6625 + $0x10] sm:$0xff]
    %v6629 = vld [vmem:[%s6625 + $0x18] sm:$0xff]
    %v6630 = vld [vmem:[%s6625 + $0x20] sm:$0xff]
    %v6631 = vld [vmem:[%s6625 + $0x28] sm:$0xff]
    %v6632 = vld [vmem:[%s6625 + $0x30] sm:$0xff]
    %v6633 = vld [vmem:[%s6625 + $0x38] sm:$0xff]
    %v6634 = vld [vmem:[%s6625 + $0x40] sm:$0xff]
    %v6635 = vld [vmem:[%s6625 + $0x48] sm:$0xff]
    %v6636 = vld [vmem:[%s6625 + $0x50] sm:$0xff]
    %v6637 = vld [vmem:[%s6625 + $0x58] sm:$0xff]
    %v6638 = vld [vmem:[%s6625 + $0x60] sm:$0xff]
    %v6639 = vld [vmem:[%s6625 + $0x68] sm:$0xff]
    %v6640 = vld [vmem:[%s6625 + $0x70] sm:$0xff]
    %v6641 = vld [vmem:[%s6625 + $0x78] sm:$0xff]
    %6642 = vmatprep.subr.mxu0 0.0
    %6643 = vmatpush1.msra.mxu0 %v6641
    %6644 = vmatprep.subr.mxu0 0.0
    %6645 = vmatpush1.msra.mxu0 %v6640
    %6646 = vmatprep.subr.mxu0 0.0
    %6647 = vmatpush1.msra.mxu0 %v6639
    %6648 = vmatprep.subr.mxu0 0.0
    %6649 = vmatpush1.msra.mxu0 %v6638
    %6650 = vmatprep.subr.mxu0 0.0
    %6651 = vmatpush1.msra.mxu0 %v6637
    %6652 = vmatprep.subr.mxu0 0.0
    %6653 = vmatpush1.msra.mxu0 %v6636
    %6654 = vmatprep.subr.mxu0 0.0
    %6655 = vmatpush1.msra.mxu0 %v6635
    %6656 = vmatprep.subr.mxu0 0.0
    %6657 = vmatpush1.msra.mxu0 %v6634
    %6658 = vmatprep.subr.mxu0 0.0
    %6659 = vmatpush1.msra.mxu0 %v6633
    %6660 = vmatprep.subr.mxu0 0.0
    %6661 = vmatpush1.msra.mxu0 %v6632
    %6662 = vmatprep.subr.mxu0 0.0
    %6663 = vmatpush1.msra.mxu0 %v6631
    %6664 = vmatprep.subr.mxu0 0.0
    %6665 = vmatpush1.msra.mxu0 %v6630
    %6666 = vmatprep.subr.mxu0 0.0
    %6667 = vmatpush1.msra.mxu0 %v6629
    %6668 = vmatprep.subr.mxu0 0.0
    %6669 = vmatpush1.msra.mxu0 %v6628
    %6670 = vmatprep.subr.mxu0 0.0
    %6671 = vmatpush1.msra.mxu0 %v6627
    %6672 = vmatprep.subr.mxu0 0.0
    %6673 = vmatpush1.msra.mxu0 %v6626
    %6674 = vmatprep.subr.mxu0 0.0
    %6675 = vmatpush2.msra.mxu0 0.0
    %6676 = vmatprep.subr.mxu0 0.0
    %6677 = vmatpush2.msra.mxu0 0.0
    %6678 = vmatprep.subr.mxu0 0.0
    %6679 = vmatpush2.msra.mxu0 0.0
    %6680 = vmatprep.subr.mxu0 0.0
    %6681 = vmatpush2.msra.mxu0 0.0
    %6682 = vmatprep.subr.mxu0 0.0
    %6683 = vmatpush2.msra.mxu0 0.0
    %6684 = vmatprep.subr.mxu0 0.0
    %6685 = vmatpush2.msra.mxu0 0.0
    %6686 = vmatprep.subr.mxu0 0.0
    %6687 = vmatpush2.msra.mxu0 0.0
    %6688 = vmatprep.subr.mxu0 0.0
    %6689 = vmatpush2.msra.mxu0 0.0
    %6690 = vmatprep.subr.mxu0 0.0
    %6691 = vmatpush2.msra.mxu0 0.0
    %6692 = vmatprep.subr.mxu0 0.0
    %6693 = vmatpush2.msra.mxu0 0.0
    %6694 = vmatprep.subr.mxu0 0.0
    %6695 = vmatpush2.msra.mxu0 0.0
    %6696 = vmatprep.subr.mxu0 0.0
    %6697 = vmatpush2.msra.mxu0 0.0
    %6698 = vmatprep.subr.mxu0 0.0
    %6699 = vmatpush2.msra.mxu0 0.0
    %6700 = vmatprep.subr.mxu0 0.0
    %6701 = vmatpush2.msra.mxu0 0.0
    %6702 = vmatprep.subr.mxu0 0.0
    %6703 = vmatpush2.msra.mxu0 0.0
    %6704 = vmatprep.subr.mxu0 0.0
    %6705 = vmatpush2.msra.mxu0 0.0
    %6706 = vmatprep.mubr.f32.mxu0 0.0
    %6707 = vmatmul.mubr.f32.gmra.mxu0 %v6622
    %v6708 = vpop.f32.mrf.mxu0
    %v6709 = vadd.f32 0.0, %v6708
    %v6710 = vpop.f32.mrf.mxu0
    %6711 = vdwg.mxu0
    %6712 = vmatprep.subr.mxu0 0.0
    %6713 = vmatpush1.msra.mxu0 %v6549
    %6714 = vmatprep.subr.mxu0 0.0
    %6715 = vmatpush1.msra.mxu0 %v6548
    %6716 = vmatprep.subr.mxu0 0.0
    %6717 = vmatpush1.msra.mxu0 %v6547
    %6718 = vmatprep.subr.mxu0 0.0
    %6719 = vmatpush1.msra.mxu0 %v6546
    %6720 = vmatprep.subr.mxu0 0.0
    %6721 = vmatpush1.msra.mxu0 %v6545
    %6722 = vmatprep.subr.mxu0 0.0
    %6723 = vmatpush1.msra.mxu0 %v6544
    %6724 = vmatprep.subr.mxu0 0.0
    %6725 = vmatpush1.msra.mxu0 %v6543
    %6726 = vmatprep.subr.mxu0 0.0
    %6727 = vmatpush1.msra.mxu0 %v6542
    %6728 = vmatprep.subr.mxu0 0.0
    %6729 = vmatpush1.msra.mxu0 %v6541
    %6730 = vmatprep.subr.mxu0 0.0
    %6731 = vmatpush1.msra.mxu0 %v6540
    %6732 = vmatprep.subr.mxu0 0.0
    %6733 = vmatpush1.msra.mxu0 %v6539
    %6734 = vmatprep.subr.mxu0 0.0
    %6735 = vmatpush1.msra.mxu0 %v6538
    %6736 = vmatprep.subr.mxu0 0.0
    %6737 = vmatpush1.msra.mxu0 %v6537
    %6738 = vmatprep.subr.mxu0 0.0
    %6739 = vmatpush1.msra.mxu0 %v6536
    %6740 = vmatprep.subr.mxu0 0.0
    %6741 = vmatpush1.msra.mxu0 %v6535
    %6742 = vmatprep.subr.mxu0 0.0
    %6743 = vmatpush1.msra.mxu0 %v6534
    %6744 = vmatprep.subr.mxu0 0.0
    %6745 = vmatpush2.msra.mxu0 0.0
    %6746 = vmatprep.subr.mxu0 0.0
    %6747 = vmatpush2.msra.mxu0 0.0
    %6748 = vmatprep.subr.mxu0 0.0
    %6749 = vmatpush2.msra.mxu0 0.0
    %6750 = vmatprep.subr.mxu0 0.0
    %6751 = vmatpush2.msra.mxu0 0.0
    %6752 = vmatprep.subr.mxu0 0.0
    %6753 = vmatpush2.msra.mxu0 0.0
    %6754 = vmatprep.subr.mxu0 0.0
    %6755 = vmatpush2.msra.mxu0 0.0
    %6756 = vmatprep.subr.mxu0 0.0
    %6757 = vmatpush2.msra.mxu0 0.0
    %6758 = vmatprep.subr.mxu0 0.0
    %6759 = vmatpush2.msra.mxu0 0.0
    %6760 = vmatprep.subr.mxu0 0.0
    %6761 = vmatpush2.msra.mxu0 0.0
    %6762 = vmatprep.subr.mxu0 0.0
    %6763 = vmatpush2.msra.mxu0 0.0
    %6764 = vmatprep.subr.mxu0 0.0
    %6765 = vmatpush2.msra.mxu0 0.0
    %6766 = vmatprep.subr.mxu0 0.0
    %6767 = vmatpush2.msra.mxu0 0.0
    %6768 = vmatprep.subr.mxu0 0.0
    %6769 = vmatpush2.msra.mxu0 0.0
    %6770 = vmatprep.subr.mxu0 0.0
    %6771 = vmatpush2.msra.mxu0 0.0
    %6772 = vmatprep.subr.mxu0 0.0
    %6773 = vmatpush2.msra.mxu0 0.0
    %6774 = vmatprep.subr.mxu0 0.0
    %6775 = vmatpush2.msra.mxu0 0.0
    %6776 = vmatprep.mubr.f32.mxu0 0.0
    %6777 = vmatmul.mubr.f32.gmra.mxu0 %v6531
    %v6778 = vpop.f32.mrf.mxu0
    %v6779 = vadd.f32 %v6709, %v6778
    %v6780 = vpop.f32.mrf.mxu0
    %6781 = vdwg.mxu0
    %s6782 = scalar_lea.vmem [#allocation16], 4
    %v6783 = vld [vmem:[%s6782] sm:$0x3]
    %v6785 = vsel %vm6460, %v6783, 0
    %6787 = vmatprep.subr.mxu0 0.0
    %6788 = vmatpush1.msra.mxu0 0.0
    %6789 = vmatprep.subr.mxu0 0.0
    %6790 = vmatpush1.msra.mxu0 0.0
    %6791 = vmatprep.subr.mxu0 0.0
    %6792 = vmatpush1.msra.mxu0 0.0
    %6793 = vmatprep.subr.mxu0 0.0
    %6794 = vmatpush1.msra.mxu0 0.0
    %6795 = vmatprep.subr.mxu0 0.0
    %6796 = vmatpush1.msra.mxu0 0.0
    %6797 = vmatprep.subr.mxu0 0.0
    %6798 = vmatpush1.msra.mxu0 0.0
    %6799 = vmatprep.subr.mxu0 0.0
    %6800 = vmatpush1.msra.mxu0 0.0
    %6801 = vmatprep.subr.mxu0 0.0
    %6802 = vmatpush1.msra.mxu0 0.0
    %6803 = vmatprep.subr.mxu0 0.0
    %6804 = vmatpush1.msra.mxu0 0.0
    %6805 = vmatprep.subr.mxu0 0.0
    %6806 = vmatpush1.msra.mxu0 0.0
    %6807 = vmatprep.subr.mxu0 0.0
    %6808 = vmatpush1.msra.mxu0 0.0
    %6809 = vmatprep.subr.mxu0 0.0
    %6810 = vmatpush1.msra.mxu0 0.0
    %6811 = vmatprep.subr.mxu0 0.0
    %6812 = vmatpush1.msra.mxu0 0.0
    %6813 = vmatprep.subr.mxu0 0.0
    %6814 = vmatpush1.msra.mxu0 0.0
    %6815 = vmatprep.subr.mxu0 0.0
    %6816 = vmatpush1.msra.mxu0 0.0
    %6817 = vmatprep.subr.mxu0 0.0
    %6818 = vmatpush1.msra.mxu0 %v6458
    %6819 = vmatprep.subr.mxu0 0.0
    %6820 = vmatpush2.msra.mxu0 0.0
    %6821 = vmatprep.subr.mxu0 0.0
    %6822 = vmatpush2.msra.mxu0 0.0
    %6823 = vmatprep.subr.mxu0 0.0
    %6824 = vmatpush2.msra.mxu0 0.0
    %6825 = vmatprep.subr.mxu0 0.0
    %6826 = vmatpush2.msra.mxu0 0.0
    %6827 = vmatprep.subr.mxu0 0.0
    %6828 = vmatpush2.msra.mxu0 0.0
    %6829 = vmatprep.subr.mxu0 0.0
    %6830 = vmatpush2.msra.mxu0 0.0
    %6831 = vmatprep.subr.mxu0 0.0
    %6832 = vmatpush2.msra.mxu0 0.0
    %6833 = vmatprep.subr.mxu0 0.0
    %6834 = vmatpush2.msra.mxu0 0.0
    %6835 = vmatprep.subr.mxu0 0.0
    %6836 = vmatpush2.msra.mxu0 0.0
    %6837 = vmatprep.subr.mxu0 0.0
    %6838 = vmatpush2.msra.mxu0 0.0
    %6839 = vmatprep.subr.mxu0 0.0
    %6840 = vmatpush2.msra.mxu0 0.0
    %6841 = vmatprep.subr.mxu0 0.0
    %6842 = vmatpush2.msra.mxu0 0.0
    %6843 = vmatprep.subr.mxu0 0.0
    %6844 = vmatpush2.msra.mxu0 0.0
    %6845 = vmatprep.subr.mxu0 0.0
    %6846 = vmatpush2.msra.mxu0 0.0
    %6847 = vmatprep.subr.mxu0 0.0
    %6848 = vmatpush2.msra.mxu0 0.0
    %6849 = vmatprep.subr.mxu0 0.0
    %6850 = vmatpush2.msra.mxu0 0.0
    %6851 = vmatprep.mubr.f32.mxu0 0.0
    %6852 = vmatmul.mubr.f32.gmra.mxu0 %v6785
    %v6853 = vpop.f32.mrf.mxu0
    %v6854 = vadd.f32 0.0, %v6853
    %v6855 = vpop.f32.mrf.mxu0
    %6856 = vdwg.mxu0
    %s6857 = scalar_lea.vmem %s11, 256
    %v6858 = vld [vmem:[%s6857] sm:$0xff]
    %v6859 = vld [vmem:[%s6857 + $0x8] sm:$0xff]
    %v6860 = vld [vmem:[%s6857 + $0x10] sm:$0xff]
    %v6861 = vld [vmem:[%s6857 + $0x18] sm:$0xff]
    %v6862 = vld [vmem:[%s6857 + $0x20] sm:$0xff]
    %v6863 = vld [vmem:[%s6857 + $0x28] sm:$0xff]
    %v6864 = vld [vmem:[%s6857 + $0x30] sm:$0xff]
    %v6865 = vld [vmem:[%s6857 + $0x38] sm:$0xff]
    %v6866 = vld [vmem:[%s6857 + $0x40] sm:$0xff]
    %v6867 = vld [vmem:[%s6857 + $0x48] sm:$0xff]
    %v6868 = vld [vmem:[%s6857 + $0x50] sm:$0xff]
    %v6869 = vld [vmem:[%s6857 + $0x58] sm:$0xff]
    %v6870 = vld [vmem:[%s6857 + $0x60] sm:$0xff]
    %v6871 = vld [vmem:[%s6857 + $0x68] sm:$0xff]
    %v6872 = vld [vmem:[%s6857 + $0x70] sm:$0xff]
    %v6873 = vld [vmem:[%s6857 + $0x78] sm:$0xff]
    %6874 = vmatprep.subr.mxu0 0.0
    %6875 = vmatpush1.msra.mxu0 %v6873
    %6876 = vmatprep.subr.mxu0 0.0
    %6877 = vmatpush1.msra.mxu0 %v6872
    %6878 = vmatprep.subr.mxu0 0.0
    %6879 = vmatpush1.msra.mxu0 %v6871
    %6880 = vmatprep.subr.mxu0 0.0
    %6881 = vmatpush1.msra.mxu0 %v6870
    %6882 = vmatprep.subr.mxu0 0.0
    %6883 = vmatpush1.msra.mxu0 %v6869
    %6884 = vmatprep.subr.mxu0 0.0
    %6885 = vmatpush1.msra.mxu0 %v6868
    %6886 = vmatprep.subr.mxu0 0.0
    %6887 = vmatpush1.msra.mxu0 %v6867
    %6888 = vmatprep.subr.mxu0 0.0
    %6889 = vmatpush1.msra.mxu0 %v6866
    %6890 = vmatprep.subr.mxu0 0.0
    %6891 = vmatpush1.msra.mxu0 %v6865
    %6892 = vmatprep.subr.mxu0 0.0
    %6893 = vmatpush1.msra.mxu0 %v6864
    %6894 = vmatprep.subr.mxu0 0.0
    %6895 = vmatpush1.msra.mxu0 %v6863
    %6896 = vmatprep.subr.mxu0 0.0
    %6897 = vmatpush1.msra.mxu0 %v6862
    %6898 = vmatprep.subr.mxu0 0.0
    %6899 = vmatpush1.msra.mxu0 %v6861
    %6900 = vmatprep.subr.mxu0 0.0
    %6901 = vmatpush1.msra.mxu0 %v6860
    %6902 = vmatprep.subr.mxu0 0.0
    %6903 = vmatpush1.msra.mxu0 %v6859
    %6904 = vmatprep.subr.mxu0 0.0
    %6905 = vmatpush1.msra.mxu0 %v6858
    %6906 = vmatprep.subr.mxu0 0.0
    %6907 = vmatpush2.msra.mxu0 0.0
    %6908 = vmatprep.subr.mxu0 0.0
    %6909 = vmatpush2.msra.mxu0 0.0
    %6910 = vmatprep.subr.mxu0 0.0
    %6911 = vmatpush2.msra.mxu0 0.0
    %6912 = vmatprep.subr.mxu0 0.0
    %6913 = vmatpush2.msra.mxu0 0.0
    %6914 = vmatprep.subr.mxu0 0.0
    %6915 = vmatpush2.msra.mxu0 0.0
    %6916 = vmatprep.subr.mxu0 0.0
    %6917 = vmatpush2.msra.mxu0 0.0
    %6918 = vmatprep.subr.mxu0 0.0
    %6919 = vmatpush2.msra.mxu0 0.0
    %6920 = vmatprep.subr.mxu0 0.0
    %6921 = vmatpush2.msra.mxu0 0.0
    %6922 = vmatprep.subr.mxu0 0.0
    %6923 = vmatpush2.msra.mxu0 0.0
    %6924 = vmatprep.subr.mxu0 0.0
    %6925 = vmatpush2.msra.mxu0 0.0
    %6926 = vmatprep.subr.mxu0 0.0
    %6927 = vmatpush2.msra.mxu0 0.0
    %6928 = vmatprep.subr.mxu0 0.0
    %6929 = vmatpush2.msra.mxu0 0.0
    %6930 = vmatprep.subr.mxu0 0.0
    %6931 = vmatpush2.msra.mxu0 0.0
    %6932 = vmatprep.subr.mxu0 0.0
    %6933 = vmatpush2.msra.mxu0 0.0
    %6934 = vmatprep.subr.mxu0 0.0
    %6935 = vmatpush2.msra.mxu0 0.0
    %6936 = vmatprep.subr.mxu0 0.0
    %6937 = vmatpush2.msra.mxu0 0.0
    %6938 = vmatprep.mubr.f32.mxu0 0.0
    %6939 = vmatmul.mubr.f32.gmra.mxu0 %v6854
    %v6940 = vpop.f32.mrf.mxu0
    %v6941 = vadd.f32 0.0, %v6940
    %v6942 = vpop.f32.mrf.mxu0
    %6943 = vdwg.mxu0
    %v6944 = vadd.f32 %v6779, %v6941
    %s6945 = scalar_lea.vmem [#allocation16], 6
    %v6946 = vld [vmem:[%s6945] sm:$0x3]
    %v6948 = vsel %vm6460, %v6946, 0
    %6950 = vmatprep.subr.mxu0 0.0
    %6951 = vmatpush1.msra.mxu0 0.0
    %6952 = vmatprep.subr.mxu0 0.0
    %6953 = vmatpush1.msra.mxu0 0.0
    %6954 = vmatprep.subr.mxu0 0.0
    %6955 = vmatpush1.msra.mxu0 0.0
    %6956 = vmatprep.subr.mxu0 0.0
    %6957 = vmatpush1.msra.mxu0 0.0
    %6958 = vmatprep.subr.mxu0 0.0
    %6959 = vmatpush1.msra.mxu0 0.0
    %6960 = vmatprep.subr.mxu0 0.0
    %6961 = vmatpush1.msra.mxu0 0.0
    %6962 = vmatprep.subr.mxu0 0.0
    %6963 = vmatpush1.msra.mxu0 0.0
    %6964 = vmatprep.subr.mxu0 0.0
    %6965 = vmatpush1.msra.mxu0 0.0
    %6966 = vmatprep.subr.mxu0 0.0
    %6967 = vmatpush1.msra.mxu0 0.0
    %6968 = vmatprep.subr.mxu0 0.0
    %6969 = vmatpush1.msra.mxu0 0.0
    %6970 = vmatprep.subr.mxu0 0.0
    %6971 = vmatpush1.msra.mxu0 0.0
    %6972 = vmatprep.subr.mxu0 0.0
    %6973 = vmatpush1.msra.mxu0 0.0
    %6974 = vmatprep.subr.mxu0 0.0
    %6975 = vmatpush1.msra.mxu0 0.0
    %6976 = vmatprep.subr.mxu0 0.0
    %6977 = vmatpush1.msra.mxu0 0.0
    %6978 = vmatprep.subr.mxu0 0.0
    %6979 = vmatpush1.msra.mxu0 0.0
    %6980 = vmatprep.subr.mxu0 0.0
    %6981 = vmatpush1.msra.mxu0 %v6458
    %6982 = vmatprep.subr.mxu0 0.0
    %6983 = vmatpush2.msra.mxu0 0.0
    %6984 = vmatprep.subr.mxu0 0.0
    %6985 = vmatpush2.msra.mxu0 0.0
    %6986 = vmatprep.subr.mxu0 0.0
    %6987 = vmatpush2.msra.mxu0 0.0
    %6988 = vmatprep.subr.mxu0 0.0
    %6989 = vmatpush2.msra.mxu0 0.0
    %6990 = vmatprep.subr.mxu0 0.0
    %6991 = vmatpush2.msra.mxu0 0.0
    %6992 = vmatprep.subr.mxu0 0.0
    %6993 = vmatpush2.msra.mxu0 0.0
    %6994 = vmatprep.subr.mxu0 0.0
    %6995 = vmatpush2.msra.mxu0 0.0
    %6996 = vmatprep.subr.mxu0 0.0
    %6997 = vmatpush2.msra.mxu0 0.0
    %6998 = vmatprep.subr.mxu0 0.0
    %6999 = vmatpush2.msra.mxu0 0.0
    %7000 = vmatprep.subr.mxu0 0.0
    %7001 = vmatpush2.msra.mxu0 0.0
    %7002 = vmatprep.subr.mxu0 0.0
    %7003 = vmatpush2.msra.mxu0 0.0
    %7004 = vmatprep.subr.mxu0 0.0
    %7005 = vmatpush2.msra.mxu0 0.0
    %7006 = vmatprep.subr.mxu0 0.0
    %7007 = vmatpush2.msra.mxu0 0.0
    %7008 = vmatprep.subr.mxu0 0.0
    %7009 = vmatpush2.msra.mxu0 0.0
    %7010 = vmatprep.subr.mxu0 0.0
    %7011 = vmatpush2.msra.mxu0 0.0
    %7012 = vmatprep.subr.mxu0 0.0
    %7013 = vmatpush2.msra.mxu0 0.0
    %7014 = vmatprep.mubr.f32.mxu0 0.0
    %7015 = vmatmul.mubr.f32.gmra.mxu0 %v6948
    %v7016 = vpop.f32.mrf.mxu0
    %v7017 = vadd.f32 0.0, %v7016
    %v7018 = vpop.f32.mrf.mxu0
    %7019 = vdwg.mxu0
    %s7020 = scalar_lea.vmem %s11, 384
    %v7021 = vld [vmem:[%s7020] sm:$0xff]
    %v7022 = vld [vmem:[%s7020 + $0x8] sm:$0xff]
    %v7023 = vld [vmem:[%s7020 + $0x10] sm:$0xff]
    %v7024 = vld [vmem:[%s7020 + $0x18] sm:$0xff]
    %v7025 = vld [vmem:[%s7020 + $0x20] sm:$0xff]
    %v7026 = vld [vmem:[%s7020 + $0x28] sm:$0xff]
    %v7027 = vld [vmem:[%s7020 + $0x30] sm:$0xff]
    %v7028 = vld [vmem:[%s7020 + $0x38] sm:$0xff]
    %v7029 = vld [vmem:[%s7020 + $0x40] sm:$0xff]
    %v7030 = vld [vmem:[%s7020 + $0x48] sm:$0xff]
    %v7031 = vld [vmem:[%s7020 + $0x50] sm:$0xff]
    %v7032 = vld [vmem:[%s7020 + $0x58] sm:$0xff]
    %v7033 = vld [vmem:[%s7020 + $0x60] sm:$0xff]
    %v7034 = vld [vmem:[%s7020 + $0x68] sm:$0xff]
    %v7035 = vld [vmem:[%s7020 + $0x70] sm:$0xff]
    %v7036 = vld [vmem:[%s7020 + $0x78] sm:$0xff]
    %7037 = vmatprep.subr.mxu0 0.0
    %7038 = vmatpush1.msra.mxu0 %v7036
    %7039 = vmatprep.subr.mxu0 0.0
    %7040 = vmatpush1.msra.mxu0 %v7035
    %7041 = vmatprep.subr.mxu0 0.0
    %7042 = vmatpush1.msra.mxu0 %v7034
    %7043 = vmatprep.subr.mxu0 0.0
    %7044 = vmatpush1.msra.mxu0 %v7033
    %7045 = vmatprep.subr.mxu0 0.0
    %7046 = vmatpush1.msra.mxu0 %v7032
    %7047 = vmatprep.subr.mxu0 0.0
    %7048 = vmatpush1.msra.mxu0 %v7031
    %7049 = vmatprep.subr.mxu0 0.0
    %7050 = vmatpush1.msra.mxu0 %v7030
    %7051 = vmatprep.subr.mxu0 0.0
    %7052 = vmatpush1.msra.mxu0 %v7029
    %7053 = vmatprep.subr.mxu0 0.0
    %7054 = vmatpush1.msra.mxu0 %v7028
    %7055 = vmatprep.subr.mxu0 0.0
    %7056 = vmatpush1.msra.mxu0 %v7027
    %7057 = vmatprep.subr.mxu0 0.0
    %7058 = vmatpush1.msra.mxu0 %v7026
    %7059 = vmatprep.subr.mxu0 0.0
    %7060 = vmatpush1.msra.mxu0 %v7025
    %7061 = vmatprep.subr.mxu0 0.0
    %7062 = vmatpush1.msra.mxu0 %v7024
    %7063 = vmatprep.subr.mxu0 0.0
    %7064 = vmatpush1.msra.mxu0 %v7023
    %7065 = vmatprep.subr.mxu0 0.0
    %7066 = vmatpush1.msra.mxu0 %v7022
    %7067 = vmatprep.subr.mxu0 0.0
    %7068 = vmatpush1.msra.mxu0 %v7021
    %7069 = vmatprep.subr.mxu0 0.0
    %7070 = vmatpush2.msra.mxu0 0.0
    %7071 = vmatprep.subr.mxu0 0.0
    %7072 = vmatpush2.msra.mxu0 0.0
    %7073 = vmatprep.subr.mxu0 0.0
    %7074 = vmatpush2.msra.mxu0 0.0
    %7075 = vmatprep.subr.mxu0 0.0
    %7076 = vmatpush2.msra.mxu0 0.0
    %7077 = vmatprep.subr.mxu0 0.0
    %7078 = vmatpush2.msra.mxu0 0.0
    %7079 = vmatprep.subr.mxu0 0.0
    %7080 = vmatpush2.msra.mxu0 0.0
    %7081 = vmatprep.subr.mxu0 0.0
    %7082 = vmatpush2.msra.mxu0 0.0
    %7083 = vmatprep.subr.mxu0 0.0
    %7084 = vmatpush2.msra.mxu0 0.0
    %7085 = vmatprep.subr.mxu0 0.0
    %7086 = vmatpush2.msra.mxu0 0.0
    %7087 = vmatprep.subr.mxu0 0.0
    %7088 = vmatpush2.msra.mxu0 0.0
    %7089 = vmatprep.subr.mxu0 0.0
    %7090 = vmatpush2.msra.mxu0 0.0
    %7091 = vmatprep.subr.mxu0 0.0
    %7092 = vmatpush2.msra.mxu0 0.0
    %7093 = vmatprep.subr.mxu0 0.0
    %7094 = vmatpush2.msra.mxu0 0.0
    %7095 = vmatprep.subr.mxu0 0.0
    %7096 = vmatpush2.msra.mxu0 0.0
    %7097 = vmatprep.subr.mxu0 0.0
    %7098 = vmatpush2.msra.mxu0 0.0
    %7099 = vmatprep.subr.mxu0 0.0
    %7100 = vmatpush2.msra.mxu0 0.0
    %7101 = vmatprep.mubr.f32.mxu0 0.0
    %7102 = vmatmul.mubr.f32.gmra.mxu0 %v7017
    %v7103 = vpop.f32.mrf.mxu0
    %v7104 = vadd.f32 0.0, %v7103
    %v7105 = vpop.f32.mrf.mxu0
    %7106 = vdwg.mxu0
    %v7107 = vadd.f32 %v6944, %v7104
    %v7108 = vld [vmem:[#allocation17] sm:$0x1]
    %v7110 = vlaneseq
    %v7111 = vshrl.u32 %v7110, 7
    %v7112 = vsub.s32 0, %v7111
    %v7113 = vrot.slane %v7108, %v7112
    %v7115 = vadd.f32 %v7107, %v7113
    %vm7116 = vcmask 254976
    %7117 = vst.msk [vmem:[#allocation19] sm:$0x3] %vm7116, %v7115
    // Predicated region
    $region94: #{encoder_forward.1} parent=1 // pred_check
      _
    $region95: #{encoder_forward.1} parent=1 // pred_check_branch
      %7119 = sbr.rel (0) target = $region97
    $region96: #{encoder_forward.1} parent=1 // pred_region
      %s7121 = ssub.s32 32, 32
      %7122 = vsyncadd [#allocation4], %s7121
      %s7124 = sshll.u32 [#allocation19], 4
      %s7125 = int_to_ptr.vmem [resolvable:$true] %s7124
      %7127 = dma.vmem_to_hbm [thread:$0]  %s7125, 32, %s13, [#allocation4]
    $region97: #{encoder_forward.1} parent=1 // pred_fallthru
      _
    // Predicated region
    $region98: #{encoder_forward.1} parent=1 // pred_check
      _
    $region99: #{encoder_forward.1} parent=1 // pred_check_branch
      %7129 = sbr.rel (0) target = $region101
    $region100: #{encoder_forward.1} parent=1 // pred_region
      %7130 = dma.done [#allocation4], 32
    $region101: #{encoder_forward.1} parent=1 // pred_fallthru
      _
    %7131 = vsyncpa [#allocation3], 1
    %7132 = vsyncpa [#allocation6], 1
    %7133 = vsyncpa [#allocation9], 1
    %7134 = vsyncpa [#allocation12], 1
    %7135 = vsyncpa [#allocation15], 1
    %7136 = vsyncpa [#allocation18], 1
    %7137 = vsyncpa [#allocation4], 1

</llo_original>
